<compile_context>
chip_gen: v7x
topology: tpu7x:2x2x1
jax: 0.10.0
libtpu: 0.0.40
codegen_flags: <defaults>
</compile_context>

<pallas_src>
import math
from typing import NamedTuple, Tuple

import jax
import jax.numpy as jnp
from jax.experimental import pallas as pl
from jax.experimental.pallas import tpu as pltpu

# Hidden layer widths of the Generator MLP.
HIDDEN = (128, 256, 512, 1024, 512)

_LANE = 128
_VMEM_LIMIT = 48 * 1024 * 1024        # fits v5e/v6e (128 MiB) and v7x (64 MiB)
_MAX_TILE_B = 512                     # v7x-friendly cap (64 MiB VMEM per TC)


def _round_up(n, m):
    return ((n + m - 1) // m) * m


# --------------------------------------------------------------------------
# Kernel
# --------------------------------------------------------------------------
def _generator_kernel(x_ref,
                      w1, b1, w2, b2, w3, b3, w4, b4, w5, b5, w6, b6,
                      o_ref):
    """Fused forward pass over one batch tile: 6 Linear layers, ReLU x5."""
    h = x_ref[...]                      # bf16 activation tile

    def layer(h, w_ref, b_ref, relu):
        # bf16 MXU operands, f32 accumulation; bias-add / ReLU stay in f32.
        y = jnp.dot(h.astype(jnp.bfloat16), w_ref[...],
                    preferred_element_type=jnp.float32)
        y = y + b_ref[...]              # b is (1, out) -> broadcasts over tile
        if relu:
            y = jnp.maximum(y, 0.0)
        return y

    h = layer(h, w1, b1, True)
    h = layer(h, w2, b2, True)
    h = layer(h, w3, b3, True)
    h = layer(h, w4, b4, True)
    h = layer(h, w5, b5, True)
    h = layer(h, w6, b6, False)         # final Linear, nn.Identity() after

    o_ref[...] = h.astype(o_ref.dtype)


# --------------------------------------------------------------------------
# Parameter init / one-time preparation (hoisted out of the forward pass)
# --------------------------------------------------------------------------
def init_generator_params(key, noise_dim, output_dim):
    """PyTorch default Linear init: U(-1/sqrt(fan_in), 1/sqrt(fan_in))."""
    dims = (noise_dim,) + HIDDEN + (output_dim,)
    params = []
    for i in range(len(dims) - 1):
        fan_in, fan_out = dims[i], dims[i + 1]
        bound = 1.0 / math.sqrt(fan_in)
        key, kw, kb = jax.random.split(key, 3)
        w = jax.random.uniform(kw, (fan_in, fan_out), jnp.float32,
                               minval=-bound, maxval=bound)
        b = jax.random.uniform(kb, (1, fan_out), jnp.float32,
                               minval=-bound, maxval=bound)
        params.append((w, b))
    return params


class PreparedGenerator(NamedTuple):
    params: Tuple            # ((w_bf16_padded, b_f32_padded), ...)
    noise_dim: int
    output_dim: int
    in_pad: int
    out_pad: int


def prepare_generator_params(params):
    """Lane-pad edge dims and cast weights to bf16 ONCE (cache the result)."""
    n_layers = len(params)
    noise_dim = params[0][0].shape[0]
    output_dim = params[-1][0].shape[1]
    in_pad = _round_up(noise_dim, _LANE)
    out_pad = _round_up(output_dim, _LANE)

    prepped = []
    for li, (w, b) in enumerate(params):
        din, dout = w.shape
        dpi = in_pad if li == 0 else din
        dpo = out_pad if li == n_layers - 1 else dout
        wp = jnp.zeros((dpi, dpo), jnp.float32).at[:din, :dout].set(w)
        wp = wp.astype(jnp.bfloat16)                       # bf16 weight storage
        bp = jnp.zeros((1, dpo), jnp.float32).at[:, :dout].set(b)   # f32 bias
        prepped.append((wp, bp))

    return PreparedGenerator(params=tuple(prepped), noise_dim=noise_dim,
                             output_dim=output_dim, in_pad=in_pad,
                             out_pad=out_pad)


# --------------------------------------------------------------------------
# Forward pass
# --------------------------------------------------------------------------
def _choose_batch_tiling(batch, max_tile_b=_MAX_TILE_B):
    """Pick (tile_b, n_tiles) so pad waste is <=7 rows and v7x gets >=2 steps."""
    min_grid = 2 if batch >= 256 else 1      # both v7x TCs busy at moderate batch
    n_tiles = max(min_grid, -(-batch // max_tile_b))
    tile_b = _round_up(-(-batch // n_tiles), 8)
    return tile_b, n_tiles


def _build_call(prepared, tile_b, n_tiles, cost, single_buffer_weights):
    in_pad, out_pad = prepared.in_pad, prepared.out_pad
    padded_batch = tile_b * n_tiles

    weight_spec_kwargs = {}
    if single_buffer_weights:
        # Constant index_map -> the block never changes; 1 buffer is enough.
        weight_spec_kwargs = dict(pipeline_mode=pl.Buffered(1))

    in_specs = [pl.BlockSpec((tile_b, in_pad), lambda i: (i, 0))]
    for w, b in prepared.params:
        in_specs.append(pl.BlockSpec(w.shape, lambda i: (0, 0),
                                     **weight_spec_kwargs))
        in_specs.append(pl.BlockSpec(b.shape, lambda i: (0, 0),
                                     **weight_spec_kwargs))
    out_specs = pl.BlockSpec((tile_b, out_pad), lambda i: (i, 0))

    return pl.pallas_call(
        _generator_kernel,
        out_shape=jax.ShapeDtypeStruct((padded_batch, out_pad), jnp.float32),
        grid=(n_tiles,),
        in_specs=in_specs,
        out_specs=out_specs,
        compiler_params=pltpu.CompilerParams(
            dimension_semantics=("parallel",),
            vmem_limit_bytes=_VMEM_LIMIT,
        ),
        cost_estimate=cost,
    )


def generator_forward(x, prepared: PreparedGenerator, max_tile_b=_MAX_TILE_B):
    """Batch-tiled fused Pallas forward pass of the Generator MLP."""
    batch, noise_dim = x.shape
    assert noise_dim == prepared.noise_dim, (noise_dim, prepared.noise_dim)
    in_pad, out_pad = prepared.in_pad, prepared.out_pad

    tile_b, n_tiles = _choose_batch_tiling(batch, max_tile_b)
    padded_batch = tile_b * n_tiles

    # bf16 input tile (halves x HBM traffic; removes the in-kernel f32->bf16
    # cast feeding layer 1).  Zero-pad batch rows and the noise_dim lanes.
    xp = jnp.zeros((padded_batch, in_pad), jnp.bfloat16)
    xp = xp.at[:batch, :noise_dim].set(x.astype(jnp.bfloat16))

    flat_params = []
    for w, b in prepared.params:
        flat_params.extend([w, b])

    # Advisory cost model for the XLA scheduler.
    dims_p = [in_pad] + list(HIDDEN) + [out_pad]
    flops = 2 * padded_batch * sum(dims_p[i] * dims_p[i + 1]
                                   for i in range(len(dims_p) - 1))
    bytes_accessed = (sum(int(w.size) * 2 + int(b.size) * 4
                          for w, b in prepared.params)
                      + int(xp.size) * 2 + padded_batch * out_pad * 4)
    cost = pl.CostEstimate(flops=flops, transcendentals=0,
                           bytes_accessed=bytes_accessed)

    try:
        call = _build_call(prepared, tile_b, n_tiles, cost,
                           single_buffer_weights=True)
        out = call(xp, *flat_params)
    except Exception:
        # pl.Buffered(1) not supported by this jax version -> default buffering.
        call = _build_call(prepared, tile_b, n_tiles, cost,
                           single_buffer_weights=False)
        out = call(xp, *flat_params)

    return out[:batch, :prepared.output_dim]


# --------------------------------------------------------------------------
# Reference (same bf16-weight / f32-accumulate math as the kernel)
# --------------------------------------------------------------------------
def generator_reference(x, params):
    h = x.astype(jnp.bfloat16)
    for i, (w, b) in enumerate(params):
        h = jnp.dot(h.astype(jnp.bfloat16), w.astype(jnp.bfloat16),
                    preferred_element_type=jnp.float32) + b
        if i < len(params) - 1:
            h = jnp.maximum(h, 0.0)
    return h


if __name__ == "__main__":
    noise_dim = 32
    output_dim = 64
    batch = 8

    key = jax.random.PRNGKey(0)
    k_params, k_x = jax.random.split(key)

    params = init_generator_params(k_params, noise_dim, output_dim)
    prepared = prepare_generator_params(params)       # one-time prep (cached)
    x = jax.random.normal(k_x, (batch, noise_dim), dtype=jnp.float32)

    out = generator_forward(x, prepared)
    out = jax.block_until_ready(out)

    ref = generator_reference(x, params)
    assert out.shape == (batch, output_dim), out.shape
    assert jnp.allclose(out, ref, atol=1e-2, rtol=1e-2), "mismatch vs reference"

    print("KERNEL_OK")
</pallas_src>

<mosaic_0001>
module attributes {stable_mosaic.version = 11 : i64} {
  func.func @_generator_kernel(%arg0: i32, %arg1: memref<8x128xbf16, #tpu.memory_space<vmem>>, %arg2: memref<128x128xbf16, #tpu.memory_space<vmem>>, %arg3: memref<1x128xf32, #tpu.memory_space<vmem>>, %arg4: memref<128x256xbf16, #tpu.memory_space<vmem>>, %arg5: memref<1x256xf32, #tpu.memory_space<vmem>>, %arg6: memref<256x512xbf16, #tpu.memory_space<vmem>>, %arg7: memref<1x512xf32, #tpu.memory_space<vmem>>, %arg8: memref<512x1024xbf16, #tpu.memory_space<vmem>>, %arg9: memref<1x1024xf32, #tpu.memory_space<vmem>>, %arg10: memref<1024x512xbf16, #tpu.memory_space<vmem>>, %arg11: memref<1x512xf32, #tpu.memory_space<vmem>>, %arg12: memref<512x128xbf16, #tpu.memory_space<vmem>>, %arg13: memref<1x128xf32, #tpu.memory_space<vmem>>, %arg14: memref<8x128xf32, #tpu.memory_space<vmem>>) attributes {dimension_semantics = [#tpu.dimension_semantics<parallel>], iteration_bounds = array<i64: 1>, scalar_prefetch = 0 : i64, scratch_operands = 0 : i64, tpu.core_type = #tpu.core_type<tc>, window_params = [{transform_indices = @transform_0, window_bounds = array<i64: 8, 128>}, {pipeline_mode = #tpu.pipeline_mode<synchronous>, transform_indices = @transform_1, window_bounds = array<i64: 128, 128>}, {pipeline_mode = #tpu.pipeline_mode<synchronous>, transform_indices = @transform_2, window_bounds = array<i64: 1, 128>}, {pipeline_mode = #tpu.pipeline_mode<synchronous>, transform_indices = @transform_3, window_bounds = array<i64: 128, 256>}, {pipeline_mode = #tpu.pipeline_mode<synchronous>, transform_indices = @transform_4, window_bounds = array<i64: 1, 256>}, {pipeline_mode = #tpu.pipeline_mode<synchronous>, transform_indices = @transform_5, window_bounds = array<i64: 256, 512>}, {pipeline_mode = #tpu.pipeline_mode<synchronous>, transform_indices = @transform_6, window_bounds = array<i64: 1, 512>}, {pipeline_mode = #tpu.pipeline_mode<synchronous>, transform_indices = @transform_7, window_bounds = array<i64: 512, 1024>}, {pipeline_mode = #tpu.pipeline_mode<synchronous>, transform_indices = @transform_8, window_bounds = array<i64: 1, 1024>}, {pipeline_mode = #tpu.pipeline_mode<synchronous>, transform_indices = @transform_9, window_bounds = array<i64: 1024, 512>}, {pipeline_mode = #tpu.pipeline_mode<synchronous>, transform_indices = @transform_10, window_bounds = array<i64: 1, 512>}, {pipeline_mode = #tpu.pipeline_mode<synchronous>, transform_indices = @transform_11, window_bounds = array<i64: 512, 128>}, {pipeline_mode = #tpu.pipeline_mode<synchronous>, transform_indices = @transform_12, window_bounds = array<i64: 1, 128>}, {transform_indices = @transform_13, window_bounds = array<i64: 8, 128>}]} {
    %c0 = arith.constant 0 : index
    %c0_0 = arith.constant 0 : index
    %0 = vector.load %arg1[%c0, %c0_0] : memref<8x128xbf16, #tpu.memory_space<vmem>>, vector<8x128xbf16>
    %c0_1 = arith.constant 0 : index
    %c0_2 = arith.constant 0 : index
    %1 = vector.load %arg2[%c0_1, %c0_2] : memref<128x128xbf16, #tpu.memory_space<vmem>>, vector<128x128xbf16>
    %cst = arith.constant dense<0.000000e+00> : vector<8x128xf32>
    %2 = tpu.matmul %0, %1, %cst {dimension_numbers = #tpu.dot_dimension_numbers<[1], [0], [0], [1], [0, 0, 1, 1], [], []>} : vector<8x128xbf16>, vector<128x128xbf16>, vector<8x128xf32> -> vector<8x128xf32>
    %c0_3 = arith.constant 0 : index
    %c0_4 = arith.constant 0 : index
    %3 = vector.load %arg3[%c0_3, %c0_4] : memref<1x128xf32, #tpu.memory_space<vmem>>, vector<1x128xf32>
    %4 = vector.broadcast %3 : vector<1x128xf32> to vector<8x128xf32>
    %5 = arith.addf %2, %4 : vector<8x128xf32>
    %cst_5 = arith.constant 0.000000e+00 : f32
    %6 = vector.broadcast %cst_5 : f32 to vector<8x128xf32>
    %7 = arith.maximumf %5, %6 : vector<8x128xf32>
    %8 = arith.truncf %7 : vector<8x128xf32> to vector<8x128xbf16>
    %c0_6 = arith.constant 0 : index
    %c0_7 = arith.constant 0 : index
    %9 = vector.load %arg4[%c0_6, %c0_7] : memref<128x256xbf16, #tpu.memory_space<vmem>>, vector<128x256xbf16>
    %cst_8 = arith.constant dense<0.000000e+00> : vector<8x256xf32>
    %10 = tpu.matmul %8, %9, %cst_8 {dimension_numbers = #tpu.dot_dimension_numbers<[1], [0], [0], [1], [0, 0, 1, 1], [], []>} : vector<8x128xbf16>, vector<128x256xbf16>, vector<8x256xf32> -> vector<8x256xf32>
    %c0_9 = arith.constant 0 : index
    %c0_10 = arith.constant 0 : index
    %11 = vector.load %arg5[%c0_9, %c0_10] : memref<1x256xf32, #tpu.memory_space<vmem>>, vector<1x256xf32>
    %12 = vector.broadcast %11 : vector<1x256xf32> to vector<8x256xf32>
    %13 = arith.addf %10, %12 : vector<8x256xf32>
    %cst_11 = arith.constant 0.000000e+00 : f32
    %14 = vector.broadcast %cst_11 : f32 to vector<8x256xf32>
    %15 = arith.maximumf %13, %14 : vector<8x256xf32>
    %16 = arith.truncf %15 : vector<8x256xf32> to vector<8x256xbf16>
    %c0_12 = arith.constant 0 : index
    %c0_13 = arith.constant 0 : index
    %17 = vector.load %arg6[%c0_12, %c0_13] : memref<256x512xbf16, #tpu.memory_space<vmem>>, vector<256x512xbf16>
    %cst_14 = arith.constant dense<0.000000e+00> : vector<8x512xf32>
    %18 = tpu.matmul %16, %17, %cst_14 {dimension_numbers = #tpu.dot_dimension_numbers<[1], [0], [0], [1], [0, 0, 1, 1], [], []>} : vector<8x256xbf16>, vector<256x512xbf16>, vector<8x512xf32> -> vector<8x512xf32>
    %c0_15 = arith.constant 0 : index
    %c0_16 = arith.constant 0 : index
    %19 = vector.load %arg7[%c0_15, %c0_16] : memref<1x512xf32, #tpu.memory_space<vmem>>, vector<1x512xf32>
    %20 = vector.broadcast %19 : vector<1x512xf32> to vector<8x512xf32>
    %21 = arith.addf %18, %20 : vector<8x512xf32>
    %cst_17 = arith.constant 0.000000e+00 : f32
    %22 = vector.broadcast %cst_17 : f32 to vector<8x512xf32>
    %23 = arith.maximumf %21, %22 : vector<8x512xf32>
    %24 = arith.truncf %23 : vector<8x512xf32> to vector<8x512xbf16>
    %c0_18 = arith.constant 0 : index
    %c0_19 = arith.constant 0 : index
    %25 = vector.load %arg8[%c0_18, %c0_19] : memref<512x1024xbf16, #tpu.memory_space<vmem>>, vector<512x1024xbf16>
    %cst_20 = arith.constant dense<0.000000e+00> : vector<8x1024xf32>
    %26 = tpu.matmul %24, %25, %cst_20 {dimension_numbers = #tpu.dot_dimension_numbers<[1], [0], [0], [1], [0, 0, 1, 1], [], []>} : vector<8x512xbf16>, vector<512x1024xbf16>, vector<8x1024xf32> -> vector<8x1024xf32>
    %c0_21 = arith.constant 0 : index
    %c0_22 = arith.constant 0 : index
    %27 = vector.load %arg9[%c0_21, %c0_22] : memref<1x1024xf32, #tpu.memory_space<vmem>>, vector<1x1024xf32>
    %28 = vector.broadcast %27 : vector<1x1024xf32> to vector<8x1024xf32>
    %29 = arith.addf %26, %28 : vector<8x1024xf32>
    %cst_23 = arith.constant 0.000000e+00 : f32
    %30 = vector.broadcast %cst_23 : f32 to vector<8x1024xf32>
    %31 = arith.maximumf %29, %30 : vector<8x1024xf32>
    %32 = arith.truncf %31 : vector<8x1024xf32> to vector<8x1024xbf16>
    %c0_24 = arith.constant 0 : index
    %c0_25 = arith.constant 0 : index
    %33 = vector.load %arg10[%c0_24, %c0_25] : memref<1024x512xbf16, #tpu.memory_space<vmem>>, vector<1024x512xbf16>
    %cst_26 = arith.constant dense<0.000000e+00> : vector<8x512xf32>
    %34 = tpu.matmul %32, %33, %cst_26 {dimension_numbers = #tpu.dot_dimension_numbers<[1], [0], [0], [1], [0, 0, 1, 1], [], []>} : vector<8x1024xbf16>, vector<1024x512xbf16>, vector<8x512xf32> -> vector<8x512xf32>
    %c0_27 = arith.constant 0 : index
    %c0_28 = arith.constant 0 : index
    %35 = vector.load %arg11[%c0_27, %c0_28] : memref<1x512xf32, #tpu.memory_space<vmem>>, vector<1x512xf32>
    %36 = vector.broadcast %35 : vector<1x512xf32> to vector<8x512xf32>
    %37 = arith.addf %34, %36 : vector<8x512xf32>
    %cst_29 = arith.constant 0.000000e+00 : f32
    %38 = vector.broadcast %cst_29 : f32 to vector<8x512xf32>
    %39 = arith.maximumf %37, %38 : vector<8x512xf32>
    %40 = arith.truncf %39 : vector<8x512xf32> to vector<8x512xbf16>
    %c0_30 = arith.constant 0 : index
    %c0_31 = arith.constant 0 : index
    %41 = vector.load %arg12[%c0_30, %c0_31] : memref<512x128xbf16, #tpu.memory_space<vmem>>, vector<512x128xbf16>
    %cst_32 = arith.constant dense<0.000000e+00> : vector<8x128xf32>
    %42 = tpu.matmul %40, %41, %cst_32 {dimension_numbers = #tpu.dot_dimension_numbers<[1], [0], [0], [1], [0, 0, 1, 1], [], []>} : vector<8x512xbf16>, vector<512x128xbf16>, vector<8x128xf32> -> vector<8x128xf32>
    %c0_33 = arith.constant 0 : index
    %c0_34 = arith.constant 0 : index
    %43 = vector.load %arg13[%c0_33, %c0_34] : memref<1x128xf32, #tpu.memory_space<vmem>>, vector<1x128xf32>
    %44 = vector.broadcast %43 : vector<1x128xf32> to vector<8x128xf32>
    %45 = arith.addf %42, %44 : vector<8x128xf32>
    %c0_35 = arith.constant 0 : index
    %c0_36 = arith.constant 0 : index
    %46 = vector.load %arg14[%c0_35, %c0_36] : memref<8x128xf32, #tpu.memory_space<vmem>>, vector<8x128xf32>
    tpu.vector_store %arg14[%c0_35, %c0_36], %45 {strides = array<i32>} : memref<8x128xf32, #tpu.memory_space<vmem>>, vector<8x128xf32>,
    return
  }
  func.func @transform_0(%arg0: i32) -> (i32, i32) {
    %c0_i32 = arith.constant 0 : i32
    %c0_i32_0 = arith.constant 0 : i32
    return %arg0, %c0_i32 : i32, i32
  }
  func.func @transform_1(%arg0: i32) -> (i32, i32) {
    %c0_i32 = arith.constant 0 : i32
    %c0_i32_0 = arith.constant 0 : i32
    %c0_i32_1 = arith.constant 0 : i32
    return %c0_i32, %c0_i32_0 : i32, i32
  }
  func.func @transform_2(%arg0: i32) -> (i32, i32) {
    %c0_i32 = arith.constant 0 : i32
    %c0_i32_0 = arith.constant 0 : i32
    %c0_i32_1 = arith.constant 0 : i32
    return %c0_i32, %c0_i32_0 : i32, i32
  }
  func.func @transform_3(%arg0: i32) -> (i32, i32) {
    %c0_i32 = arith.constant 0 : i32
    %c0_i32_0 = arith.constant 0 : i32
    %c0_i32_1 = arith.constant 0 : i32
    return %c0_i32, %c0_i32_0 : i32, i32
  }
  func.func @transform_4(%arg0: i32) -> (i32, i32) {
    %c0_i32 = arith.constant 0 : i32
    %c0_i32_0 = arith.constant 0 : i32
    %c0_i32_1 = arith.constant 0 : i32
    return %c0_i32, %c0_i32_0 : i32, i32
  }
  func.func @transform_5(%arg0: i32) -> (i32, i32) {
    %c0_i32 = arith.constant 0 : i32
    %c0_i32_0 = arith.constant 0 : i32
    %c0_i32_1 = arith.constant 0 : i32
    return %c0_i32, %c0_i32_0 : i32, i32
  }
  func.func @transform_6(%arg0: i32) -> (i32, i32) {
    %c0_i32 = arith.constant 0 : i32
    %c0_i32_0 = arith.constant 0 : i32
    %c0_i32_1 = arith.constant 0 : i32
    return %c0_i32, %c0_i32_0 : i32, i32
  }
  func.func @transform_7(%arg0: i32) -> (i32, i32) {
    %c0_i32 = arith.constant 0 : i32
    %c0_i32_0 = arith.constant 0 : i32
    %c0_i32_1 = arith.constant 0 : i32
    return %c0_i32, %c0_i32_0 : i32, i32
  }
  func.func @transform_8(%arg0: i32) -> (i32, i32) {
    %c0_i32 = arith.constant 0 : i32
    %c0_i32_0 = arith.constant 0 : i32
    %c0_i32_1 = arith.constant 0 : i32
    return %c0_i32, %c0_i32_0 : i32, i32
  }
  func.func @transform_9(%arg0: i32) -> (i32, i32) {
    %c0_i32 = arith.constant 0 : i32
    %c0_i32_0 = arith.constant 0 : i32
    %c0_i32_1 = arith.constant 0 : i32
    return %c0_i32, %c0_i32_0 : i32, i32
  }
  func.func @transform_10(%arg0: i32) -> (i32, i32) {
    %c0_i32 = arith.constant 0 : i32
    %c0_i32_0 = arith.constant 0 : i32
    %c0_i32_1 = arith.constant 0 : i32
    return %c0_i32, %c0_i32_0 : i32, i32
  }
  func.func @transform_11(%arg0: i32) -> (i32, i32) {
    %c0_i32 = arith.constant 0 : i32
    %c0_i32_0 = arith.constant 0 : i32
    %c0_i32_1 = arith.constant 0 : i32
    return %c0_i32, %c0_i32_0 : i32, i32
  }
  func.func @transform_12(%arg0: i32) -> (i32, i32) {
    %c0_i32 = arith.constant 0 : i32
    %c0_i32_0 = arith.constant 0 : i32
    %c0_i32_1 = arith.constant 0 : i32
    return %c0_i32, %c0_i32_0 : i32, i32
  }
  func.func @transform_13(%arg0: i32) -> (i32, i32) {
    %c0_i32 = arith.constant 0 : i32
    %c0_i32_0 = arith.constant 0 : i32
    return %arg0, %c0_i32 : i32, i32
  }
}

module attributes {stable_mosaic.version = 11 : i64} {
  func.func @_generator_kernel(%arg0: i32, %arg1: memref<8x128xbf16, #tpu.memory_space<vmem>>, %arg2: memref<128x128xbf16, #tpu.memory_space<vmem>>, %arg3: memref<1x128xf32, #tpu.memory_space<vmem>>, %arg4: memref<128x256xbf16, #tpu.memory_space<vmem>>, %arg5: memref<1x256xf32, #tpu.memory_space<vmem>>, %arg6: memref<256x512xbf16, #tpu.memory_space<vmem>>, %arg7: memref<1x512xf32, #tpu.memory_space<vmem>>, %arg8: memref<512x1024xbf16, #tpu.memory_space<vmem>>, %arg9: memref<1x1024xf32, #tpu.memory_space<vmem>>, %arg10: memref<1024x512xbf16, #tpu.memory_space<vmem>>, %arg11: memref<1x512xf32, #tpu.memory_space<vmem>>, %arg12: memref<512x128xbf16, #tpu.memory_space<vmem>>, %arg13: memref<1x128xf32, #tpu.memory_space<vmem>>, %arg14: memref<8x128xf32, #tpu.memory_space<vmem>>) attributes {dimension_semantics = [#tpu.dimension_semantics<parallel>], iteration_bounds = array<i64: 1>, scalar_prefetch = 0 : i64, scratch_operands = 0 : i64, tpu.core_type = #tpu.core_type<tc>, window_params = [{transform_indices = @transform_0, window_bounds = array<i64: 8, 128>}, {pipeline_mode = #tpu.pipeline_mode<synchronous>, transform_indices = @transform_1, window_bounds = array<i64: 128, 128>}, {pipeline_mode = #tpu.pipeline_mode<synchronous>, transform_indices = @transform_2, window_bounds = array<i64: 1, 128>}, {pipeline_mode = #tpu.pipeline_mode<synchronous>, transform_indices = @transform_3, window_bounds = array<i64: 128, 256>}, {pipeline_mode = #tpu.pipeline_mode<synchronous>, transform_indices = @transform_4, window_bounds = array<i64: 1, 256>}, {pipeline_mode = #tpu.pipeline_mode<synchronous>, transform_indices = @transform_5, window_bounds = array<i64: 256, 512>}, {pipeline_mode = #tpu.pipeline_mode<synchronous>, transform_indices = @transform_6, window_bounds = array<i64: 1, 512>}, {pipeline_mode = #tpu.pipeline_mode<synchronous>, transform_indices = @transform_7, window_bounds = array<i64: 512, 1024>}, {pipeline_mode = #tpu.pipeline_mode<synchronous>, transform_indices = @transform_8, window_bounds = array<i64: 1, 1024>}, {pipeline_mode = #tpu.pipeline_mode<synchronous>, transform_indices = @transform_9, window_bounds = array<i64: 1024, 512>}, {pipeline_mode = #tpu.pipeline_mode<synchronous>, transform_indices = @transform_10, window_bounds = array<i64: 1, 512>}, {pipeline_mode = #tpu.pipeline_mode<synchronous>, transform_indices = @transform_11, window_bounds = array<i64: 512, 128>}, {pipeline_mode = #tpu.pipeline_mode<synchronous>, transform_indices = @transform_12, window_bounds = array<i64: 1, 128>}, {transform_indices = @transform_13, window_bounds = array<i64: 8, 128>}]} {
    %c0 = arith.constant 0 : index
    %c0_0 = arith.constant 0 : index
    %0 = vector.load %arg1[%c0, %c0_0] : memref<8x128xbf16, #tpu.memory_space<vmem>>, vector<8x128xbf16>
    %c0_1 = arith.constant 0 : index
    %c0_2 = arith.constant 0 : index
    %1 = vector.load %arg2[%c0_1, %c0_2] : memref<128x128xbf16, #tpu.memory_space<vmem>>, vector<128x128xbf16>
    %cst = arith.constant dense<0.000000e+00> : vector<8x128xf32>
    %2 = tpu.matmul %0, %1, %cst {dimension_numbers = #tpu.dot_dimension_numbers<[1], [0], [0], [1], [0, 0, 1, 1], [], []>} : vector<8x128xbf16>, vector<128x128xbf16>, vector<8x128xf32> -> vector<8x128xf32>
    %c0_3 = arith.constant 0 : index
    %c0_4 = arith.constant 0 : index
    %3 = vector.load %arg3[%c0_3, %c0_4] : memref<1x128xf32, #tpu.memory_space<vmem>>, vector<1x128xf32>
    %4 = vector.broadcast %3 : vector<1x128xf32> to vector<8x128xf32>
    %5 = arith.addf %2, %4 : vector<8x128xf32>
    %cst_5 = arith.constant 0.000000e+00 : f32
    %6 = vector.broadcast %cst_5 : f32 to vector<8x128xf32>
    %7 = arith.maximumf %5, %6 : vector<8x128xf32>
    %8 = arith.truncf %7 : vector<8x128xf32> to vector<8x128xbf16>
    %c0_6 = arith.constant 0 : index
    %c0_7 = arith.constant 0 : index
    %9 = vector.load %arg4[%c0_6, %c0_7] : memref<128x256xbf16, #tpu.memory_space<vmem>>, vector<128x256xbf16>
    %cst_8 = arith.constant dense<0.000000e+00> : vector<8x256xf32>
    %10 = tpu.matmul %8, %9, %cst_8 {dimension_numbers = #tpu.dot_dimension_numbers<[1], [0], [0], [1], [0, 0, 1, 1], [], []>} : vector<8x128xbf16>, vector<128x256xbf16>, vector<8x256xf32> -> vector<8x256xf32>
    %c0_9 = arith.constant 0 : index
    %c0_10 = arith.constant 0 : index
    %11 = vector.load %arg5[%c0_9, %c0_10] : memref<1x256xf32, #tpu.memory_space<vmem>>, vector<1x256xf32>
    %12 = vector.broadcast %11 : vector<1x256xf32> to vector<8x256xf32>
    %13 = arith.addf %10, %12 : vector<8x256xf32>
    %cst_11 = arith.constant 0.000000e+00 : f32
    %14 = vector.broadcast %cst_11 : f32 to vector<8x256xf32>
    %15 = arith.maximumf %13, %14 : vector<8x256xf32>
    %16 = arith.truncf %15 : vector<8x256xf32> to vector<8x256xbf16>
    %c0_12 = arith.constant 0 : index
    %c0_13 = arith.constant 0 : index
    %17 = vector.load %arg6[%c0_12, %c0_13] : memref<256x512xbf16, #tpu.memory_space<vmem>>, vector<256x512xbf16>
    %cst_14 = arith.constant dense<0.000000e+00> : vector<8x512xf32>
    %18 = tpu.matmul %16, %17, %cst_14 {dimension_numbers = #tpu.dot_dimension_numbers<[1], [0], [0], [1], [0, 0, 1, 1], [], []>} : vector<8x256xbf16>, vector<256x512xbf16>, vector<8x512xf32> -> vector<8x512xf32>
    %c0_15 = arith.constant 0 : index
    %c0_16 = arith.constant 0 : index
    %19 = vector.load %arg7[%c0_15, %c0_16] : memref<1x512xf32, #tpu.memory_space<vmem>>, vector<1x512xf32>
    %20 = vector.broadcast %19 : vector<1x512xf32> to vector<8x512xf32>
    %21 = arith.addf %18, %20 : vector<8x512xf32>
    %cst_17 = arith.constant 0.000000e+00 : f32
    %22 = vector.broadcast %cst_17 : f32 to vector<8x512xf32>
    %23 = arith.maximumf %21, %22 : vector<8x512xf32>
    %24 = arith.truncf %23 : vector<8x512xf32> to vector<8x512xbf16>
    %c0_18 = arith.constant 0 : index
    %c0_19 = arith.constant 0 : index
    %25 = vector.load %arg8[%c0_18, %c0_19] : memref<512x1024xbf16, #tpu.memory_space<vmem>>, vector<512x1024xbf16>
    %cst_20 = arith.constant dense<0.000000e+00> : vector<8x1024xf32>
    %26 = tpu.matmul %24, %25, %cst_20 {dimension_numbers = #tpu.dot_dimension_numbers<[1], [0], [0], [1], [0, 0, 1, 1], [], []>} : vector<8x512xbf16>, vector<512x1024xbf16>, vector<8x1024xf32> -> vector<8x1024xf32>
    %c0_21 = arith.constant 0 : index
    %c0_22 = arith.constant 0 : index
    %27 = vector.load %arg9[%c0_21, %c0_22] : memref<1x1024xf32, #tpu.memory_space<vmem>>, vector<1x1024xf32>
    %28 = vector.broadcast %27 : vector<1x1024xf32> to vector<8x1024xf32>
    %29 = arith.addf %26, %28 : vector<8x1024xf32>
    %cst_23 = arith.constant 0.000000e+00 : f32
    %30 = vector.broadcast %cst_23 : f32 to vector<8x1024xf32>
    %31 = arith.maximumf %29, %30 : vector<8x1024xf32>
    %32 = arith.truncf %31 : vector<8x1024xf32> to vector<8x1024xbf16>
    %c0_24 = arith.constant 0 : index
    %c0_25 = arith.constant 0 : index
    %33 = vector.load %arg10[%c0_24, %c0_25] : memref<1024x512xbf16, #tpu.memory_space<vmem>>, vector<1024x512xbf16>
    %cst_26 = arith.constant dense<0.000000e+00> : vector<8x512xf32>
    %34 = tpu.matmul %32, %33, %cst_26 {dimension_numbers = #tpu.dot_dimension_numbers<[1], [0], [0], [1], [0, 0, 1, 1], [], []>} : vector<8x1024xbf16>, vector<1024x512xbf16>, vector<8x512xf32> -> vector<8x512xf32>
    %c0_27 = arith.constant 0 : index
    %c0_28 = arith.constant 0 : index
    %35 = vector.load %arg11[%c0_27, %c0_28] : memref<1x512xf32, #tpu.memory_space<vmem>>, vector<1x512xf32>
    %36 = vector.broadcast %35 : vector<1x512xf32> to vector<8x512xf32>
    %37 = arith.addf %34, %36 : vector<8x512xf32>
    %cst_29 = arith.constant 0.000000e+00 : f32
    %38 = vector.broadcast %cst_29 : f32 to vector<8x512xf32>
    %39 = arith.maximumf %37, %38 : vector<8x512xf32>
    %40 = arith.truncf %39 : vector<8x512xf32> to vector<8x512xbf16>
    %c0_30 = arith.constant 0 : index
    %c0_31 = arith.constant 0 : index
    %41 = vector.load %arg12[%c0_30, %c0_31] : memref<512x128xbf16, #tpu.memory_space<vmem>>, vector<512x128xbf16>
    %cst_32 = arith.constant dense<0.000000e+00> : vector<8x128xf32>
    %42 = tpu.matmul %40, %41, %cst_32 {dimension_numbers = #tpu.dot_dimension_numbers<[1], [0], [0], [1], [0, 0, 1, 1], [], []>} : vector<8x512xbf16>, vector<512x128xbf16>, vector<8x128xf32> -> vector<8x128xf32>
    %c0_33 = arith.constant 0 : index
    %c0_34 = arith.constant 0 : index
    %43 = vector.load %arg13[%c0_33, %c0_34] : memref<1x128xf32, #tpu.memory_space<vmem>>, vector<1x128xf32>
    %44 = vector.broadcast %43 : vector<1x128xf32> to vector<8x128xf32>
    %45 = arith.addf %42, %44 : vector<8x128xf32>
    %c0_35 = arith.constant 0 : index
    %c0_36 = arith.constant 0 : index
    %46 = vector.load %arg14[%c0_35, %c0_36] : memref<8x128xf32, #tpu.memory_space<vmem>>, vector<8x128xf32>
    tpu.vector_store %arg14[%c0_35, %c0_36], %45 {strides = array<i32>} : memref<8x128xf32, #tpu.memory_space<vmem>>, vector<8x128xf32>,
    return
  }
  func.func @transform_0(%arg0: i32) -> (i32, i32) {
    %c0_i32 = arith.constant 0 : i32
    %c0_i32_0 = arith.constant 0 : i32
    return %arg0, %c0_i32 : i32, i32
  }
  func.func @transform_1(%arg0: i32) -> (i32, i32) {
    %c0_i32 = arith.constant 0 : i32
    %c0_i32_0 = arith.constant 0 : i32
    %c0_i32_1 = arith.constant 0 : i32
    return %c0_i32, %c0_i32_0 : i32, i32
  }
  func.func @transform_2(%arg0: i32) -> (i32, i32) {
    %c0_i32 = arith.constant 0 : i32
    %c0_i32_0 = arith.constant 0 : i32
    %c0_i32_1 = arith.constant 0 : i32
    return %c0_i32, %c0_i32_0 : i32, i32
  }
  func.func @transform_3(%arg0: i32) -> (i32, i32) {
    %c0_i32 = arith.constant 0 : i32
    %c0_i32_0 = arith.constant 0 : i32
    %c0_i32_1 = arith.constant 0 : i32
    return %c0_i32, %c0_i32_0 : i32, i32
  }
  func.func @transform_4(%arg0: i32) -> (i32, i32) {
    %c0_i32 = arith.constant 0 : i32
    %c0_i32_0 = arith.constant 0 : i32
    %c0_i32_1 = arith.constant 0 : i32
    return %c0_i32, %c0_i32_0 : i32, i32
  }
  func.func @transform_5(%arg0: i32) -> (i32, i32) {
    %c0_i32 = arith.constant 0 : i32
    %c0_i32_0 = arith.constant 0 : i32
    %c0_i32_1 = arith.constant 0 : i32
    return %c0_i32, %c0_i32_0 : i32, i32
  }
  func.func @transform_6(%arg0: i32) -> (i32, i32) {
    %c0_i32 = arith.constant 0 : i32
    %c0_i32_0 = arith.constant 0 : i32
    %c0_i32_1 = arith.constant 0 : i32
    return %c0_i32, %c0_i32_0 : i32, i32
  }
  func.func @transform_7(%arg0: i32) -> (i32, i32) {
    %c0_i32 = arith.constant 0 : i32
    %c0_i32_0 = arith.constant 0 : i32
    %c0_i32_1 = arith.constant 0 : i32
    return %c0_i32, %c0_i32_0 : i32, i32
  }
  func.func @transform_8(%arg0: i32) -> (i32, i32) {
    %c0_i32 = arith.constant 0 : i32
    %c0_i32_0 = arith.constant 0 : i32
    %c0_i32_1 = arith.constant 0 : i32
    return %c0_i32, %c0_i32_0 : i32, i32
  }
  func.func @transform_9(%arg0: i32) -> (i32, i32) {
    %c0_i32 = arith.constant 0 : i32
    %c0_i32_0 = arith.constant 0 : i32
    %c0_i32_1 = arith.constant 0 : i32
    return %c0_i32, %c0_i32_0 : i32, i32
  }
  func.func @transform_10(%arg0: i32) -> (i32, i32) {
    %c0_i32 = arith.constant 0 : i32
    %c0_i32_0 = arith.constant 0 : i32
    %c0_i32_1 = arith.constant 0 : i32
    return %c0_i32, %c0_i32_0 : i32, i32
  }
  func.func @transform_11(%arg0: i32) -> (i32, i32) {
    %c0_i32 = arith.constant 0 : i32
    %c0_i32_0 = arith.constant 0 : i32
    %c0_i32_1 = arith.constant 0 : i32
    return %c0_i32, %c0_i32_0 : i32, i32
  }
  func.func @transform_12(%arg0: i32) -> (i32, i32) {
    %c0_i32 = arith.constant 0 : i32
    %c0_i32_0 = arith.constant 0 : i32
    %c0_i32_1 = arith.constant 0 : i32
    return %c0_i32, %c0_i32_0 : i32, i32
  }
  func.func @transform_13(%arg0: i32) -> (i32, i32) {
    %c0_i32 = arith.constant 0 : i32
    %c0_i32_0 = arith.constant 0 : i32
    return %arg0, %c0_i32 : i32, i32
  }
}

</mosaic_0001>

<llo_original>
// kernel: tpu_custom_call.1
$region0: #{tpu_custom_call.1}
  #allocation0 [shape = 'u32[]', space=smem, size = 0x4, offset = 0x4, fixed_abs, tag = 'smem constant byte address 0x4 - core index']
  #allocation1 [shape = 'u32[144,128]{1,0:T(1,128)}', space=vmem, size = 0x12000, scoped, tag = 'internal scratch']
  %s0 = inlined_call_operand.hbm [shape: bf16[8,128], index: 0, kind: input, shape index: {}]
  %s1 = inlined_call_operand.hbm [shape: bf16[128,128], index: 1, kind: input, shape index: {}]
  %s2 = inlined_call_operand.hbm [shape: f32[1,128], index: 2, kind: input, shape index: {}]
  %s3 = inlined_call_operand.hbm [shape: bf16[128,256], index: 3, kind: input, shape index: {}]
  %s4 = inlined_call_operand.vmem [shape: f32[1,256], index: 4, kind: input, shape index: {}]
  %s5 = inlined_call_operand.hbm [shape: bf16[256,512], index: 5, kind: input, shape index: {}]
  %s6 = inlined_call_operand.vmem [shape: f32[1,512], index: 6, kind: input, shape index: {}]
  %s7 = inlined_call_operand.hbm [shape: bf16[512,1024], index: 7, kind: input, shape index: {}]
  %s8 = inlined_call_operand.vmem [shape: f32[1,1024], index: 8, kind: input, shape index: {}]
  %s9 = inlined_call_operand.hbm [shape: bf16[1024,512], index: 9, kind: input, shape index: {}]
  %s10 = inlined_call_operand.vmem [shape: f32[1,512], index: 10, kind: input, shape index: {}]
  %s11 = inlined_call_operand.hbm [shape: bf16[512,128], index: 11, kind: input, shape index: {}]
  %s12 = inlined_call_operand.vmem [shape: f32[1,128], index: 12, kind: input, shape index: {}]
  %s13 = inlined_call_operand.hbm [shape: f32[8,128], index: 13, kind: output, shape index: {}]
  %s14 = sld [smem:[#allocation0]]
  $region94: #{tpu_custom_call.1} parent=0
    _
  %s16 = ssub.s32 1, %s14
  %s17 = scalar_select 0, %s16, %s14
  $region1: #{tpu_custom_call.1} parent=0
    #allocation2 [shape = 'u8[2048]{0}', space=vmem, size = 0x800, scoped, tag = 'input window, operand 0, single buffered']
    #allocation3 [shape = 's32[1]{0}', space=sflag, size = 0x4, scoped, tag = 'scoped memory for tpu_custom_call.1']
    #allocation4 [shape = 's32[1]{0}', space=sflag, size = 0x4, scoped, tag = 'scoped memory for tpu_custom_call.1']
    #allocation5 [shape = 'u8[32768]{0}', space=vmem, size = 0x8000, scoped, tag = 'input window, operand 1, single buffered']
    #allocation6 [shape = 's32[1]{0}', space=sflag, size = 0x4, scoped, tag = 'scoped memory for tpu_custom_call.1']
    #allocation7 [shape = 'u8[512]{0}', space=vmem, size = 0x400, scoped, tag = 'input window, operand 2, single buffered']
    #allocation8 [shape = 'u8[65536]{0}', space=vmem, size = 0x10000, scoped, tag = 'input window, operand 3, single buffered']
    #allocation9 [shape = 's32[1]{0}', space=sflag, size = 0x4, scoped, tag = 'scoped memory for tpu_custom_call.1']
    #allocation10 [shape = 'u8[262144]{0}', space=vmem, size = 0x40000, scoped, tag = 'input window, operand 5, single buffered']
    #allocation11 [shape = 'u8[1048576]{0}', space=vmem, size = 0x100000, scoped, tag = 'input window, operand 7, single buffered']
    #allocation12 [shape = 's32[1]{0}', space=sflag, size = 0x4, scoped, tag = 'scoped memory for tpu_custom_call.1']
    #allocation13 [shape = 'u8[1048576]{0}', space=vmem, size = 0x100000, scoped, tag = 'input window, operand 9, single buffered']
    #allocation14 [shape = 'u8[131072]{0}', space=vmem, size = 0x20000, scoped, tag = 'input window, operand 11, single buffered']
    #allocation15 [shape = 's32[1]{0}', space=sflag, size = 0x4, scoped, tag = 'scoped memory for tpu_custom_call.1']
    #allocation16 [shape = 'u8[4096]{0}', space=vmem, size = 0x1000, scoped, tag = 'output window, operand 0, single buffered']
    %18 = vsyncpa [#allocation3], 0
    %19 = vsyncpa [#allocation6], 0
    %20 = vsyncpa [#allocation9], 0
    %21 = vsyncpa [#allocation12], 0
    %22 = vsyncpa [#allocation15], 0
    %23 = vsyncpa [#allocation4], 0
    // Predicated region
    $region2: #{tpu_custom_call.1} parent=1 // pred_check
      _
    $region3: #{tpu_custom_call.1} parent=1 // pred_check_branch
      %25 = sbr.rel (0) target = $region5
    $region4: #{tpu_custom_call.1} parent=1 // pred_region
      %s27 = ssub.s32 64, 64
      %28 = vsyncadd [#allocation3], %s27
      %s30 = sshll.u32 [#allocation2], 4
      %s31 = int_to_ptr.vmem [resolvable:$true] %s30
      %33 = dma.hbm_to_vmem [thread:$0]  %s0, 64, %s31, [#allocation3]
    $region5: #{tpu_custom_call.1} parent=1 // pred_fallthru
      _
    // Predicated region
    $region6: #{tpu_custom_call.1} parent=1 // pred_check
      _
    $region7: #{tpu_custom_call.1} parent=1 // pred_check_branch
      %35 = sbr.rel (0) target = $region9
    $region8: #{tpu_custom_call.1} parent=1 // pred_region
      %s37 = ssub.s32 1024, 1024
      %38 = vsyncadd [#allocation6], %s37
      %s39 = sshll.u32 [#allocation5], 4
      %s40 = int_to_ptr.vmem [resolvable:$true] %s39
      %45 = dma.hbm_to_vmem [thread:$0]  %s1, 1024, %s40, [#allocation6], 64, 64, 4
    $region9: #{tpu_custom_call.1} parent=1 // pred_fallthru
      _
    // Predicated region
    $region10: #{tpu_custom_call.1} parent=1 // pred_check
      _
    $region11: #{tpu_custom_call.1} parent=1 // pred_check_branch
      %47 = sbr.rel (0) target = $region13
    $region12: #{tpu_custom_call.1} parent=1 // pred_region
      %s49 = ssub.s32 16, 16
      %50 = vsyncadd [#allocation6], %s49
      %s52 = sshll.u32 [#allocation7], 4
      %s53 = int_to_ptr.vmem [resolvable:$true] %s52
      %55 = dma.hbm_to_vmem [thread:$0]  %s2, 16, %s53, [#allocation6]
    $region13: #{tpu_custom_call.1} parent=1 // pred_fallthru
      _
    // Predicated region
    $region14: #{tpu_custom_call.1} parent=1 // pred_check
      _
    $region15: #{tpu_custom_call.1} parent=1 // pred_check_branch
      %57 = sbr.rel (0) target = $region17
    $region16: #{tpu_custom_call.1} parent=1 // pred_region
      %s59 = ssub.s32 2048, 2048
      %60 = vsyncadd [#allocation9], %s59
      %s61 = sshll.u32 [#allocation8], 4
      %s62 = int_to_ptr.vmem [resolvable:$true] %s61
      %67 = dma.hbm_to_vmem [thread:$0]  %s3, 2048, %s62, [#allocation9], 128, 128, 8
    $region17: #{tpu_custom_call.1} parent=1 // pred_fallthru
      _
    // Predicated region
    $region18: #{tpu_custom_call.1} parent=1 // pred_check
      _
    $region19: #{tpu_custom_call.1} parent=1 // pred_check_branch
      %69 = sbr.rel (0) target = $region21
    $region20: #{tpu_custom_call.1} parent=1 // pred_region
      _
    $region21: #{tpu_custom_call.1} parent=1 // pred_fallthru
      _
    // Predicated region
    $region22: #{tpu_custom_call.1} parent=1 // pred_check
      _
    $region23: #{tpu_custom_call.1} parent=1 // pred_check_branch
      %71 = sbr.rel (0) target = $region25
    $region24: #{tpu_custom_call.1} parent=1 // pred_region
      %s73 = ssub.s32 8192, 8192
      %74 = vsyncadd [#allocation9], %s73
      %s75 = sshll.u32 [#allocation10], 4
      %s76 = int_to_ptr.vmem [resolvable:$true] %s75
      %81 = dma.hbm_to_vmem [thread:$0]  %s5, 8192, %s76, [#allocation9], 256, 256, 16
    $region25: #{tpu_custom_call.1} parent=1 // pred_fallthru
      _
    // Predicated region
    $region26: #{tpu_custom_call.1} parent=1 // pred_check
      _
    $region27: #{tpu_custom_call.1} parent=1 // pred_check_branch
      %83 = sbr.rel (0) target = $region29
    $region28: #{tpu_custom_call.1} parent=1 // pred_region
      _
    $region29: #{tpu_custom_call.1} parent=1 // pred_fallthru
      _
    // Predicated region
    $region30: #{tpu_custom_call.1} parent=1 // pred_check
      _
    $region31: #{tpu_custom_call.1} parent=1 // pred_check_branch
      %85 = sbr.rel (0) target = $region33
    $region32: #{tpu_custom_call.1} parent=1 // pred_region
      %s87 = ssub.s32 32768, 32768
      %88 = vsyncadd [#allocation12], %s87
      %s89 = sshll.u32 [#allocation11], 4
      %s90 = int_to_ptr.vmem [resolvable:$true] %s89
      %95 = dma.hbm_to_vmem [thread:$0]  %s7, 32768, %s90, [#allocation12], 512, 512, 32
    $region33: #{tpu_custom_call.1} parent=1 // pred_fallthru
      _
    // Predicated region
    $region34: #{tpu_custom_call.1} parent=1 // pred_check
      _
    $region35: #{tpu_custom_call.1} parent=1 // pred_check_branch
      %97 = sbr.rel (0) target = $region37
    $region36: #{tpu_custom_call.1} parent=1 // pred_region
      _
    $region37: #{tpu_custom_call.1} parent=1 // pred_fallthru
      _
    // Predicated region
    $region38: #{tpu_custom_call.1} parent=1 // pred_check
      _
    $region39: #{tpu_custom_call.1} parent=1 // pred_check_branch
      %99 = sbr.rel (0) target = $region41
    $region40: #{tpu_custom_call.1} parent=1 // pred_region
      %s101 = ssub.s32 32768, 32768
      %102 = vsyncadd [#allocation12], %s101
      %s103 = sshll.u32 [#allocation13], 4
      %s104 = int_to_ptr.vmem [resolvable:$true] %s103
      %109 = dma.hbm_to_vmem [thread:$0]  %s9, 32768, %s104, [#allocation12], 256, 256, 16
    $region41: #{tpu_custom_call.1} parent=1 // pred_fallthru
      _
    // Predicated region
    $region42: #{tpu_custom_call.1} parent=1 // pred_check
      _
    $region43: #{tpu_custom_call.1} parent=1 // pred_check_branch
      %111 = sbr.rel (0) target = $region45
    $region44: #{tpu_custom_call.1} parent=1 // pred_region
      _
    $region45: #{tpu_custom_call.1} parent=1 // pred_fallthru
      _
    // Predicated region
    $region46: #{tpu_custom_call.1} parent=1 // pred_check
      _
    $region47: #{tpu_custom_call.1} parent=1 // pred_check_branch
      %113 = sbr.rel (0) target = $region49
    $region48: #{tpu_custom_call.1} parent=1 // pred_region
      %s115 = ssub.s32 4096, 4096
      %116 = vsyncadd [#allocation15], %s115
      %s117 = sshll.u32 [#allocation14], 4
      %s118 = int_to_ptr.vmem [resolvable:$true] %s117
      %123 = dma.hbm_to_vmem [thread:$0]  %s11, 4096, %s118, [#allocation15], 64, 64, 4
    $region49: #{tpu_custom_call.1} parent=1 // pred_fallthru
      _
    // Predicated region
    $region50: #{tpu_custom_call.1} parent=1 // pred_check
      _
    $region51: #{tpu_custom_call.1} parent=1 // pred_check_branch
      %125 = sbr.rel (0) target = $region53
    $region52: #{tpu_custom_call.1} parent=1 // pred_region
      _
    $region53: #{tpu_custom_call.1} parent=1 // pred_fallthru
      _
    // Predicated region
    $region54: #{tpu_custom_call.1} parent=1 // pred_check
      _
    $region55: #{tpu_custom_call.1} parent=1 // pred_check_branch
      %127 = sbr.rel (0) target = $region57
    $region56: #{tpu_custom_call.1} parent=1 // pred_region
      %128 = dma.done [#allocation3], 64
    $region57: #{tpu_custom_call.1} parent=1 // pred_fallthru
      _
    // Predicated region
    $region58: #{tpu_custom_call.1} parent=1 // pred_check
      _
    $region59: #{tpu_custom_call.1} parent=1 // pred_check_branch
      %130 = sbr.rel (0) target = $region61
    $region60: #{tpu_custom_call.1} parent=1 // pred_region
      %131 = dma.done [#allocation6], 1024
    $region61: #{tpu_custom_call.1} parent=1 // pred_fallthru
      _
    // Predicated region
    $region62: #{tpu_custom_call.1} parent=1 // pred_check
      _
    $region63: #{tpu_custom_call.1} parent=1 // pred_check_branch
      %133 = sbr.rel (0) target = $region65
    $region64: #{tpu_custom_call.1} parent=1 // pred_region
      %134 = dma.done [#allocation6], 16
    $region65: #{tpu_custom_call.1} parent=1 // pred_fallthru
      _
    // Predicated region
    $region66: #{tpu_custom_call.1} parent=1 // pred_check
      _
    $region67: #{tpu_custom_call.1} parent=1 // pred_check_branch
      %136 = sbr.rel (0) target = $region69
    $region68: #{tpu_custom_call.1} parent=1 // pred_region
      %137 = dma.done [#allocation9], 2048
    $region69: #{tpu_custom_call.1} parent=1 // pred_fallthru
      _
    // Predicated region
    $region70: #{tpu_custom_call.1} parent=1 // pred_check
      _
    $region71: #{tpu_custom_call.1} parent=1 // pred_check_branch
      %139 = sbr.rel (0) target = $region73
    $region72: #{tpu_custom_call.1} parent=1 // pred_region
      %140 = dma.done [#allocation9], 8192
    $region73: #{tpu_custom_call.1} parent=1 // pred_fallthru
      _
    // Predicated region
    $region74: #{tpu_custom_call.1} parent=1 // pred_check
      _
    $region75: #{tpu_custom_call.1} parent=1 // pred_check_branch
      %142 = sbr.rel (0) target = $region77
    $region76: #{tpu_custom_call.1} parent=1 // pred_region
      %143 = dma.done [#allocation12], 32768
    $region77: #{tpu_custom_call.1} parent=1 // pred_fallthru
      _
    // Predicated region
    $region78: #{tpu_custom_call.1} parent=1 // pred_check
      _
    $region79: #{tpu_custom_call.1} parent=1 // pred_check_branch
      %145 = sbr.rel (0) target = $region81
    $region80: #{tpu_custom_call.1} parent=1 // pred_region
      %146 = dma.done [#allocation12], 32768
    $region81: #{tpu_custom_call.1} parent=1 // pred_fallthru
      _
    // Predicated region
    $region82: #{tpu_custom_call.1} parent=1 // pred_check
      _
    $region83: #{tpu_custom_call.1} parent=1 // pred_check_branch
      %148 = sbr.rel (0) target = $region85
    $region84: #{tpu_custom_call.1} parent=1 // pred_region
      %149 = dma.done [#allocation15], 4096
    $region85: #{tpu_custom_call.1} parent=1 // pred_fallthru
      _
    %v151 = vld [vmem:[#allocation2] sm:$0xf]
    %v152 = vld [vmem:[#allocation5] sm:$0xf]
    %v153 = vld [vmem:[#allocation5 + $0x4] sm:$0xf]
    %v154 = vld [vmem:[#allocation5 + $0x8] sm:$0xf]
    %v155 = vld [vmem:[#allocation5 + $0xc] sm:$0xf]
    %v156 = vld [vmem:[#allocation5 + $0x10] sm:$0xf]
    %v157 = vld [vmem:[#allocation5 + $0x14] sm:$0xf]
    %v158 = vld [vmem:[#allocation5 + $0x18] sm:$0xf]
    %v159 = vld [vmem:[#allocation5 + $0x1c] sm:$0xf]
    %v160 = vld [vmem:[#allocation5 + $0x20] sm:$0xf]
    %v161 = vld [vmem:[#allocation5 + $0x24] sm:$0xf]
    %v162 = vld [vmem:[#allocation5 + $0x28] sm:$0xf]
    %v163 = vld [vmem:[#allocation5 + $0x2c] sm:$0xf]
    %v164 = vld [vmem:[#allocation5 + $0x30] sm:$0xf]
    %v165 = vld [vmem:[#allocation5 + $0x34] sm:$0xf]
    %v166 = vld [vmem:[#allocation5 + $0x38] sm:$0xf]
    %v167 = vld [vmem:[#allocation5 + $0x3c] sm:$0xf]
    %v168 = vld [vmem:[#allocation7] sm:$0x1]
    %v170 = vlaneseq
    %v171 = vshrl.u32 %v170, 7
    %v172 = vsub.s32 0, %v171
    %v173 = vrot.slane %v168, %v172
    %v191 = vunpack.c.l.b16 %v152
    %v192 = vunpack.c.l.b16 %v153
    %v193 = vunpack.c.l.b16 %v154
    %v194 = vunpack.c.l.b16 %v155
    %v195 = vunpack.c.l.b16 %v156
    %v196 = vunpack.c.l.b16 %v157
    %v197 = vunpack.c.l.b16 %v158
    %v198 = vunpack.c.l.b16 %v159
    %v199 = vunpack.c.l.b16 %v160
    %v200 = vunpack.c.l.b16 %v161
    %v201 = vunpack.c.l.b16 %v162
    %v202 = vunpack.c.l.b16 %v163
    %v203 = vunpack.c.l.b16 %v164
    %v204 = vunpack.c.l.b16 %v165
    %v205 = vunpack.c.l.b16 %v166
    %v206 = vunpack.c.l.b16 %v167
    %v207 = vpack.c.b16 %v192, %v191
    %v208 = vpack.c.b16 %v194, %v193
    %v209 = vpack.c.b16 %v196, %v195
    %v210 = vpack.c.b16 %v198, %v197
    %v211 = vpack.c.b16 %v200, %v199
    %v212 = vpack.c.b16 %v202, %v201
    %v213 = vpack.c.b16 %v204, %v203
    %v214 = vpack.c.b16 %v206, %v205
    %223 = vmatprep.subr.bf16.mxu0 0
    %224 = vmatpush1.bf16.msra.mxu0 %v207
    %225 = vmatprep.subr.bf16.mxu0 0
    %226 = vmatpush1.bf16.msra.mxu0 %v208
    %227 = vmatprep.subr.bf16.mxu0 0
    %228 = vmatpush1.bf16.msra.mxu0 %v209
    %229 = vmatprep.subr.bf16.mxu0 0
    %230 = vmatpush1.bf16.msra.mxu0 %v210
    %231 = vmatprep.subr.bf16.mxu0 0
    %232 = vmatpush1.bf16.msra.mxu0 %v211
    %233 = vmatprep.subr.bf16.mxu0 0
    %234 = vmatpush1.bf16.msra.mxu0 %v212
    %235 = vmatprep.subr.bf16.mxu0 0
    %236 = vmatpush1.bf16.msra.mxu0 %v213
    %237 = vmatprep.subr.bf16.mxu0 0
    %238 = vmatpush1.bf16.msra.mxu0 %v214
    %239 = vmatprep.subr.bf16.mxu0 0
    %240 = vmatpush1.bf16.msra.mxu0 0
    %241 = vmatprep.subr.bf16.mxu0 0
    %242 = vmatpush1.bf16.msra.mxu0 0
    %243 = vmatprep.subr.bf16.mxu0 0
    %244 = vmatpush1.bf16.msra.mxu0 0
    %245 = vmatprep.subr.bf16.mxu0 0
    %246 = vmatpush1.bf16.msra.mxu0 0
    %247 = vmatprep.subr.bf16.mxu0 0
    %248 = vmatpush1.bf16.msra.mxu0 0
    %249 = vmatprep.subr.bf16.mxu0 0
    %250 = vmatpush1.bf16.msra.mxu0 0
    %251 = vmatprep.subr.bf16.mxu0 0
    %252 = vmatpush1.bf16.msra.mxu0 0
    %253 = vmatprep.subr.bf16.mxu0 0
    %254 = vmatpush1.bf16.msra.mxu0 0
    %255 = vmatprep.mubr.bf16.mxu0 0
    %256 = vmatmul.mubr.bf16.gmra.mrb[0].mxu0 %v151
    %v257 = vpop.f32.mrb[0].mxu0
    %v258 = vadd.f32 %v173, %v257
    %v259 = vpop.f32.mrb[0].mxu0
    %v260 = vpop.f32.mrb[0].mxu0
    %v261 = vpop.f32.mrb[0].mxu0
    %262 = vdwg.mxu0
    %v263 = vmax.f32 %v258, 0.0
    %v264 = vpack.c.bf16 %v263, %v263
    %v265 = vld [vmem:[#allocation8] sm:$0xff]
    %v266 = vld [vmem:[#allocation8 + $0x8] sm:$0xff]
    %v267 = vld [vmem:[#allocation8 + $0x10] sm:$0xff]
    %v268 = vld [vmem:[#allocation8 + $0x18] sm:$0xff]
    %v269 = vld [vmem:[#allocation8 + $0x20] sm:$0xff]
    %v270 = vld [vmem:[#allocation8 + $0x28] sm:$0xff]
    %v271 = vld [vmem:[#allocation8 + $0x30] sm:$0xff]
    %v272 = vld [vmem:[#allocation8 + $0x38] sm:$0xff]
    %v273 = vld [vmem:[#allocation8 + $0x40] sm:$0xff]
    %v274 = vld [vmem:[#allocation8 + $0x48] sm:$0xff]
    %v275 = vld [vmem:[#allocation8 + $0x50] sm:$0xff]
    %v276 = vld [vmem:[#allocation8 + $0x58] sm:$0xff]
    %v277 = vld [vmem:[#allocation8 + $0x60] sm:$0xff]
    %v278 = vld [vmem:[#allocation8 + $0x68] sm:$0xff]
    %v279 = vld [vmem:[#allocation8 + $0x70] sm:$0xff]
    %v280 = vld [vmem:[#allocation8 + $0x78] sm:$0xff]
    %v281 = vld [vmem:[%s4] sm:$0x3]
    %v283 = vlaneseq
    %v284 = vshrl.u32 %v283, 7
    %v285 = vsub.s32 0, %v284
    %v286 = vrot.slane %v281, %v285
    %v287 = vlaneseq
    %v288 = vshrl.u32 %v287, 7
    %v289 = vsub.s32 1, %v288
    %v290 = vrot.slane %v281, %v289
    %v309 = vunpack.c.l.b16 %v265
    %v310 = vunpack.c.h.b16 %v265
    %v311 = vunpack.c.l.b16 %v266
    %v312 = vunpack.c.h.b16 %v266
    %v313 = vunpack.c.l.b16 %v267
    %v314 = vunpack.c.h.b16 %v267
    %v315 = vunpack.c.l.b16 %v268
    %v316 = vunpack.c.h.b16 %v268
    %v317 = vunpack.c.l.b16 %v269
    %v318 = vunpack.c.h.b16 %v269
    %v319 = vunpack.c.l.b16 %v270
    %v320 = vunpack.c.h.b16 %v270
    %v321 = vunpack.c.l.b16 %v271
    %v322 = vunpack.c.h.b16 %v271
    %v323 = vunpack.c.l.b16 %v272
    %v324 = vunpack.c.h.b16 %v272
    %v325 = vunpack.c.l.b16 %v273
    %v326 = vunpack.c.h.b16 %v273
    %v327 = vunpack.c.l.b16 %v274
    %v328 = vunpack.c.h.b16 %v274
    %v329 = vunpack.c.l.b16 %v275
    %v330 = vunpack.c.h.b16 %v275
    %v331 = vunpack.c.l.b16 %v276
    %v332 = vunpack.c.h.b16 %v276
    %v333 = vunpack.c.l.b16 %v277
    %v334 = vunpack.c.h.b16 %v277
    %v335 = vunpack.c.l.b16 %v278
    %v336 = vunpack.c.h.b16 %v278
    %v337 = vunpack.c.l.b16 %v279
    %v338 = vunpack.c.h.b16 %v279
    %v339 = vunpack.c.l.b16 %v280
    %v340 = vunpack.c.h.b16 %v280
    %v341 = vpack.c.b16 %v311, %v309
    %v342 = vpack.c.b16 %v312, %v310
    %v343 = vpack.c.b16 %v315, %v313
    %v344 = vpack.c.b16 %v316, %v314
    %v345 = vpack.c.b16 %v319, %v317
    %v346 = vpack.c.b16 %v320, %v318
    %v347 = vpack.c.b16 %v323, %v321
    %v348 = vpack.c.b16 %v324, %v322
    %v349 = vpack.c.b16 %v327, %v325
    %v350 = vpack.c.b16 %v328, %v326
    %v351 = vpack.c.b16 %v331, %v329
    %v352 = vpack.c.b16 %v332, %v330
    %v353 = vpack.c.b16 %v335, %v333
    %v354 = vpack.c.b16 %v336, %v334
    %v355 = vpack.c.b16 %v339, %v337
    %v356 = vpack.c.b16 %v340, %v338
    %373 = vmatprep.subr.bf16.mxu0 %v342
    %374 = vmatpush1.bf16.msra.mxu0 %v341
    %375 = vmatprep.subr.bf16.mxu0 %v344
    %376 = vmatpush1.bf16.msra.mxu0 %v343
    %377 = vmatprep.subr.bf16.mxu0 %v346
    %378 = vmatpush1.bf16.msra.mxu0 %v345
    %379 = vmatprep.subr.bf16.mxu0 %v348
    %380 = vmatpush1.bf16.msra.mxu0 %v347
    %381 = vmatprep.subr.bf16.mxu0 %v350
    %382 = vmatpush1.bf16.msra.mxu0 %v349
    %383 = vmatprep.subr.bf16.mxu0 %v352
    %384 = vmatpush1.bf16.msra.mxu0 %v351
    %385 = vmatprep.subr.bf16.mxu0 %v354
    %386 = vmatpush1.bf16.msra.mxu0 %v353
    %387 = vmatprep.subr.bf16.mxu0 %v356
    %388 = vmatpush1.bf16.msra.mxu0 %v355
    %389 = vmatprep.subr.bf16.mxu0 0
    %390 = vmatpush1.bf16.msra.mxu0 0
    %391 = vmatprep.subr.bf16.mxu0 0
    %392 = vmatpush1.bf16.msra.mxu0 0
    %393 = vmatprep.subr.bf16.mxu0 0
    %394 = vmatpush1.bf16.msra.mxu0 0
    %395 = vmatprep.subr.bf16.mxu0 0
    %396 = vmatpush1.bf16.msra.mxu0 0
    %397 = vmatprep.subr.bf16.mxu0 0
    %398 = vmatpush1.bf16.msra.mxu0 0
    %399 = vmatprep.subr.bf16.mxu0 0
    %400 = vmatpush1.bf16.msra.mxu0 0
    %401 = vmatprep.subr.bf16.mxu0 0
    %402 = vmatpush1.bf16.msra.mxu0 0
    %403 = vmatprep.subr.bf16.mxu0 0
    %404 = vmatpush1.bf16.msra.mxu0 0
    %405 = vmatprep.mubr.bf16.mxu0 0
    %406 = vmatmul.mubr.bf16.gmra.mrb[0].mxu0 %v264
    %v407 = vpop.f32.mrb[0].mxu0
    %v408 = vadd.f32 %v286, %v407
    %v409 = vpop.f32.mrb[0].mxu0
    %v410 = vadd.f32 %v290, %v409
    %v411 = vpop.f32.mrb[0].mxu0
    %v412 = vpop.f32.mrb[0].mxu0
    %413 = vdwg.mxu0
    %v414 = vmax.f32 %v408, 0.0
    %v415 = vmax.f32 %v410, 0.0
    %v416 = vpack.c.bf16 %v414, %v414
    %v417 = vpack.c.bf16 %v415, %v415
    %v418 = vld [vmem:[#allocation10] sm:$0xff]
    %v419 = vld [vmem:[#allocation10 + $0x8] sm:$0xff]
    %v420 = vld [vmem:[#allocation10 + $0x10] sm:$0xff]
    %v421 = vld [vmem:[#allocation10 + $0x18] sm:$0xff]
    %v422 = vld [vmem:[#allocation10 + $0x20] sm:$0xff]
    %v423 = vld [vmem:[#allocation10 + $0x28] sm:$0xff]
    %v424 = vld [vmem:[#allocation10 + $0x30] sm:$0xff]
    %v425 = vld [vmem:[#allocation10 + $0x38] sm:$0xff]
    %v426 = vld [vmem:[#allocation10 + $0x40] sm:$0xff]
    %v427 = vld [vmem:[#allocation10 + $0x48] sm:$0xff]
    %v428 = vld [vmem:[#allocation10 + $0x50] sm:$0xff]
    %v429 = vld [vmem:[#allocation10 + $0x58] sm:$0xff]
    %v430 = vld [vmem:[#allocation10 + $0x60] sm:$0xff]
    %v431 = vld [vmem:[#allocation10 + $0x68] sm:$0xff]
    %v432 = vld [vmem:[#allocation10 + $0x70] sm:$0xff]
    %v433 = vld [vmem:[#allocation10 + $0x78] sm:$0xff]
    %v434 = vld [vmem:[#allocation10 + $0x80] sm:$0xff]
    %v435 = vld [vmem:[#allocation10 + $0x88] sm:$0xff]
    %v436 = vld [vmem:[#allocation10 + $0x90] sm:$0xff]
    %v437 = vld [vmem:[#allocation10 + $0x98] sm:$0xff]
    %v438 = vld [vmem:[#allocation10 + $0xa0] sm:$0xff]
    %v439 = vld [vmem:[#allocation10 + $0xa8] sm:$0xff]
    %v440 = vld [vmem:[#allocation10 + $0xb0] sm:$0xff]
    %v441 = vld [vmem:[#allocation10 + $0xb8] sm:$0xff]
    %v442 = vld [vmem:[#allocation10 + $0xc0] sm:$0xff]
    %v443 = vld [vmem:[#allocation10 + $0xc8] sm:$0xff]
    %v444 = vld [vmem:[#allocation10 + $0xd0] sm:$0xff]
    %v445 = vld [vmem:[#allocation10 + $0xd8] sm:$0xff]
    %v446 = vld [vmem:[#allocation10 + $0xe0] sm:$0xff]
    %v447 = vld [vmem:[#allocation10 + $0xe8] sm:$0xff]
    %v448 = vld [vmem:[#allocation10 + $0xf0] sm:$0xff]
    %v449 = vld [vmem:[#allocation10 + $0xf8] sm:$0xff]
    %v450 = vld [vmem:[#allocation10 + $0x100] sm:$0xff]
    %v451 = vld [vmem:[#allocation10 + $0x108] sm:$0xff]
    %v452 = vld [vmem:[#allocation10 + $0x110] sm:$0xff]
    %v453 = vld [vmem:[#allocation10 + $0x118] sm:$0xff]
    %v454 = vld [vmem:[#allocation10 + $0x120] sm:$0xff]
    %v455 = vld [vmem:[#allocation10 + $0x128] sm:$0xff]
    %v456 = vld [vmem:[#allocation10 + $0x130] sm:$0xff]
    %v457 = vld [vmem:[#allocation10 + $0x138] sm:$0xff]
    %v458 = vld [vmem:[#allocation10 + $0x140] sm:$0xff]
    %v459 = vld [vmem:[#allocation10 + $0x148] sm:$0xff]
    %v460 = vld [vmem:[#allocation10 + $0x150] sm:$0xff]
    %v461 = vld [vmem:[#allocation10 + $0x158] sm:$0xff]
    %v462 = vld [vmem:[#allocation10 + $0x160] sm:$0xff]
    %v463 = vld [vmem:[#allocation10 + $0x168] sm:$0xff]
    %v464 = vld [vmem:[#allocation10 + $0x170] sm:$0xff]
    %v465 = vld [vmem:[#allocation10 + $0x178] sm:$0xff]
    %v466 = vld [vmem:[#allocation10 + $0x180] sm:$0xff]
    %v467 = vld [vmem:[#allocation10 + $0x188] sm:$0xff]
    %v468 = vld [vmem:[#allocation10 + $0x190] sm:$0xff]
    %v469 = vld [vmem:[#allocation10 + $0x198] sm:$0xff]
    %v470 = vld [vmem:[#allocation10 + $0x1a0] sm:$0xff]
    %v471 = vld [vmem:[#allocation10 + $0x1a8] sm:$0xff]
    %v472 = vld [vmem:[#allocation10 + $0x1b0] sm:$0xff]
    %v473 = vld [vmem:[#allocation10 + $0x1b8] sm:$0xff]
    %v474 = vld [vmem:[#allocation10 + $0x1c0] sm:$0xff]
    %v475 = vld [vmem:[#allocation10 + $0x1c8] sm:$0xff]
    %v476 = vld [vmem:[#allocation10 + $0x1d0] sm:$0xff]
    %v477 = vld [vmem:[#allocation10 + $0x1d8] sm:$0xff]
    %v478 = vld [vmem:[#allocation10 + $0x1e0] sm:$0xff]
    %v479 = vld [vmem:[#allocation10 + $0x1e8] sm:$0xff]
    %v480 = vld [vmem:[#allocation10 + $0x1f0] sm:$0xff]
    %v481 = vld [vmem:[#allocation10 + $0x1f8] sm:$0xff]
    %v482 = vld [vmem:[%s6] sm:$0xf]
    %v484 = vlaneseq
    %v485 = vshrl.u32 %v484, 7
    %v486 = vsub.s32 0, %v485
    %v487 = vrot.slane %v482, %v486
    %v488 = vlaneseq
    %v489 = vshrl.u32 %v488, 7
    %v490 = vsub.s32 1, %v489
    %v491 = vrot.slane %v482, %v490
    %v492 = vlaneseq
    %v493 = vshrl.u32 %v492, 7
    %v494 = vsub.s32 2, %v493
    %v495 = vrot.slane %v482, %v494
    %v496 = vlaneseq
    %v497 = vshrl.u32 %v496, 7
    %v498 = vsub.s32 3, %v497
    %v499 = vrot.slane %v482, %v498
    %v568 = vunpack.c.l.b16 %v418
    %v569 = vunpack.c.h.b16 %v418
    %v570 = vunpack.c.l.b16 %v419
    %v571 = vunpack.c.h.b16 %v419
    %v572 = vunpack.c.l.b16 %v420
    %v573 = vunpack.c.h.b16 %v420
    %v574 = vunpack.c.l.b16 %v421
    %v575 = vunpack.c.h.b16 %v421
    %v576 = vunpack.c.l.b16 %v422
    %v577 = vunpack.c.h.b16 %v422
    %v578 = vunpack.c.l.b16 %v423
    %v579 = vunpack.c.h.b16 %v423
    %v580 = vunpack.c.l.b16 %v424
    %v581 = vunpack.c.h.b16 %v424
    %v582 = vunpack.c.l.b16 %v425
    %v583 = vunpack.c.h.b16 %v425
    %v584 = vunpack.c.l.b16 %v426
    %v585 = vunpack.c.h.b16 %v426
    %v586 = vunpack.c.l.b16 %v427
    %v587 = vunpack.c.h.b16 %v427
    %v588 = vunpack.c.l.b16 %v428
    %v589 = vunpack.c.h.b16 %v428
    %v590 = vunpack.c.l.b16 %v429
    %v591 = vunpack.c.h.b16 %v429
    %v592 = vunpack.c.l.b16 %v430
    %v593 = vunpack.c.h.b16 %v430
    %v594 = vunpack.c.l.b16 %v431
    %v595 = vunpack.c.h.b16 %v431
    %v596 = vunpack.c.l.b16 %v432
    %v597 = vunpack.c.h.b16 %v432
    %v598 = vunpack.c.l.b16 %v433
    %v599 = vunpack.c.h.b16 %v433
    %v600 = vunpack.c.l.b16 %v434
    %v601 = vunpack.c.h.b16 %v434
    %v602 = vunpack.c.l.b16 %v435
    %v603 = vunpack.c.h.b16 %v435
    %v604 = vunpack.c.l.b16 %v436
    %v605 = vunpack.c.h.b16 %v436
    %v606 = vunpack.c.l.b16 %v437
    %v607 = vunpack.c.h.b16 %v437
    %v608 = vunpack.c.l.b16 %v438
    %v609 = vunpack.c.h.b16 %v438
    %v610 = vunpack.c.l.b16 %v439
    %v611 = vunpack.c.h.b16 %v439
    %v612 = vunpack.c.l.b16 %v440
    %v613 = vunpack.c.h.b16 %v440
    %v614 = vunpack.c.l.b16 %v441
    %v615 = vunpack.c.h.b16 %v441
    %v616 = vunpack.c.l.b16 %v442
    %v617 = vunpack.c.h.b16 %v442
    %v618 = vunpack.c.l.b16 %v443
    %v619 = vunpack.c.h.b16 %v443
    %v620 = vunpack.c.l.b16 %v444
    %v621 = vunpack.c.h.b16 %v444
    %v622 = vunpack.c.l.b16 %v445
    %v623 = vunpack.c.h.b16 %v445
    %v624 = vunpack.c.l.b16 %v446
    %v625 = vunpack.c.h.b16 %v446
    %v626 = vunpack.c.l.b16 %v447
    %v627 = vunpack.c.h.b16 %v447
    %v628 = vunpack.c.l.b16 %v448
    %v629 = vunpack.c.h.b16 %v448
    %v630 = vunpack.c.l.b16 %v449
    %v631 = vunpack.c.h.b16 %v449
    %v632 = vunpack.c.l.b16 %v450
    %v633 = vunpack.c.h.b16 %v450
    %v634 = vunpack.c.l.b16 %v451
    %v635 = vunpack.c.h.b16 %v451
    %v636 = vunpack.c.l.b16 %v452
    %v637 = vunpack.c.h.b16 %v452
    %v638 = vunpack.c.l.b16 %v453
    %v639 = vunpack.c.h.b16 %v453
    %v640 = vunpack.c.l.b16 %v454
    %v641 = vunpack.c.h.b16 %v454
    %v642 = vunpack.c.l.b16 %v455
    %v643 = vunpack.c.h.b16 %v455
    %v644 = vunpack.c.l.b16 %v456
    %v645 = vunpack.c.h.b16 %v456
    %v646 = vunpack.c.l.b16 %v457
    %v647 = vunpack.c.h.b16 %v457
    %v648 = vunpack.c.l.b16 %v458
    %v649 = vunpack.c.h.b16 %v458
    %v650 = vunpack.c.l.b16 %v459
    %v651 = vunpack.c.h.b16 %v459
    %v652 = vunpack.c.l.b16 %v460
    %v653 = vunpack.c.h.b16 %v460
    %v654 = vunpack.c.l.b16 %v461
    %v655 = vunpack.c.h.b16 %v461
    %v656 = vunpack.c.l.b16 %v462
    %v657 = vunpack.c.h.b16 %v462
    %v658 = vunpack.c.l.b16 %v463
    %v659 = vunpack.c.h.b16 %v463
    %v660 = vunpack.c.l.b16 %v464
    %v661 = vunpack.c.h.b16 %v464
    %v662 = vunpack.c.l.b16 %v465
    %v663 = vunpack.c.h.b16 %v465
    %v664 = vunpack.c.l.b16 %v466
    %v665 = vunpack.c.h.b16 %v466
    %v666 = vunpack.c.l.b16 %v467
    %v667 = vunpack.c.h.b16 %v467
    %v668 = vunpack.c.l.b16 %v468
    %v669 = vunpack.c.h.b16 %v468
    %v670 = vunpack.c.l.b16 %v469
    %v671 = vunpack.c.h.b16 %v469
    %v672 = vunpack.c.l.b16 %v470
    %v673 = vunpack.c.h.b16 %v470
    %v674 = vunpack.c.l.b16 %v471
    %v675 = vunpack.c.h.b16 %v471
    %v676 = vunpack.c.l.b16 %v472
    %v677 = vunpack.c.h.b16 %v472
    %v678 = vunpack.c.l.b16 %v473
    %v679 = vunpack.c.h.b16 %v473
    %v680 = vunpack.c.l.b16 %v474
    %v681 = vunpack.c.h.b16 %v474
    %v682 = vunpack.c.l.b16 %v475
    %v683 = vunpack.c.h.b16 %v475
    %v684 = vunpack.c.l.b16 %v476
    %v685 = vunpack.c.h.b16 %v476
    %v686 = vunpack.c.l.b16 %v477
    %v687 = vunpack.c.h.b16 %v477
    %v688 = vunpack.c.l.b16 %v478
    %v689 = vunpack.c.h.b16 %v478
    %v690 = vunpack.c.l.b16 %v479
    %v691 = vunpack.c.h.b16 %v479
    %v692 = vunpack.c.l.b16 %v480
    %v693 = vunpack.c.h.b16 %v480
    %v694 = vunpack.c.l.b16 %v481
    %v695 = vunpack.c.h.b16 %v481
    %v696 = vpack.c.b16 %v572, %v568
    %v697 = vpack.c.b16 %v573, %v569
    %v698 = vpack.c.b16 %v574, %v570
    %v699 = vpack.c.b16 %v575, %v571
    %v700 = vpack.c.b16 %v580, %v576
    %v701 = vpack.c.b16 %v581, %v577
    %v702 = vpack.c.b16 %v582, %v578
    %v703 = vpack.c.b16 %v583, %v579
    %v704 = vpack.c.b16 %v588, %v584
    %v705 = vpack.c.b16 %v589, %v585
    %v706 = vpack.c.b16 %v590, %v586
    %v707 = vpack.c.b16 %v591, %v587
    %v708 = vpack.c.b16 %v596, %v592
    %v709 = vpack.c.b16 %v597, %v593
    %v710 = vpack.c.b16 %v598, %v594
    %v711 = vpack.c.b16 %v599, %v595
    %v712 = vpack.c.b16 %v604, %v600
    %v713 = vpack.c.b16 %v605, %v601
    %v714 = vpack.c.b16 %v606, %v602
    %v715 = vpack.c.b16 %v607, %v603
    %v716 = vpack.c.b16 %v612, %v608
    %v717 = vpack.c.b16 %v613, %v609
    %v718 = vpack.c.b16 %v614, %v610
    %v719 = vpack.c.b16 %v615, %v611
    %v720 = vpack.c.b16 %v620, %v616
    %v721 = vpack.c.b16 %v621, %v617
    %v722 = vpack.c.b16 %v622, %v618
    %v723 = vpack.c.b16 %v623, %v619
    %v724 = vpack.c.b16 %v628, %v624
    %v725 = vpack.c.b16 %v629, %v625
    %v726 = vpack.c.b16 %v630, %v626
    %v727 = vpack.c.b16 %v631, %v627
    %v728 = vpack.c.b16 %v636, %v632
    %v729 = vpack.c.b16 %v637, %v633
    %v730 = vpack.c.b16 %v638, %v634
    %v731 = vpack.c.b16 %v639, %v635
    %v732 = vpack.c.b16 %v644, %v640
    %v733 = vpack.c.b16 %v645, %v641
    %v734 = vpack.c.b16 %v646, %v642
    %v735 = vpack.c.b16 %v647, %v643
    %v736 = vpack.c.b16 %v652, %v648
    %v737 = vpack.c.b16 %v653, %v649
    %v738 = vpack.c.b16 %v654, %v650
    %v739 = vpack.c.b16 %v655, %v651
    %v740 = vpack.c.b16 %v660, %v656
    %v741 = vpack.c.b16 %v661, %v657
    %v742 = vpack.c.b16 %v662, %v658
    %v743 = vpack.c.b16 %v663, %v659
    %v744 = vpack.c.b16 %v668, %v664
    %v745 = vpack.c.b16 %v669, %v665
    %v746 = vpack.c.b16 %v670, %v666
    %v747 = vpack.c.b16 %v671, %v667
    %v748 = vpack.c.b16 %v676, %v672
    %v749 = vpack.c.b16 %v677, %v673
    %v750 = vpack.c.b16 %v678, %v674
    %v751 = vpack.c.b16 %v679, %v675
    %v752 = vpack.c.b16 %v684, %v680
    %v753 = vpack.c.b16 %v685, %v681
    %v754 = vpack.c.b16 %v686, %v682
    %v755 = vpack.c.b16 %v687, %v683
    %v756 = vpack.c.b16 %v692, %v688
    %v757 = vpack.c.b16 %v693, %v689
    %v758 = vpack.c.b16 %v694, %v690
    %v759 = vpack.c.b16 %v695, %v691
    %824 = vmatprep.subr.bf16.mxu0 %v697
    %825 = vmatpush1.bf16.msra.mxu0 %v696
    %826 = vmatprep.subr.bf16.mxu0 %v701
    %827 = vmatpush1.bf16.msra.mxu0 %v700
    %828 = vmatprep.subr.bf16.mxu0 %v705
    %829 = vmatpush1.bf16.msra.mxu0 %v704
    %830 = vmatprep.subr.bf16.mxu0 %v709
    %831 = vmatpush1.bf16.msra.mxu0 %v708
    %832 = vmatprep.subr.bf16.mxu0 %v713
    %833 = vmatpush1.bf16.msra.mxu0 %v712
    %834 = vmatprep.subr.bf16.mxu0 %v717
    %835 = vmatpush1.bf16.msra.mxu0 %v716
    %836 = vmatprep.subr.bf16.mxu0 %v721
    %837 = vmatpush1.bf16.msra.mxu0 %v720
    %838 = vmatprep.subr.bf16.mxu0 %v725
    %839 = vmatpush1.bf16.msra.mxu0 %v724
    %840 = vmatprep.subr.bf16.mxu0 %v729
    %841 = vmatpush1.bf16.msra.mxu0 %v728
    %842 = vmatprep.subr.bf16.mxu0 %v733
    %843 = vmatpush1.bf16.msra.mxu0 %v732
    %844 = vmatprep.subr.bf16.mxu0 %v737
    %845 = vmatpush1.bf16.msra.mxu0 %v736
    %846 = vmatprep.subr.bf16.mxu0 %v741
    %847 = vmatpush1.bf16.msra.mxu0 %v740
    %848 = vmatprep.subr.bf16.mxu0 %v745
    %849 = vmatpush1.bf16.msra.mxu0 %v744
    %850 = vmatprep.subr.bf16.mxu0 %v749
    %851 = vmatpush1.bf16.msra.mxu0 %v748
    %852 = vmatprep.subr.bf16.mxu0 %v753
    %853 = vmatpush1.bf16.msra.mxu0 %v752
    %854 = vmatprep.subr.bf16.mxu0 %v757
    %855 = vmatpush1.bf16.msra.mxu0 %v756
    %856 = vmatprep.mubr.bf16.mxu0 %v417
    %857 = vmatmul.mubr.bf16.gmra.mrb[0].mxu0 %v416
    %v858 = vpop.f32.mrb[0].mxu0
    %v859 = vadd.f32 %v487, %v858
    %v860 = vpop.f32.mrb[0].mxu0
    %v861 = vadd.f32 %v491, %v860
    %v862 = vpop.f32.mrb[0].mxu0
    %v863 = vpop.f32.mrb[0].mxu0
    %864 = vdwg.mxu0
    %865 = vmatprep.subr.bf16.mxu0 %v699
    %866 = vmatpush1.bf16.msra.mxu0 %v698
    %867 = vmatprep.subr.bf16.mxu0 %v703
    %868 = vmatpush1.bf16.msra.mxu0 %v702
    %869 = vmatprep.subr.bf16.mxu0 %v707
    %870 = vmatpush1.bf16.msra.mxu0 %v706
    %871 = vmatprep.subr.bf16.mxu0 %v711
    %872 = vmatpush1.bf16.msra.mxu0 %v710
    %873 = vmatprep.subr.bf16.mxu0 %v715
    %874 = vmatpush1.bf16.msra.mxu0 %v714
    %875 = vmatprep.subr.bf16.mxu0 %v719
    %876 = vmatpush1.bf16.msra.mxu0 %v718
    %877 = vmatprep.subr.bf16.mxu0 %v723
    %878 = vmatpush1.bf16.msra.mxu0 %v722
    %879 = vmatprep.subr.bf16.mxu0 %v727
    %880 = vmatpush1.bf16.msra.mxu0 %v726
    %881 = vmatprep.subr.bf16.mxu0 %v731
    %882 = vmatpush1.bf16.msra.mxu0 %v730
    %883 = vmatprep.subr.bf16.mxu0 %v735
    %884 = vmatpush1.bf16.msra.mxu0 %v734
    %885 = vmatprep.subr.bf16.mxu0 %v739
    %886 = vmatpush1.bf16.msra.mxu0 %v738
    %887 = vmatprep.subr.bf16.mxu0 %v743
    %888 = vmatpush1.bf16.msra.mxu0 %v742
    %889 = vmatprep.subr.bf16.mxu0 %v747
    %890 = vmatpush1.bf16.msra.mxu0 %v746
    %891 = vmatprep.subr.bf16.mxu0 %v751
    %892 = vmatpush1.bf16.msra.mxu0 %v750
    %893 = vmatprep.subr.bf16.mxu0 %v755
    %894 = vmatpush1.bf16.msra.mxu0 %v754
    %895 = vmatprep.subr.bf16.mxu0 %v759
    %896 = vmatpush1.bf16.msra.mxu0 %v758
    %897 = vmatprep.mubr.bf16.mxu0 %v417
    %898 = vmatmul.mubr.bf16.gmra.mrb[0].mxu0 %v416
    %v899 = vpop.f32.mrb[0].mxu0
    %v900 = vadd.f32 %v495, %v899
    %v901 = vpop.f32.mrb[0].mxu0
    %v902 = vadd.f32 %v499, %v901
    %v903 = vpop.f32.mrb[0].mxu0
    %v904 = vpop.f32.mrb[0].mxu0
    %905 = vdwg.mxu0
    %v906 = vmax.f32 %v859, 0.0
    %v907 = vmax.f32 %v861, 0.0
    %v908 = vmax.f32 %v900, 0.0
    %v909 = vmax.f32 %v902, 0.0
    %v910 = vpack.c.bf16 %v906, %v906
    %v911 = vpack.c.bf16 %v907, %v907
    %v912 = vpack.c.bf16 %v908, %v908
    %v913 = vpack.c.bf16 %v909, %v909
    %v914 = vld [vmem:[#allocation11] sm:$0xff]
    %v915 = vld [vmem:[#allocation11 + $0x8] sm:$0xff]
    %v916 = vld [vmem:[#allocation11 + $0x10] sm:$0xff]
    %v917 = vld [vmem:[#allocation11 + $0x18] sm:$0xff]
    %v918 = vld [vmem:[#allocation11 + $0x20] sm:$0xff]
    %v919 = vld [vmem:[#allocation11 + $0x28] sm:$0xff]
    %v920 = vld [vmem:[#allocation11 + $0x30] sm:$0xff]
    %v921 = vld [vmem:[#allocation11 + $0x38] sm:$0xff]
    %v922 = vld [vmem:[#allocation11 + $0x40] sm:$0xff]
    %v923 = vld [vmem:[#allocation11 + $0x48] sm:$0xff]
    %v924 = vld [vmem:[#allocation11 + $0x50] sm:$0xff]
    %v925 = vld [vmem:[#allocation11 + $0x58] sm:$0xff]
    %v926 = vld [vmem:[#allocation11 + $0x60] sm:$0xff]
    %v927 = vld [vmem:[#allocation11 + $0x68] sm:$0xff]
    %v928 = vld [vmem:[#allocation11 + $0x70] sm:$0xff]
    %v929 = vld [vmem:[#allocation11 + $0x78] sm:$0xff]
    %v930 = vld [vmem:[#allocation11 + $0x80] sm:$0xff]
    %v931 = vld [vmem:[#allocation11 + $0x88] sm:$0xff]
    %v932 = vld [vmem:[#allocation11 + $0x90] sm:$0xff]
    %v933 = vld [vmem:[#allocation11 + $0x98] sm:$0xff]
    %v934 = vld [vmem:[#allocation11 + $0xa0] sm:$0xff]
    %v935 = vld [vmem:[#allocation11 + $0xa8] sm:$0xff]
    %v936 = vld [vmem:[#allocation11 + $0xb0] sm:$0xff]
    %v937 = vld [vmem:[#allocation11 + $0xb8] sm:$0xff]
    %v938 = vld [vmem:[#allocation11 + $0xc0] sm:$0xff]
    %v939 = vld [vmem:[#allocation11 + $0xc8] sm:$0xff]
    %v940 = vld [vmem:[#allocation11 + $0xd0] sm:$0xff]
    %v941 = vld [vmem:[#allocation11 + $0xd8] sm:$0xff]
    %v942 = vld [vmem:[#allocation11 + $0xe0] sm:$0xff]
    %v943 = vld [vmem:[#allocation11 + $0xe8] sm:$0xff]
    %v944 = vld [vmem:[#allocation11 + $0xf0] sm:$0xff]
    %v945 = vld [vmem:[#allocation11 + $0xf8] sm:$0xff]
    %v946 = vld [vmem:[#allocation11 + $0x100] sm:$0xff]
    %v947 = vld [vmem:[#allocation11 + $0x108] sm:$0xff]
    %v948 = vld [vmem:[#allocation11 + $0x110] sm:$0xff]
    %v949 = vld [vmem:[#allocation11 + $0x118] sm:$0xff]
    %v950 = vld [vmem:[#allocation11 + $0x120] sm:$0xff]
    %v951 = vld [vmem:[#allocation11 + $0x128] sm:$0xff]
    %v952 = vld [vmem:[#allocation11 + $0x130] sm:$0xff]
    %v953 = vld [vmem:[#allocation11 + $0x138] sm:$0xff]
    %v954 = vld [vmem:[#allocation11 + $0x140] sm:$0xff]
    %v955 = vld [vmem:[#allocation11 + $0x148] sm:$0xff]
    %v956 = vld [vmem:[#allocation11 + $0x150] sm:$0xff]
    %v957 = vld [vmem:[#allocation11 + $0x158] sm:$0xff]
    %v958 = vld [vmem:[#allocation11 + $0x160] sm:$0xff]
    %v959 = vld [vmem:[#allocation11 + $0x168] sm:$0xff]
    %v960 = vld [vmem:[#allocation11 + $0x170] sm:$0xff]
    %v961 = vld [vmem:[#allocation11 + $0x178] sm:$0xff]
    %v962 = vld [vmem:[#allocation11 + $0x180] sm:$0xff]
    %v963 = vld [vmem:[#allocation11 + $0x188] sm:$0xff]
    %v964 = vld [vmem:[#allocation11 + $0x190] sm:$0xff]
    %v965 = vld [vmem:[#allocation11 + $0x198] sm:$0xff]
    %v966 = vld [vmem:[#allocation11 + $0x1a0] sm:$0xff]
    %v967 = vld [vmem:[#allocation11 + $0x1a8] sm:$0xff]
    %v968 = vld [vmem:[#allocation11 + $0x1b0] sm:$0xff]
    %v969 = vld [vmem:[#allocation11 + $0x1b8] sm:$0xff]
    %v970 = vld [vmem:[#allocation11 + $0x1c0] sm:$0xff]
    %v971 = vld [vmem:[#allocation11 + $0x1c8] sm:$0xff]
    %v972 = vld [vmem:[#allocation11 + $0x1d0] sm:$0xff]
    %v973 = vld [vmem:[#allocation11 + $0x1d8] sm:$0xff]
    %v974 = vld [vmem:[#allocation11 + $0x1e0] sm:$0xff]
    %v975 = vld [vmem:[#allocation11 + $0x1e8] sm:$0xff]
    %v976 = vld [vmem:[#allocation11 + $0x1f0] sm:$0xff]
    %v977 = vld [vmem:[#allocation11 + $0x1f8] sm:$0xff]
    %v978 = vld [vmem:[#allocation11 + $0x200] sm:$0xff]
    %v979 = vld [vmem:[#allocation11 + $0x208] sm:$0xff]
    %v980 = vld [vmem:[#allocation11 + $0x210] sm:$0xff]
    %v981 = vld [vmem:[#allocation11 + $0x218] sm:$0xff]
    %v982 = vld [vmem:[#allocation11 + $0x220] sm:$0xff]
    %v983 = vld [vmem:[#allocation11 + $0x228] sm:$0xff]
    %v984 = vld [vmem:[#allocation11 + $0x230] sm:$0xff]
    %v985 = vld [vmem:[#allocation11 + $0x238] sm:$0xff]
    %v986 = vld [vmem:[#allocation11 + $0x240] sm:$0xff]
    %v987 = vld [vmem:[#allocation11 + $0x248] sm:$0xff]
    %v988 = vld [vmem:[#allocation11 + $0x250] sm:$0xff]
    %v989 = vld [vmem:[#allocation11 + $0x258] sm:$0xff]
    %v990 = vld [vmem:[#allocation11 + $0x260] sm:$0xff]
    %v991 = vld [vmem:[#allocation11 + $0x268] sm:$0xff]
    %v992 = vld [vmem:[#allocation11 + $0x270] sm:$0xff]
    %v993 = vld [vmem:[#allocation11 + $0x278] sm:$0xff]
    %v994 = vld [vmem:[#allocation11 + $0x280] sm:$0xff]
    %v995 = vld [vmem:[#allocation11 + $0x288] sm:$0xff]
    %v996 = vld [vmem:[#allocation11 + $0x290] sm:$0xff]
    %v997 = vld [vmem:[#allocation11 + $0x298] sm:$0xff]
    %v998 = vld [vmem:[#allocation11 + $0x2a0] sm:$0xff]
    %v999 = vld [vmem:[#allocation11 + $0x2a8] sm:$0xff]
    %v1000 = vld [vmem:[#allocation11 + $0x2b0] sm:$0xff]
    %v1001 = vld [vmem:[#allocation11 + $0x2b8] sm:$0xff]
    %v1002 = vld [vmem:[#allocation11 + $0x2c0] sm:$0xff]
    %v1003 = vld [vmem:[#allocation11 + $0x2c8] sm:$0xff]
    %v1004 = vld [vmem:[#allocation11 + $0x2d0] sm:$0xff]
    %v1005 = vld [vmem:[#allocation11 + $0x2d8] sm:$0xff]
    %v1006 = vld [vmem:[#allocation11 + $0x2e0] sm:$0xff]
    %v1007 = vld [vmem:[#allocation11 + $0x2e8] sm:$0xff]
    %v1008 = vld [vmem:[#allocation11 + $0x2f0] sm:$0xff]
    %v1009 = vld [vmem:[#allocation11 + $0x2f8] sm:$0xff]
    %v1010 = vld [vmem:[#allocation11 + $0x300] sm:$0xff]
    %v1011 = vld [vmem:[#allocation11 + $0x308] sm:$0xff]
    %v1012 = vld [vmem:[#allocation11 + $0x310] sm:$0xff]
    %v1013 = vld [vmem:[#allocation11 + $0x318] sm:$0xff]
    %v1014 = vld [vmem:[#allocation11 + $0x320] sm:$0xff]
    %v1015 = vld [vmem:[#allocation11 + $0x328] sm:$0xff]
    %v1016 = vld [vmem:[#allocation11 + $0x330] sm:$0xff]
    %v1017 = vld [vmem:[#allocation11 + $0x338] sm:$0xff]
    %v1018 = vld [vmem:[#allocation11 + $0x340] sm:$0xff]
    %v1019 = vld [vmem:[#allocation11 + $0x348] sm:$0xff]
    %v1020 = vld [vmem:[#allocation11 + $0x350] sm:$0xff]
    %v1021 = vld [vmem:[#allocation11 + $0x358] sm:$0xff]
    %v1022 = vld [vmem:[#allocation11 + $0x360] sm:$0xff]
    %v1023 = vld [vmem:[#allocation11 + $0x368] sm:$0xff]
    %v1024 = vld [vmem:[#allocation11 + $0x370] sm:$0xff]
    %v1025 = vld [vmem:[#allocation11 + $0x378] sm:$0xff]
    %v1026 = vld [vmem:[#allocation11 + $0x380] sm:$0xff]
    %v1027 = vld [vmem:[#allocation11 + $0x388] sm:$0xff]
    %v1028 = vld [vmem:[#allocation11 + $0x390] sm:$0xff]
    %v1029 = vld [vmem:[#allocation11 + $0x398] sm:$0xff]
    %v1030 = vld [vmem:[#allocation11 + $0x3a0] sm:$0xff]
    %v1031 = vld [vmem:[#allocation11 + $0x3a8] sm:$0xff]
    %v1032 = vld [vmem:[#allocation11 + $0x3b0] sm:$0xff]
    %v1033 = vld [vmem:[#allocation11 + $0x3b8] sm:$0xff]
    %v1034 = vld [vmem:[#allocation11 + $0x3c0] sm:$0xff]
    %v1035 = vld [vmem:[#allocation11 + $0x3c8] sm:$0xff]
    %v1036 = vld [vmem:[#allocation11 + $0x3d0] sm:$0xff]
    %v1037 = vld [vmem:[#allocation11 + $0x3d8] sm:$0xff]
    %v1038 = vld [vmem:[#allocation11 + $0x3e0] sm:$0xff]
    %v1039 = vld [vmem:[#allocation11 + $0x3e8] sm:$0xff]
    %v1040 = vld [vmem:[#allocation11 + $0x3f0] sm:$0xff]
    %v1041 = vld [vmem:[#allocation11 + $0x3f8] sm:$0xff]
    %v1042 = vld [vmem:[#allocation11 + $0x400] sm:$0xff]
    %v1043 = vld [vmem:[#allocation11 + $0x408] sm:$0xff]
    %v1044 = vld [vmem:[#allocation11 + $0x410] sm:$0xff]
    %v1045 = vld [vmem:[#allocation11 + $0x418] sm:$0xff]
    %v1046 = vld [vmem:[#allocation11 + $0x420] sm:$0xff]
    %v1047 = vld [vmem:[#allocation11 + $0x428] sm:$0xff]
    %v1048 = vld [vmem:[#allocation11 + $0x430] sm:$0xff]
    %v1049 = vld [vmem:[#allocation11 + $0x438] sm:$0xff]
    %v1050 = vld [vmem:[#allocation11 + $0x440] sm:$0xff]
    %v1051 = vld [vmem:[#allocation11 + $0x448] sm:$0xff]
    %v1052 = vld [vmem:[#allocation11 + $0x450] sm:$0xff]
    %v1053 = vld [vmem:[#allocation11 + $0x458] sm:$0xff]
    %v1054 = vld [vmem:[#allocation11 + $0x460] sm:$0xff]
    %v1055 = vld [vmem:[#allocation11 + $0x468] sm:$0xff]
    %v1056 = vld [vmem:[#allocation11 + $0x470] sm:$0xff]
    %v1057 = vld [vmem:[#allocation11 + $0x478] sm:$0xff]
    %v1058 = vld [vmem:[#allocation11 + $0x480] sm:$0xff]
    %v1059 = vld [vmem:[#allocation11 + $0x488] sm:$0xff]
    %v1060 = vld [vmem:[#allocation11 + $0x490] sm:$0xff]
    %v1061 = vld [vmem:[#allocation11 + $0x498] sm:$0xff]
    %v1062 = vld [vmem:[#allocation11 + $0x4a0] sm:$0xff]
    %v1063 = vld [vmem:[#allocation11 + $0x4a8] sm:$0xff]
    %v1064 = vld [vmem:[#allocation11 + $0x4b0] sm:$0xff]
    %v1065 = vld [vmem:[#allocation11 + $0x4b8] sm:$0xff]
    %v1066 = vld [vmem:[#allocation11 + $0x4c0] sm:$0xff]
    %v1067 = vld [vmem:[#allocation11 + $0x4c8] sm:$0xff]
    %v1068 = vld [vmem:[#allocation11 + $0x4d0] sm:$0xff]
    %v1069 = vld [vmem:[#allocation11 + $0x4d8] sm:$0xff]
    %v1070 = vld [vmem:[#allocation11 + $0x4e0] sm:$0xff]
    %v1071 = vld [vmem:[#allocation11 + $0x4e8] sm:$0xff]
    %v1072 = vld [vmem:[#allocation11 + $0x4f0] sm:$0xff]
    %v1073 = vld [vmem:[#allocation11 + $0x4f8] sm:$0xff]
    %v1074 = vld [vmem:[#allocation11 + $0x500] sm:$0xff]
    %v1075 = vld [vmem:[#allocation11 + $0x508] sm:$0xff]
    %v1076 = vld [vmem:[#allocation11 + $0x510] sm:$0xff]
    %v1077 = vld [vmem:[#allocation11 + $0x518] sm:$0xff]
    %v1078 = vld [vmem:[#allocation11 + $0x520] sm:$0xff]
    %v1079 = vld [vmem:[#allocation11 + $0x528] sm:$0xff]
    %v1080 = vld [vmem:[#allocation11 + $0x530] sm:$0xff]
    %v1081 = vld [vmem:[#allocation11 + $0x538] sm:$0xff]
    %v1082 = vld [vmem:[#allocation11 + $0x540] sm:$0xff]
    %v1083 = vld [vmem:[#allocation11 + $0x548] sm:$0xff]
    %v1084 = vld [vmem:[#allocation11 + $0x550] sm:$0xff]
    %v1085 = vld [vmem:[#allocation11 + $0x558] sm:$0xff]
    %v1086 = vld [vmem:[#allocation11 + $0x560] sm:$0xff]
    %v1087 = vld [vmem:[#allocation11 + $0x568] sm:$0xff]
    %v1088 = vld [vmem:[#allocation11 + $0x570] sm:$0xff]
    %v1089 = vld [vmem:[#allocation11 + $0x578] sm:$0xff]
    %v1090 = vld [vmem:[#allocation11 + $0x580] sm:$0xff]
    %v1091 = vld [vmem:[#allocation11 + $0x588] sm:$0xff]
    %v1092 = vld [vmem:[#allocation11 + $0x590] sm:$0xff]
    %v1093 = vld [vmem:[#allocation11 + $0x598] sm:$0xff]
    %v1094 = vld [vmem:[#allocation11 + $0x5a0] sm:$0xff]
    %v1095 = vld [vmem:[#allocation11 + $0x5a8] sm:$0xff]
    %v1096 = vld [vmem:[#allocation11 + $0x5b0] sm:$0xff]
    %v1097 = vld [vmem:[#allocation11 + $0x5b8] sm:$0xff]
    %v1098 = vld [vmem:[#allocation11 + $0x5c0] sm:$0xff]
    %v1099 = vld [vmem:[#allocation11 + $0x5c8] sm:$0xff]
    %v1100 = vld [vmem:[#allocation11 + $0x5d0] sm:$0xff]
    %v1101 = vld [vmem:[#allocation11 + $0x5d8] sm:$0xff]
    %v1102 = vld [vmem:[#allocation11 + $0x5e0] sm:$0xff]
    %v1103 = vld [vmem:[#allocation11 + $0x5e8] sm:$0xff]
    %v1104 = vld [vmem:[#allocation11 + $0x5f0] sm:$0xff]
    %v1105 = vld [vmem:[#allocation11 + $0x5f8] sm:$0xff]
    %v1106 = vld [vmem:[#allocation11 + $0x600] sm:$0xff]
    %v1107 = vld [vmem:[#allocation11 + $0x608] sm:$0xff]
    %v1108 = vld [vmem:[#allocation11 + $0x610] sm:$0xff]
    %v1109 = vld [vmem:[#allocation11 + $0x618] sm:$0xff]
    %v1110 = vld [vmem:[#allocation11 + $0x620] sm:$0xff]
    %v1111 = vld [vmem:[#allocation11 + $0x628] sm:$0xff]
    %v1112 = vld [vmem:[#allocation11 + $0x630] sm:$0xff]
    %v1113 = vld [vmem:[#allocation11 + $0x638] sm:$0xff]
    %v1114 = vld [vmem:[#allocation11 + $0x640] sm:$0xff]
    %v1115 = vld [vmem:[#allocation11 + $0x648] sm:$0xff]
    %v1116 = vld [vmem:[#allocation11 + $0x650] sm:$0xff]
    %v1117 = vld [vmem:[#allocation11 + $0x658] sm:$0xff]
    %v1118 = vld [vmem:[#allocation11 + $0x660] sm:$0xff]
    %v1119 = vld [vmem:[#allocation11 + $0x668] sm:$0xff]
    %v1120 = vld [vmem:[#allocation11 + $0x670] sm:$0xff]
    %v1121 = vld [vmem:[#allocation11 + $0x678] sm:$0xff]
    %v1122 = vld [vmem:[#allocation11 + $0x680] sm:$0xff]
    %v1123 = vld [vmem:[#allocation11 + $0x688] sm:$0xff]
    %v1124 = vld [vmem:[#allocation11 + $0x690] sm:$0xff]
    %v1125 = vld [vmem:[#allocation11 + $0x698] sm:$0xff]
    %v1126 = vld [vmem:[#allocation11 + $0x6a0] sm:$0xff]
    %v1127 = vld [vmem:[#allocation11 + $0x6a8] sm:$0xff]
    %v1128 = vld [vmem:[#allocation11 + $0x6b0] sm:$0xff]
    %v1129 = vld [vmem:[#allocation11 + $0x6b8] sm:$0xff]
    %v1130 = vld [vmem:[#allocation11 + $0x6c0] sm:$0xff]
    %v1131 = vld [vmem:[#allocation11 + $0x6c8] sm:$0xff]
    %v1132 = vld [vmem:[#allocation11 + $0x6d0] sm:$0xff]
    %v1133 = vld [vmem:[#allocation11 + $0x6d8] sm:$0xff]
    %v1134 = vld [vmem:[#allocation11 + $0x6e0] sm:$0xff]
    %v1135 = vld [vmem:[#allocation11 + $0x6e8] sm:$0xff]
    %v1136 = vld [vmem:[#allocation11 + $0x6f0] sm:$0xff]
    %v1137 = vld [vmem:[#allocation11 + $0x6f8] sm:$0xff]
    %v1138 = vld [vmem:[#allocation11 + $0x700] sm:$0xff]
    %v1139 = vld [vmem:[#allocation11 + $0x708] sm:$0xff]
    %v1140 = vld [vmem:[#allocation11 + $0x710] sm:$0xff]
    %v1141 = vld [vmem:[#allocation11 + $0x718] sm:$0xff]
    %v1142 = vld [vmem:[#allocation11 + $0x720] sm:$0xff]
    %v1143 = vld [vmem:[#allocation11 + $0x728] sm:$0xff]
    %v1144 = vld [vmem:[#allocation11 + $0x730] sm:$0xff]
    %v1145 = vld [vmem:[#allocation11 + $0x738] sm:$0xff]
    %v1146 = vld [vmem:[#allocation11 + $0x740] sm:$0xff]
    %v1147 = vld [vmem:[#allocation11 + $0x748] sm:$0xff]
    %v1148 = vld [vmem:[#allocation11 + $0x750] sm:$0xff]
    %v1149 = vld [vmem:[#allocation11 + $0x758] sm:$0xff]
    %v1150 = vld [vmem:[#allocation11 + $0x760] sm:$0xff]
    %v1151 = vld [vmem:[#allocation11 + $0x768] sm:$0xff]
    %v1152 = vld [vmem:[#allocation11 + $0x770] sm:$0xff]
    %v1153 = vld [vmem:[#allocation11 + $0x778] sm:$0xff]
    %v1154 = vld [vmem:[#allocation11 + $0x780] sm:$0xff]
    %v1155 = vld [vmem:[#allocation11 + $0x788] sm:$0xff]
    %v1156 = vld [vmem:[#allocation11 + $0x790] sm:$0xff]
    %v1157 = vld [vmem:[#allocation11 + $0x798] sm:$0xff]
    %v1158 = vld [vmem:[#allocation11 + $0x7a0] sm:$0xff]
    %v1159 = vld [vmem:[#allocation11 + $0x7a8] sm:$0xff]
    %v1160 = vld [vmem:[#allocation11 + $0x7b0] sm:$0xff]
    %v1161 = vld [vmem:[#allocation11 + $0x7b8] sm:$0xff]
    %v1162 = vld [vmem:[#allocation11 + $0x7c0] sm:$0xff]
    %v1163 = vld [vmem:[#allocation11 + $0x7c8] sm:$0xff]
    %v1164 = vld [vmem:[#allocation11 + $0x7d0] sm:$0xff]
    %v1165 = vld [vmem:[#allocation11 + $0x7d8] sm:$0xff]
    %v1166 = vld [vmem:[#allocation11 + $0x7e0] sm:$0xff]
    %v1167 = vld [vmem:[#allocation11 + $0x7e8] sm:$0xff]
    %v1168 = vld [vmem:[#allocation11 + $0x7f0] sm:$0xff]
    %v1169 = vld [vmem:[#allocation11 + $0x7f8] sm:$0xff]
    %v1170 = vld [vmem:[%s8] sm:$0xff]
    %v1172 = vlaneseq
    %v1173 = vshrl.u32 %v1172, 7
    %v1174 = vsub.s32 0, %v1173
    %v1175 = vrot.slane %v1170, %v1174
    %v1176 = vlaneseq
    %v1177 = vshrl.u32 %v1176, 7
    %v1178 = vsub.s32 1, %v1177
    %v1179 = vrot.slane %v1170, %v1178
    %v1180 = vlaneseq
    %v1181 = vshrl.u32 %v1180, 7
    %v1182 = vsub.s32 2, %v1181
    %v1183 = vrot.slane %v1170, %v1182
    %v1184 = vlaneseq
    %v1185 = vshrl.u32 %v1184, 7
    %v1186 = vsub.s32 3, %v1185
    %v1187 = vrot.slane %v1170, %v1186
    %v1188 = vlaneseq
    %v1189 = vshrl.u32 %v1188, 7
    %v1190 = vsub.s32 4, %v1189
    %v1191 = vrot.slane %v1170, %v1190
    %v1192 = vlaneseq
    %v1193 = vshrl.u32 %v1192, 7
    %v1194 = vsub.s32 5, %v1193
    %v1195 = vrot.slane %v1170, %v1194
    %v1196 = vlaneseq
    %v1197 = vshrl.u32 %v1196, 7
    %v1198 = vsub.s32 6, %v1197
    %v1199 = vrot.slane %v1170, %v1198
    %v1200 = vlaneseq
    %v1201 = vshrl.u32 %v1200, 7
    %v1202 = vsub.s32 7, %v1201
    %v1203 = vrot.slane %v1170, %v1202
    %v1468 = vunpack.c.l.b16 %v914
    %v1469 = vunpack.c.h.b16 %v914
    %v1470 = vunpack.c.l.b16 %v915
    %v1471 = vunpack.c.h.b16 %v915
    %v1472 = vunpack.c.l.b16 %v916
    %v1473 = vunpack.c.h.b16 %v916
    %v1474 = vunpack.c.l.b16 %v917
    %v1475 = vunpack.c.h.b16 %v917
    %v1476 = vunpack.c.l.b16 %v918
    %v1477 = vunpack.c.h.b16 %v918
    %v1478 = vunpack.c.l.b16 %v919
    %v1479 = vunpack.c.h.b16 %v919
    %v1480 = vunpack.c.l.b16 %v920
    %v1481 = vunpack.c.h.b16 %v920
    %v1482 = vunpack.c.l.b16 %v921
    %v1483 = vunpack.c.h.b16 %v921
    %v1484 = vunpack.c.l.b16 %v922
    %v1485 = vunpack.c.h.b16 %v922
    %v1486 = vunpack.c.l.b16 %v923
    %v1487 = vunpack.c.h.b16 %v923
    %v1488 = vunpack.c.l.b16 %v924
    %v1489 = vunpack.c.h.b16 %v924
    %v1490 = vunpack.c.l.b16 %v925
    %v1491 = vunpack.c.h.b16 %v925
    %v1492 = vunpack.c.l.b16 %v926
    %v1493 = vunpack.c.h.b16 %v926
    %v1494 = vunpack.c.l.b16 %v927
    %v1495 = vunpack.c.h.b16 %v927
    %v1496 = vunpack.c.l.b16 %v928
    %v1497 = vunpack.c.h.b16 %v928
    %v1498 = vunpack.c.l.b16 %v929
    %v1499 = vunpack.c.h.b16 %v929
    %v1500 = vunpack.c.l.b16 %v930
    %v1501 = vunpack.c.h.b16 %v930
    %v1502 = vunpack.c.l.b16 %v931
    %v1503 = vunpack.c.h.b16 %v931
    %v1504 = vunpack.c.l.b16 %v932
    %v1505 = vunpack.c.h.b16 %v932
    %v1506 = vunpack.c.l.b16 %v933
    %v1507 = vunpack.c.h.b16 %v933
    %v1508 = vunpack.c.l.b16 %v934
    %v1509 = vunpack.c.h.b16 %v934
    %v1510 = vunpack.c.l.b16 %v935
    %v1511 = vunpack.c.h.b16 %v935
    %v1512 = vunpack.c.l.b16 %v936
    %v1513 = vunpack.c.h.b16 %v936
    %v1514 = vunpack.c.l.b16 %v937
    %v1515 = vunpack.c.h.b16 %v937
    %v1516 = vunpack.c.l.b16 %v938
    %v1517 = vunpack.c.h.b16 %v938
    %v1518 = vunpack.c.l.b16 %v939
    %v1519 = vunpack.c.h.b16 %v939
    %v1520 = vunpack.c.l.b16 %v940
    %v1521 = vunpack.c.h.b16 %v940
    %v1522 = vunpack.c.l.b16 %v941
    %v1523 = vunpack.c.h.b16 %v941
    %v1524 = vunpack.c.l.b16 %v942
    %v1525 = vunpack.c.h.b16 %v942
    %v1526 = vunpack.c.l.b16 %v943
    %v1527 = vunpack.c.h.b16 %v943
    %v1528 = vunpack.c.l.b16 %v944
    %v1529 = vunpack.c.h.b16 %v944
    %v1530 = vunpack.c.l.b16 %v945
    %v1531 = vunpack.c.h.b16 %v945
    %v1532 = vunpack.c.l.b16 %v946
    %v1533 = vunpack.c.h.b16 %v946
    %v1534 = vunpack.c.l.b16 %v947
    %v1535 = vunpack.c.h.b16 %v947
    %v1536 = vunpack.c.l.b16 %v948
    %v1537 = vunpack.c.h.b16 %v948
    %v1538 = vunpack.c.l.b16 %v949
    %v1539 = vunpack.c.h.b16 %v949
    %v1540 = vunpack.c.l.b16 %v950
    %v1541 = vunpack.c.h.b16 %v950
    %v1542 = vunpack.c.l.b16 %v951
    %v1543 = vunpack.c.h.b16 %v951
    %v1544 = vunpack.c.l.b16 %v952
    %v1545 = vunpack.c.h.b16 %v952
    %v1546 = vunpack.c.l.b16 %v953
    %v1547 = vunpack.c.h.b16 %v953
    %v1548 = vunpack.c.l.b16 %v954
    %v1549 = vunpack.c.h.b16 %v954
    %v1550 = vunpack.c.l.b16 %v955
    %v1551 = vunpack.c.h.b16 %v955
    %v1552 = vunpack.c.l.b16 %v956
    %v1553 = vunpack.c.h.b16 %v956
    %v1554 = vunpack.c.l.b16 %v957
    %v1555 = vunpack.c.h.b16 %v957
    %v1556 = vunpack.c.l.b16 %v958
    %v1557 = vunpack.c.h.b16 %v958
    %v1558 = vunpack.c.l.b16 %v959
    %v1559 = vunpack.c.h.b16 %v959
    %v1560 = vunpack.c.l.b16 %v960
    %v1561 = vunpack.c.h.b16 %v960
    %v1562 = vunpack.c.l.b16 %v961
    %v1563 = vunpack.c.h.b16 %v961
    %v1564 = vunpack.c.l.b16 %v962
    %v1565 = vunpack.c.h.b16 %v962
    %v1566 = vunpack.c.l.b16 %v963
    %v1567 = vunpack.c.h.b16 %v963
    %v1568 = vunpack.c.l.b16 %v964
    %v1569 = vunpack.c.h.b16 %v964
    %v1570 = vunpack.c.l.b16 %v965
    %v1571 = vunpack.c.h.b16 %v965
    %v1572 = vunpack.c.l.b16 %v966
    %v1573 = vunpack.c.h.b16 %v966
    %v1574 = vunpack.c.l.b16 %v967
    %v1575 = vunpack.c.h.b16 %v967
    %v1576 = vunpack.c.l.b16 %v968
    %v1577 = vunpack.c.h.b16 %v968
    %v1578 = vunpack.c.l.b16 %v969
    %v1579 = vunpack.c.h.b16 %v969
    %v1580 = vunpack.c.l.b16 %v970
    %v1581 = vunpack.c.h.b16 %v970
    %v1582 = vunpack.c.l.b16 %v971
    %v1583 = vunpack.c.h.b16 %v971
    %v1584 = vunpack.c.l.b16 %v972
    %v1585 = vunpack.c.h.b16 %v972
    %v1586 = vunpack.c.l.b16 %v973
    %v1587 = vunpack.c.h.b16 %v973
    %v1588 = vunpack.c.l.b16 %v974
    %v1589 = vunpack.c.h.b16 %v974
    %v1590 = vunpack.c.l.b16 %v975
    %v1591 = vunpack.c.h.b16 %v975
    %v1592 = vunpack.c.l.b16 %v976
    %v1593 = vunpack.c.h.b16 %v976
    %v1594 = vunpack.c.l.b16 %v977
    %v1595 = vunpack.c.h.b16 %v977
    %v1596 = vunpack.c.l.b16 %v978
    %v1597 = vunpack.c.h.b16 %v978
    %v1598 = vunpack.c.l.b16 %v979
    %v1599 = vunpack.c.h.b16 %v979
    %v1600 = vunpack.c.l.b16 %v980
    %v1601 = vunpack.c.h.b16 %v980
    %v1602 = vunpack.c.l.b16 %v981
    %v1603 = vunpack.c.h.b16 %v981
    %v1604 = vunpack.c.l.b16 %v982
    %v1605 = vunpack.c.h.b16 %v982
    %v1606 = vunpack.c.l.b16 %v983
    %v1607 = vunpack.c.h.b16 %v983
    %v1608 = vunpack.c.l.b16 %v984
    %v1609 = vunpack.c.h.b16 %v984
    %v1610 = vunpack.c.l.b16 %v985
    %v1611 = vunpack.c.h.b16 %v985
    %v1612 = vunpack.c.l.b16 %v986
    %v1613 = vunpack.c.h.b16 %v986
    %v1614 = vunpack.c.l.b16 %v987
    %v1615 = vunpack.c.h.b16 %v987
    %v1616 = vunpack.c.l.b16 %v988
    %v1617 = vunpack.c.h.b16 %v988
    %v1618 = vunpack.c.l.b16 %v989
    %v1619 = vunpack.c.h.b16 %v989
    %v1620 = vunpack.c.l.b16 %v990
    %v1621 = vunpack.c.h.b16 %v990
    %v1622 = vunpack.c.l.b16 %v991
    %v1623 = vunpack.c.h.b16 %v991
    %v1624 = vunpack.c.l.b16 %v992
    %v1625 = vunpack.c.h.b16 %v992
    %v1626 = vunpack.c.l.b16 %v993
    %v1627 = vunpack.c.h.b16 %v993
    %v1628 = vunpack.c.l.b16 %v994
    %v1629 = vunpack.c.h.b16 %v994
    %v1630 = vunpack.c.l.b16 %v995
    %v1631 = vunpack.c.h.b16 %v995
    %v1632 = vunpack.c.l.b16 %v996
    %v1633 = vunpack.c.h.b16 %v996
    %v1634 = vunpack.c.l.b16 %v997
    %v1635 = vunpack.c.h.b16 %v997
    %v1636 = vunpack.c.l.b16 %v998
    %v1637 = vunpack.c.h.b16 %v998
    %v1638 = vunpack.c.l.b16 %v999
    %v1639 = vunpack.c.h.b16 %v999
    %v1640 = vunpack.c.l.b16 %v1000
    %v1641 = vunpack.c.h.b16 %v1000
    %v1642 = vunpack.c.l.b16 %v1001
    %v1643 = vunpack.c.h.b16 %v1001
    %v1644 = vunpack.c.l.b16 %v1002
    %v1645 = vunpack.c.h.b16 %v1002
    %v1646 = vunpack.c.l.b16 %v1003
    %v1647 = vunpack.c.h.b16 %v1003
    %v1648 = vunpack.c.l.b16 %v1004
    %v1649 = vunpack.c.h.b16 %v1004
    %v1650 = vunpack.c.l.b16 %v1005
    %v1651 = vunpack.c.h.b16 %v1005
    %v1652 = vunpack.c.l.b16 %v1006
    %v1653 = vunpack.c.h.b16 %v1006
    %v1654 = vunpack.c.l.b16 %v1007
    %v1655 = vunpack.c.h.b16 %v1007
    %v1656 = vunpack.c.l.b16 %v1008
    %v1657 = vunpack.c.h.b16 %v1008
    %v1658 = vunpack.c.l.b16 %v1009
    %v1659 = vunpack.c.h.b16 %v1009
    %v1660 = vunpack.c.l.b16 %v1010
    %v1661 = vunpack.c.h.b16 %v1010
    %v1662 = vunpack.c.l.b16 %v1011
    %v1663 = vunpack.c.h.b16 %v1011
    %v1664 = vunpack.c.l.b16 %v1012
    %v1665 = vunpack.c.h.b16 %v1012
    %v1666 = vunpack.c.l.b16 %v1013
    %v1667 = vunpack.c.h.b16 %v1013
    %v1668 = vunpack.c.l.b16 %v1014
    %v1669 = vunpack.c.h.b16 %v1014
    %v1670 = vunpack.c.l.b16 %v1015
    %v1671 = vunpack.c.h.b16 %v1015
    %v1672 = vunpack.c.l.b16 %v1016
    %v1673 = vunpack.c.h.b16 %v1016
    %v1674 = vunpack.c.l.b16 %v1017
    %v1675 = vunpack.c.h.b16 %v1017
    %v1676 = vunpack.c.l.b16 %v1018
    %v1677 = vunpack.c.h.b16 %v1018
    %v1678 = vunpack.c.l.b16 %v1019
    %v1679 = vunpack.c.h.b16 %v1019
    %v1680 = vunpack.c.l.b16 %v1020
    %v1681 = vunpack.c.h.b16 %v1020
    %v1682 = vunpack.c.l.b16 %v1021
    %v1683 = vunpack.c.h.b16 %v1021
    %v1684 = vunpack.c.l.b16 %v1022
    %v1685 = vunpack.c.h.b16 %v1022
    %v1686 = vunpack.c.l.b16 %v1023
    %v1687 = vunpack.c.h.b16 %v1023
    %v1688 = vunpack.c.l.b16 %v1024
    %v1689 = vunpack.c.h.b16 %v1024
    %v1690 = vunpack.c.l.b16 %v1025
    %v1691 = vunpack.c.h.b16 %v1025
    %v1692 = vunpack.c.l.b16 %v1026
    %v1693 = vunpack.c.h.b16 %v1026
    %v1694 = vunpack.c.l.b16 %v1027
    %v1695 = vunpack.c.h.b16 %v1027
    %v1696 = vunpack.c.l.b16 %v1028
    %v1697 = vunpack.c.h.b16 %v1028
    %v1698 = vunpack.c.l.b16 %v1029
    %v1699 = vunpack.c.h.b16 %v1029
    %v1700 = vunpack.c.l.b16 %v1030
    %v1701 = vunpack.c.h.b16 %v1030
    %v1702 = vunpack.c.l.b16 %v1031
    %v1703 = vunpack.c.h.b16 %v1031
    %v1704 = vunpack.c.l.b16 %v1032
    %v1705 = vunpack.c.h.b16 %v1032
    %v1706 = vunpack.c.l.b16 %v1033
    %v1707 = vunpack.c.h.b16 %v1033
    %v1708 = vunpack.c.l.b16 %v1034
    %v1709 = vunpack.c.h.b16 %v1034
    %v1710 = vunpack.c.l.b16 %v1035
    %v1711 = vunpack.c.h.b16 %v1035
    %v1712 = vunpack.c.l.b16 %v1036
    %v1713 = vunpack.c.h.b16 %v1036
    %v1714 = vunpack.c.l.b16 %v1037
    %v1715 = vunpack.c.h.b16 %v1037
    %v1716 = vunpack.c.l.b16 %v1038
    %v1717 = vunpack.c.h.b16 %v1038
    %v1718 = vunpack.c.l.b16 %v1039
    %v1719 = vunpack.c.h.b16 %v1039
    %v1720 = vunpack.c.l.b16 %v1040
    %v1721 = vunpack.c.h.b16 %v1040
    %v1722 = vunpack.c.l.b16 %v1041
    %v1723 = vunpack.c.h.b16 %v1041
    %v1724 = vunpack.c.l.b16 %v1042
    %v1725 = vunpack.c.h.b16 %v1042
    %v1726 = vunpack.c.l.b16 %v1043
    %v1727 = vunpack.c.h.b16 %v1043
    %v1728 = vunpack.c.l.b16 %v1044
    %v1729 = vunpack.c.h.b16 %v1044
    %v1730 = vunpack.c.l.b16 %v1045
    %v1731 = vunpack.c.h.b16 %v1045
    %v1732 = vunpack.c.l.b16 %v1046
    %v1733 = vunpack.c.h.b16 %v1046
    %v1734 = vunpack.c.l.b16 %v1047
    %v1735 = vunpack.c.h.b16 %v1047
    %v1736 = vunpack.c.l.b16 %v1048
    %v1737 = vunpack.c.h.b16 %v1048
    %v1738 = vunpack.c.l.b16 %v1049
    %v1739 = vunpack.c.h.b16 %v1049
    %v1740 = vunpack.c.l.b16 %v1050
    %v1741 = vunpack.c.h.b16 %v1050
    %v1742 = vunpack.c.l.b16 %v1051
    %v1743 = vunpack.c.h.b16 %v1051
    %v1744 = vunpack.c.l.b16 %v1052
    %v1745 = vunpack.c.h.b16 %v1052
    %v1746 = vunpack.c.l.b16 %v1053
    %v1747 = vunpack.c.h.b16 %v1053
    %v1748 = vunpack.c.l.b16 %v1054
    %v1749 = vunpack.c.h.b16 %v1054
    %v1750 = vunpack.c.l.b16 %v1055
    %v1751 = vunpack.c.h.b16 %v1055
    %v1752 = vunpack.c.l.b16 %v1056
    %v1753 = vunpack.c.h.b16 %v1056
    %v1754 = vunpack.c.l.b16 %v1057
    %v1755 = vunpack.c.h.b16 %v1057
    %v1756 = vunpack.c.l.b16 %v1058
    %v1757 = vunpack.c.h.b16 %v1058
    %v1758 = vunpack.c.l.b16 %v1059
    %v1759 = vunpack.c.h.b16 %v1059
    %v1760 = vunpack.c.l.b16 %v1060
    %v1761 = vunpack.c.h.b16 %v1060
    %v1762 = vunpack.c.l.b16 %v1061
    %v1763 = vunpack.c.h.b16 %v1061
    %v1764 = vunpack.c.l.b16 %v1062
    %v1765 = vunpack.c.h.b16 %v1062
    %v1766 = vunpack.c.l.b16 %v1063
    %v1767 = vunpack.c.h.b16 %v1063
    %v1768 = vunpack.c.l.b16 %v1064
    %v1769 = vunpack.c.h.b16 %v1064
    %v1770 = vunpack.c.l.b16 %v1065
    %v1771 = vunpack.c.h.b16 %v1065
    %v1772 = vunpack.c.l.b16 %v1066
    %v1773 = vunpack.c.h.b16 %v1066
    %v1774 = vunpack.c.l.b16 %v1067
    %v1775 = vunpack.c.h.b16 %v1067
    %v1776 = vunpack.c.l.b16 %v1068
    %v1777 = vunpack.c.h.b16 %v1068
    %v1778 = vunpack.c.l.b16 %v1069
    %v1779 = vunpack.c.h.b16 %v1069
    %v1780 = vunpack.c.l.b16 %v1070
    %v1781 = vunpack.c.h.b16 %v1070
    %v1782 = vunpack.c.l.b16 %v1071
    %v1783 = vunpack.c.h.b16 %v1071
    %v1784 = vunpack.c.l.b16 %v1072
    %v1785 = vunpack.c.h.b16 %v1072
    %v1786 = vunpack.c.l.b16 %v1073
    %v1787 = vunpack.c.h.b16 %v1073
    %v1788 = vunpack.c.l.b16 %v1074
    %v1789 = vunpack.c.h.b16 %v1074
    %v1790 = vunpack.c.l.b16 %v1075
    %v1791 = vunpack.c.h.b16 %v1075
    %v1792 = vunpack.c.l.b16 %v1076
    %v1793 = vunpack.c.h.b16 %v1076
    %v1794 = vunpack.c.l.b16 %v1077
    %v1795 = vunpack.c.h.b16 %v1077
    %v1796 = vunpack.c.l.b16 %v1078
    %v1797 = vunpack.c.h.b16 %v1078
    %v1798 = vunpack.c.l.b16 %v1079
    %v1799 = vunpack.c.h.b16 %v1079
    %v1800 = vunpack.c.l.b16 %v1080
    %v1801 = vunpack.c.h.b16 %v1080
    %v1802 = vunpack.c.l.b16 %v1081
    %v1803 = vunpack.c.h.b16 %v1081
    %v1804 = vunpack.c.l.b16 %v1082
    %v1805 = vunpack.c.h.b16 %v1082
    %v1806 = vunpack.c.l.b16 %v1083
    %v1807 = vunpack.c.h.b16 %v1083
    %v1808 = vunpack.c.l.b16 %v1084
    %v1809 = vunpack.c.h.b16 %v1084
    %v1810 = vunpack.c.l.b16 %v1085
    %v1811 = vunpack.c.h.b16 %v1085
    %v1812 = vunpack.c.l.b16 %v1086
    %v1813 = vunpack.c.h.b16 %v1086
    %v1814 = vunpack.c.l.b16 %v1087
    %v1815 = vunpack.c.h.b16 %v1087
    %v1816 = vunpack.c.l.b16 %v1088
    %v1817 = vunpack.c.h.b16 %v1088
    %v1818 = vunpack.c.l.b16 %v1089
    %v1819 = vunpack.c.h.b16 %v1089
    %v1820 = vunpack.c.l.b16 %v1090
    %v1821 = vunpack.c.h.b16 %v1090
    %v1822 = vunpack.c.l.b16 %v1091
    %v1823 = vunpack.c.h.b16 %v1091
    %v1824 = vunpack.c.l.b16 %v1092
    %v1825 = vunpack.c.h.b16 %v1092
    %v1826 = vunpack.c.l.b16 %v1093
    %v1827 = vunpack.c.h.b16 %v1093
    %v1828 = vunpack.c.l.b16 %v1094
    %v1829 = vunpack.c.h.b16 %v1094
    %v1830 = vunpack.c.l.b16 %v1095
    %v1831 = vunpack.c.h.b16 %v1095
    %v1832 = vunpack.c.l.b16 %v1096
    %v1833 = vunpack.c.h.b16 %v1096
    %v1834 = vunpack.c.l.b16 %v1097
    %v1835 = vunpack.c.h.b16 %v1097
    %v1836 = vunpack.c.l.b16 %v1098
    %v1837 = vunpack.c.h.b16 %v1098
    %v1838 = vunpack.c.l.b16 %v1099
    %v1839 = vunpack.c.h.b16 %v1099
    %v1840 = vunpack.c.l.b16 %v1100
    %v1841 = vunpack.c.h.b16 %v1100
    %v1842 = vunpack.c.l.b16 %v1101
    %v1843 = vunpack.c.h.b16 %v1101
    %v1844 = vunpack.c.l.b16 %v1102
    %v1845 = vunpack.c.h.b16 %v1102
    %v1846 = vunpack.c.l.b16 %v1103
    %v1847 = vunpack.c.h.b16 %v1103
    %v1848 = vunpack.c.l.b16 %v1104
    %v1849 = vunpack.c.h.b16 %v1104
    %v1850 = vunpack.c.l.b16 %v1105
    %v1851 = vunpack.c.h.b16 %v1105
    %v1852 = vunpack.c.l.b16 %v1106
    %v1853 = vunpack.c.h.b16 %v1106
    %v1854 = vunpack.c.l.b16 %v1107
    %v1855 = vunpack.c.h.b16 %v1107
    %v1856 = vunpack.c.l.b16 %v1108
    %v1857 = vunpack.c.h.b16 %v1108
    %v1858 = vunpack.c.l.b16 %v1109
    %v1859 = vunpack.c.h.b16 %v1109
    %v1860 = vunpack.c.l.b16 %v1110
    %v1861 = vunpack.c.h.b16 %v1110
    %v1862 = vunpack.c.l.b16 %v1111
    %v1863 = vunpack.c.h.b16 %v1111
    %v1864 = vunpack.c.l.b16 %v1112
    %v1865 = vunpack.c.h.b16 %v1112
    %v1866 = vunpack.c.l.b16 %v1113
    %v1867 = vunpack.c.h.b16 %v1113
    %v1868 = vunpack.c.l.b16 %v1114
    %v1869 = vunpack.c.h.b16 %v1114
    %v1870 = vunpack.c.l.b16 %v1115
    %v1871 = vunpack.c.h.b16 %v1115
    %v1872 = vunpack.c.l.b16 %v1116
    %v1873 = vunpack.c.h.b16 %v1116
    %v1874 = vunpack.c.l.b16 %v1117
    %v1875 = vunpack.c.h.b16 %v1117
    %v1876 = vunpack.c.l.b16 %v1118
    %v1877 = vunpack.c.h.b16 %v1118
    %v1878 = vunpack.c.l.b16 %v1119
    %v1879 = vunpack.c.h.b16 %v1119
    %v1880 = vunpack.c.l.b16 %v1120
    %v1881 = vunpack.c.h.b16 %v1120
    %v1882 = vunpack.c.l.b16 %v1121
    %v1883 = vunpack.c.h.b16 %v1121
    %v1884 = vunpack.c.l.b16 %v1122
    %v1885 = vunpack.c.h.b16 %v1122
    %v1886 = vunpack.c.l.b16 %v1123
    %v1887 = vunpack.c.h.b16 %v1123
    %v1888 = vunpack.c.l.b16 %v1124
    %v1889 = vunpack.c.h.b16 %v1124
    %v1890 = vunpack.c.l.b16 %v1125
    %v1891 = vunpack.c.h.b16 %v1125
    %v1892 = vunpack.c.l.b16 %v1126
    %v1893 = vunpack.c.h.b16 %v1126
    %v1894 = vunpack.c.l.b16 %v1127
    %v1895 = vunpack.c.h.b16 %v1127
    %v1896 = vunpack.c.l.b16 %v1128
    %v1897 = vunpack.c.h.b16 %v1128
    %v1898 = vunpack.c.l.b16 %v1129
    %v1899 = vunpack.c.h.b16 %v1129
    %v1900 = vunpack.c.l.b16 %v1130
    %v1901 = vunpack.c.h.b16 %v1130
    %v1902 = vunpack.c.l.b16 %v1131
    %v1903 = vunpack.c.h.b16 %v1131
    %v1904 = vunpack.c.l.b16 %v1132
    %v1905 = vunpack.c.h.b16 %v1132
    %v1906 = vunpack.c.l.b16 %v1133
    %v1907 = vunpack.c.h.b16 %v1133
    %v1908 = vunpack.c.l.b16 %v1134
    %v1909 = vunpack.c.h.b16 %v1134
    %v1910 = vunpack.c.l.b16 %v1135
    %v1911 = vunpack.c.h.b16 %v1135
    %v1912 = vunpack.c.l.b16 %v1136
    %v1913 = vunpack.c.h.b16 %v1136
    %v1914 = vunpack.c.l.b16 %v1137
    %v1915 = vunpack.c.h.b16 %v1137
    %v1916 = vunpack.c.l.b16 %v1138
    %v1917 = vunpack.c.h.b16 %v1138
    %v1918 = vunpack.c.l.b16 %v1139
    %v1919 = vunpack.c.h.b16 %v1139
    %v1920 = vunpack.c.l.b16 %v1140
    %v1921 = vunpack.c.h.b16 %v1140
    %v1922 = vunpack.c.l.b16 %v1141
    %v1923 = vunpack.c.h.b16 %v1141
    %v1924 = vunpack.c.l.b16 %v1142
    %v1925 = vunpack.c.h.b16 %v1142
    %v1926 = vunpack.c.l.b16 %v1143
    %v1927 = vunpack.c.h.b16 %v1143
    %v1928 = vunpack.c.l.b16 %v1144
    %v1929 = vunpack.c.h.b16 %v1144
    %v1930 = vunpack.c.l.b16 %v1145
    %v1931 = vunpack.c.h.b16 %v1145
    %v1932 = vunpack.c.l.b16 %v1146
    %v1933 = vunpack.c.h.b16 %v1146
    %v1934 = vunpack.c.l.b16 %v1147
    %v1935 = vunpack.c.h.b16 %v1147
    %v1936 = vunpack.c.l.b16 %v1148
    %v1937 = vunpack.c.h.b16 %v1148
    %v1938 = vunpack.c.l.b16 %v1149
    %v1939 = vunpack.c.h.b16 %v1149
    %v1940 = vunpack.c.l.b16 %v1150
    %v1941 = vunpack.c.h.b16 %v1150
    %v1942 = vunpack.c.l.b16 %v1151
    %v1943 = vunpack.c.h.b16 %v1151
    %v1944 = vunpack.c.l.b16 %v1152
    %v1945 = vunpack.c.h.b16 %v1152
    %v1946 = vunpack.c.l.b16 %v1153
    %v1947 = vunpack.c.h.b16 %v1153
    %v1948 = vunpack.c.l.b16 %v1154
    %v1949 = vunpack.c.h.b16 %v1154
    %v1950 = vunpack.c.l.b16 %v1155
    %v1951 = vunpack.c.h.b16 %v1155
    %v1952 = vunpack.c.l.b16 %v1156
    %v1953 = vunpack.c.h.b16 %v1156
    %v1954 = vunpack.c.l.b16 %v1157
    %v1955 = vunpack.c.h.b16 %v1157
    %v1956 = vunpack.c.l.b16 %v1158
    %v1957 = vunpack.c.h.b16 %v1158
    %v1958 = vunpack.c.l.b16 %v1159
    %v1959 = vunpack.c.h.b16 %v1159
    %v1960 = vunpack.c.l.b16 %v1160
    %v1961 = vunpack.c.h.b16 %v1160
    %v1962 = vunpack.c.l.b16 %v1161
    %v1963 = vunpack.c.h.b16 %v1161
    %v1964 = vunpack.c.l.b16 %v1162
    %v1965 = vunpack.c.h.b16 %v1162
    %v1966 = vunpack.c.l.b16 %v1163
    %v1967 = vunpack.c.h.b16 %v1163
    %v1968 = vunpack.c.l.b16 %v1164
    %v1969 = vunpack.c.h.b16 %v1164
    %v1970 = vunpack.c.l.b16 %v1165
    %v1971 = vunpack.c.h.b16 %v1165
    %v1972 = vunpack.c.l.b16 %v1166
    %v1973 = vunpack.c.h.b16 %v1166
    %v1974 = vunpack.c.l.b16 %v1167
    %v1975 = vunpack.c.h.b16 %v1167
    %v1976 = vunpack.c.l.b16 %v1168
    %v1977 = vunpack.c.h.b16 %v1168
    %v1978 = vunpack.c.l.b16 %v1169
    %v1979 = vunpack.c.h.b16 %v1169
    %v1980 = vpack.c.b16 %v1476, %v1468
    %v1981 = vpack.c.b16 %v1477, %v1469
    %v1982 = vpack.c.b16 %v1478, %v1470
    %v1983 = vpack.c.b16 %v1479, %v1471
    %v1984 = vpack.c.b16 %v1480, %v1472
    %v1985 = vpack.c.b16 %v1481, %v1473
    %v1986 = vpack.c.b16 %v1482, %v1474
    %v1987 = vpack.c.b16 %v1483, %v1475
    %v1988 = vpack.c.b16 %v1492, %v1484
    %v1989 = vpack.c.b16 %v1493, %v1485
    %v1990 = vpack.c.b16 %v1494, %v1486
    %v1991 = vpack.c.b16 %v1495, %v1487
    %v1992 = vpack.c.b16 %v1496, %v1488
    %v1993 = vpack.c.b16 %v1497, %v1489
    %v1994 = vpack.c.b16 %v1498, %v1490
    %v1995 = vpack.c.b16 %v1499, %v1491
    %v1996 = vpack.c.b16 %v1508, %v1500
    %v1997 = vpack.c.b16 %v1509, %v1501
    %v1998 = vpack.c.b16 %v1510, %v1502
    %v1999 = vpack.c.b16 %v1511, %v1503
    %v2000 = vpack.c.b16 %v1512, %v1504
    %v2001 = vpack.c.b16 %v1513, %v1505
    %v2002 = vpack.c.b16 %v1514, %v1506
    %v2003 = vpack.c.b16 %v1515, %v1507
    %v2004 = vpack.c.b16 %v1524, %v1516
    %v2005 = vpack.c.b16 %v1525, %v1517
    %v2006 = vpack.c.b16 %v1526, %v1518
    %v2007 = vpack.c.b16 %v1527, %v1519
    %v2008 = vpack.c.b16 %v1528, %v1520
    %v2009 = vpack.c.b16 %v1529, %v1521
    %v2010 = vpack.c.b16 %v1530, %v1522
    %v2011 = vpack.c.b16 %v1531, %v1523
    %v2012 = vpack.c.b16 %v1540, %v1532
    %v2013 = vpack.c.b16 %v1541, %v1533
    %v2014 = vpack.c.b16 %v1542, %v1534
    %v2015 = vpack.c.b16 %v1543, %v1535
    %v2016 = vpack.c.b16 %v1544, %v1536
    %v2017 = vpack.c.b16 %v1545, %v1537
    %v2018 = vpack.c.b16 %v1546, %v1538
    %v2019 = vpack.c.b16 %v1547, %v1539
    %v2020 = vpack.c.b16 %v1556, %v1548
    %v2021 = vpack.c.b16 %v1557, %v1549
    %v2022 = vpack.c.b16 %v1558, %v1550
    %v2023 = vpack.c.b16 %v1559, %v1551
    %v2024 = vpack.c.b16 %v1560, %v1552
    %v2025 = vpack.c.b16 %v1561, %v1553
    %v2026 = vpack.c.b16 %v1562, %v1554
    %v2027 = vpack.c.b16 %v1563, %v1555
    %v2028 = vpack.c.b16 %v1572, %v1564
    %v2029 = vpack.c.b16 %v1573, %v1565
    %v2030 = vpack.c.b16 %v1574, %v1566
    %v2031 = vpack.c.b16 %v1575, %v1567
    %v2032 = vpack.c.b16 %v1576, %v1568
    %v2033 = vpack.c.b16 %v1577, %v1569
    %v2034 = vpack.c.b16 %v1578, %v1570
    %v2035 = vpack.c.b16 %v1579, %v1571
    %v2036 = vpack.c.b16 %v1588, %v1580
    %v2037 = vpack.c.b16 %v1589, %v1581
    %v2038 = vpack.c.b16 %v1590, %v1582
    %v2039 = vpack.c.b16 %v1591, %v1583
    %v2040 = vpack.c.b16 %v1592, %v1584
    %v2041 = vpack.c.b16 %v1593, %v1585
    %v2042 = vpack.c.b16 %v1594, %v1586
    %v2043 = vpack.c.b16 %v1595, %v1587
    %v2044 = vpack.c.b16 %v1604, %v1596
    %v2045 = vpack.c.b16 %v1605, %v1597
    %v2046 = vpack.c.b16 %v1606, %v1598
    %v2047 = vpack.c.b16 %v1607, %v1599
    %v2048 = vpack.c.b16 %v1608, %v1600
    %v2049 = vpack.c.b16 %v1609, %v1601
    %v2050 = vpack.c.b16 %v1610, %v1602
    %v2051 = vpack.c.b16 %v1611, %v1603
    %v2052 = vpack.c.b16 %v1620, %v1612
    %v2053 = vpack.c.b16 %v1621, %v1613
    %v2054 = vpack.c.b16 %v1622, %v1614
    %v2055 = vpack.c.b16 %v1623, %v1615
    %v2056 = vpack.c.b16 %v1624, %v1616
    %v2057 = vpack.c.b16 %v1625, %v1617
    %v2058 = vpack.c.b16 %v1626, %v1618
    %v2059 = vpack.c.b16 %v1627, %v1619
    %v2060 = vpack.c.b16 %v1636, %v1628
    %v2061 = vpack.c.b16 %v1637, %v1629
    %v2062 = vpack.c.b16 %v1638, %v1630
    %v2063 = vpack.c.b16 %v1639, %v1631
    %v2064 = vpack.c.b16 %v1640, %v1632
    %v2065 = vpack.c.b16 %v1641, %v1633
    %v2066 = vpack.c.b16 %v1642, %v1634
    %v2067 = vpack.c.b16 %v1643, %v1635
    %v2068 = vpack.c.b16 %v1652, %v1644
    %v2069 = vpack.c.b16 %v1653, %v1645
    %v2070 = vpack.c.b16 %v1654, %v1646
    %v2071 = vpack.c.b16 %v1655, %v1647
    %v2072 = vpack.c.b16 %v1656, %v1648
    %v2073 = vpack.c.b16 %v1657, %v1649
    %v2074 = vpack.c.b16 %v1658, %v1650
    %v2075 = vpack.c.b16 %v1659, %v1651
    %v2076 = vpack.c.b16 %v1668, %v1660
    %v2077 = vpack.c.b16 %v1669, %v1661
    %v2078 = vpack.c.b16 %v1670, %v1662
    %v2079 = vpack.c.b16 %v1671, %v1663
    %v2080 = vpack.c.b16 %v1672, %v1664
    %v2081 = vpack.c.b16 %v1673, %v1665
    %v2082 = vpack.c.b16 %v1674, %v1666
    %v2083 = vpack.c.b16 %v1675, %v1667
    %v2084 = vpack.c.b16 %v1684, %v1676
    %v2085 = vpack.c.b16 %v1685, %v1677
    %v2086 = vpack.c.b16 %v1686, %v1678
    %v2087 = vpack.c.b16 %v1687, %v1679
    %v2088 = vpack.c.b16 %v1688, %v1680
    %v2089 = vpack.c.b16 %v1689, %v1681
    %v2090 = vpack.c.b16 %v1690, %v1682
    %v2091 = vpack.c.b16 %v1691, %v1683
    %v2092 = vpack.c.b16 %v1700, %v1692
    %v2093 = vpack.c.b16 %v1701, %v1693
    %v2094 = vpack.c.b16 %v1702, %v1694
    %v2095 = vpack.c.b16 %v1703, %v1695
    %v2096 = vpack.c.b16 %v1704, %v1696
    %v2097 = vpack.c.b16 %v1705, %v1697
    %v2098 = vpack.c.b16 %v1706, %v1698
    %v2099 = vpack.c.b16 %v1707, %v1699
    %v2100 = vpack.c.b16 %v1716, %v1708
    %v2101 = vpack.c.b16 %v1717, %v1709
    %v2102 = vpack.c.b16 %v1718, %v1710
    %v2103 = vpack.c.b16 %v1719, %v1711
    %v2104 = vpack.c.b16 %v1720, %v1712
    %v2105 = vpack.c.b16 %v1721, %v1713
    %v2106 = vpack.c.b16 %v1722, %v1714
    %v2107 = vpack.c.b16 %v1723, %v1715
    %v2108 = vpack.c.b16 %v1732, %v1724
    %v2109 = vpack.c.b16 %v1733, %v1725
    %v2110 = vpack.c.b16 %v1734, %v1726
    %v2111 = vpack.c.b16 %v1735, %v1727
    %v2112 = vpack.c.b16 %v1736, %v1728
    %v2113 = vpack.c.b16 %v1737, %v1729
    %v2114 = vpack.c.b16 %v1738, %v1730
    %v2115 = vpack.c.b16 %v1739, %v1731
    %v2116 = vpack.c.b16 %v1748, %v1740
    %v2117 = vpack.c.b16 %v1749, %v1741
    %v2118 = vpack.c.b16 %v1750, %v1742
    %v2119 = vpack.c.b16 %v1751, %v1743
    %v2120 = vpack.c.b16 %v1752, %v1744
    %v2121 = vpack.c.b16 %v1753, %v1745
    %v2122 = vpack.c.b16 %v1754, %v1746
    %v2123 = vpack.c.b16 %v1755, %v1747
    %v2124 = vpack.c.b16 %v1764, %v1756
    %v2125 = vpack.c.b16 %v1765, %v1757
    %v2126 = vpack.c.b16 %v1766, %v1758
    %v2127 = vpack.c.b16 %v1767, %v1759
    %v2128 = vpack.c.b16 %v1768, %v1760
    %v2129 = vpack.c.b16 %v1769, %v1761
    %v2130 = vpack.c.b16 %v1770, %v1762
    %v2131 = vpack.c.b16 %v1771, %v1763
    %v2132 = vpack.c.b16 %v1780, %v1772
    %v2133 = vpack.c.b16 %v1781, %v1773
    %v2134 = vpack.c.b16 %v1782, %v1774
    %v2135 = vpack.c.b16 %v1783, %v1775
    %v2136 = vpack.c.b16 %v1784, %v1776
    %v2137 = vpack.c.b16 %v1785, %v1777
    %v2138 = vpack.c.b16 %v1786, %v1778
    %v2139 = vpack.c.b16 %v1787, %v1779
    %v2140 = vpack.c.b16 %v1796, %v1788
    %v2141 = vpack.c.b16 %v1797, %v1789
    %v2142 = vpack.c.b16 %v1798, %v1790
    %v2143 = vpack.c.b16 %v1799, %v1791
    %v2144 = vpack.c.b16 %v1800, %v1792
    %v2145 = vpack.c.b16 %v1801, %v1793
    %v2146 = vpack.c.b16 %v1802, %v1794
    %v2147 = vpack.c.b16 %v1803, %v1795
    %v2148 = vpack.c.b16 %v1812, %v1804
    %v2149 = vpack.c.b16 %v1813, %v1805
    %v2150 = vpack.c.b16 %v1814, %v1806
    %v2151 = vpack.c.b16 %v1815, %v1807
    %v2152 = vpack.c.b16 %v1816, %v1808
    %v2153 = vpack.c.b16 %v1817, %v1809
    %v2154 = vpack.c.b16 %v1818, %v1810
    %v2155 = vpack.c.b16 %v1819, %v1811
    %v2156 = vpack.c.b16 %v1828, %v1820
    %v2157 = vpack.c.b16 %v1829, %v1821
    %v2158 = vpack.c.b16 %v1830, %v1822
    %v2159 = vpack.c.b16 %v1831, %v1823
    %v2160 = vpack.c.b16 %v1832, %v1824
    %v2161 = vpack.c.b16 %v1833, %v1825
    %v2162 = vpack.c.b16 %v1834, %v1826
    %v2163 = vpack.c.b16 %v1835, %v1827
    %v2164 = vpack.c.b16 %v1844, %v1836
    %v2165 = vpack.c.b16 %v1845, %v1837
    %v2166 = vpack.c.b16 %v1846, %v1838
    %v2167 = vpack.c.b16 %v1847, %v1839
    %v2168 = vpack.c.b16 %v1848, %v1840
    %v2169 = vpack.c.b16 %v1849, %v1841
    %v2170 = vpack.c.b16 %v1850, %v1842
    %v2171 = vpack.c.b16 %v1851, %v1843
    %v2172 = vpack.c.b16 %v1860, %v1852
    %v2173 = vpack.c.b16 %v1861, %v1853
    %v2174 = vpack.c.b16 %v1862, %v1854
    %v2175 = vpack.c.b16 %v1863, %v1855
    %v2176 = vpack.c.b16 %v1864, %v1856
    %v2177 = vpack.c.b16 %v1865, %v1857
    %v2178 = vpack.c.b16 %v1866, %v1858
    %v2179 = vpack.c.b16 %v1867, %v1859
    %v2180 = vpack.c.b16 %v1876, %v1868
    %v2181 = vpack.c.b16 %v1877, %v1869
    %v2182 = vpack.c.b16 %v1878, %v1870
    %v2183 = vpack.c.b16 %v1879, %v1871
    %v2184 = vpack.c.b16 %v1880, %v1872
    %v2185 = vpack.c.b16 %v1881, %v1873
    %v2186 = vpack.c.b16 %v1882, %v1874
    %v2187 = vpack.c.b16 %v1883, %v1875
    %v2188 = vpack.c.b16 %v1892, %v1884
    %v2189 = vpack.c.b16 %v1893, %v1885
    %v2190 = vpack.c.b16 %v1894, %v1886
    %v2191 = vpack.c.b16 %v1895, %v1887
    %v2192 = vpack.c.b16 %v1896, %v1888
    %v2193 = vpack.c.b16 %v1897, %v1889
    %v2194 = vpack.c.b16 %v1898, %v1890
    %v2195 = vpack.c.b16 %v1899, %v1891
    %v2196 = vpack.c.b16 %v1908, %v1900
    %v2197 = vpack.c.b16 %v1909, %v1901
    %v2198 = vpack.c.b16 %v1910, %v1902
    %v2199 = vpack.c.b16 %v1911, %v1903
    %v2200 = vpack.c.b16 %v1912, %v1904
    %v2201 = vpack.c.b16 %v1913, %v1905
    %v2202 = vpack.c.b16 %v1914, %v1906
    %v2203 = vpack.c.b16 %v1915, %v1907
    %v2204 = vpack.c.b16 %v1924, %v1916
    %v2205 = vpack.c.b16 %v1925, %v1917
    %v2206 = vpack.c.b16 %v1926, %v1918
    %v2207 = vpack.c.b16 %v1927, %v1919
    %v2208 = vpack.c.b16 %v1928, %v1920
    %v2209 = vpack.c.b16 %v1929, %v1921
    %v2210 = vpack.c.b16 %v1930, %v1922
    %v2211 = vpack.c.b16 %v1931, %v1923
    %v2212 = vpack.c.b16 %v1940, %v1932
    %v2213 = vpack.c.b16 %v1941, %v1933
    %v2214 = vpack.c.b16 %v1942, %v1934
    %v2215 = vpack.c.b16 %v1943, %v1935
    %v2216 = vpack.c.b16 %v1944, %v1936
    %v2217 = vpack.c.b16 %v1945, %v1937
    %v2218 = vpack.c.b16 %v1946, %v1938
    %v2219 = vpack.c.b16 %v1947, %v1939
    %v2220 = vpack.c.b16 %v1956, %v1948
    %v2221 = vpack.c.b16 %v1957, %v1949
    %v2222 = vpack.c.b16 %v1958, %v1950
    %v2223 = vpack.c.b16 %v1959, %v1951
    %v2224 = vpack.c.b16 %v1960, %v1952
    %v2225 = vpack.c.b16 %v1961, %v1953
    %v2226 = vpack.c.b16 %v1962, %v1954
    %v2227 = vpack.c.b16 %v1963, %v1955
    %v2228 = vpack.c.b16 %v1972, %v1964
    %v2229 = vpack.c.b16 %v1973, %v1965
    %v2230 = vpack.c.b16 %v1974, %v1966
    %v2231 = vpack.c.b16 %v1975, %v1967
    %v2232 = vpack.c.b16 %v1976, %v1968
    %v2233 = vpack.c.b16 %v1977, %v1969
    %v2234 = vpack.c.b16 %v1978, %v1970
    %v2235 = vpack.c.b16 %v1979, %v1971
    %2492 = vmatprep.subr.bf16.mxu0 %v1981
    %2493 = vmatpush1.bf16.msra.mxu0 %v1980
    %2494 = vmatprep.subr.bf16.mxu0 %v1989
    %2495 = vmatpush1.bf16.msra.mxu0 %v1988
    %2496 = vmatprep.subr.bf16.mxu0 %v1997
    %2497 = vmatpush1.bf16.msra.mxu0 %v1996
    %2498 = vmatprep.subr.bf16.mxu0 %v2005
    %2499 = vmatpush1.bf16.msra.mxu0 %v2004
    %2500 = vmatprep.subr.bf16.mxu0 %v2013
    %2501 = vmatpush1.bf16.msra.mxu0 %v2012
    %2502 = vmatprep.subr.bf16.mxu0 %v2021
    %2503 = vmatpush1.bf16.msra.mxu0 %v2020
    %2504 = vmatprep.subr.bf16.mxu0 %v2029
    %2505 = vmatpush1.bf16.msra.mxu0 %v2028
    %2506 = vmatprep.subr.bf16.mxu0 %v2037
    %2507 = vmatpush1.bf16.msra.mxu0 %v2036
    %2508 = vmatprep.subr.bf16.mxu0 %v2045
    %2509 = vmatpush1.bf16.msra.mxu0 %v2044
    %2510 = vmatprep.subr.bf16.mxu0 %v2053
    %2511 = vmatpush1.bf16.msra.mxu0 %v2052
    %2512 = vmatprep.subr.bf16.mxu0 %v2061
    %2513 = vmatpush1.bf16.msra.mxu0 %v2060
    %2514 = vmatprep.subr.bf16.mxu0 %v2069
    %2515 = vmatpush1.bf16.msra.mxu0 %v2068
    %2516 = vmatprep.subr.bf16.mxu0 %v2077
    %2517 = vmatpush1.bf16.msra.mxu0 %v2076
    %2518 = vmatprep.subr.bf16.mxu0 %v2085
    %2519 = vmatpush1.bf16.msra.mxu0 %v2084
    %2520 = vmatprep.subr.bf16.mxu0 %v2093
    %2521 = vmatpush1.bf16.msra.mxu0 %v2092
    %2522 = vmatprep.subr.bf16.mxu0 %v2101
    %2523 = vmatpush1.bf16.msra.mxu0 %v2100
    %2524 = vmatprep.mubr.bf16.mxu0 %v911
    %2525 = vmatmul.mubr.bf16.gmra.mrb[0].mxu0 %v910
    %v2526 = vpop.f32.mrb[0].mxu0
    %v2527 = vadd.f32 %v1175, %v2526
    %v2528 = vpop.f32.mrb[0].mxu0
    %v2529 = vadd.f32 %v1179, %v2528
    %v2530 = vpop.f32.mrb[0].mxu0
    %v2531 = vpop.f32.mrb[0].mxu0
    %2532 = vdwg.mxu0
    %2533 = vmatprep.subr.bf16.mxu0 %v2109
    %2534 = vmatpush1.bf16.msra.mxu0 %v2108
    %2535 = vmatprep.subr.bf16.mxu0 %v2117
    %2536 = vmatpush1.bf16.msra.mxu0 %v2116
    %2537 = vmatprep.subr.bf16.mxu0 %v2125
    %2538 = vmatpush1.bf16.msra.mxu0 %v2124
    %2539 = vmatprep.subr.bf16.mxu0 %v2133
    %2540 = vmatpush1.bf16.msra.mxu0 %v2132
    %2541 = vmatprep.subr.bf16.mxu0 %v2141
    %2542 = vmatpush1.bf16.msra.mxu0 %v2140
    %2543 = vmatprep.subr.bf16.mxu0 %v2149
    %2544 = vmatpush1.bf16.msra.mxu0 %v2148
    %2545 = vmatprep.subr.bf16.mxu0 %v2157
    %2546 = vmatpush1.bf16.msra.mxu0 %v2156
    %2547 = vmatprep.subr.bf16.mxu0 %v2165
    %2548 = vmatpush1.bf16.msra.mxu0 %v2164
    %2549 = vmatprep.subr.bf16.mxu0 %v2173
    %2550 = vmatpush1.bf16.msra.mxu0 %v2172
    %2551 = vmatprep.subr.bf16.mxu0 %v2181
    %2552 = vmatpush1.bf16.msra.mxu0 %v2180
    %2553 = vmatprep.subr.bf16.mxu0 %v2189
    %2554 = vmatpush1.bf16.msra.mxu0 %v2188
    %2555 = vmatprep.subr.bf16.mxu0 %v2197
    %2556 = vmatpush1.bf16.msra.mxu0 %v2196
    %2557 = vmatprep.subr.bf16.mxu0 %v2205
    %2558 = vmatpush1.bf16.msra.mxu0 %v2204
    %2559 = vmatprep.subr.bf16.mxu0 %v2213
    %2560 = vmatpush1.bf16.msra.mxu0 %v2212
    %2561 = vmatprep.subr.bf16.mxu0 %v2221
    %2562 = vmatpush1.bf16.msra.mxu0 %v2220
    %2563 = vmatprep.subr.bf16.mxu0 %v2229
    %2564 = vmatpush1.bf16.msra.mxu0 %v2228
    %2565 = vmatprep.mubr.bf16.mxu0 %v913
    %2566 = vmatmul.mubr.bf16.gmra.mrb[0].mxu0 %v912
    %v2567 = vpop.f32.mrb[0].mxu0
    %v2568 = vadd.f32 %v2527, %v2567
    %v2569 = vpop.f32.mrb[0].mxu0
    %v2570 = vadd.f32 %v2529, %v2569
    %v2571 = vpop.f32.mrb[0].mxu0
    %v2572 = vpop.f32.mrb[0].mxu0
    %2573 = vdwg.mxu0
    %2574 = vmatprep.subr.bf16.mxu0 %v1983
    %2575 = vmatpush1.bf16.msra.mxu0 %v1982
    %2576 = vmatprep.subr.bf16.mxu0 %v1991
    %2577 = vmatpush1.bf16.msra.mxu0 %v1990
    %2578 = vmatprep.subr.bf16.mxu0 %v1999
    %2579 = vmatpush1.bf16.msra.mxu0 %v1998
    %2580 = vmatprep.subr.bf16.mxu0 %v2007
    %2581 = vmatpush1.bf16.msra.mxu0 %v2006
    %2582 = vmatprep.subr.bf16.mxu0 %v2015
    %2583 = vmatpush1.bf16.msra.mxu0 %v2014
    %2584 = vmatprep.subr.bf16.mxu0 %v2023
    %2585 = vmatpush1.bf16.msra.mxu0 %v2022
    %2586 = vmatprep.subr.bf16.mxu0 %v2031
    %2587 = vmatpush1.bf16.msra.mxu0 %v2030
    %2588 = vmatprep.subr.bf16.mxu0 %v2039
    %2589 = vmatpush1.bf16.msra.mxu0 %v2038
    %2590 = vmatprep.subr.bf16.mxu0 %v2047
    %2591 = vmatpush1.bf16.msra.mxu0 %v2046
    %2592 = vmatprep.subr.bf16.mxu0 %v2055
    %2593 = vmatpush1.bf16.msra.mxu0 %v2054
    %2594 = vmatprep.subr.bf16.mxu0 %v2063
    %2595 = vmatpush1.bf16.msra.mxu0 %v2062
    %2596 = vmatprep.subr.bf16.mxu0 %v2071
    %2597 = vmatpush1.bf16.msra.mxu0 %v2070
    %2598 = vmatprep.subr.bf16.mxu0 %v2079
    %2599 = vmatpush1.bf16.msra.mxu0 %v2078
    %2600 = vmatprep.subr.bf16.mxu0 %v2087
    %2601 = vmatpush1.bf16.msra.mxu0 %v2086
    %2602 = vmatprep.subr.bf16.mxu0 %v2095
    %2603 = vmatpush1.bf16.msra.mxu0 %v2094
    %2604 = vmatprep.subr.bf16.mxu0 %v2103
    %2605 = vmatpush1.bf16.msra.mxu0 %v2102
    %2606 = vmatprep.mubr.bf16.mxu0 %v911
    %2607 = vmatmul.mubr.bf16.gmra.mrb[0].mxu0 %v910
    %v2608 = vpop.f32.mrb[0].mxu0
    %v2609 = vadd.f32 %v1183, %v2608
    %v2610 = vpop.f32.mrb[0].mxu0
    %v2611 = vadd.f32 %v1187, %v2610
    %v2612 = vpop.f32.mrb[0].mxu0
    %v2613 = vpop.f32.mrb[0].mxu0
    %2614 = vdwg.mxu0
    %2615 = vmatprep.subr.bf16.mxu0 %v2111
    %2616 = vmatpush1.bf16.msra.mxu0 %v2110
    %2617 = vmatprep.subr.bf16.mxu0 %v2119
    %2618 = vmatpush1.bf16.msra.mxu0 %v2118
    %2619 = vmatprep.subr.bf16.mxu0 %v2127
    %2620 = vmatpush1.bf16.msra.mxu0 %v2126
    %2621 = vmatprep.subr.bf16.mxu0 %v2135
    %2622 = vmatpush1.bf16.msra.mxu0 %v2134
    %2623 = vmatprep.subr.bf16.mxu0 %v2143
    %2624 = vmatpush1.bf16.msra.mxu0 %v2142
    %2625 = vmatprep.subr.bf16.mxu0 %v2151
    %2626 = vmatpush1.bf16.msra.mxu0 %v2150
    %2627 = vmatprep.subr.bf16.mxu0 %v2159
    %2628 = vmatpush1.bf16.msra.mxu0 %v2158
    %2629 = vmatprep.subr.bf16.mxu0 %v2167
    %2630 = vmatpush1.bf16.msra.mxu0 %v2166
    %2631 = vmatprep.subr.bf16.mxu0 %v2175
    %2632 = vmatpush1.bf16.msra.mxu0 %v2174
    %2633 = vmatprep.subr.bf16.mxu0 %v2183
    %2634 = vmatpush1.bf16.msra.mxu0 %v2182
    %2635 = vmatprep.subr.bf16.mxu0 %v2191
    %2636 = vmatpush1.bf16.msra.mxu0 %v2190
    %2637 = vmatprep.subr.bf16.mxu0 %v2199
    %2638 = vmatpush1.bf16.msra.mxu0 %v2198
    %2639 = vmatprep.subr.bf16.mxu0 %v2207
    %2640 = vmatpush1.bf16.msra.mxu0 %v2206
    %2641 = vmatprep.subr.bf16.mxu0 %v2215
    %2642 = vmatpush1.bf16.msra.mxu0 %v2214
    %2643 = vmatprep.subr.bf16.mxu0 %v2223
    %2644 = vmatpush1.bf16.msra.mxu0 %v2222
    %2645 = vmatprep.subr.bf16.mxu0 %v2231
    %2646 = vmatpush1.bf16.msra.mxu0 %v2230
    %2647 = vmatprep.mubr.bf16.mxu0 %v913
    %2648 = vmatmul.mubr.bf16.gmra.mrb[0].mxu0 %v912
    %v2649 = vpop.f32.mrb[0].mxu0
    %v2650 = vadd.f32 %v2609, %v2649
    %v2651 = vpop.f32.mrb[0].mxu0
    %v2652 = vadd.f32 %v2611, %v2651
    %v2653 = vpop.f32.mrb[0].mxu0
    %v2654 = vpop.f32.mrb[0].mxu0
    %2655 = vdwg.mxu0
    %2656 = vmatprep.subr.bf16.mxu0 %v1985
    %2657 = vmatpush1.bf16.msra.mxu0 %v1984
    %2658 = vmatprep.subr.bf16.mxu0 %v1993
    %2659 = vmatpush1.bf16.msra.mxu0 %v1992
    %2660 = vmatprep.subr.bf16.mxu0 %v2001
    %2661 = vmatpush1.bf16.msra.mxu0 %v2000
    %2662 = vmatprep.subr.bf16.mxu0 %v2009
    %2663 = vmatpush1.bf16.msra.mxu0 %v2008
    %2664 = vmatprep.subr.bf16.mxu0 %v2017
    %2665 = vmatpush1.bf16.msra.mxu0 %v2016
    %2666 = vmatprep.subr.bf16.mxu0 %v2025
    %2667 = vmatpush1.bf16.msra.mxu0 %v2024
    %2668 = vmatprep.subr.bf16.mxu0 %v2033
    %2669 = vmatpush1.bf16.msra.mxu0 %v2032
    %2670 = vmatprep.subr.bf16.mxu0 %v2041
    %2671 = vmatpush1.bf16.msra.mxu0 %v2040
    %2672 = vmatprep.subr.bf16.mxu0 %v2049
    %2673 = vmatpush1.bf16.msra.mxu0 %v2048
    %2674 = vmatprep.subr.bf16.mxu0 %v2057
    %2675 = vmatpush1.bf16.msra.mxu0 %v2056
    %2676 = vmatprep.subr.bf16.mxu0 %v2065
    %2677 = vmatpush1.bf16.msra.mxu0 %v2064
    %2678 = vmatprep.subr.bf16.mxu0 %v2073
    %2679 = vmatpush1.bf16.msra.mxu0 %v2072
    %2680 = vmatprep.subr.bf16.mxu0 %v2081
    %2681 = vmatpush1.bf16.msra.mxu0 %v2080
    %2682 = vmatprep.subr.bf16.mxu0 %v2089
    %2683 = vmatpush1.bf16.msra.mxu0 %v2088
    %2684 = vmatprep.subr.bf16.mxu0 %v2097
    %2685 = vmatpush1.bf16.msra.mxu0 %v2096
    %2686 = vmatprep.subr.bf16.mxu0 %v2105
    %2687 = vmatpush1.bf16.msra.mxu0 %v2104
    %2688 = vmatprep.mubr.bf16.mxu0 %v911
    %2689 = vmatmul.mubr.bf16.gmra.mrb[0].mxu0 %v910
    %v2690 = vpop.f32.mrb[0].mxu0
    %v2691 = vadd.f32 %v1191, %v2690
    %v2692 = vpop.f32.mrb[0].mxu0
    %v2693 = vadd.f32 %v1195, %v2692
    %v2694 = vpop.f32.mrb[0].mxu0
    %v2695 = vpop.f32.mrb[0].mxu0
    %2696 = vdwg.mxu0
    %2697 = vmatprep.subr.bf16.mxu0 %v2113
    %2698 = vmatpush1.bf16.msra.mxu0 %v2112
    %2699 = vmatprep.subr.bf16.mxu0 %v2121
    %2700 = vmatpush1.bf16.msra.mxu0 %v2120
    %2701 = vmatprep.subr.bf16.mxu0 %v2129
    %2702 = vmatpush1.bf16.msra.mxu0 %v2128
    %2703 = vmatprep.subr.bf16.mxu0 %v2137
    %2704 = vmatpush1.bf16.msra.mxu0 %v2136
    %2705 = vmatprep.subr.bf16.mxu0 %v2145
    %2706 = vmatpush1.bf16.msra.mxu0 %v2144
    %2707 = vmatprep.subr.bf16.mxu0 %v2153
    %2708 = vmatpush1.bf16.msra.mxu0 %v2152
    %2709 = vmatprep.subr.bf16.mxu0 %v2161
    %2710 = vmatpush1.bf16.msra.mxu0 %v2160
    %2711 = vmatprep.subr.bf16.mxu0 %v2169
    %2712 = vmatpush1.bf16.msra.mxu0 %v2168
    %2713 = vmatprep.subr.bf16.mxu0 %v2177
    %2714 = vmatpush1.bf16.msra.mxu0 %v2176
    %2715 = vmatprep.subr.bf16.mxu0 %v2185
    %2716 = vmatpush1.bf16.msra.mxu0 %v2184
    %2717 = vmatprep.subr.bf16.mxu0 %v2193
    %2718 = vmatpush1.bf16.msra.mxu0 %v2192
    %2719 = vmatprep.subr.bf16.mxu0 %v2201
    %2720 = vmatpush1.bf16.msra.mxu0 %v2200
    %2721 = vmatprep.subr.bf16.mxu0 %v2209
    %2722 = vmatpush1.bf16.msra.mxu0 %v2208
    %2723 = vmatprep.subr.bf16.mxu0 %v2217
    %2724 = vmatpush1.bf16.msra.mxu0 %v2216
    %2725 = vmatprep.subr.bf16.mxu0 %v2225
    %2726 = vmatpush1.bf16.msra.mxu0 %v2224
    %2727 = vmatprep.subr.bf16.mxu0 %v2233
    %2728 = vmatpush1.bf16.msra.mxu0 %v2232
    %2729 = vmatprep.mubr.bf16.mxu0 %v913
    %2730 = vmatmul.mubr.bf16.gmra.mrb[0].mxu0 %v912
    %v2731 = vpop.f32.mrb[0].mxu0
    %v2732 = vadd.f32 %v2691, %v2731
    %v2733 = vpop.f32.mrb[0].mxu0
    %v2734 = vadd.f32 %v2693, %v2733
    %v2735 = vpop.f32.mrb[0].mxu0
    %v2736 = vpop.f32.mrb[0].mxu0
    %2737 = vdwg.mxu0
    %2738 = vmatprep.subr.bf16.mxu0 %v1987
    %2739 = vmatpush1.bf16.msra.mxu0 %v1986
    %2740 = vmatprep.subr.bf16.mxu0 %v1995
    %2741 = vmatpush1.bf16.msra.mxu0 %v1994
    %2742 = vmatprep.subr.bf16.mxu0 %v2003
    %2743 = vmatpush1.bf16.msra.mxu0 %v2002
    %2744 = vmatprep.subr.bf16.mxu0 %v2011
    %2745 = vmatpush1.bf16.msra.mxu0 %v2010
    %2746 = vmatprep.subr.bf16.mxu0 %v2019
    %2747 = vmatpush1.bf16.msra.mxu0 %v2018
    %2748 = vmatprep.subr.bf16.mxu0 %v2027
    %2749 = vmatpush1.bf16.msra.mxu0 %v2026
    %2750 = vmatprep.subr.bf16.mxu0 %v2035
    %2751 = vmatpush1.bf16.msra.mxu0 %v2034
    %2752 = vmatprep.subr.bf16.mxu0 %v2043
    %2753 = vmatpush1.bf16.msra.mxu0 %v2042
    %2754 = vmatprep.subr.bf16.mxu0 %v2051
    %2755 = vmatpush1.bf16.msra.mxu0 %v2050
    %2756 = vmatprep.subr.bf16.mxu0 %v2059
    %2757 = vmatpush1.bf16.msra.mxu0 %v2058
    %2758 = vmatprep.subr.bf16.mxu0 %v2067
    %2759 = vmatpush1.bf16.msra.mxu0 %v2066
    %2760 = vmatprep.subr.bf16.mxu0 %v2075
    %2761 = vmatpush1.bf16.msra.mxu0 %v2074
    %2762 = vmatprep.subr.bf16.mxu0 %v2083
    %2763 = vmatpush1.bf16.msra.mxu0 %v2082
    %2764 = vmatprep.subr.bf16.mxu0 %v2091
    %2765 = vmatpush1.bf16.msra.mxu0 %v2090
    %2766 = vmatprep.subr.bf16.mxu0 %v2099
    %2767 = vmatpush1.bf16.msra.mxu0 %v2098
    %2768 = vmatprep.subr.bf16.mxu0 %v2107
    %2769 = vmatpush1.bf16.msra.mxu0 %v2106
    %2770 = vmatprep.mubr.bf16.mxu0 %v911
    %2771 = vmatmul.mubr.bf16.gmra.mrb[0].mxu0 %v910
    %v2772 = vpop.f32.mrb[0].mxu0
    %v2773 = vadd.f32 %v1199, %v2772
    %v2774 = vpop.f32.mrb[0].mxu0
    %v2775 = vadd.f32 %v1203, %v2774
    %v2776 = vpop.f32.mrb[0].mxu0
    %v2777 = vpop.f32.mrb[0].mxu0
    %2778 = vdwg.mxu0
    %2779 = vmatprep.subr.bf16.mxu0 %v2115
    %2780 = vmatpush1.bf16.msra.mxu0 %v2114
    %2781 = vmatprep.subr.bf16.mxu0 %v2123
    %2782 = vmatpush1.bf16.msra.mxu0 %v2122
    %2783 = vmatprep.subr.bf16.mxu0 %v2131
    %2784 = vmatpush1.bf16.msra.mxu0 %v2130
    %2785 = vmatprep.subr.bf16.mxu0 %v2139
    %2786 = vmatpush1.bf16.msra.mxu0 %v2138
    %2787 = vmatprep.subr.bf16.mxu0 %v2147
    %2788 = vmatpush1.bf16.msra.mxu0 %v2146
    %2789 = vmatprep.subr.bf16.mxu0 %v2155
    %2790 = vmatpush1.bf16.msra.mxu0 %v2154
    %2791 = vmatprep.subr.bf16.mxu0 %v2163
    %2792 = vmatpush1.bf16.msra.mxu0 %v2162
    %2793 = vmatprep.subr.bf16.mxu0 %v2171
    %2794 = vmatpush1.bf16.msra.mxu0 %v2170
    %2795 = vmatprep.subr.bf16.mxu0 %v2179
    %2796 = vmatpush1.bf16.msra.mxu0 %v2178
    %2797 = vmatprep.subr.bf16.mxu0 %v2187
    %2798 = vmatpush1.bf16.msra.mxu0 %v2186
    %2799 = vmatprep.subr.bf16.mxu0 %v2195
    %2800 = vmatpush1.bf16.msra.mxu0 %v2194
    %2801 = vmatprep.subr.bf16.mxu0 %v2203
    %2802 = vmatpush1.bf16.msra.mxu0 %v2202
    %2803 = vmatprep.subr.bf16.mxu0 %v2211
    %2804 = vmatpush1.bf16.msra.mxu0 %v2210
    %2805 = vmatprep.subr.bf16.mxu0 %v2219
    %2806 = vmatpush1.bf16.msra.mxu0 %v2218
    %2807 = vmatprep.subr.bf16.mxu0 %v2227
    %2808 = vmatpush1.bf16.msra.mxu0 %v2226
    %2809 = vmatprep.subr.bf16.mxu0 %v2235
    %2810 = vmatpush1.bf16.msra.mxu0 %v2234
    %2811 = vmatprep.mubr.bf16.mxu0 %v913
    %2812 = vmatmul.mubr.bf16.gmra.mrb[0].mxu0 %v912
    %v2813 = vpop.f32.mrb[0].mxu0
    %v2814 = vadd.f32 %v2773, %v2813
    %v2815 = vpop.f32.mrb[0].mxu0
    %v2816 = vadd.f32 %v2775, %v2815
    %v2817 = vpop.f32.mrb[0].mxu0
    %v2818 = vpop.f32.mrb[0].mxu0
    %2819 = vdwg.mxu0
    %v2820 = vmax.f32 %v2568, 0.0
    %v2821 = vmax.f32 %v2570, 0.0
    %v2822 = vmax.f32 %v2650, 0.0
    %v2823 = vmax.f32 %v2652, 0.0
    %v2824 = vmax.f32 %v2732, 0.0
    %v2825 = vmax.f32 %v2734, 0.0
    %v2826 = vmax.f32 %v2814, 0.0
    %v2827 = vmax.f32 %v2816, 0.0
    %v2828 = vpack.c.bf16 %v2820, %v2820
    %v2829 = vpack.c.bf16 %v2821, %v2821
    %v2830 = vpack.c.bf16 %v2822, %v2822
    %v2831 = vpack.c.bf16 %v2823, %v2823
    %v2832 = vpack.c.bf16 %v2824, %v2824
    %v2833 = vpack.c.bf16 %v2825, %v2825
    %v2834 = vpack.c.bf16 %v2826, %v2826
    %v2835 = vpack.c.bf16 %v2827, %v2827
    %v2836 = vld [vmem:[#allocation13] sm:$0xff]
    %v2837 = vld [vmem:[#allocation13 + $0x8] sm:$0xff]
    %v2838 = vld [vmem:[#allocation13 + $0x10] sm:$0xff]
    %v2839 = vld [vmem:[#allocation13 + $0x18] sm:$0xff]
    %v2840 = vld [vmem:[#allocation13 + $0x20] sm:$0xff]
    %v2841 = vld [vmem:[#allocation13 + $0x28] sm:$0xff]
    %v2842 = vld [vmem:[#allocation13 + $0x30] sm:$0xff]
    %v2843 = vld [vmem:[#allocation13 + $0x38] sm:$0xff]
    %v2844 = vld [vmem:[#allocation13 + $0x40] sm:$0xff]
    %v2845 = vld [vmem:[#allocation13 + $0x48] sm:$0xff]
    %v2846 = vld [vmem:[#allocation13 + $0x50] sm:$0xff]
    %v2847 = vld [vmem:[#allocation13 + $0x58] sm:$0xff]
    %v2848 = vld [vmem:[#allocation13 + $0x60] sm:$0xff]
    %v2849 = vld [vmem:[#allocation13 + $0x68] sm:$0xff]
    %v2850 = vld [vmem:[#allocation13 + $0x70] sm:$0xff]
    %v2851 = vld [vmem:[#allocation13 + $0x78] sm:$0xff]
    %v2852 = vld [vmem:[#allocation13 + $0x80] sm:$0xff]
    %v2853 = vld [vmem:[#allocation13 + $0x88] sm:$0xff]
    %v2854 = vld [vmem:[#allocation13 + $0x90] sm:$0xff]
    %v2855 = vld [vmem:[#allocation13 + $0x98] sm:$0xff]
    %v2856 = vld [vmem:[#allocation13 + $0xa0] sm:$0xff]
    %v2857 = vld [vmem:[#allocation13 + $0xa8] sm:$0xff]
    %v2858 = vld [vmem:[#allocation13 + $0xb0] sm:$0xff]
    %v2859 = vld [vmem:[#allocation13 + $0xb8] sm:$0xff]
    %v2860 = vld [vmem:[#allocation13 + $0xc0] sm:$0xff]
    %v2861 = vld [vmem:[#allocation13 + $0xc8] sm:$0xff]
    %v2862 = vld [vmem:[#allocation13 + $0xd0] sm:$0xff]
    %v2863 = vld [vmem:[#allocation13 + $0xd8] sm:$0xff]
    %v2864 = vld [vmem:[#allocation13 + $0xe0] sm:$0xff]
    %v2865 = vld [vmem:[#allocation13 + $0xe8] sm:$0xff]
    %v2866 = vld [vmem:[#allocation13 + $0xf0] sm:$0xff]
    %v2867 = vld [vmem:[#allocation13 + $0xf8] sm:$0xff]
    %v2868 = vld [vmem:[#allocation13 + $0x100] sm:$0xff]
    %v2869 = vld [vmem:[#allocation13 + $0x108] sm:$0xff]
    %v2870 = vld [vmem:[#allocation13 + $0x110] sm:$0xff]
    %v2871 = vld [vmem:[#allocation13 + $0x118] sm:$0xff]
    %v2872 = vld [vmem:[#allocation13 + $0x120] sm:$0xff]
    %v2873 = vld [vmem:[#allocation13 + $0x128] sm:$0xff]
    %v2874 = vld [vmem:[#allocation13 + $0x130] sm:$0xff]
    %v2875 = vld [vmem:[#allocation13 + $0x138] sm:$0xff]
    %v2876 = vld [vmem:[#allocation13 + $0x140] sm:$0xff]
    %v2877 = vld [vmem:[#allocation13 + $0x148] sm:$0xff]
    %v2878 = vld [vmem:[#allocation13 + $0x150] sm:$0xff]
    %v2879 = vld [vmem:[#allocation13 + $0x158] sm:$0xff]
    %v2880 = vld [vmem:[#allocation13 + $0x160] sm:$0xff]
    %v2881 = vld [vmem:[#allocation13 + $0x168] sm:$0xff]
    %v2882 = vld [vmem:[#allocation13 + $0x170] sm:$0xff]
    %v2883 = vld [vmem:[#allocation13 + $0x178] sm:$0xff]
    %v2884 = vld [vmem:[#allocation13 + $0x180] sm:$0xff]
    %v2885 = vld [vmem:[#allocation13 + $0x188] sm:$0xff]
    %v2886 = vld [vmem:[#allocation13 + $0x190] sm:$0xff]
    %v2887 = vld [vmem:[#allocation13 + $0x198] sm:$0xff]
    %v2888 = vld [vmem:[#allocation13 + $0x1a0] sm:$0xff]
    %v2889 = vld [vmem:[#allocation13 + $0x1a8] sm:$0xff]
    %v2890 = vld [vmem:[#allocation13 + $0x1b0] sm:$0xff]
    %v2891 = vld [vmem:[#allocation13 + $0x1b8] sm:$0xff]
    %v2892 = vld [vmem:[#allocation13 + $0x1c0] sm:$0xff]
    %v2893 = vld [vmem:[#allocation13 + $0x1c8] sm:$0xff]
    %v2894 = vld [vmem:[#allocation13 + $0x1d0] sm:$0xff]
    %v2895 = vld [vmem:[#allocation13 + $0x1d8] sm:$0xff]
    %v2896 = vld [vmem:[#allocation13 + $0x1e0] sm:$0xff]
    %v2897 = vld [vmem:[#allocation13 + $0x1e8] sm:$0xff]
    %v2898 = vld [vmem:[#allocation13 + $0x1f0] sm:$0xff]
    %v2899 = vld [vmem:[#allocation13 + $0x1f8] sm:$0xff]
    %v2900 = vld [vmem:[#allocation13 + $0x200] sm:$0xff]
    %v2901 = vld [vmem:[#allocation13 + $0x208] sm:$0xff]
    %v2902 = vld [vmem:[#allocation13 + $0x210] sm:$0xff]
    %v2903 = vld [vmem:[#allocation13 + $0x218] sm:$0xff]
    %v2904 = vld [vmem:[#allocation13 + $0x220] sm:$0xff]
    %v2905 = vld [vmem:[#allocation13 + $0x228] sm:$0xff]
    %v2906 = vld [vmem:[#allocation13 + $0x230] sm:$0xff]
    %v2907 = vld [vmem:[#allocation13 + $0x238] sm:$0xff]
    %v2908 = vld [vmem:[#allocation13 + $0x240] sm:$0xff]
    %v2909 = vld [vmem:[#allocation13 + $0x248] sm:$0xff]
    %v2910 = vld [vmem:[#allocation13 + $0x250] sm:$0xff]
    %v2911 = vld [vmem:[#allocation13 + $0x258] sm:$0xff]
    %v2912 = vld [vmem:[#allocation13 + $0x260] sm:$0xff]
    %v2913 = vld [vmem:[#allocation13 + $0x268] sm:$0xff]
    %v2914 = vld [vmem:[#allocation13 + $0x270] sm:$0xff]
    %v2915 = vld [vmem:[#allocation13 + $0x278] sm:$0xff]
    %v2916 = vld [vmem:[#allocation13 + $0x280] sm:$0xff]
    %v2917 = vld [vmem:[#allocation13 + $0x288] sm:$0xff]
    %v2918 = vld [vmem:[#allocation13 + $0x290] sm:$0xff]
    %v2919 = vld [vmem:[#allocation13 + $0x298] sm:$0xff]
    %v2920 = vld [vmem:[#allocation13 + $0x2a0] sm:$0xff]
    %v2921 = vld [vmem:[#allocation13 + $0x2a8] sm:$0xff]
    %v2922 = vld [vmem:[#allocation13 + $0x2b0] sm:$0xff]
    %v2923 = vld [vmem:[#allocation13 + $0x2b8] sm:$0xff]
    %v2924 = vld [vmem:[#allocation13 + $0x2c0] sm:$0xff]
    %v2925 = vld [vmem:[#allocation13 + $0x2c8] sm:$0xff]
    %v2926 = vld [vmem:[#allocation13 + $0x2d0] sm:$0xff]
    %v2927 = vld [vmem:[#allocation13 + $0x2d8] sm:$0xff]
    %v2928 = vld [vmem:[#allocation13 + $0x2e0] sm:$0xff]
    %v2929 = vld [vmem:[#allocation13 + $0x2e8] sm:$0xff]
    %v2930 = vld [vmem:[#allocation13 + $0x2f0] sm:$0xff]
    %v2931 = vld [vmem:[#allocation13 + $0x2f8] sm:$0xff]
    %v2932 = vld [vmem:[#allocation13 + $0x300] sm:$0xff]
    %v2933 = vld [vmem:[#allocation13 + $0x308] sm:$0xff]
    %v2934 = vld [vmem:[#allocation13 + $0x310] sm:$0xff]
    %v2935 = vld [vmem:[#allocation13 + $0x318] sm:$0xff]
    %v2936 = vld [vmem:[#allocation13 + $0x320] sm:$0xff]
    %v2937 = vld [vmem:[#allocation13 + $0x328] sm:$0xff]
    %v2938 = vld [vmem:[#allocation13 + $0x330] sm:$0xff]
    %v2939 = vld [vmem:[#allocation13 + $0x338] sm:$0xff]
    %v2940 = vld [vmem:[#allocation13 + $0x340] sm:$0xff]
    %v2941 = vld [vmem:[#allocation13 + $0x348] sm:$0xff]
    %v2942 = vld [vmem:[#allocation13 + $0x350] sm:$0xff]
    %v2943 = vld [vmem:[#allocation13 + $0x358] sm:$0xff]
    %v2944 = vld [vmem:[#allocation13 + $0x360] sm:$0xff]
    %v2945 = vld [vmem:[#allocation13 + $0x368] sm:$0xff]
    %v2946 = vld [vmem:[#allocation13 + $0x370] sm:$0xff]
    %v2947 = vld [vmem:[#allocation13 + $0x378] sm:$0xff]
    %v2948 = vld [vmem:[#allocation13 + $0x380] sm:$0xff]
    %v2949 = vld [vmem:[#allocation13 + $0x388] sm:$0xff]
    %v2950 = vld [vmem:[#allocation13 + $0x390] sm:$0xff]
    %v2951 = vld [vmem:[#allocation13 + $0x398] sm:$0xff]
    %v2952 = vld [vmem:[#allocation13 + $0x3a0] sm:$0xff]
    %v2953 = vld [vmem:[#allocation13 + $0x3a8] sm:$0xff]
    %v2954 = vld [vmem:[#allocation13 + $0x3b0] sm:$0xff]
    %v2955 = vld [vmem:[#allocation13 + $0x3b8] sm:$0xff]
    %v2956 = vld [vmem:[#allocation13 + $0x3c0] sm:$0xff]
    %v2957 = vld [vmem:[#allocation13 + $0x3c8] sm:$0xff]
    %v2958 = vld [vmem:[#allocation13 + $0x3d0] sm:$0xff]
    %v2959 = vld [vmem:[#allocation13 + $0x3d8] sm:$0xff]
    %v2960 = vld [vmem:[#allocation13 + $0x3e0] sm:$0xff]
    %v2961 = vld [vmem:[#allocation13 + $0x3e8] sm:$0xff]
    %v2962 = vld [vmem:[#allocation13 + $0x3f0] sm:$0xff]
    %v2963 = vld [vmem:[#allocation13 + $0x3f8] sm:$0xff]
    %v2964 = vld [vmem:[#allocation13 + $0x400] sm:$0xff]
    %v2965 = vld [vmem:[#allocation13 + $0x408] sm:$0xff]
    %v2966 = vld [vmem:[#allocation13 + $0x410] sm:$0xff]
    %v2967 = vld [vmem:[#allocation13 + $0x418] sm:$0xff]
    %v2968 = vld [vmem:[#allocation13 + $0x420] sm:$0xff]
    %v2969 = vld [vmem:[#allocation13 + $0x428] sm:$0xff]
    %v2970 = vld [vmem:[#allocation13 + $0x430] sm:$0xff]
    %v2971 = vld [vmem:[#allocation13 + $0x438] sm:$0xff]
    %v2972 = vld [vmem:[#allocation13 + $0x440] sm:$0xff]
    %v2973 = vld [vmem:[#allocation13 + $0x448] sm:$0xff]
    %v2974 = vld [vmem:[#allocation13 + $0x450] sm:$0xff]
    %v2975 = vld [vmem:[#allocation13 + $0x458] sm:$0xff]
    %v2976 = vld [vmem:[#allocation13 + $0x460] sm:$0xff]
    %v2977 = vld [vmem:[#allocation13 + $0x468] sm:$0xff]
    %v2978 = vld [vmem:[#allocation13 + $0x470] sm:$0xff]
    %v2979 = vld [vmem:[#allocation13 + $0x478] sm:$0xff]
    %v2980 = vld [vmem:[#allocation13 + $0x480] sm:$0xff]
    %v2981 = vld [vmem:[#allocation13 + $0x488] sm:$0xff]
    %v2982 = vld [vmem:[#allocation13 + $0x490] sm:$0xff]
    %v2983 = vld [vmem:[#allocation13 + $0x498] sm:$0xff]
    %v2984 = vld [vmem:[#allocation13 + $0x4a0] sm:$0xff]
    %v2985 = vld [vmem:[#allocation13 + $0x4a8] sm:$0xff]
    %v2986 = vld [vmem:[#allocation13 + $0x4b0] sm:$0xff]
    %v2987 = vld [vmem:[#allocation13 + $0x4b8] sm:$0xff]
    %v2988 = vld [vmem:[#allocation13 + $0x4c0] sm:$0xff]
    %v2989 = vld [vmem:[#allocation13 + $0x4c8] sm:$0xff]
    %v2990 = vld [vmem:[#allocation13 + $0x4d0] sm:$0xff]
    %v2991 = vld [vmem:[#allocation13 + $0x4d8] sm:$0xff]
    %v2992 = vld [vmem:[#allocation13 + $0x4e0] sm:$0xff]
    %v2993 = vld [vmem:[#allocation13 + $0x4e8] sm:$0xff]
    %v2994 = vld [vmem:[#allocation13 + $0x4f0] sm:$0xff]
    %v2995 = vld [vmem:[#allocation13 + $0x4f8] sm:$0xff]
    %v2996 = vld [vmem:[#allocation13 + $0x500] sm:$0xff]
    %v2997 = vld [vmem:[#allocation13 + $0x508] sm:$0xff]
    %v2998 = vld [vmem:[#allocation13 + $0x510] sm:$0xff]
    %v2999 = vld [vmem:[#allocation13 + $0x518] sm:$0xff]
    %v3000 = vld [vmem:[#allocation13 + $0x520] sm:$0xff]
    %v3001 = vld [vmem:[#allocation13 + $0x528] sm:$0xff]
    %v3002 = vld [vmem:[#allocation13 + $0x530] sm:$0xff]
    %v3003 = vld [vmem:[#allocation13 + $0x538] sm:$0xff]
    %v3004 = vld [vmem:[#allocation13 + $0x540] sm:$0xff]
    %v3005 = vld [vmem:[#allocation13 + $0x548] sm:$0xff]
    %v3006 = vld [vmem:[#allocation13 + $0x550] sm:$0xff]
    %v3007 = vld [vmem:[#allocation13 + $0x558] sm:$0xff]
    %v3008 = vld [vmem:[#allocation13 + $0x560] sm:$0xff]
    %v3009 = vld [vmem:[#allocation13 + $0x568] sm:$0xff]
    %v3010 = vld [vmem:[#allocation13 + $0x570] sm:$0xff]
    %v3011 = vld [vmem:[#allocation13 + $0x578] sm:$0xff]
    %v3012 = vld [vmem:[#allocation13 + $0x580] sm:$0xff]
    %v3013 = vld [vmem:[#allocation13 + $0x588] sm:$0xff]
    %v3014 = vld [vmem:[#allocation13 + $0x590] sm:$0xff]
    %v3015 = vld [vmem:[#allocation13 + $0x598] sm:$0xff]
    %v3016 = vld [vmem:[#allocation13 + $0x5a0] sm:$0xff]
    %v3017 = vld [vmem:[#allocation13 + $0x5a8] sm:$0xff]
    %v3018 = vld [vmem:[#allocation13 + $0x5b0] sm:$0xff]
    %v3019 = vld [vmem:[#allocation13 + $0x5b8] sm:$0xff]
    %v3020 = vld [vmem:[#allocation13 + $0x5c0] sm:$0xff]
    %v3021 = vld [vmem:[#allocation13 + $0x5c8] sm:$0xff]
    %v3022 = vld [vmem:[#allocation13 + $0x5d0] sm:$0xff]
    %v3023 = vld [vmem:[#allocation13 + $0x5d8] sm:$0xff]
    %v3024 = vld [vmem:[#allocation13 + $0x5e0] sm:$0xff]
    %v3025 = vld [vmem:[#allocation13 + $0x5e8] sm:$0xff]
    %v3026 = vld [vmem:[#allocation13 + $0x5f0] sm:$0xff]
    %v3027 = vld [vmem:[#allocation13 + $0x5f8] sm:$0xff]
    %v3028 = vld [vmem:[#allocation13 + $0x600] sm:$0xff]
    %v3029 = vld [vmem:[#allocation13 + $0x608] sm:$0xff]
    %v3030 = vld [vmem:[#allocation13 + $0x610] sm:$0xff]
    %v3031 = vld [vmem:[#allocation13 + $0x618] sm:$0xff]
    %v3032 = vld [vmem:[#allocation13 + $0x620] sm:$0xff]
    %v3033 = vld [vmem:[#allocation13 + $0x628] sm:$0xff]
    %v3034 = vld [vmem:[#allocation13 + $0x630] sm:$0xff]
    %v3035 = vld [vmem:[#allocation13 + $0x638] sm:$0xff]
    %v3036 = vld [vmem:[#allocation13 + $0x640] sm:$0xff]
    %v3037 = vld [vmem:[#allocation13 + $0x648] sm:$0xff]
    %v3038 = vld [vmem:[#allocation13 + $0x650] sm:$0xff]
    %v3039 = vld [vmem:[#allocation13 + $0x658] sm:$0xff]
    %v3040 = vld [vmem:[#allocation13 + $0x660] sm:$0xff]
    %v3041 = vld [vmem:[#allocation13 + $0x668] sm:$0xff]
    %v3042 = vld [vmem:[#allocation13 + $0x670] sm:$0xff]
    %v3043 = vld [vmem:[#allocation13 + $0x678] sm:$0xff]
    %v3044 = vld [vmem:[#allocation13 + $0x680] sm:$0xff]
    %v3045 = vld [vmem:[#allocation13 + $0x688] sm:$0xff]
    %v3046 = vld [vmem:[#allocation13 + $0x690] sm:$0xff]
    %v3047 = vld [vmem:[#allocation13 + $0x698] sm:$0xff]
    %v3048 = vld [vmem:[#allocation13 + $0x6a0] sm:$0xff]
    %v3049 = vld [vmem:[#allocation13 + $0x6a8] sm:$0xff]
    %v3050 = vld [vmem:[#allocation13 + $0x6b0] sm:$0xff]
    %v3051 = vld [vmem:[#allocation13 + $0x6b8] sm:$0xff]
    %v3052 = vld [vmem:[#allocation13 + $0x6c0] sm:$0xff]
    %v3053 = vld [vmem:[#allocation13 + $0x6c8] sm:$0xff]
    %v3054 = vld [vmem:[#allocation13 + $0x6d0] sm:$0xff]
    %v3055 = vld [vmem:[#allocation13 + $0x6d8] sm:$0xff]
    %v3056 = vld [vmem:[#allocation13 + $0x6e0] sm:$0xff]
    %v3057 = vld [vmem:[#allocation13 + $0x6e8] sm:$0xff]
    %v3058 = vld [vmem:[#allocation13 + $0x6f0] sm:$0xff]
    %v3059 = vld [vmem:[#allocation13 + $0x6f8] sm:$0xff]
    %v3060 = vld [vmem:[#allocation13 + $0x700] sm:$0xff]
    %v3061 = vld [vmem:[#allocation13 + $0x708] sm:$0xff]
    %v3062 = vld [vmem:[#allocation13 + $0x710] sm:$0xff]
    %v3063 = vld [vmem:[#allocation13 + $0x718] sm:$0xff]
    %v3064 = vld [vmem:[#allocation13 + $0x720] sm:$0xff]
    %v3065 = vld [vmem:[#allocation13 + $0x728] sm:$0xff]
    %v3066 = vld [vmem:[#allocation13 + $0x730] sm:$0xff]
    %v3067 = vld [vmem:[#allocation13 + $0x738] sm:$0xff]
    %v3068 = vld [vmem:[#allocation13 + $0x740] sm:$0xff]
    %v3069 = vld [vmem:[#allocation13 + $0x748] sm:$0xff]
    %v3070 = vld [vmem:[#allocation13 + $0x750] sm:$0xff]
    %v3071 = vld [vmem:[#allocation13 + $0x758] sm:$0xff]
    %v3072 = vld [vmem:[#allocation13 + $0x760] sm:$0xff]
    %v3073 = vld [vmem:[#allocation13 + $0x768] sm:$0xff]
    %v3074 = vld [vmem:[#allocation13 + $0x770] sm:$0xff]
    %v3075 = vld [vmem:[#allocation13 + $0x778] sm:$0xff]
    %v3076 = vld [vmem:[#allocation13 + $0x780] sm:$0xff]
    %v3077 = vld [vmem:[#allocation13 + $0x788] sm:$0xff]
    %v3078 = vld [vmem:[#allocation13 + $0x790] sm:$0xff]
    %v3079 = vld [vmem:[#allocation13 + $0x798] sm:$0xff]
    %v3080 = vld [vmem:[#allocation13 + $0x7a0] sm:$0xff]
    %v3081 = vld [vmem:[#allocation13 + $0x7a8] sm:$0xff]
    %v3082 = vld [vmem:[#allocation13 + $0x7b0] sm:$0xff]
    %v3083 = vld [vmem:[#allocation13 + $0x7b8] sm:$0xff]
    %v3084 = vld [vmem:[#allocation13 + $0x7c0] sm:$0xff]
    %v3085 = vld [vmem:[#allocation13 + $0x7c8] sm:$0xff]
    %v3086 = vld [vmem:[#allocation13 + $0x7d0] sm:$0xff]
    %v3087 = vld [vmem:[#allocation13 + $0x7d8] sm:$0xff]
    %v3088 = vld [vmem:[#allocation13 + $0x7e0] sm:$0xff]
    %v3089 = vld [vmem:[#allocation13 + $0x7e8] sm:$0xff]
    %v3090 = vld [vmem:[#allocation13 + $0x7f0] sm:$0xff]
    %v3091 = vld [vmem:[#allocation13 + $0x7f8] sm:$0xff]
    %v3092 = vld [vmem:[%s10] sm:$0xf]
    %v3094 = vlaneseq
    %v3095 = vshrl.u32 %v3094, 7
    %v3096 = vsub.s32 0, %v3095
    %v3097 = vrot.slane %v3092, %v3096
    %v3098 = vlaneseq
    %v3099 = vshrl.u32 %v3098, 7
    %v3100 = vsub.s32 1, %v3099
    %v3101 = vrot.slane %v3092, %v3100
    %v3102 = vlaneseq
    %v3103 = vshrl.u32 %v3102, 7
    %v3104 = vsub.s32 2, %v3103
    %v3105 = vrot.slane %v3092, %v3104
    %v3106 = vlaneseq
    %v3107 = vshrl.u32 %v3106, 7
    %v3108 = vsub.s32 3, %v3107
    %v3109 = vrot.slane %v3092, %v3108
    %v3370 = vunpack.c.l.b16 %v2836
    %v3371 = vunpack.c.h.b16 %v2836
    %v3372 = vunpack.c.l.b16 %v2837
    %v3373 = vunpack.c.h.b16 %v2837
    %v3374 = vunpack.c.l.b16 %v2838
    %v3375 = vunpack.c.h.b16 %v2838
    %v3376 = vunpack.c.l.b16 %v2839
    %v3377 = vunpack.c.h.b16 %v2839
    %v3378 = vunpack.c.l.b16 %v2840
    %v3379 = vunpack.c.h.b16 %v2840
    %v3380 = vunpack.c.l.b16 %v2841
    %v3381 = vunpack.c.h.b16 %v2841
    %v3382 = vunpack.c.l.b16 %v2842
    %v3383 = vunpack.c.h.b16 %v2842
    %v3384 = vunpack.c.l.b16 %v2843
    %v3385 = vunpack.c.h.b16 %v2843
    %v3386 = vunpack.c.l.b16 %v2844
    %v3387 = vunpack.c.h.b16 %v2844
    %v3388 = vunpack.c.l.b16 %v2845
    %v3389 = vunpack.c.h.b16 %v2845
    %v3390 = vunpack.c.l.b16 %v2846
    %v3391 = vunpack.c.h.b16 %v2846
    %v3392 = vunpack.c.l.b16 %v2847
    %v3393 = vunpack.c.h.b16 %v2847
    %v3394 = vunpack.c.l.b16 %v2848
    %v3395 = vunpack.c.h.b16 %v2848
    %v3396 = vunpack.c.l.b16 %v2849
    %v3397 = vunpack.c.h.b16 %v2849
    %v3398 = vunpack.c.l.b16 %v2850
    %v3399 = vunpack.c.h.b16 %v2850
    %v3400 = vunpack.c.l.b16 %v2851
    %v3401 = vunpack.c.h.b16 %v2851
    %v3402 = vunpack.c.l.b16 %v2852
    %v3403 = vunpack.c.h.b16 %v2852
    %v3404 = vunpack.c.l.b16 %v2853
    %v3405 = vunpack.c.h.b16 %v2853
    %v3406 = vunpack.c.l.b16 %v2854
    %v3407 = vunpack.c.h.b16 %v2854
    %v3408 = vunpack.c.l.b16 %v2855
    %v3409 = vunpack.c.h.b16 %v2855
    %v3410 = vunpack.c.l.b16 %v2856
    %v3411 = vunpack.c.h.b16 %v2856
    %v3412 = vunpack.c.l.b16 %v2857
    %v3413 = vunpack.c.h.b16 %v2857
    %v3414 = vunpack.c.l.b16 %v2858
    %v3415 = vunpack.c.h.b16 %v2858
    %v3416 = vunpack.c.l.b16 %v2859
    %v3417 = vunpack.c.h.b16 %v2859
    %v3418 = vunpack.c.l.b16 %v2860
    %v3419 = vunpack.c.h.b16 %v2860
    %v3420 = vunpack.c.l.b16 %v2861
    %v3421 = vunpack.c.h.b16 %v2861
    %v3422 = vunpack.c.l.b16 %v2862
    %v3423 = vunpack.c.h.b16 %v2862
    %v3424 = vunpack.c.l.b16 %v2863
    %v3425 = vunpack.c.h.b16 %v2863
    %v3426 = vunpack.c.l.b16 %v2864
    %v3427 = vunpack.c.h.b16 %v2864
    %v3428 = vunpack.c.l.b16 %v2865
    %v3429 = vunpack.c.h.b16 %v2865
    %v3430 = vunpack.c.l.b16 %v2866
    %v3431 = vunpack.c.h.b16 %v2866
    %v3432 = vunpack.c.l.b16 %v2867
    %v3433 = vunpack.c.h.b16 %v2867
    %v3434 = vunpack.c.l.b16 %v2868
    %v3435 = vunpack.c.h.b16 %v2868
    %v3436 = vunpack.c.l.b16 %v2869
    %v3437 = vunpack.c.h.b16 %v2869
    %v3438 = vunpack.c.l.b16 %v2870
    %v3439 = vunpack.c.h.b16 %v2870
    %v3440 = vunpack.c.l.b16 %v2871
    %v3441 = vunpack.c.h.b16 %v2871
    %v3442 = vunpack.c.l.b16 %v2872
    %v3443 = vunpack.c.h.b16 %v2872
    %v3444 = vunpack.c.l.b16 %v2873
    %v3445 = vunpack.c.h.b16 %v2873
    %v3446 = vunpack.c.l.b16 %v2874
    %v3447 = vunpack.c.h.b16 %v2874
    %v3448 = vunpack.c.l.b16 %v2875
    %v3449 = vunpack.c.h.b16 %v2875
    %v3450 = vunpack.c.l.b16 %v2876
    %v3451 = vunpack.c.h.b16 %v2876
    %v3452 = vunpack.c.l.b16 %v2877
    %v3453 = vunpack.c.h.b16 %v2877
    %v3454 = vunpack.c.l.b16 %v2878
    %v3455 = vunpack.c.h.b16 %v2878
    %v3456 = vunpack.c.l.b16 %v2879
    %v3457 = vunpack.c.h.b16 %v2879
    %v3458 = vunpack.c.l.b16 %v2880
    %v3459 = vunpack.c.h.b16 %v2880
    %v3460 = vunpack.c.l.b16 %v2881
    %v3461 = vunpack.c.h.b16 %v2881
    %v3462 = vunpack.c.l.b16 %v2882
    %v3463 = vunpack.c.h.b16 %v2882
    %v3464 = vunpack.c.l.b16 %v2883
    %v3465 = vunpack.c.h.b16 %v2883
    %v3466 = vunpack.c.l.b16 %v2884
    %v3467 = vunpack.c.h.b16 %v2884
    %v3468 = vunpack.c.l.b16 %v2885
    %v3469 = vunpack.c.h.b16 %v2885
    %v3470 = vunpack.c.l.b16 %v2886
    %v3471 = vunpack.c.h.b16 %v2886
    %v3472 = vunpack.c.l.b16 %v2887
    %v3473 = vunpack.c.h.b16 %v2887
    %v3474 = vunpack.c.l.b16 %v2888
    %v3475 = vunpack.c.h.b16 %v2888
    %v3476 = vunpack.c.l.b16 %v2889
    %v3477 = vunpack.c.h.b16 %v2889
    %v3478 = vunpack.c.l.b16 %v2890
    %v3479 = vunpack.c.h.b16 %v2890
    %v3480 = vunpack.c.l.b16 %v2891
    %v3481 = vunpack.c.h.b16 %v2891
    %v3482 = vunpack.c.l.b16 %v2892
    %v3483 = vunpack.c.h.b16 %v2892
    %v3484 = vunpack.c.l.b16 %v2893
    %v3485 = vunpack.c.h.b16 %v2893
    %v3486 = vunpack.c.l.b16 %v2894
    %v3487 = vunpack.c.h.b16 %v2894
    %v3488 = vunpack.c.l.b16 %v2895
    %v3489 = vunpack.c.h.b16 %v2895
    %v3490 = vunpack.c.l.b16 %v2896
    %v3491 = vunpack.c.h.b16 %v2896
    %v3492 = vunpack.c.l.b16 %v2897
    %v3493 = vunpack.c.h.b16 %v2897
    %v3494 = vunpack.c.l.b16 %v2898
    %v3495 = vunpack.c.h.b16 %v2898
    %v3496 = vunpack.c.l.b16 %v2899
    %v3497 = vunpack.c.h.b16 %v2899
    %v3498 = vunpack.c.l.b16 %v2900
    %v3499 = vunpack.c.h.b16 %v2900
    %v3500 = vunpack.c.l.b16 %v2901
    %v3501 = vunpack.c.h.b16 %v2901
    %v3502 = vunpack.c.l.b16 %v2902
    %v3503 = vunpack.c.h.b16 %v2902
    %v3504 = vunpack.c.l.b16 %v2903
    %v3505 = vunpack.c.h.b16 %v2903
    %v3506 = vunpack.c.l.b16 %v2904
    %v3507 = vunpack.c.h.b16 %v2904
    %v3508 = vunpack.c.l.b16 %v2905
    %v3509 = vunpack.c.h.b16 %v2905
    %v3510 = vunpack.c.l.b16 %v2906
    %v3511 = vunpack.c.h.b16 %v2906
    %v3512 = vunpack.c.l.b16 %v2907
    %v3513 = vunpack.c.h.b16 %v2907
    %v3514 = vunpack.c.l.b16 %v2908
    %v3515 = vunpack.c.h.b16 %v2908
    %v3516 = vunpack.c.l.b16 %v2909
    %v3517 = vunpack.c.h.b16 %v2909
    %v3518 = vunpack.c.l.b16 %v2910
    %v3519 = vunpack.c.h.b16 %v2910
    %v3520 = vunpack.c.l.b16 %v2911
    %v3521 = vunpack.c.h.b16 %v2911
    %v3522 = vunpack.c.l.b16 %v2912
    %v3523 = vunpack.c.h.b16 %v2912
    %v3524 = vunpack.c.l.b16 %v2913
    %v3525 = vunpack.c.h.b16 %v2913
    %v3526 = vunpack.c.l.b16 %v2914
    %v3527 = vunpack.c.h.b16 %v2914
    %v3528 = vunpack.c.l.b16 %v2915
    %v3529 = vunpack.c.h.b16 %v2915
    %v3530 = vunpack.c.l.b16 %v2916
    %v3531 = vunpack.c.h.b16 %v2916
    %v3532 = vunpack.c.l.b16 %v2917
    %v3533 = vunpack.c.h.b16 %v2917
    %v3534 = vunpack.c.l.b16 %v2918
    %v3535 = vunpack.c.h.b16 %v2918
    %v3536 = vunpack.c.l.b16 %v2919
    %v3537 = vunpack.c.h.b16 %v2919
    %v3538 = vunpack.c.l.b16 %v2920
    %v3539 = vunpack.c.h.b16 %v2920
    %v3540 = vunpack.c.l.b16 %v2921
    %v3541 = vunpack.c.h.b16 %v2921
    %v3542 = vunpack.c.l.b16 %v2922
    %v3543 = vunpack.c.h.b16 %v2922
    %v3544 = vunpack.c.l.b16 %v2923
    %v3545 = vunpack.c.h.b16 %v2923
    %v3546 = vunpack.c.l.b16 %v2924
    %v3547 = vunpack.c.h.b16 %v2924
    %v3548 = vunpack.c.l.b16 %v2925
    %v3549 = vunpack.c.h.b16 %v2925
    %v3550 = vunpack.c.l.b16 %v2926
    %v3551 = vunpack.c.h.b16 %v2926
    %v3552 = vunpack.c.l.b16 %v2927
    %v3553 = vunpack.c.h.b16 %v2927
    %v3554 = vunpack.c.l.b16 %v2928
    %v3555 = vunpack.c.h.b16 %v2928
    %v3556 = vunpack.c.l.b16 %v2929
    %v3557 = vunpack.c.h.b16 %v2929
    %v3558 = vunpack.c.l.b16 %v2930
    %v3559 = vunpack.c.h.b16 %v2930
    %v3560 = vunpack.c.l.b16 %v2931
    %v3561 = vunpack.c.h.b16 %v2931
    %v3562 = vunpack.c.l.b16 %v2932
    %v3563 = vunpack.c.h.b16 %v2932
    %v3564 = vunpack.c.l.b16 %v2933
    %v3565 = vunpack.c.h.b16 %v2933
    %v3566 = vunpack.c.l.b16 %v2934
    %v3567 = vunpack.c.h.b16 %v2934
    %v3568 = vunpack.c.l.b16 %v2935
    %v3569 = vunpack.c.h.b16 %v2935
    %v3570 = vunpack.c.l.b16 %v2936
    %v3571 = vunpack.c.h.b16 %v2936
    %v3572 = vunpack.c.l.b16 %v2937
    %v3573 = vunpack.c.h.b16 %v2937
    %v3574 = vunpack.c.l.b16 %v2938
    %v3575 = vunpack.c.h.b16 %v2938
    %v3576 = vunpack.c.l.b16 %v2939
    %v3577 = vunpack.c.h.b16 %v2939
    %v3578 = vunpack.c.l.b16 %v2940
    %v3579 = vunpack.c.h.b16 %v2940
    %v3580 = vunpack.c.l.b16 %v2941
    %v3581 = vunpack.c.h.b16 %v2941
    %v3582 = vunpack.c.l.b16 %v2942
    %v3583 = vunpack.c.h.b16 %v2942
    %v3584 = vunpack.c.l.b16 %v2943
    %v3585 = vunpack.c.h.b16 %v2943
    %v3586 = vunpack.c.l.b16 %v2944
    %v3587 = vunpack.c.h.b16 %v2944
    %v3588 = vunpack.c.l.b16 %v2945
    %v3589 = vunpack.c.h.b16 %v2945
    %v3590 = vunpack.c.l.b16 %v2946
    %v3591 = vunpack.c.h.b16 %v2946
    %v3592 = vunpack.c.l.b16 %v2947
    %v3593 = vunpack.c.h.b16 %v2947
    %v3594 = vunpack.c.l.b16 %v2948
    %v3595 = vunpack.c.h.b16 %v2948
    %v3596 = vunpack.c.l.b16 %v2949
    %v3597 = vunpack.c.h.b16 %v2949
    %v3598 = vunpack.c.l.b16 %v2950
    %v3599 = vunpack.c.h.b16 %v2950
    %v3600 = vunpack.c.l.b16 %v2951
    %v3601 = vunpack.c.h.b16 %v2951
    %v3602 = vunpack.c.l.b16 %v2952
    %v3603 = vunpack.c.h.b16 %v2952
    %v3604 = vunpack.c.l.b16 %v2953
    %v3605 = vunpack.c.h.b16 %v2953
    %v3606 = vunpack.c.l.b16 %v2954
    %v3607 = vunpack.c.h.b16 %v2954
    %v3608 = vunpack.c.l.b16 %v2955
    %v3609 = vunpack.c.h.b16 %v2955
    %v3610 = vunpack.c.l.b16 %v2956
    %v3611 = vunpack.c.h.b16 %v2956
    %v3612 = vunpack.c.l.b16 %v2957
    %v3613 = vunpack.c.h.b16 %v2957
    %v3614 = vunpack.c.l.b16 %v2958
    %v3615 = vunpack.c.h.b16 %v2958
    %v3616 = vunpack.c.l.b16 %v2959
    %v3617 = vunpack.c.h.b16 %v2959
    %v3618 = vunpack.c.l.b16 %v2960
    %v3619 = vunpack.c.h.b16 %v2960
    %v3620 = vunpack.c.l.b16 %v2961
    %v3621 = vunpack.c.h.b16 %v2961
    %v3622 = vunpack.c.l.b16 %v2962
    %v3623 = vunpack.c.h.b16 %v2962
    %v3624 = vunpack.c.l.b16 %v2963
    %v3625 = vunpack.c.h.b16 %v2963
    %v3626 = vunpack.c.l.b16 %v2964
    %v3627 = vunpack.c.h.b16 %v2964
    %v3628 = vunpack.c.l.b16 %v2965
    %v3629 = vunpack.c.h.b16 %v2965
    %v3630 = vunpack.c.l.b16 %v2966
    %v3631 = vunpack.c.h.b16 %v2966
    %v3632 = vunpack.c.l.b16 %v2967
    %v3633 = vunpack.c.h.b16 %v2967
    %v3634 = vunpack.c.l.b16 %v2968
    %v3635 = vunpack.c.h.b16 %v2968
    %v3636 = vunpack.c.l.b16 %v2969
    %v3637 = vunpack.c.h.b16 %v2969
    %v3638 = vunpack.c.l.b16 %v2970
    %v3639 = vunpack.c.h.b16 %v2970
    %v3640 = vunpack.c.l.b16 %v2971
    %v3641 = vunpack.c.h.b16 %v2971
    %v3642 = vunpack.c.l.b16 %v2972
    %v3643 = vunpack.c.h.b16 %v2972
    %v3644 = vunpack.c.l.b16 %v2973
    %v3645 = vunpack.c.h.b16 %v2973
    %v3646 = vunpack.c.l.b16 %v2974
    %v3647 = vunpack.c.h.b16 %v2974
    %v3648 = vunpack.c.l.b16 %v2975
    %v3649 = vunpack.c.h.b16 %v2975
    %v3650 = vunpack.c.l.b16 %v2976
    %v3651 = vunpack.c.h.b16 %v2976
    %v3652 = vunpack.c.l.b16 %v2977
    %v3653 = vunpack.c.h.b16 %v2977
    %v3654 = vunpack.c.l.b16 %v2978
    %v3655 = vunpack.c.h.b16 %v2978
    %v3656 = vunpack.c.l.b16 %v2979
    %v3657 = vunpack.c.h.b16 %v2979
    %v3658 = vunpack.c.l.b16 %v2980
    %v3659 = vunpack.c.h.b16 %v2980
    %v3660 = vunpack.c.l.b16 %v2981
    %v3661 = vunpack.c.h.b16 %v2981
    %v3662 = vunpack.c.l.b16 %v2982
    %v3663 = vunpack.c.h.b16 %v2982
    %v3664 = vunpack.c.l.b16 %v2983
    %v3665 = vunpack.c.h.b16 %v2983
    %v3666 = vunpack.c.l.b16 %v2984
    %v3667 = vunpack.c.h.b16 %v2984
    %v3668 = vunpack.c.l.b16 %v2985
    %v3669 = vunpack.c.h.b16 %v2985
    %v3670 = vunpack.c.l.b16 %v2986
    %v3671 = vunpack.c.h.b16 %v2986
    %v3672 = vunpack.c.l.b16 %v2987
    %v3673 = vunpack.c.h.b16 %v2987
    %v3674 = vunpack.c.l.b16 %v2988
    %v3675 = vunpack.c.h.b16 %v2988
    %v3676 = vunpack.c.l.b16 %v2989
    %v3677 = vunpack.c.h.b16 %v2989
    %v3678 = vunpack.c.l.b16 %v2990
    %v3679 = vunpack.c.h.b16 %v2990
    %v3680 = vunpack.c.l.b16 %v2991
    %v3681 = vunpack.c.h.b16 %v2991
    %v3682 = vunpack.c.l.b16 %v2992
    %v3683 = vunpack.c.h.b16 %v2992
    %v3684 = vunpack.c.l.b16 %v2993
    %v3685 = vunpack.c.h.b16 %v2993
    %v3686 = vunpack.c.l.b16 %v2994
    %v3687 = vunpack.c.h.b16 %v2994
    %v3688 = vunpack.c.l.b16 %v2995
    %v3689 = vunpack.c.h.b16 %v2995
    %v3690 = vunpack.c.l.b16 %v2996
    %v3691 = vunpack.c.h.b16 %v2996
    %v3692 = vunpack.c.l.b16 %v2997
    %v3693 = vunpack.c.h.b16 %v2997
    %v3694 = vunpack.c.l.b16 %v2998
    %v3695 = vunpack.c.h.b16 %v2998
    %v3696 = vunpack.c.l.b16 %v2999
    %v3697 = vunpack.c.h.b16 %v2999
    %v3698 = vunpack.c.l.b16 %v3000
    %v3699 = vunpack.c.h.b16 %v3000
    %v3700 = vunpack.c.l.b16 %v3001
    %v3701 = vunpack.c.h.b16 %v3001
    %v3702 = vunpack.c.l.b16 %v3002
    %v3703 = vunpack.c.h.b16 %v3002
    %v3704 = vunpack.c.l.b16 %v3003
    %v3705 = vunpack.c.h.b16 %v3003
    %v3706 = vunpack.c.l.b16 %v3004
    %v3707 = vunpack.c.h.b16 %v3004
    %v3708 = vunpack.c.l.b16 %v3005
    %v3709 = vunpack.c.h.b16 %v3005
    %v3710 = vunpack.c.l.b16 %v3006
    %v3711 = vunpack.c.h.b16 %v3006
    %v3712 = vunpack.c.l.b16 %v3007
    %v3713 = vunpack.c.h.b16 %v3007
    %v3714 = vunpack.c.l.b16 %v3008
    %v3715 = vunpack.c.h.b16 %v3008
    %v3716 = vunpack.c.l.b16 %v3009
    %v3717 = vunpack.c.h.b16 %v3009
    %v3718 = vunpack.c.l.b16 %v3010
    %v3719 = vunpack.c.h.b16 %v3010
    %v3720 = vunpack.c.l.b16 %v3011
    %v3721 = vunpack.c.h.b16 %v3011
    %v3722 = vunpack.c.l.b16 %v3012
    %v3723 = vunpack.c.h.b16 %v3012
    %v3724 = vunpack.c.l.b16 %v3013
    %v3725 = vunpack.c.h.b16 %v3013
    %v3726 = vunpack.c.l.b16 %v3014
    %v3727 = vunpack.c.h.b16 %v3014
    %v3728 = vunpack.c.l.b16 %v3015
    %v3729 = vunpack.c.h.b16 %v3015
    %v3730 = vunpack.c.l.b16 %v3016
    %v3731 = vunpack.c.h.b16 %v3016
    %v3732 = vunpack.c.l.b16 %v3017
    %v3733 = vunpack.c.h.b16 %v3017
    %v3734 = vunpack.c.l.b16 %v3018
    %v3735 = vunpack.c.h.b16 %v3018
    %v3736 = vunpack.c.l.b16 %v3019
    %v3737 = vunpack.c.h.b16 %v3019
    %v3738 = vunpack.c.l.b16 %v3020
    %v3739 = vunpack.c.h.b16 %v3020
    %v3740 = vunpack.c.l.b16 %v3021
    %v3741 = vunpack.c.h.b16 %v3021
    %v3742 = vunpack.c.l.b16 %v3022
    %v3743 = vunpack.c.h.b16 %v3022
    %v3744 = vunpack.c.l.b16 %v3023
    %v3745 = vunpack.c.h.b16 %v3023
    %v3746 = vunpack.c.l.b16 %v3024
    %v3747 = vunpack.c.h.b16 %v3024
    %v3748 = vunpack.c.l.b16 %v3025
    %v3749 = vunpack.c.h.b16 %v3025
    %v3750 = vunpack.c.l.b16 %v3026
    %v3751 = vunpack.c.h.b16 %v3026
    %v3752 = vunpack.c.l.b16 %v3027
    %v3753 = vunpack.c.h.b16 %v3027
    %v3754 = vunpack.c.l.b16 %v3028
    %v3755 = vunpack.c.h.b16 %v3028
    %v3756 = vunpack.c.l.b16 %v3029
    %v3757 = vunpack.c.h.b16 %v3029
    %v3758 = vunpack.c.l.b16 %v3030
    %v3759 = vunpack.c.h.b16 %v3030
    %v3760 = vunpack.c.l.b16 %v3031
    %v3761 = vunpack.c.h.b16 %v3031
    %v3762 = vunpack.c.l.b16 %v3032
    %v3763 = vunpack.c.h.b16 %v3032
    %v3764 = vunpack.c.l.b16 %v3033
    %v3765 = vunpack.c.h.b16 %v3033
    %v3766 = vunpack.c.l.b16 %v3034
    %v3767 = vunpack.c.h.b16 %v3034
    %v3768 = vunpack.c.l.b16 %v3035
    %v3769 = vunpack.c.h.b16 %v3035
    %v3770 = vunpack.c.l.b16 %v3036
    %v3771 = vunpack.c.h.b16 %v3036
    %v3772 = vunpack.c.l.b16 %v3037
    %v3773 = vunpack.c.h.b16 %v3037
    %v3774 = vunpack.c.l.b16 %v3038
    %v3775 = vunpack.c.h.b16 %v3038
    %v3776 = vunpack.c.l.b16 %v3039
    %v3777 = vunpack.c.h.b16 %v3039
    %v3778 = vunpack.c.l.b16 %v3040
    %v3779 = vunpack.c.h.b16 %v3040
    %v3780 = vunpack.c.l.b16 %v3041
    %v3781 = vunpack.c.h.b16 %v3041
    %v3782 = vunpack.c.l.b16 %v3042
    %v3783 = vunpack.c.h.b16 %v3042
    %v3784 = vunpack.c.l.b16 %v3043
    %v3785 = vunpack.c.h.b16 %v3043
    %v3786 = vunpack.c.l.b16 %v3044
    %v3787 = vunpack.c.h.b16 %v3044
    %v3788 = vunpack.c.l.b16 %v3045
    %v3789 = vunpack.c.h.b16 %v3045
    %v3790 = vunpack.c.l.b16 %v3046
    %v3791 = vunpack.c.h.b16 %v3046
    %v3792 = vunpack.c.l.b16 %v3047
    %v3793 = vunpack.c.h.b16 %v3047
    %v3794 = vunpack.c.l.b16 %v3048
    %v3795 = vunpack.c.h.b16 %v3048
    %v3796 = vunpack.c.l.b16 %v3049
    %v3797 = vunpack.c.h.b16 %v3049
    %v3798 = vunpack.c.l.b16 %v3050
    %v3799 = vunpack.c.h.b16 %v3050
    %v3800 = vunpack.c.l.b16 %v3051
    %v3801 = vunpack.c.h.b16 %v3051
    %v3802 = vunpack.c.l.b16 %v3052
    %v3803 = vunpack.c.h.b16 %v3052
    %v3804 = vunpack.c.l.b16 %v3053
    %v3805 = vunpack.c.h.b16 %v3053
    %v3806 = vunpack.c.l.b16 %v3054
    %v3807 = vunpack.c.h.b16 %v3054
    %v3808 = vunpack.c.l.b16 %v3055
    %v3809 = vunpack.c.h.b16 %v3055
    %v3810 = vunpack.c.l.b16 %v3056
    %v3811 = vunpack.c.h.b16 %v3056
    %v3812 = vunpack.c.l.b16 %v3057
    %v3813 = vunpack.c.h.b16 %v3057
    %v3814 = vunpack.c.l.b16 %v3058
    %v3815 = vunpack.c.h.b16 %v3058
    %v3816 = vunpack.c.l.b16 %v3059
    %v3817 = vunpack.c.h.b16 %v3059
    %v3818 = vunpack.c.l.b16 %v3060
    %v3819 = vunpack.c.h.b16 %v3060
    %v3820 = vunpack.c.l.b16 %v3061
    %v3821 = vunpack.c.h.b16 %v3061
    %v3822 = vunpack.c.l.b16 %v3062
    %v3823 = vunpack.c.h.b16 %v3062
    %v3824 = vunpack.c.l.b16 %v3063
    %v3825 = vunpack.c.h.b16 %v3063
    %v3826 = vunpack.c.l.b16 %v3064
    %v3827 = vunpack.c.h.b16 %v3064
    %v3828 = vunpack.c.l.b16 %v3065
    %v3829 = vunpack.c.h.b16 %v3065
    %v3830 = vunpack.c.l.b16 %v3066
    %v3831 = vunpack.c.h.b16 %v3066
    %v3832 = vunpack.c.l.b16 %v3067
    %v3833 = vunpack.c.h.b16 %v3067
    %v3834 = vunpack.c.l.b16 %v3068
    %v3835 = vunpack.c.h.b16 %v3068
    %v3836 = vunpack.c.l.b16 %v3069
    %v3837 = vunpack.c.h.b16 %v3069
    %v3838 = vunpack.c.l.b16 %v3070
    %v3839 = vunpack.c.h.b16 %v3070
    %v3840 = vunpack.c.l.b16 %v3071
    %v3841 = vunpack.c.h.b16 %v3071
    %v3842 = vunpack.c.l.b16 %v3072
    %v3843 = vunpack.c.h.b16 %v3072
    %v3844 = vunpack.c.l.b16 %v3073
    %v3845 = vunpack.c.h.b16 %v3073
    %v3846 = vunpack.c.l.b16 %v3074
    %v3847 = vunpack.c.h.b16 %v3074
    %v3848 = vunpack.c.l.b16 %v3075
    %v3849 = vunpack.c.h.b16 %v3075
    %v3850 = vunpack.c.l.b16 %v3076
    %v3851 = vunpack.c.h.b16 %v3076
    %v3852 = vunpack.c.l.b16 %v3077
    %v3853 = vunpack.c.h.b16 %v3077
    %v3854 = vunpack.c.l.b16 %v3078
    %v3855 = vunpack.c.h.b16 %v3078
    %v3856 = vunpack.c.l.b16 %v3079
    %v3857 = vunpack.c.h.b16 %v3079
    %v3858 = vunpack.c.l.b16 %v3080
    %v3859 = vunpack.c.h.b16 %v3080
    %v3860 = vunpack.c.l.b16 %v3081
    %v3861 = vunpack.c.h.b16 %v3081
    %v3862 = vunpack.c.l.b16 %v3082
    %v3863 = vunpack.c.h.b16 %v3082
    %v3864 = vunpack.c.l.b16 %v3083
    %v3865 = vunpack.c.h.b16 %v3083
    %v3866 = vunpack.c.l.b16 %v3084
    %v3867 = vunpack.c.h.b16 %v3084
    %v3868 = vunpack.c.l.b16 %v3085
    %v3869 = vunpack.c.h.b16 %v3085
    %v3870 = vunpack.c.l.b16 %v3086
    %v3871 = vunpack.c.h.b16 %v3086
    %v3872 = vunpack.c.l.b16 %v3087
    %v3873 = vunpack.c.h.b16 %v3087
    %v3874 = vunpack.c.l.b16 %v3088
    %v3875 = vunpack.c.h.b16 %v3088
    %v3876 = vunpack.c.l.b16 %v3089
    %v3877 = vunpack.c.h.b16 %v3089
    %v3878 = vunpack.c.l.b16 %v3090
    %v3879 = vunpack.c.h.b16 %v3090
    %v3880 = vunpack.c.l.b16 %v3091
    %v3881 = vunpack.c.h.b16 %v3091
    %v3882 = vpack.c.b16 %v3374, %v3370
    %v3883 = vpack.c.b16 %v3375, %v3371
    %v3884 = vpack.c.b16 %v3376, %v3372
    %v3885 = vpack.c.b16 %v3377, %v3373
    %v3886 = vpack.c.b16 %v3382, %v3378
    %v3887 = vpack.c.b16 %v3383, %v3379
    %v3888 = vpack.c.b16 %v3384, %v3380
    %v3889 = vpack.c.b16 %v3385, %v3381
    %v3890 = vpack.c.b16 %v3390, %v3386
    %v3891 = vpack.c.b16 %v3391, %v3387
    %v3892 = vpack.c.b16 %v3392, %v3388
    %v3893 = vpack.c.b16 %v3393, %v3389
    %v3894 = vpack.c.b16 %v3398, %v3394
    %v3895 = vpack.c.b16 %v3399, %v3395
    %v3896 = vpack.c.b16 %v3400, %v3396
    %v3897 = vpack.c.b16 %v3401, %v3397
    %v3898 = vpack.c.b16 %v3406, %v3402
    %v3899 = vpack.c.b16 %v3407, %v3403
    %v3900 = vpack.c.b16 %v3408, %v3404
    %v3901 = vpack.c.b16 %v3409, %v3405
    %v3902 = vpack.c.b16 %v3414, %v3410
    %v3903 = vpack.c.b16 %v3415, %v3411
    %v3904 = vpack.c.b16 %v3416, %v3412
    %v3905 = vpack.c.b16 %v3417, %v3413
    %v3906 = vpack.c.b16 %v3422, %v3418
    %v3907 = vpack.c.b16 %v3423, %v3419
    %v3908 = vpack.c.b16 %v3424, %v3420
    %v3909 = vpack.c.b16 %v3425, %v3421
    %v3910 = vpack.c.b16 %v3430, %v3426
    %v3911 = vpack.c.b16 %v3431, %v3427
    %v3912 = vpack.c.b16 %v3432, %v3428
    %v3913 = vpack.c.b16 %v3433, %v3429
    %v3914 = vpack.c.b16 %v3438, %v3434
    %v3915 = vpack.c.b16 %v3439, %v3435
    %v3916 = vpack.c.b16 %v3440, %v3436
    %v3917 = vpack.c.b16 %v3441, %v3437
    %v3918 = vpack.c.b16 %v3446, %v3442
    %v3919 = vpack.c.b16 %v3447, %v3443
    %v3920 = vpack.c.b16 %v3448, %v3444
    %v3921 = vpack.c.b16 %v3449, %v3445
    %v3922 = vpack.c.b16 %v3454, %v3450
    %v3923 = vpack.c.b16 %v3455, %v3451
    %v3924 = vpack.c.b16 %v3456, %v3452
    %v3925 = vpack.c.b16 %v3457, %v3453
    %v3926 = vpack.c.b16 %v3462, %v3458
    %v3927 = vpack.c.b16 %v3463, %v3459
    %v3928 = vpack.c.b16 %v3464, %v3460
    %v3929 = vpack.c.b16 %v3465, %v3461
    %v3930 = vpack.c.b16 %v3470, %v3466
    %v3931 = vpack.c.b16 %v3471, %v3467
    %v3932 = vpack.c.b16 %v3472, %v3468
    %v3933 = vpack.c.b16 %v3473, %v3469
    %v3934 = vpack.c.b16 %v3478, %v3474
    %v3935 = vpack.c.b16 %v3479, %v3475
    %v3936 = vpack.c.b16 %v3480, %v3476
    %v3937 = vpack.c.b16 %v3481, %v3477
    %v3938 = vpack.c.b16 %v3486, %v3482
    %v3939 = vpack.c.b16 %v3487, %v3483
    %v3940 = vpack.c.b16 %v3488, %v3484
    %v3941 = vpack.c.b16 %v3489, %v3485
    %v3942 = vpack.c.b16 %v3494, %v3490
    %v3943 = vpack.c.b16 %v3495, %v3491
    %v3944 = vpack.c.b16 %v3496, %v3492
    %v3945 = vpack.c.b16 %v3497, %v3493
    %v3946 = vpack.c.b16 %v3502, %v3498
    %v3947 = vpack.c.b16 %v3503, %v3499
    %v3948 = vpack.c.b16 %v3504, %v3500
    %v3949 = vpack.c.b16 %v3505, %v3501
    %v3950 = vpack.c.b16 %v3510, %v3506
    %v3951 = vpack.c.b16 %v3511, %v3507
    %v3952 = vpack.c.b16 %v3512, %v3508
    %v3953 = vpack.c.b16 %v3513, %v3509
    %v3954 = vpack.c.b16 %v3518, %v3514
    %v3955 = vpack.c.b16 %v3519, %v3515
    %v3956 = vpack.c.b16 %v3520, %v3516
    %v3957 = vpack.c.b16 %v3521, %v3517
    %v3958 = vpack.c.b16 %v3526, %v3522
    %v3959 = vpack.c.b16 %v3527, %v3523
    %v3960 = vpack.c.b16 %v3528, %v3524
    %v3961 = vpack.c.b16 %v3529, %v3525
    %v3962 = vpack.c.b16 %v3534, %v3530
    %v3963 = vpack.c.b16 %v3535, %v3531
    %v3964 = vpack.c.b16 %v3536, %v3532
    %v3965 = vpack.c.b16 %v3537, %v3533
    %v3966 = vpack.c.b16 %v3542, %v3538
    %v3967 = vpack.c.b16 %v3543, %v3539
    %v3968 = vpack.c.b16 %v3544, %v3540
    %v3969 = vpack.c.b16 %v3545, %v3541
    %v3970 = vpack.c.b16 %v3550, %v3546
    %v3971 = vpack.c.b16 %v3551, %v3547
    %v3972 = vpack.c.b16 %v3552, %v3548
    %v3973 = vpack.c.b16 %v3553, %v3549
    %v3974 = vpack.c.b16 %v3558, %v3554
    %v3975 = vpack.c.b16 %v3559, %v3555
    %v3976 = vpack.c.b16 %v3560, %v3556
    %v3977 = vpack.c.b16 %v3561, %v3557
    %v3978 = vpack.c.b16 %v3566, %v3562
    %v3979 = vpack.c.b16 %v3567, %v3563
    %v3980 = vpack.c.b16 %v3568, %v3564
    %v3981 = vpack.c.b16 %v3569, %v3565
    %v3982 = vpack.c.b16 %v3574, %v3570
    %v3983 = vpack.c.b16 %v3575, %v3571
    %v3984 = vpack.c.b16 %v3576, %v3572
    %v3985 = vpack.c.b16 %v3577, %v3573
    %v3986 = vpack.c.b16 %v3582, %v3578
    %v3987 = vpack.c.b16 %v3583, %v3579
    %v3988 = vpack.c.b16 %v3584, %v3580
    %v3989 = vpack.c.b16 %v3585, %v3581
    %v3990 = vpack.c.b16 %v3590, %v3586
    %v3991 = vpack.c.b16 %v3591, %v3587
    %v3992 = vpack.c.b16 %v3592, %v3588
    %v3993 = vpack.c.b16 %v3593, %v3589
    %v3994 = vpack.c.b16 %v3598, %v3594
    %v3995 = vpack.c.b16 %v3599, %v3595
    %v3996 = vpack.c.b16 %v3600, %v3596
    %v3997 = vpack.c.b16 %v3601, %v3597
    %v3998 = vpack.c.b16 %v3606, %v3602
    %v3999 = vpack.c.b16 %v3607, %v3603
    %v4000 = vpack.c.b16 %v3608, %v3604
    %v4001 = vpack.c.b16 %v3609, %v3605
    %v4002 = vpack.c.b16 %v3614, %v3610
    %v4003 = vpack.c.b16 %v3615, %v3611
    %v4004 = vpack.c.b16 %v3616, %v3612
    %v4005 = vpack.c.b16 %v3617, %v3613
    %v4006 = vpack.c.b16 %v3622, %v3618
    %v4007 = vpack.c.b16 %v3623, %v3619
    %v4008 = vpack.c.b16 %v3624, %v3620
    %v4009 = vpack.c.b16 %v3625, %v3621
    %v4010 = vpack.c.b16 %v3630, %v3626
    %v4011 = vpack.c.b16 %v3631, %v3627
    %v4012 = vpack.c.b16 %v3632, %v3628
    %v4013 = vpack.c.b16 %v3633, %v3629
    %v4014 = vpack.c.b16 %v3638, %v3634
    %v4015 = vpack.c.b16 %v3639, %v3635
    %v4016 = vpack.c.b16 %v3640, %v3636
    %v4017 = vpack.c.b16 %v3641, %v3637
    %v4018 = vpack.c.b16 %v3646, %v3642
    %v4019 = vpack.c.b16 %v3647, %v3643
    %v4020 = vpack.c.b16 %v3648, %v3644
    %v4021 = vpack.c.b16 %v3649, %v3645
    %v4022 = vpack.c.b16 %v3654, %v3650
    %v4023 = vpack.c.b16 %v3655, %v3651
    %v4024 = vpack.c.b16 %v3656, %v3652
    %v4025 = vpack.c.b16 %v3657, %v3653
    %v4026 = vpack.c.b16 %v3662, %v3658
    %v4027 = vpack.c.b16 %v3663, %v3659
    %v4028 = vpack.c.b16 %v3664, %v3660
    %v4029 = vpack.c.b16 %v3665, %v3661
    %v4030 = vpack.c.b16 %v3670, %v3666
    %v4031 = vpack.c.b16 %v3671, %v3667
    %v4032 = vpack.c.b16 %v3672, %v3668
    %v4033 = vpack.c.b16 %v3673, %v3669
    %v4034 = vpack.c.b16 %v3678, %v3674
    %v4035 = vpack.c.b16 %v3679, %v3675
    %v4036 = vpack.c.b16 %v3680, %v3676
    %v4037 = vpack.c.b16 %v3681, %v3677
    %v4038 = vpack.c.b16 %v3686, %v3682
    %v4039 = vpack.c.b16 %v3687, %v3683
    %v4040 = vpack.c.b16 %v3688, %v3684
    %v4041 = vpack.c.b16 %v3689, %v3685
    %v4042 = vpack.c.b16 %v3694, %v3690
    %v4043 = vpack.c.b16 %v3695, %v3691
    %v4044 = vpack.c.b16 %v3696, %v3692
    %v4045 = vpack.c.b16 %v3697, %v3693
    %v4046 = vpack.c.b16 %v3702, %v3698
    %v4047 = vpack.c.b16 %v3703, %v3699
    %v4048 = vpack.c.b16 %v3704, %v3700
    %v4049 = vpack.c.b16 %v3705, %v3701
    %v4050 = vpack.c.b16 %v3710, %v3706
    %v4051 = vpack.c.b16 %v3711, %v3707
    %v4052 = vpack.c.b16 %v3712, %v3708
    %v4053 = vpack.c.b16 %v3713, %v3709
    %v4054 = vpack.c.b16 %v3718, %v3714
    %v4055 = vpack.c.b16 %v3719, %v3715
    %v4056 = vpack.c.b16 %v3720, %v3716
    %v4057 = vpack.c.b16 %v3721, %v3717
    %v4058 = vpack.c.b16 %v3726, %v3722
    %v4059 = vpack.c.b16 %v3727, %v3723
    %v4060 = vpack.c.b16 %v3728, %v3724
    %v4061 = vpack.c.b16 %v3729, %v3725
    %v4062 = vpack.c.b16 %v3734, %v3730
    %v4063 = vpack.c.b16 %v3735, %v3731
    %v4064 = vpack.c.b16 %v3736, %v3732
    %v4065 = vpack.c.b16 %v3737, %v3733
    %v4066 = vpack.c.b16 %v3742, %v3738
    %v4067 = vpack.c.b16 %v3743, %v3739
    %v4068 = vpack.c.b16 %v3744, %v3740
    %v4069 = vpack.c.b16 %v3745, %v3741
    %v4070 = vpack.c.b16 %v3750, %v3746
    %v4071 = vpack.c.b16 %v3751, %v3747
    %v4072 = vpack.c.b16 %v3752, %v3748
    %v4073 = vpack.c.b16 %v3753, %v3749
    %v4074 = vpack.c.b16 %v3758, %v3754
    %v4075 = vpack.c.b16 %v3759, %v3755
    %v4076 = vpack.c.b16 %v3760, %v3756
    %v4077 = vpack.c.b16 %v3761, %v3757
    %v4078 = vpack.c.b16 %v3766, %v3762
    %v4079 = vpack.c.b16 %v3767, %v3763
    %v4080 = vpack.c.b16 %v3768, %v3764
    %v4081 = vpack.c.b16 %v3769, %v3765
    %v4082 = vpack.c.b16 %v3774, %v3770
    %v4083 = vpack.c.b16 %v3775, %v3771
    %v4084 = vpack.c.b16 %v3776, %v3772
    %v4085 = vpack.c.b16 %v3777, %v3773
    %v4086 = vpack.c.b16 %v3782, %v3778
    %v4087 = vpack.c.b16 %v3783, %v3779
    %v4088 = vpack.c.b16 %v3784, %v3780
    %v4089 = vpack.c.b16 %v3785, %v3781
    %v4090 = vpack.c.b16 %v3790, %v3786
    %v4091 = vpack.c.b16 %v3791, %v3787
    %v4092 = vpack.c.b16 %v3792, %v3788
    %v4093 = vpack.c.b16 %v3793, %v3789
    %v4094 = vpack.c.b16 %v3798, %v3794
    %v4095 = vpack.c.b16 %v3799, %v3795
    %v4096 = vpack.c.b16 %v3800, %v3796
    %v4097 = vpack.c.b16 %v3801, %v3797
    %v4098 = vpack.c.b16 %v3806, %v3802
    %v4099 = vpack.c.b16 %v3807, %v3803
    %v4100 = vpack.c.b16 %v3808, %v3804
    %v4101 = vpack.c.b16 %v3809, %v3805
    %v4102 = vpack.c.b16 %v3814, %v3810
    %v4103 = vpack.c.b16 %v3815, %v3811
    %v4104 = vpack.c.b16 %v3816, %v3812
    %v4105 = vpack.c.b16 %v3817, %v3813
    %v4106 = vpack.c.b16 %v3822, %v3818
    %v4107 = vpack.c.b16 %v3823, %v3819
    %v4108 = vpack.c.b16 %v3824, %v3820
    %v4109 = vpack.c.b16 %v3825, %v3821
    %v4110 = vpack.c.b16 %v3830, %v3826
    %v4111 = vpack.c.b16 %v3831, %v3827
    %v4112 = vpack.c.b16 %v3832, %v3828
    %v4113 = vpack.c.b16 %v3833, %v3829
    %v4114 = vpack.c.b16 %v3838, %v3834
    %v4115 = vpack.c.b16 %v3839, %v3835
    %v4116 = vpack.c.b16 %v3840, %v3836
    %v4117 = vpack.c.b16 %v3841, %v3837
    %v4118 = vpack.c.b16 %v3846, %v3842
    %v4119 = vpack.c.b16 %v3847, %v3843
    %v4120 = vpack.c.b16 %v3848, %v3844
    %v4121 = vpack.c.b16 %v3849, %v3845
    %v4122 = vpack.c.b16 %v3854, %v3850
    %v4123 = vpack.c.b16 %v3855, %v3851
    %v4124 = vpack.c.b16 %v3856, %v3852
    %v4125 = vpack.c.b16 %v3857, %v3853
    %v4126 = vpack.c.b16 %v3862, %v3858
    %v4127 = vpack.c.b16 %v3863, %v3859
    %v4128 = vpack.c.b16 %v3864, %v3860
    %v4129 = vpack.c.b16 %v3865, %v3861
    %v4130 = vpack.c.b16 %v3870, %v3866
    %v4131 = vpack.c.b16 %v3871, %v3867
    %v4132 = vpack.c.b16 %v3872, %v3868
    %v4133 = vpack.c.b16 %v3873, %v3869
    %v4134 = vpack.c.b16 %v3878, %v3874
    %v4135 = vpack.c.b16 %v3879, %v3875
    %v4136 = vpack.c.b16 %v3880, %v3876
    %v4137 = vpack.c.b16 %v3881, %v3877
    %4394 = vmatprep.subr.bf16.mxu0 %v3883
    %4395 = vmatpush1.bf16.msra.mxu0 %v3882
    %4396 = vmatprep.subr.bf16.mxu0 %v3887
    %4397 = vmatpush1.bf16.msra.mxu0 %v3886
    %4398 = vmatprep.subr.bf16.mxu0 %v3891
    %4399 = vmatpush1.bf16.msra.mxu0 %v3890
    %4400 = vmatprep.subr.bf16.mxu0 %v3895
    %4401 = vmatpush1.bf16.msra.mxu0 %v3894
    %4402 = vmatprep.subr.bf16.mxu0 %v3899
    %4403 = vmatpush1.bf16.msra.mxu0 %v3898
    %4404 = vmatprep.subr.bf16.mxu0 %v3903
    %4405 = vmatpush1.bf16.msra.mxu0 %v3902
    %4406 = vmatprep.subr.bf16.mxu0 %v3907
    %4407 = vmatpush1.bf16.msra.mxu0 %v3906
    %4408 = vmatprep.subr.bf16.mxu0 %v3911
    %4409 = vmatpush1.bf16.msra.mxu0 %v3910
    %4410 = vmatprep.subr.bf16.mxu0 %v3915
    %4411 = vmatpush1.bf16.msra.mxu0 %v3914
    %4412 = vmatprep.subr.bf16.mxu0 %v3919
    %4413 = vmatpush1.bf16.msra.mxu0 %v3918
    %4414 = vmatprep.subr.bf16.mxu0 %v3923
    %4415 = vmatpush1.bf16.msra.mxu0 %v3922
    %4416 = vmatprep.subr.bf16.mxu0 %v3927
    %4417 = vmatpush1.bf16.msra.mxu0 %v3926
    %4418 = vmatprep.subr.bf16.mxu0 %v3931
    %4419 = vmatpush1.bf16.msra.mxu0 %v3930
    %4420 = vmatprep.subr.bf16.mxu0 %v3935
    %4421 = vmatpush1.bf16.msra.mxu0 %v3934
    %4422 = vmatprep.subr.bf16.mxu0 %v3939
    %4423 = vmatpush1.bf16.msra.mxu0 %v3938
    %4424 = vmatprep.subr.bf16.mxu0 %v3943
    %4425 = vmatpush1.bf16.msra.mxu0 %v3942
    %4426 = vmatprep.mubr.bf16.mxu0 %v2829
    %4427 = vmatmul.mubr.bf16.gmra.mrb[0].mxu0 %v2828
    %v4428 = vpop.f32.mrb[0].mxu0
    %v4429 = vadd.f32 %v3097, %v4428
    %v4430 = vpop.f32.mrb[0].mxu0
    %v4431 = vadd.f32 %v3101, %v4430
    %v4432 = vpop.f32.mrb[0].mxu0
    %v4433 = vpop.f32.mrb[0].mxu0
    %4434 = vdwg.mxu0
    %4435 = vmatprep.subr.bf16.mxu0 %v3947
    %4436 = vmatpush1.bf16.msra.mxu0 %v3946
    %4437 = vmatprep.subr.bf16.mxu0 %v3951
    %4438 = vmatpush1.bf16.msra.mxu0 %v3950
    %4439 = vmatprep.subr.bf16.mxu0 %v3955
    %4440 = vmatpush1.bf16.msra.mxu0 %v3954
    %4441 = vmatprep.subr.bf16.mxu0 %v3959
    %4442 = vmatpush1.bf16.msra.mxu0 %v3958
    %4443 = vmatprep.subr.bf16.mxu0 %v3963
    %4444 = vmatpush1.bf16.msra.mxu0 %v3962
    %4445 = vmatprep.subr.bf16.mxu0 %v3967
    %4446 = vmatpush1.bf16.msra.mxu0 %v3966
    %4447 = vmatprep.subr.bf16.mxu0 %v3971
    %4448 = vmatpush1.bf16.msra.mxu0 %v3970
    %4449 = vmatprep.subr.bf16.mxu0 %v3975
    %4450 = vmatpush1.bf16.msra.mxu0 %v3974
    %4451 = vmatprep.subr.bf16.mxu0 %v3979
    %4452 = vmatpush1.bf16.msra.mxu0 %v3978
    %4453 = vmatprep.subr.bf16.mxu0 %v3983
    %4454 = vmatpush1.bf16.msra.mxu0 %v3982
    %4455 = vmatprep.subr.bf16.mxu0 %v3987
    %4456 = vmatpush1.bf16.msra.mxu0 %v3986
    %4457 = vmatprep.subr.bf16.mxu0 %v3991
    %4458 = vmatpush1.bf16.msra.mxu0 %v3990
    %4459 = vmatprep.subr.bf16.mxu0 %v3995
    %4460 = vmatpush1.bf16.msra.mxu0 %v3994
    %4461 = vmatprep.subr.bf16.mxu0 %v3999
    %4462 = vmatpush1.bf16.msra.mxu0 %v3998
    %4463 = vmatprep.subr.bf16.mxu0 %v4003
    %4464 = vmatpush1.bf16.msra.mxu0 %v4002
    %4465 = vmatprep.subr.bf16.mxu0 %v4007
    %4466 = vmatpush1.bf16.msra.mxu0 %v4006
    %4467 = vmatprep.mubr.bf16.mxu0 %v2831
    %4468 = vmatmul.mubr.bf16.gmra.mrb[0].mxu0 %v2830
    %v4469 = vpop.f32.mrb[0].mxu0
    %v4470 = vadd.f32 %v4429, %v4469
    %v4471 = vpop.f32.mrb[0].mxu0
    %v4472 = vadd.f32 %v4431, %v4471
    %v4473 = vpop.f32.mrb[0].mxu0
    %v4474 = vpop.f32.mrb[0].mxu0
    %4475 = vdwg.mxu0
    %4476 = vmatprep.subr.bf16.mxu0 %v4011
    %4477 = vmatpush1.bf16.msra.mxu0 %v4010
    %4478 = vmatprep.subr.bf16.mxu0 %v4015
    %4479 = vmatpush1.bf16.msra.mxu0 %v4014
    %4480 = vmatprep.subr.bf16.mxu0 %v4019
    %4481 = vmatpush1.bf16.msra.mxu0 %v4018
    %4482 = vmatprep.subr.bf16.mxu0 %v4023
    %4483 = vmatpush1.bf16.msra.mxu0 %v4022
    %4484 = vmatprep.subr.bf16.mxu0 %v4027
    %4485 = vmatpush1.bf16.msra.mxu0 %v4026
    %4486 = vmatprep.subr.bf16.mxu0 %v4031
    %4487 = vmatpush1.bf16.msra.mxu0 %v4030
    %4488 = vmatprep.subr.bf16.mxu0 %v4035
    %4489 = vmatpush1.bf16.msra.mxu0 %v4034
    %4490 = vmatprep.subr.bf16.mxu0 %v4039
    %4491 = vmatpush1.bf16.msra.mxu0 %v4038
    %4492 = vmatprep.subr.bf16.mxu0 %v4043
    %4493 = vmatpush1.bf16.msra.mxu0 %v4042
    %4494 = vmatprep.subr.bf16.mxu0 %v4047
    %4495 = vmatpush1.bf16.msra.mxu0 %v4046
    %4496 = vmatprep.subr.bf16.mxu0 %v4051
    %4497 = vmatpush1.bf16.msra.mxu0 %v4050
    %4498 = vmatprep.subr.bf16.mxu0 %v4055
    %4499 = vmatpush1.bf16.msra.mxu0 %v4054
    %4500 = vmatprep.subr.bf16.mxu0 %v4059
    %4501 = vmatpush1.bf16.msra.mxu0 %v4058
    %4502 = vmatprep.subr.bf16.mxu0 %v4063
    %4503 = vmatpush1.bf16.msra.mxu0 %v4062
    %4504 = vmatprep.subr.bf16.mxu0 %v4067
    %4505 = vmatpush1.bf16.msra.mxu0 %v4066
    %4506 = vmatprep.subr.bf16.mxu0 %v4071
    %4507 = vmatpush1.bf16.msra.mxu0 %v4070
    %4508 = vmatprep.mubr.bf16.mxu0 %v2833
    %4509 = vmatmul.mubr.bf16.gmra.mrb[0].mxu0 %v2832
    %v4510 = vpop.f32.mrb[0].mxu0
    %v4511 = vadd.f32 %v4470, %v4510
    %v4512 = vpop.f32.mrb[0].mxu0
    %v4513 = vadd.f32 %v4472, %v4512
    %v4514 = vpop.f32.mrb[0].mxu0
    %v4515 = vpop.f32.mrb[0].mxu0
    %4516 = vdwg.mxu0
    %4517 = vmatprep.subr.bf16.mxu0 %v4075
    %4518 = vmatpush1.bf16.msra.mxu0 %v4074
    %4519 = vmatprep.subr.bf16.mxu0 %v4079
    %4520 = vmatpush1.bf16.msra.mxu0 %v4078
    %4521 = vmatprep.subr.bf16.mxu0 %v4083
    %4522 = vmatpush1.bf16.msra.mxu0 %v4082
    %4523 = vmatprep.subr.bf16.mxu0 %v4087
    %4524 = vmatpush1.bf16.msra.mxu0 %v4086
    %4525 = vmatprep.subr.bf16.mxu0 %v4091
    %4526 = vmatpush1.bf16.msra.mxu0 %v4090
    %4527 = vmatprep.subr.bf16.mxu0 %v4095
    %4528 = vmatpush1.bf16.msra.mxu0 %v4094
    %4529 = vmatprep.subr.bf16.mxu0 %v4099
    %4530 = vmatpush1.bf16.msra.mxu0 %v4098
    %4531 = vmatprep.subr.bf16.mxu0 %v4103
    %4532 = vmatpush1.bf16.msra.mxu0 %v4102
    %4533 = vmatprep.subr.bf16.mxu0 %v4107
    %4534 = vmatpush1.bf16.msra.mxu0 %v4106
    %4535 = vmatprep.subr.bf16.mxu0 %v4111
    %4536 = vmatpush1.bf16.msra.mxu0 %v4110
    %4537 = vmatprep.subr.bf16.mxu0 %v4115
    %4538 = vmatpush1.bf16.msra.mxu0 %v4114
    %4539 = vmatprep.subr.bf16.mxu0 %v4119
    %4540 = vmatpush1.bf16.msra.mxu0 %v4118
    %4541 = vmatprep.subr.bf16.mxu0 %v4123
    %4542 = vmatpush1.bf16.msra.mxu0 %v4122
    %4543 = vmatprep.subr.bf16.mxu0 %v4127
    %4544 = vmatpush1.bf16.msra.mxu0 %v4126
    %4545 = vmatprep.subr.bf16.mxu0 %v4131
    %4546 = vmatpush1.bf16.msra.mxu0 %v4130
    %4547 = vmatprep.subr.bf16.mxu0 %v4135
    %4548 = vmatpush1.bf16.msra.mxu0 %v4134
    %4549 = vmatprep.mubr.bf16.mxu0 %v2835
    %4550 = vmatmul.mubr.bf16.gmra.mrb[0].mxu0 %v2834
    %v4551 = vpop.f32.mrb[0].mxu0
    %v4552 = vadd.f32 %v4511, %v4551
    %v4553 = vpop.f32.mrb[0].mxu0
    %v4554 = vadd.f32 %v4513, %v4553
    %v4555 = vpop.f32.mrb[0].mxu0
    %v4556 = vpop.f32.mrb[0].mxu0
    %4557 = vdwg.mxu0
    %4558 = vmatprep.subr.bf16.mxu0 %v3885
    %4559 = vmatpush1.bf16.msra.mxu0 %v3884
    %4560 = vmatprep.subr.bf16.mxu0 %v3889
    %4561 = vmatpush1.bf16.msra.mxu0 %v3888
    %4562 = vmatprep.subr.bf16.mxu0 %v3893
    %4563 = vmatpush1.bf16.msra.mxu0 %v3892
    %4564 = vmatprep.subr.bf16.mxu0 %v3897
    %4565 = vmatpush1.bf16.msra.mxu0 %v3896
    %4566 = vmatprep.subr.bf16.mxu0 %v3901
    %4567 = vmatpush1.bf16.msra.mxu0 %v3900
    %4568 = vmatprep.subr.bf16.mxu0 %v3905
    %4569 = vmatpush1.bf16.msra.mxu0 %v3904
    %4570 = vmatprep.subr.bf16.mxu0 %v3909
    %4571 = vmatpush1.bf16.msra.mxu0 %v3908
    %4572 = vmatprep.subr.bf16.mxu0 %v3913
    %4573 = vmatpush1.bf16.msra.mxu0 %v3912
    %4574 = vmatprep.subr.bf16.mxu0 %v3917
    %4575 = vmatpush1.bf16.msra.mxu0 %v3916
    %4576 = vmatprep.subr.bf16.mxu0 %v3921
    %4577 = vmatpush1.bf16.msra.mxu0 %v3920
    %4578 = vmatprep.subr.bf16.mxu0 %v3925
    %4579 = vmatpush1.bf16.msra.mxu0 %v3924
    %4580 = vmatprep.subr.bf16.mxu0 %v3929
    %4581 = vmatpush1.bf16.msra.mxu0 %v3928
    %4582 = vmatprep.subr.bf16.mxu0 %v3933
    %4583 = vmatpush1.bf16.msra.mxu0 %v3932
    %4584 = vmatprep.subr.bf16.mxu0 %v3937
    %4585 = vmatpush1.bf16.msra.mxu0 %v3936
    %4586 = vmatprep.subr.bf16.mxu0 %v3941
    %4587 = vmatpush1.bf16.msra.mxu0 %v3940
    %4588 = vmatprep.subr.bf16.mxu0 %v3945
    %4589 = vmatpush1.bf16.msra.mxu0 %v3944
    %4590 = vmatprep.mubr.bf16.mxu0 %v2829
    %4591 = vmatmul.mubr.bf16.gmra.mrb[0].mxu0 %v2828
    %v4592 = vpop.f32.mrb[0].mxu0
    %v4593 = vadd.f32 %v3105, %v4592
    %v4594 = vpop.f32.mrb[0].mxu0
    %v4595 = vadd.f32 %v3109, %v4594
    %v4596 = vpop.f32.mrb[0].mxu0
    %v4597 = vpop.f32.mrb[0].mxu0
    %4598 = vdwg.mxu0
    %4599 = vmatprep.subr.bf16.mxu0 %v3949
    %4600 = vmatpush1.bf16.msra.mxu0 %v3948
    %4601 = vmatprep.subr.bf16.mxu0 %v3953
    %4602 = vmatpush1.bf16.msra.mxu0 %v3952
    %4603 = vmatprep.subr.bf16.mxu0 %v3957
    %4604 = vmatpush1.bf16.msra.mxu0 %v3956
    %4605 = vmatprep.subr.bf16.mxu0 %v3961
    %4606 = vmatpush1.bf16.msra.mxu0 %v3960
    %4607 = vmatprep.subr.bf16.mxu0 %v3965
    %4608 = vmatpush1.bf16.msra.mxu0 %v3964
    %4609 = vmatprep.subr.bf16.mxu0 %v3969
    %4610 = vmatpush1.bf16.msra.mxu0 %v3968
    %4611 = vmatprep.subr.bf16.mxu0 %v3973
    %4612 = vmatpush1.bf16.msra.mxu0 %v3972
    %4613 = vmatprep.subr.bf16.mxu0 %v3977
    %4614 = vmatpush1.bf16.msra.mxu0 %v3976
    %4615 = vmatprep.subr.bf16.mxu0 %v3981
    %4616 = vmatpush1.bf16.msra.mxu0 %v3980
    %4617 = vmatprep.subr.bf16.mxu0 %v3985
    %4618 = vmatpush1.bf16.msra.mxu0 %v3984
    %4619 = vmatprep.subr.bf16.mxu0 %v3989
    %4620 = vmatpush1.bf16.msra.mxu0 %v3988
    %4621 = vmatprep.subr.bf16.mxu0 %v3993
    %4622 = vmatpush1.bf16.msra.mxu0 %v3992
    %4623 = vmatprep.subr.bf16.mxu0 %v3997
    %4624 = vmatpush1.bf16.msra.mxu0 %v3996
    %4625 = vmatprep.subr.bf16.mxu0 %v4001
    %4626 = vmatpush1.bf16.msra.mxu0 %v4000
    %4627 = vmatprep.subr.bf16.mxu0 %v4005
    %4628 = vmatpush1.bf16.msra.mxu0 %v4004
    %4629 = vmatprep.subr.bf16.mxu0 %v4009
    %4630 = vmatpush1.bf16.msra.mxu0 %v4008
    %4631 = vmatprep.mubr.bf16.mxu0 %v2831
    %4632 = vmatmul.mubr.bf16.gmra.mrb[0].mxu0 %v2830
    %v4633 = vpop.f32.mrb[0].mxu0
    %v4634 = vadd.f32 %v4593, %v4633
    %v4635 = vpop.f32.mrb[0].mxu0
    %v4636 = vadd.f32 %v4595, %v4635
    %v4637 = vpop.f32.mrb[0].mxu0
    %v4638 = vpop.f32.mrb[0].mxu0
    %4639 = vdwg.mxu0
    %4640 = vmatprep.subr.bf16.mxu0 %v4013
    %4641 = vmatpush1.bf16.msra.mxu0 %v4012
    %4642 = vmatprep.subr.bf16.mxu0 %v4017
    %4643 = vmatpush1.bf16.msra.mxu0 %v4016
    %4644 = vmatprep.subr.bf16.mxu0 %v4021
    %4645 = vmatpush1.bf16.msra.mxu0 %v4020
    %4646 = vmatprep.subr.bf16.mxu0 %v4025
    %4647 = vmatpush1.bf16.msra.mxu0 %v4024
    %4648 = vmatprep.subr.bf16.mxu0 %v4029
    %4649 = vmatpush1.bf16.msra.mxu0 %v4028
    %4650 = vmatprep.subr.bf16.mxu0 %v4033
    %4651 = vmatpush1.bf16.msra.mxu0 %v4032
    %4652 = vmatprep.subr.bf16.mxu0 %v4037
    %4653 = vmatpush1.bf16.msra.mxu0 %v4036
    %4654 = vmatprep.subr.bf16.mxu0 %v4041
    %4655 = vmatpush1.bf16.msra.mxu0 %v4040
    %4656 = vmatprep.subr.bf16.mxu0 %v4045
    %4657 = vmatpush1.bf16.msra.mxu0 %v4044
    %4658 = vmatprep.subr.bf16.mxu0 %v4049
    %4659 = vmatpush1.bf16.msra.mxu0 %v4048
    %4660 = vmatprep.subr.bf16.mxu0 %v4053
    %4661 = vmatpush1.bf16.msra.mxu0 %v4052
    %4662 = vmatprep.subr.bf16.mxu0 %v4057
    %4663 = vmatpush1.bf16.msra.mxu0 %v4056
    %4664 = vmatprep.subr.bf16.mxu0 %v4061
    %4665 = vmatpush1.bf16.msra.mxu0 %v4060
    %4666 = vmatprep.subr.bf16.mxu0 %v4065
    %4667 = vmatpush1.bf16.msra.mxu0 %v4064
    %4668 = vmatprep.subr.bf16.mxu0 %v4069
    %4669 = vmatpush1.bf16.msra.mxu0 %v4068
    %4670 = vmatprep.subr.bf16.mxu0 %v4073
    %4671 = vmatpush1.bf16.msra.mxu0 %v4072
    %4672 = vmatprep.mubr.bf16.mxu0 %v2833
    %4673 = vmatmul.mubr.bf16.gmra.mrb[0].mxu0 %v2832
    %v4674 = vpop.f32.mrb[0].mxu0
    %v4675 = vadd.f32 %v4634, %v4674
    %v4676 = vpop.f32.mrb[0].mxu0
    %v4677 = vadd.f32 %v4636, %v4676
    %v4678 = vpop.f32.mrb[0].mxu0
    %v4679 = vpop.f32.mrb[0].mxu0
    %4680 = vdwg.mxu0
    %4681 = vmatprep.subr.bf16.mxu0 %v4077
    %4682 = vmatpush1.bf16.msra.mxu0 %v4076
    %4683 = vmatprep.subr.bf16.mxu0 %v4081
    %4684 = vmatpush1.bf16.msra.mxu0 %v4080
    %4685 = vmatprep.subr.bf16.mxu0 %v4085
    %4686 = vmatpush1.bf16.msra.mxu0 %v4084
    %4687 = vmatprep.subr.bf16.mxu0 %v4089
    %4688 = vmatpush1.bf16.msra.mxu0 %v4088
    %4689 = vmatprep.subr.bf16.mxu0 %v4093
    %4690 = vmatpush1.bf16.msra.mxu0 %v4092
    %4691 = vmatprep.subr.bf16.mxu0 %v4097
    %4692 = vmatpush1.bf16.msra.mxu0 %v4096
    %4693 = vmatprep.subr.bf16.mxu0 %v4101
    %4694 = vmatpush1.bf16.msra.mxu0 %v4100
    %4695 = vmatprep.subr.bf16.mxu0 %v4105
    %4696 = vmatpush1.bf16.msra.mxu0 %v4104
    %4697 = vmatprep.subr.bf16.mxu0 %v4109
    %4698 = vmatpush1.bf16.msra.mxu0 %v4108
    %4699 = vmatprep.subr.bf16.mxu0 %v4113
    %4700 = vmatpush1.bf16.msra.mxu0 %v4112
    %4701 = vmatprep.subr.bf16.mxu0 %v4117
    %4702 = vmatpush1.bf16.msra.mxu0 %v4116
    %4703 = vmatprep.subr.bf16.mxu0 %v4121
    %4704 = vmatpush1.bf16.msra.mxu0 %v4120
    %4705 = vmatprep.subr.bf16.mxu0 %v4125
    %4706 = vmatpush1.bf16.msra.mxu0 %v4124
    %4707 = vmatprep.subr.bf16.mxu0 %v4129
    %4708 = vmatpush1.bf16.msra.mxu0 %v4128
    %4709 = vmatprep.subr.bf16.mxu0 %v4133
    %4710 = vmatpush1.bf16.msra.mxu0 %v4132
    %4711 = vmatprep.subr.bf16.mxu0 %v4137
    %4712 = vmatpush1.bf16.msra.mxu0 %v4136
    %4713 = vmatprep.mubr.bf16.mxu0 %v2835
    %4714 = vmatmul.mubr.bf16.gmra.mrb[0].mxu0 %v2834
    %v4715 = vpop.f32.mrb[0].mxu0
    %v4716 = vadd.f32 %v4675, %v4715
    %v4717 = vpop.f32.mrb[0].mxu0
    %v4718 = vadd.f32 %v4677, %v4717
    %v4719 = vpop.f32.mrb[0].mxu0
    %v4720 = vpop.f32.mrb[0].mxu0
    %4721 = vdwg.mxu0
    %v4722 = vmax.f32 %v4552, 0.0
    %v4723 = vmax.f32 %v4554, 0.0
    %v4724 = vmax.f32 %v4716, 0.0
    %v4725 = vmax.f32 %v4718, 0.0
    %v4726 = vpack.c.bf16 %v4722, %v4722
    %v4727 = vpack.c.bf16 %v4723, %v4723
    %v4728 = vpack.c.bf16 %v4724, %v4724
    %v4729 = vpack.c.bf16 %v4725, %v4725
    %v4730 = vld [vmem:[#allocation14] sm:$0xf]
    %v4731 = vld [vmem:[#allocation14 + $0x4] sm:$0xf]
    %v4732 = vld [vmem:[#allocation14 + $0x8] sm:$0xf]
    %v4733 = vld [vmem:[#allocation14 + $0xc] sm:$0xf]
    %v4734 = vld [vmem:[#allocation14 + $0x10] sm:$0xf]
    %v4735 = vld [vmem:[#allocation14 + $0x14] sm:$0xf]
    %v4736 = vld [vmem:[#allocation14 + $0x18] sm:$0xf]
    %v4737 = vld [vmem:[#allocation14 + $0x1c] sm:$0xf]
    %v4738 = vld [vmem:[#allocation14 + $0x20] sm:$0xf]
    %v4739 = vld [vmem:[#allocation14 + $0x24] sm:$0xf]
    %v4740 = vld [vmem:[#allocation14 + $0x28] sm:$0xf]
    %v4741 = vld [vmem:[#allocation14 + $0x2c] sm:$0xf]
    %v4742 = vld [vmem:[#allocation14 + $0x30] sm:$0xf]
    %v4743 = vld [vmem:[#allocation14 + $0x34] sm:$0xf]
    %v4744 = vld [vmem:[#allocation14 + $0x38] sm:$0xf]
    %v4745 = vld [vmem:[#allocation14 + $0x3c] sm:$0xf]
    %v4746 = vld [vmem:[#allocation14 + $0x40] sm:$0xf]
    %v4747 = vld [vmem:[#allocation14 + $0x44] sm:$0xf]
    %v4748 = vld [vmem:[#allocation14 + $0x48] sm:$0xf]
    %v4749 = vld [vmem:[#allocation14 + $0x4c] sm:$0xf]
    %v4750 = vld [vmem:[#allocation14 + $0x50] sm:$0xf]
    %v4751 = vld [vmem:[#allocation14 + $0x54] sm:$0xf]
    %v4752 = vld [vmem:[#allocation14 + $0x58] sm:$0xf]
    %v4753 = vld [vmem:[#allocation14 + $0x5c] sm:$0xf]
    %v4754 = vld [vmem:[#allocation14 + $0x60] sm:$0xf]
    %v4755 = vld [vmem:[#allocation14 + $0x64] sm:$0xf]
    %v4756 = vld [vmem:[#allocation14 + $0x68] sm:$0xf]
    %v4757 = vld [vmem:[#allocation14 + $0x6c] sm:$0xf]
    %v4758 = vld [vmem:[#allocation14 + $0x70] sm:$0xf]
    %v4759 = vld [vmem:[#allocation14 + $0x74] sm:$0xf]
    %v4760 = vld [vmem:[#allocation14 + $0x78] sm:$0xf]
    %v4761 = vld [vmem:[#allocation14 + $0x7c] sm:$0xf]
    %v4762 = vld [vmem:[#allocation14 + $0x80] sm:$0xf]
    %v4763 = vld [vmem:[#allocation14 + $0x84] sm:$0xf]
    %v4764 = vld [vmem:[#allocation14 + $0x88] sm:$0xf]
    %v4765 = vld [vmem:[#allocation14 + $0x8c] sm:$0xf]
    %v4766 = vld [vmem:[#allocation14 + $0x90] sm:$0xf]
    %v4767 = vld [vmem:[#allocation14 + $0x94] sm:$0xf]
    %v4768 = vld [vmem:[#allocation14 + $0x98] sm:$0xf]
    %v4769 = vld [vmem:[#allocation14 + $0x9c] sm:$0xf]
    %v4770 = vld [vmem:[#allocation14 + $0xa0] sm:$0xf]
    %v4771 = vld [vmem:[#allocation14 + $0xa4] sm:$0xf]
    %v4772 = vld [vmem:[#allocation14 + $0xa8] sm:$0xf]
    %v4773 = vld [vmem:[#allocation14 + $0xac] sm:$0xf]
    %v4774 = vld [vmem:[#allocation14 + $0xb0] sm:$0xf]
    %v4775 = vld [vmem:[#allocation14 + $0xb4] sm:$0xf]
    %v4776 = vld [vmem:[#allocation14 + $0xb8] sm:$0xf]
    %v4777 = vld [vmem:[#allocation14 + $0xbc] sm:$0xf]
    %v4778 = vld [vmem:[#allocation14 + $0xc0] sm:$0xf]
    %v4779 = vld [vmem:[#allocation14 + $0xc4] sm:$0xf]
    %v4780 = vld [vmem:[#allocation14 + $0xc8] sm:$0xf]
    %v4781 = vld [vmem:[#allocation14 + $0xcc] sm:$0xf]
    %v4782 = vld [vmem:[#allocation14 + $0xd0] sm:$0xf]
    %v4783 = vld [vmem:[#allocation14 + $0xd4] sm:$0xf]
    %v4784 = vld [vmem:[#allocation14 + $0xd8] sm:$0xf]
    %v4785 = vld [vmem:[#allocation14 + $0xdc] sm:$0xf]
    %v4786 = vld [vmem:[#allocation14 + $0xe0] sm:$0xf]
    %v4787 = vld [vmem:[#allocation14 + $0xe4] sm:$0xf]
    %v4788 = vld [vmem:[#allocation14 + $0xe8] sm:$0xf]
    %v4789 = vld [vmem:[#allocation14 + $0xec] sm:$0xf]
    %v4790 = vld [vmem:[#allocation14 + $0xf0] sm:$0xf]
    %v4791 = vld [vmem:[#allocation14 + $0xf4] sm:$0xf]
    %v4792 = vld [vmem:[#allocation14 + $0xf8] sm:$0xf]
    %v4793 = vld [vmem:[#allocation14 + $0xfc] sm:$0xf]
    %v4794 = vld [vmem:[%s12] sm:$0x1]
    %v4796 = vlaneseq
    %v4797 = vshrl.u32 %v4796, 7
    %v4798 = vsub.s32 0, %v4797
    %v4799 = vrot.slane %v4794, %v4798
    %v4865 = vunpack.c.l.b16 %v4730
    %v4866 = vunpack.c.l.b16 %v4731
    %v4867 = vunpack.c.l.b16 %v4732
    %v4868 = vunpack.c.l.b16 %v4733
    %v4869 = vunpack.c.l.b16 %v4734
    %v4870 = vunpack.c.l.b16 %v4735
    %v4871 = vunpack.c.l.b16 %v4736
    %v4872 = vunpack.c.l.b16 %v4737
    %v4873 = vunpack.c.l.b16 %v4738
    %v4874 = vunpack.c.l.b16 %v4739
    %v4875 = vunpack.c.l.b16 %v4740
    %v4876 = vunpack.c.l.b16 %v4741
    %v4877 = vunpack.c.l.b16 %v4742
    %v4878 = vunpack.c.l.b16 %v4743
    %v4879 = vunpack.c.l.b16 %v4744
    %v4880 = vunpack.c.l.b16 %v4745
    %v4881 = vunpack.c.l.b16 %v4746
    %v4882 = vunpack.c.l.b16 %v4747
    %v4883 = vunpack.c.l.b16 %v4748
    %v4884 = vunpack.c.l.b16 %v4749
    %v4885 = vunpack.c.l.b16 %v4750
    %v4886 = vunpack.c.l.b16 %v4751
    %v4887 = vunpack.c.l.b16 %v4752
    %v4888 = vunpack.c.l.b16 %v4753
    %v4889 = vunpack.c.l.b16 %v4754
    %v4890 = vunpack.c.l.b16 %v4755
    %v4891 = vunpack.c.l.b16 %v4756
    %v4892 = vunpack.c.l.b16 %v4757
    %v4893 = vunpack.c.l.b16 %v4758
    %v4894 = vunpack.c.l.b16 %v4759
    %v4895 = vunpack.c.l.b16 %v4760
    %v4896 = vunpack.c.l.b16 %v4761
    %v4897 = vunpack.c.l.b16 %v4762
    %v4898 = vunpack.c.l.b16 %v4763
    %v4899 = vunpack.c.l.b16 %v4764
    %v4900 = vunpack.c.l.b16 %v4765
    %v4901 = vunpack.c.l.b16 %v4766
    %v4902 = vunpack.c.l.b16 %v4767
    %v4903 = vunpack.c.l.b16 %v4768
    %v4904 = vunpack.c.l.b16 %v4769
    %v4905 = vunpack.c.l.b16 %v4770
    %v4906 = vunpack.c.l.b16 %v4771
    %v4907 = vunpack.c.l.b16 %v4772
    %v4908 = vunpack.c.l.b16 %v4773
    %v4909 = vunpack.c.l.b16 %v4774
    %v4910 = vunpack.c.l.b16 %v4775
    %v4911 = vunpack.c.l.b16 %v4776
    %v4912 = vunpack.c.l.b16 %v4777
    %v4913 = vunpack.c.l.b16 %v4778
    %v4914 = vunpack.c.l.b16 %v4779
    %v4915 = vunpack.c.l.b16 %v4780
    %v4916 = vunpack.c.l.b16 %v4781
    %v4917 = vunpack.c.l.b16 %v4782
    %v4918 = vunpack.c.l.b16 %v4783
    %v4919 = vunpack.c.l.b16 %v4784
    %v4920 = vunpack.c.l.b16 %v4785
    %v4921 = vunpack.c.l.b16 %v4786
    %v4922 = vunpack.c.l.b16 %v4787
    %v4923 = vunpack.c.l.b16 %v4788
    %v4924 = vunpack.c.l.b16 %v4789
    %v4925 = vunpack.c.l.b16 %v4790
    %v4926 = vunpack.c.l.b16 %v4791
    %v4927 = vunpack.c.l.b16 %v4792
    %v4928 = vunpack.c.l.b16 %v4793
    %v4929 = vpack.c.b16 %v4866, %v4865
    %v4930 = vpack.c.b16 %v4868, %v4867
    %v4931 = vpack.c.b16 %v4870, %v4869
    %v4932 = vpack.c.b16 %v4872, %v4871
    %v4933 = vpack.c.b16 %v4874, %v4873
    %v4934 = vpack.c.b16 %v4876, %v4875
    %v4935 = vpack.c.b16 %v4878, %v4877
    %v4936 = vpack.c.b16 %v4880, %v4879
    %v4937 = vpack.c.b16 %v4882, %v4881
    %v4938 = vpack.c.b16 %v4884, %v4883
    %v4939 = vpack.c.b16 %v4886, %v4885
    %v4940 = vpack.c.b16 %v4888, %v4887
    %v4941 = vpack.c.b16 %v4890, %v4889
    %v4942 = vpack.c.b16 %v4892, %v4891
    %v4943 = vpack.c.b16 %v4894, %v4893
    %v4944 = vpack.c.b16 %v4896, %v4895
    %v4945 = vpack.c.b16 %v4898, %v4897
    %v4946 = vpack.c.b16 %v4900, %v4899
    %v4947 = vpack.c.b16 %v4902, %v4901
    %v4948 = vpack.c.b16 %v4904, %v4903
    %v4949 = vpack.c.b16 %v4906, %v4905
    %v4950 = vpack.c.b16 %v4908, %v4907
    %v4951 = vpack.c.b16 %v4910, %v4909
    %v4952 = vpack.c.b16 %v4912, %v4911
    %v4953 = vpack.c.b16 %v4914, %v4913
    %v4954 = vpack.c.b16 %v4916, %v4915
    %v4955 = vpack.c.b16 %v4918, %v4917
    %v4956 = vpack.c.b16 %v4920, %v4919
    %v4957 = vpack.c.b16 %v4922, %v4921
    %v4958 = vpack.c.b16 %v4924, %v4923
    %v4959 = vpack.c.b16 %v4926, %v4925
    %v4960 = vpack.c.b16 %v4928, %v4927
    %4993 = vmatprep.subr.bf16.mxu0 0
    %4994 = vmatpush1.bf16.msra.mxu0 %v4929
    %4995 = vmatprep.subr.bf16.mxu0 0
    %4996 = vmatpush1.bf16.msra.mxu0 %v4930
    %4997 = vmatprep.subr.bf16.mxu0 0
    %4998 = vmatpush1.bf16.msra.mxu0 %v4931
    %4999 = vmatprep.subr.bf16.mxu0 0
    %5000 = vmatpush1.bf16.msra.mxu0 %v4932
    %5001 = vmatprep.subr.bf16.mxu0 0
    %5002 = vmatpush1.bf16.msra.mxu0 %v4933
    %5003 = vmatprep.subr.bf16.mxu0 0
    %5004 = vmatpush1.bf16.msra.mxu0 %v4934
    %5005 = vmatprep.subr.bf16.mxu0 0
    %5006 = vmatpush1.bf16.msra.mxu0 %v4935
    %5007 = vmatprep.subr.bf16.mxu0 0
    %5008 = vmatpush1.bf16.msra.mxu0 %v4936
    %5009 = vmatprep.subr.bf16.mxu0 0
    %5010 = vmatpush1.bf16.msra.mxu0 %v4937
    %5011 = vmatprep.subr.bf16.mxu0 0
    %5012 = vmatpush1.bf16.msra.mxu0 %v4938
    %5013 = vmatprep.subr.bf16.mxu0 0
    %5014 = vmatpush1.bf16.msra.mxu0 %v4939
    %5015 = vmatprep.subr.bf16.mxu0 0
    %5016 = vmatpush1.bf16.msra.mxu0 %v4940
    %5017 = vmatprep.subr.bf16.mxu0 0
    %5018 = vmatpush1.bf16.msra.mxu0 %v4941
    %5019 = vmatprep.subr.bf16.mxu0 0
    %5020 = vmatpush1.bf16.msra.mxu0 %v4942
    %5021 = vmatprep.subr.bf16.mxu0 0
    %5022 = vmatpush1.bf16.msra.mxu0 %v4943
    %5023 = vmatprep.subr.bf16.mxu0 0
    %5024 = vmatpush1.bf16.msra.mxu0 %v4944
    %5025 = vmatprep.mubr.bf16.mxu0 %v4727
    %5026 = vmatmul.mubr.bf16.gmra.mrb[0].mxu0 %v4726
    %v5027 = vpop.f32.mrb[0].mxu0
    %v5028 = vadd.f32 %v4799, %v5027
    %v5029 = vpop.f32.mrb[0].mxu0
    %v5030 = vpop.f32.mrb[0].mxu0
    %v5031 = vpop.f32.mrb[0].mxu0
    %5032 = vdwg.mxu0
    %5033 = vmatprep.subr.bf16.mxu0 0
    %5034 = vmatpush1.bf16.msra.mxu0 %v4945
    %5035 = vmatprep.subr.bf16.mxu0 0
    %5036 = vmatpush1.bf16.msra.mxu0 %v4946
    %5037 = vmatprep.subr.bf16.mxu0 0
    %5038 = vmatpush1.bf16.msra.mxu0 %v4947
    %5039 = vmatprep.subr.bf16.mxu0 0
    %5040 = vmatpush1.bf16.msra.mxu0 %v4948
    %5041 = vmatprep.subr.bf16.mxu0 0
    %5042 = vmatpush1.bf16.msra.mxu0 %v4949
    %5043 = vmatprep.subr.bf16.mxu0 0
    %5044 = vmatpush1.bf16.msra.mxu0 %v4950
    %5045 = vmatprep.subr.bf16.mxu0 0
    %5046 = vmatpush1.bf16.msra.mxu0 %v4951
    %5047 = vmatprep.subr.bf16.mxu0 0
    %5048 = vmatpush1.bf16.msra.mxu0 %v4952
    %5049 = vmatprep.subr.bf16.mxu0 0
    %5050 = vmatpush1.bf16.msra.mxu0 %v4953
    %5051 = vmatprep.subr.bf16.mxu0 0
    %5052 = vmatpush1.bf16.msra.mxu0 %v4954
    %5053 = vmatprep.subr.bf16.mxu0 0
    %5054 = vmatpush1.bf16.msra.mxu0 %v4955
    %5055 = vmatprep.subr.bf16.mxu0 0
    %5056 = vmatpush1.bf16.msra.mxu0 %v4956
    %5057 = vmatprep.subr.bf16.mxu0 0
    %5058 = vmatpush1.bf16.msra.mxu0 %v4957
    %5059 = vmatprep.subr.bf16.mxu0 0
    %5060 = vmatpush1.bf16.msra.mxu0 %v4958
    %5061 = vmatprep.subr.bf16.mxu0 0
    %5062 = vmatpush1.bf16.msra.mxu0 %v4959
    %5063 = vmatprep.subr.bf16.mxu0 0
    %5064 = vmatpush1.bf16.msra.mxu0 %v4960
    %5065 = vmatprep.mubr.bf16.mxu0 %v4729
    %5066 = vmatmul.mubr.bf16.gmra.mrb[0].mxu0 %v4728
    %v5067 = vpop.f32.mrb[0].mxu0
    %v5068 = vadd.f32 %v5028, %v5067
    %v5069 = vpop.f32.mrb[0].mxu0
    %v5070 = vpop.f32.mrb[0].mxu0
    %v5071 = vpop.f32.mrb[0].mxu0
    %5072 = vdwg.mxu0
    %5073 = vst [vmem:[#allocation16] sm:$0xff] %v5068
    // Predicated region
    $region86: #{tpu_custom_call.1} parent=1 // pred_check
      _
    $region87: #{tpu_custom_call.1} parent=1 // pred_check_branch
      %5075 = sbr.rel (0) target = $region89
    $region88: #{tpu_custom_call.1} parent=1 // pred_region
      %s5077 = ssub.s32 128, 128
      %5078 = vsyncadd [#allocation4], %s5077
      %s5080 = sshll.u32 [#allocation16], 4
      %s5081 = int_to_ptr.vmem [resolvable:$true] %s5080
      %5083 = dma.vmem_to_hbm [thread:$0]  %s5081, 128, %s13, [#allocation4]
    $region89: #{tpu_custom_call.1} parent=1 // pred_fallthru
      _
    // Predicated region
    $region90: #{tpu_custom_call.1} parent=1 // pred_check
      _
    $region91: #{tpu_custom_call.1} parent=1 // pred_check_branch
      %5085 = sbr.rel (0) target = $region93
    $region92: #{tpu_custom_call.1} parent=1 // pred_region
      %5086 = dma.done [#allocation4], 128
    $region93: #{tpu_custom_call.1} parent=1 // pred_fallthru
      _
    %5087 = vsyncpa [#allocation3], 1
    %5088 = vsyncpa [#allocation6], 1
    %5089 = vsyncpa [#allocation9], 1
    %5090 = vsyncpa [#allocation12], 1
    %5091 = vsyncpa [#allocation15], 1
    %5092 = vsyncpa [#allocation4], 1

// kernel: tpu_custom_call.1
$region0: #{tpu_custom_call.1}
  #allocation0 [shape = 'u32[]', space=smem, size = 0x4, offset = 0x4, fixed_abs, tag = 'smem constant byte address 0x4 - core index']
  #allocation1 [shape = 'u32[144,128]{1,0:T(1,128)}', space=vmem, size = 0x12000, scoped, tag = 'internal scratch']
  %s0 = inlined_call_operand.hbm [shape: bf16[8,128], index: 0, kind: input, shape index: {}]
  %s1 = inlined_call_operand.hbm [shape: bf16[128,128], index: 1, kind: input, shape index: {}]
  %s2 = inlined_call_operand.hbm [shape: f32[1,128], index: 2, kind: input, shape index: {}]
  %s3 = inlined_call_operand.hbm [shape: bf16[128,256], index: 3, kind: input, shape index: {}]
  %s4 = inlined_call_operand.vmem [shape: f32[1,256], index: 4, kind: input, shape index: {}]
  %s5 = inlined_call_operand.hbm [shape: bf16[256,512], index: 5, kind: input, shape index: {}]
  %s6 = inlined_call_operand.vmem [shape: f32[1,512], index: 6, kind: input, shape index: {}]
  %s7 = inlined_call_operand.hbm [shape: bf16[512,1024], index: 7, kind: input, shape index: {}]
  %s8 = inlined_call_operand.vmem [shape: f32[1,1024], index: 8, kind: input, shape index: {}]
  %s9 = inlined_call_operand.hbm [shape: bf16[1024,512], index: 9, kind: input, shape index: {}]
  %s10 = inlined_call_operand.vmem [shape: f32[1,512], index: 10, kind: input, shape index: {}]
  %s11 = inlined_call_operand.hbm [shape: bf16[512,128], index: 11, kind: input, shape index: {}]
  %s12 = inlined_call_operand.vmem [shape: f32[1,128], index: 12, kind: input, shape index: {}]
  %s13 = inlined_call_operand.hbm [shape: f32[8,128], index: 13, kind: output, shape index: {}]
  %s14 = sld [smem:[#allocation0]]
  $region94: #{tpu_custom_call.1} parent=0
    _
  %s16 = ssub.s32 1, %s14
  %s17 = scalar_select 0, %s16, %s14
  $region1: #{tpu_custom_call.1} parent=0
    #allocation2 [shape = 'u8[2048]{0}', space=vmem, size = 0x800, scoped, tag = 'input window, operand 0, single buffered']
    #allocation3 [shape = 's32[1]{0}', space=sflag, size = 0x4, scoped, tag = 'scoped memory for tpu_custom_call.1']
    #allocation4 [shape = 's32[1]{0}', space=sflag, size = 0x4, scoped, tag = 'scoped memory for tpu_custom_call.1']
    #allocation5 [shape = 'u8[32768]{0}', space=vmem, size = 0x8000, scoped, tag = 'input window, operand 1, single buffered']
    #allocation6 [shape = 's32[1]{0}', space=sflag, size = 0x4, scoped, tag = 'scoped memory for tpu_custom_call.1']
    #allocation7 [shape = 'u8[512]{0}', space=vmem, size = 0x400, scoped, tag = 'input window, operand 2, single buffered']
    #allocation8 [shape = 'u8[65536]{0}', space=vmem, size = 0x10000, scoped, tag = 'input window, operand 3, single buffered']
    #allocation9 [shape = 's32[1]{0}', space=sflag, size = 0x4, scoped, tag = 'scoped memory for tpu_custom_call.1']
    #allocation10 [shape = 'u8[262144]{0}', space=vmem, size = 0x40000, scoped, tag = 'input window, operand 5, single buffered']
    #allocation11 [shape = 'u8[1048576]{0}', space=vmem, size = 0x100000, scoped, tag = 'input window, operand 7, single buffered']
    #allocation12 [shape = 's32[1]{0}', space=sflag, size = 0x4, scoped, tag = 'scoped memory for tpu_custom_call.1']
    #allocation13 [shape = 'u8[1048576]{0}', space=vmem, size = 0x100000, scoped, tag = 'input window, operand 9, single buffered']
    #allocation14 [shape = 'u8[131072]{0}', space=vmem, size = 0x20000, scoped, tag = 'input window, operand 11, single buffered']
    #allocation15 [shape = 's32[1]{0}', space=sflag, size = 0x4, scoped, tag = 'scoped memory for tpu_custom_call.1']
    #allocation16 [shape = 'u8[4096]{0}', space=vmem, size = 0x1000, scoped, tag = 'output window, operand 0, single buffered']
    %18 = vsyncpa [#allocation3], 0
    %19 = vsyncpa [#allocation6], 0
    %20 = vsyncpa [#allocation9], 0
    %21 = vsyncpa [#allocation12], 0
    %22 = vsyncpa [#allocation15], 0
    %23 = vsyncpa [#allocation4], 0
    // Predicated region
    $region2: #{tpu_custom_call.1} parent=1 // pred_check
      _
    $region3: #{tpu_custom_call.1} parent=1 // pred_check_branch
      %25 = sbr.rel (0) target = $region5
    $region4: #{tpu_custom_call.1} parent=1 // pred_region
      %s27 = ssub.s32 64, 64
      %28 = vsyncadd [#allocation3], %s27
      %s30 = sshll.u32 [#allocation2], 4
      %s31 = int_to_ptr.vmem [resolvable:$true] %s30
      %33 = dma.hbm_to_vmem [thread:$0]  %s0, 64, %s31, [#allocation3]
    $region5: #{tpu_custom_call.1} parent=1 // pred_fallthru
      _
    // Predicated region
    $region6: #{tpu_custom_call.1} parent=1 // pred_check
      _
    $region7: #{tpu_custom_call.1} parent=1 // pred_check_branch
      %35 = sbr.rel (0) target = $region9
    $region8: #{tpu_custom_call.1} parent=1 // pred_region
      %s37 = ssub.s32 1024, 1024
      %38 = vsyncadd [#allocation6], %s37
      %s39 = sshll.u32 [#allocation5], 4
      %s40 = int_to_ptr.vmem [resolvable:$true] %s39
      %45 = dma.hbm_to_vmem [thread:$0]  %s1, 1024, %s40, [#allocation6], 64, 64, 4
    $region9: #{tpu_custom_call.1} parent=1 // pred_fallthru
      _
    // Predicated region
    $region10: #{tpu_custom_call.1} parent=1 // pred_check
      _
    $region11: #{tpu_custom_call.1} parent=1 // pred_check_branch
      %47 = sbr.rel (0) target = $region13
    $region12: #{tpu_custom_call.1} parent=1 // pred_region
      %s49 = ssub.s32 16, 16
      %50 = vsyncadd [#allocation6], %s49
      %s52 = sshll.u32 [#allocation7], 4
      %s53 = int_to_ptr.vmem [resolvable:$true] %s52
      %55 = dma.hbm_to_vmem [thread:$0]  %s2, 16, %s53, [#allocation6]
    $region13: #{tpu_custom_call.1} parent=1 // pred_fallthru
      _
    // Predicated region
    $region14: #{tpu_custom_call.1} parent=1 // pred_check
      _
    $region15: #{tpu_custom_call.1} parent=1 // pred_check_branch
      %57 = sbr.rel (0) target = $region17
    $region16: #{tpu_custom_call.1} parent=1 // pred_region
      %s59 = ssub.s32 2048, 2048
      %60 = vsyncadd [#allocation9], %s59
      %s61 = sshll.u32 [#allocation8], 4
      %s62 = int_to_ptr.vmem [resolvable:$true] %s61
      %67 = dma.hbm_to_vmem [thread:$0]  %s3, 2048, %s62, [#allocation9], 128, 128, 8
    $region17: #{tpu_custom_call.1} parent=1 // pred_fallthru
      _
    // Predicated region
    $region18: #{tpu_custom_call.1} parent=1 // pred_check
      _
    $region19: #{tpu_custom_call.1} parent=1 // pred_check_branch
      %69 = sbr.rel (0) target = $region21
    $region20: #{tpu_custom_call.1} parent=1 // pred_region
      _
    $region21: #{tpu_custom_call.1} parent=1 // pred_fallthru
      _
    // Predicated region
    $region22: #{tpu_custom_call.1} parent=1 // pred_check
      _
    $region23: #{tpu_custom_call.1} parent=1 // pred_check_branch
      %71 = sbr.rel (0) target = $region25
    $region24: #{tpu_custom_call.1} parent=1 // pred_region
      %s73 = ssub.s32 8192, 8192
      %74 = vsyncadd [#allocation9], %s73
      %s75 = sshll.u32 [#allocation10], 4
      %s76 = int_to_ptr.vmem [resolvable:$true] %s75
      %81 = dma.hbm_to_vmem [thread:$0]  %s5, 8192, %s76, [#allocation9], 256, 256, 16
    $region25: #{tpu_custom_call.1} parent=1 // pred_fallthru
      _
    // Predicated region
    $region26: #{tpu_custom_call.1} parent=1 // pred_check
      _
    $region27: #{tpu_custom_call.1} parent=1 // pred_check_branch
      %83 = sbr.rel (0) target = $region29
    $region28: #{tpu_custom_call.1} parent=1 // pred_region
      _
    $region29: #{tpu_custom_call.1} parent=1 // pred_fallthru
      _
    // Predicated region
    $region30: #{tpu_custom_call.1} parent=1 // pred_check
      _
    $region31: #{tpu_custom_call.1} parent=1 // pred_check_branch
      %85 = sbr.rel (0) target = $region33
    $region32: #{tpu_custom_call.1} parent=1 // pred_region
      %s87 = ssub.s32 32768, 32768
      %88 = vsyncadd [#allocation12], %s87
      %s89 = sshll.u32 [#allocation11], 4
      %s90 = int_to_ptr.vmem [resolvable:$true] %s89
      %95 = dma.hbm_to_vmem [thread:$0]  %s7, 32768, %s90, [#allocation12], 512, 512, 32
    $region33: #{tpu_custom_call.1} parent=1 // pred_fallthru
      _
    // Predicated region
    $region34: #{tpu_custom_call.1} parent=1 // pred_check
      _
    $region35: #{tpu_custom_call.1} parent=1 // pred_check_branch
      %97 = sbr.rel (0) target = $region37
    $region36: #{tpu_custom_call.1} parent=1 // pred_region
      _
    $region37: #{tpu_custom_call.1} parent=1 // pred_fallthru
      _
    // Predicated region
    $region38: #{tpu_custom_call.1} parent=1 // pred_check
      _
    $region39: #{tpu_custom_call.1} parent=1 // pred_check_branch
      %99 = sbr.rel (0) target = $region41
    $region40: #{tpu_custom_call.1} parent=1 // pred_region
      %s101 = ssub.s32 32768, 32768
      %102 = vsyncadd [#allocation12], %s101
      %s103 = sshll.u32 [#allocation13], 4
      %s104 = int_to_ptr.vmem [resolvable:$true] %s103
      %109 = dma.hbm_to_vmem [thread:$0]  %s9, 32768, %s104, [#allocation12], 256, 256, 16
    $region41: #{tpu_custom_call.1} parent=1 // pred_fallthru
      _
    // Predicated region
    $region42: #{tpu_custom_call.1} parent=1 // pred_check
      _
    $region43: #{tpu_custom_call.1} parent=1 // pred_check_branch
      %111 = sbr.rel (0) target = $region45
    $region44: #{tpu_custom_call.1} parent=1 // pred_region
      _
    $region45: #{tpu_custom_call.1} parent=1 // pred_fallthru
      _
    // Predicated region
    $region46: #{tpu_custom_call.1} parent=1 // pred_check
      _
    $region47: #{tpu_custom_call.1} parent=1 // pred_check_branch
      %113 = sbr.rel (0) target = $region49
    $region48: #{tpu_custom_call.1} parent=1 // pred_region
      %s115 = ssub.s32 4096, 4096
      %116 = vsyncadd [#allocation15], %s115
      %s117 = sshll.u32 [#allocation14], 4
      %s118 = int_to_ptr.vmem [resolvable:$true] %s117
      %123 = dma.hbm_to_vmem [thread:$0]  %s11, 4096, %s118, [#allocation15], 64, 64, 4
    $region49: #{tpu_custom_call.1} parent=1 // pred_fallthru
      _
    // Predicated region
    $region50: #{tpu_custom_call.1} parent=1 // pred_check
      _
    $region51: #{tpu_custom_call.1} parent=1 // pred_check_branch
      %125 = sbr.rel (0) target = $region53
    $region52: #{tpu_custom_call.1} parent=1 // pred_region
      _
    $region53: #{tpu_custom_call.1} parent=1 // pred_fallthru
      _
    // Predicated region
    $region54: #{tpu_custom_call.1} parent=1 // pred_check
      _
    $region55: #{tpu_custom_call.1} parent=1 // pred_check_branch
      %127 = sbr.rel (0) target = $region57
    $region56: #{tpu_custom_call.1} parent=1 // pred_region
      %128 = dma.done [#allocation3], 64
    $region57: #{tpu_custom_call.1} parent=1 // pred_fallthru
      _
    // Predicated region
    $region58: #{tpu_custom_call.1} parent=1 // pred_check
      _
    $region59: #{tpu_custom_call.1} parent=1 // pred_check_branch
      %130 = sbr.rel (0) target = $region61
    $region60: #{tpu_custom_call.1} parent=1 // pred_region
      %131 = dma.done [#allocation6], 1024
    $region61: #{tpu_custom_call.1} parent=1 // pred_fallthru
      _
    // Predicated region
    $region62: #{tpu_custom_call.1} parent=1 // pred_check
      _
    $region63: #{tpu_custom_call.1} parent=1 // pred_check_branch
      %133 = sbr.rel (0) target = $region65
    $region64: #{tpu_custom_call.1} parent=1 // pred_region
      %134 = dma.done [#allocation6], 16
    $region65: #{tpu_custom_call.1} parent=1 // pred_fallthru
      _
    // Predicated region
    $region66: #{tpu_custom_call.1} parent=1 // pred_check
      _
    $region67: #{tpu_custom_call.1} parent=1 // pred_check_branch
      %136 = sbr.rel (0) target = $region69
    $region68: #{tpu_custom_call.1} parent=1 // pred_region
      %137 = dma.done [#allocation9], 2048
    $region69: #{tpu_custom_call.1} parent=1 // pred_fallthru
      _
    // Predicated region
    $region70: #{tpu_custom_call.1} parent=1 // pred_check
      _
    $region71: #{tpu_custom_call.1} parent=1 // pred_check_branch
      %139 = sbr.rel (0) target = $region73
    $region72: #{tpu_custom_call.1} parent=1 // pred_region
      %140 = dma.done [#allocation9], 8192
    $region73: #{tpu_custom_call.1} parent=1 // pred_fallthru
      _
    // Predicated region
    $region74: #{tpu_custom_call.1} parent=1 // pred_check
      _
    $region75: #{tpu_custom_call.1} parent=1 // pred_check_branch
      %142 = sbr.rel (0) target = $region77
    $region76: #{tpu_custom_call.1} parent=1 // pred_region
      %143 = dma.done [#allocation12], 32768
    $region77: #{tpu_custom_call.1} parent=1 // pred_fallthru
      _
    // Predicated region
    $region78: #{tpu_custom_call.1} parent=1 // pred_check
      _
    $region79: #{tpu_custom_call.1} parent=1 // pred_check_branch
      %145 = sbr.rel (0) target = $region81
    $region80: #{tpu_custom_call.1} parent=1 // pred_region
      %146 = dma.done [#allocation12], 32768
    $region81: #{tpu_custom_call.1} parent=1 // pred_fallthru
      _
    // Predicated region
    $region82: #{tpu_custom_call.1} parent=1 // pred_check
      _
    $region83: #{tpu_custom_call.1} parent=1 // pred_check_branch
      %148 = sbr.rel (0) target = $region85
    $region84: #{tpu_custom_call.1} parent=1 // pred_region
      %149 = dma.done [#allocation15], 4096
    $region85: #{tpu_custom_call.1} parent=1 // pred_fallthru
      _
    %v151 = vld [vmem:[#allocation2] sm:$0xf]
    %v152 = vld [vmem:[#allocation5] sm:$0xf]
    %v153 = vld [vmem:[#allocation5 + $0x4] sm:$0xf]
    %v154 = vld [vmem:[#allocation5 + $0x8] sm:$0xf]
    %v155 = vld [vmem:[#allocation5 + $0xc] sm:$0xf]
    %v156 = vld [vmem:[#allocation5 + $0x10] sm:$0xf]
    %v157 = vld [vmem:[#allocation5 + $0x14] sm:$0xf]
    %v158 = vld [vmem:[#allocation5 + $0x18] sm:$0xf]
    %v159 = vld [vmem:[#allocation5 + $0x1c] sm:$0xf]
    %v160 = vld [vmem:[#allocation5 + $0x20] sm:$0xf]
    %v161 = vld [vmem:[#allocation5 + $0x24] sm:$0xf]
    %v162 = vld [vmem:[#allocation5 + $0x28] sm:$0xf]
    %v163 = vld [vmem:[#allocation5 + $0x2c] sm:$0xf]
    %v164 = vld [vmem:[#allocation5 + $0x30] sm:$0xf]
    %v165 = vld [vmem:[#allocation5 + $0x34] sm:$0xf]
    %v166 = vld [vmem:[#allocation5 + $0x38] sm:$0xf]
    %v167 = vld [vmem:[#allocation5 + $0x3c] sm:$0xf]
    %v168 = vld [vmem:[#allocation7] sm:$0x1]
    %v170 = vlaneseq
    %v171 = vshrl.u32 %v170, 7
    %v172 = vsub.s32 0, %v171
    %v173 = vrot.slane %v168, %v172
    %v191 = vunpack.c.l.b16 %v152
    %v192 = vunpack.c.l.b16 %v153
    %v193 = vunpack.c.l.b16 %v154
    %v194 = vunpack.c.l.b16 %v155
    %v195 = vunpack.c.l.b16 %v156
    %v196 = vunpack.c.l.b16 %v157
    %v197 = vunpack.c.l.b16 %v158
    %v198 = vunpack.c.l.b16 %v159
    %v199 = vunpack.c.l.b16 %v160
    %v200 = vunpack.c.l.b16 %v161
    %v201 = vunpack.c.l.b16 %v162
    %v202 = vunpack.c.l.b16 %v163
    %v203 = vunpack.c.l.b16 %v164
    %v204 = vunpack.c.l.b16 %v165
    %v205 = vunpack.c.l.b16 %v166
    %v206 = vunpack.c.l.b16 %v167
    %v207 = vpack.c.b16 %v192, %v191
    %v208 = vpack.c.b16 %v194, %v193
    %v209 = vpack.c.b16 %v196, %v195
    %v210 = vpack.c.b16 %v198, %v197
    %v211 = vpack.c.b16 %v200, %v199
    %v212 = vpack.c.b16 %v202, %v201
    %v213 = vpack.c.b16 %v204, %v203
    %v214 = vpack.c.b16 %v206, %v205
    %223 = vmatprep.subr.bf16.mxu0 0
    %224 = vmatpush1.bf16.msra.mxu0 %v207
    %225 = vmatprep.subr.bf16.mxu0 0
    %226 = vmatpush1.bf16.msra.mxu0 %v208
    %227 = vmatprep.subr.bf16.mxu0 0
    %228 = vmatpush1.bf16.msra.mxu0 %v209
    %229 = vmatprep.subr.bf16.mxu0 0
    %230 = vmatpush1.bf16.msra.mxu0 %v210
    %231 = vmatprep.subr.bf16.mxu0 0
    %232 = vmatpush1.bf16.msra.mxu0 %v211
    %233 = vmatprep.subr.bf16.mxu0 0
    %234 = vmatpush1.bf16.msra.mxu0 %v212
    %235 = vmatprep.subr.bf16.mxu0 0
    %236 = vmatpush1.bf16.msra.mxu0 %v213
    %237 = vmatprep.subr.bf16.mxu0 0
    %238 = vmatpush1.bf16.msra.mxu0 %v214
    %239 = vmatprep.subr.bf16.mxu0 0
    %240 = vmatpush1.bf16.msra.mxu0 0
    %241 = vmatprep.subr.bf16.mxu0 0
    %242 = vmatpush1.bf16.msra.mxu0 0
    %243 = vmatprep.subr.bf16.mxu0 0
    %244 = vmatpush1.bf16.msra.mxu0 0
    %245 = vmatprep.subr.bf16.mxu0 0
    %246 = vmatpush1.bf16.msra.mxu0 0
    %247 = vmatprep.subr.bf16.mxu0 0
    %248 = vmatpush1.bf16.msra.mxu0 0
    %249 = vmatprep.subr.bf16.mxu0 0
    %250 = vmatpush1.bf16.msra.mxu0 0
    %251 = vmatprep.subr.bf16.mxu0 0
    %252 = vmatpush1.bf16.msra.mxu0 0
    %253 = vmatprep.subr.bf16.mxu0 0
    %254 = vmatpush1.bf16.msra.mxu0 0
    %255 = vmatprep.mubr.bf16.mxu0 0
    %256 = vmatmul.mubr.bf16.gmra.mrb[0].mxu0 %v151
    %v257 = vpop.f32.mrb[0].mxu0
    %v258 = vadd.f32 %v173, %v257
    %v259 = vpop.f32.mrb[0].mxu0
    %v260 = vpop.f32.mrb[0].mxu0
    %v261 = vpop.f32.mrb[0].mxu0
    %262 = vdwg.mxu0
    %v263 = vmax.f32 %v258, 0.0
    %v264 = vpack.c.bf16 %v263, %v263
    %v265 = vld [vmem:[#allocation8] sm:$0xff]
    %v266 = vld [vmem:[#allocation8 + $0x8] sm:$0xff]
    %v267 = vld [vmem:[#allocation8 + $0x10] sm:$0xff]
    %v268 = vld [vmem:[#allocation8 + $0x18] sm:$0xff]
    %v269 = vld [vmem:[#allocation8 + $0x20] sm:$0xff]
    %v270 = vld [vmem:[#allocation8 + $0x28] sm:$0xff]
    %v271 = vld [vmem:[#allocation8 + $0x30] sm:$0xff]
    %v272 = vld [vmem:[#allocation8 + $0x38] sm:$0xff]
    %v273 = vld [vmem:[#allocation8 + $0x40] sm:$0xff]
    %v274 = vld [vmem:[#allocation8 + $0x48] sm:$0xff]
    %v275 = vld [vmem:[#allocation8 + $0x50] sm:$0xff]
    %v276 = vld [vmem:[#allocation8 + $0x58] sm:$0xff]
    %v277 = vld [vmem:[#allocation8 + $0x60] sm:$0xff]
    %v278 = vld [vmem:[#allocation8 + $0x68] sm:$0xff]
    %v279 = vld [vmem:[#allocation8 + $0x70] sm:$0xff]
    %v280 = vld [vmem:[#allocation8 + $0x78] sm:$0xff]
    %v281 = vld [vmem:[%s4] sm:$0x3]
    %v283 = vlaneseq
    %v284 = vshrl.u32 %v283, 7
    %v285 = vsub.s32 0, %v284
    %v286 = vrot.slane %v281, %v285
    %v287 = vlaneseq
    %v288 = vshrl.u32 %v287, 7
    %v289 = vsub.s32 1, %v288
    %v290 = vrot.slane %v281, %v289
    %v309 = vunpack.c.l.b16 %v265
    %v310 = vunpack.c.h.b16 %v265
    %v311 = vunpack.c.l.b16 %v266
    %v312 = vunpack.c.h.b16 %v266
    %v313 = vunpack.c.l.b16 %v267
    %v314 = vunpack.c.h.b16 %v267
    %v315 = vunpack.c.l.b16 %v268
    %v316 = vunpack.c.h.b16 %v268
    %v317 = vunpack.c.l.b16 %v269
    %v318 = vunpack.c.h.b16 %v269
    %v319 = vunpack.c.l.b16 %v270
    %v320 = vunpack.c.h.b16 %v270
    %v321 = vunpack.c.l.b16 %v271
    %v322 = vunpack.c.h.b16 %v271
    %v323 = vunpack.c.l.b16 %v272
    %v324 = vunpack.c.h.b16 %v272
    %v325 = vunpack.c.l.b16 %v273
    %v326 = vunpack.c.h.b16 %v273
    %v327 = vunpack.c.l.b16 %v274
    %v328 = vunpack.c.h.b16 %v274
    %v329 = vunpack.c.l.b16 %v275
    %v330 = vunpack.c.h.b16 %v275
    %v331 = vunpack.c.l.b16 %v276
    %v332 = vunpack.c.h.b16 %v276
    %v333 = vunpack.c.l.b16 %v277
    %v334 = vunpack.c.h.b16 %v277
    %v335 = vunpack.c.l.b16 %v278
    %v336 = vunpack.c.h.b16 %v278
    %v337 = vunpack.c.l.b16 %v279
    %v338 = vunpack.c.h.b16 %v279
    %v339 = vunpack.c.l.b16 %v280
    %v340 = vunpack.c.h.b16 %v280
    %v341 = vpack.c.b16 %v311, %v309
    %v342 = vpack.c.b16 %v312, %v310
    %v343 = vpack.c.b16 %v315, %v313
    %v344 = vpack.c.b16 %v316, %v314
    %v345 = vpack.c.b16 %v319, %v317
    %v346 = vpack.c.b16 %v320, %v318
    %v347 = vpack.c.b16 %v323, %v321
    %v348 = vpack.c.b16 %v324, %v322
    %v349 = vpack.c.b16 %v327, %v325
    %v350 = vpack.c.b16 %v328, %v326
    %v351 = vpack.c.b16 %v331, %v329
    %v352 = vpack.c.b16 %v332, %v330
    %v353 = vpack.c.b16 %v335, %v333
    %v354 = vpack.c.b16 %v336, %v334
    %v355 = vpack.c.b16 %v339, %v337
    %v356 = vpack.c.b16 %v340, %v338
    %373 = vmatprep.subr.bf16.mxu0 %v342
    %374 = vmatpush1.bf16.msra.mxu0 %v341
    %375 = vmatprep.subr.bf16.mxu0 %v344
    %376 = vmatpush1.bf16.msra.mxu0 %v343
    %377 = vmatprep.subr.bf16.mxu0 %v346
    %378 = vmatpush1.bf16.msra.mxu0 %v345
    %379 = vmatprep.subr.bf16.mxu0 %v348
    %380 = vmatpush1.bf16.msra.mxu0 %v347
    %381 = vmatprep.subr.bf16.mxu0 %v350
    %382 = vmatpush1.bf16.msra.mxu0 %v349
    %383 = vmatprep.subr.bf16.mxu0 %v352
    %384 = vmatpush1.bf16.msra.mxu0 %v351
    %385 = vmatprep.subr.bf16.mxu0 %v354
    %386 = vmatpush1.bf16.msra.mxu0 %v353
    %387 = vmatprep.subr.bf16.mxu0 %v356
    %388 = vmatpush1.bf16.msra.mxu0 %v355
    %389 = vmatprep.subr.bf16.mxu0 0
    %390 = vmatpush1.bf16.msra.mxu0 0
    %391 = vmatprep.subr.bf16.mxu0 0
    %392 = vmatpush1.bf16.msra.mxu0 0
    %393 = vmatprep.subr.bf16.mxu0 0
    %394 = vmatpush1.bf16.msra.mxu0 0
    %395 = vmatprep.subr.bf16.mxu0 0
    %396 = vmatpush1.bf16.msra.mxu0 0
    %397 = vmatprep.subr.bf16.mxu0 0
    %398 = vmatpush1.bf16.msra.mxu0 0
    %399 = vmatprep.subr.bf16.mxu0 0
    %400 = vmatpush1.bf16.msra.mxu0 0
    %401 = vmatprep.subr.bf16.mxu0 0
    %402 = vmatpush1.bf16.msra.mxu0 0
    %403 = vmatprep.subr.bf16.mxu0 0
    %404 = vmatpush1.bf16.msra.mxu0 0
    %405 = vmatprep.mubr.bf16.mxu0 0
    %406 = vmatmul.mubr.bf16.gmra.mrb[0].mxu0 %v264
    %v407 = vpop.f32.mrb[0].mxu0
    %v408 = vadd.f32 %v286, %v407
    %v409 = vpop.f32.mrb[0].mxu0
    %v410 = vadd.f32 %v290, %v409
    %v411 = vpop.f32.mrb[0].mxu0
    %v412 = vpop.f32.mrb[0].mxu0
    %413 = vdwg.mxu0
    %v414 = vmax.f32 %v408, 0.0
    %v415 = vmax.f32 %v410, 0.0
    %v416 = vpack.c.bf16 %v414, %v414
    %v417 = vpack.c.bf16 %v415, %v415
    %v418 = vld [vmem:[#allocation10] sm:$0xff]
    %v419 = vld [vmem:[#allocation10 + $0x8] sm:$0xff]
    %v420 = vld [vmem:[#allocation10 + $0x10] sm:$0xff]
    %v421 = vld [vmem:[#allocation10 + $0x18] sm:$0xff]
    %v422 = vld [vmem:[#allocation10 + $0x20] sm:$0xff]
    %v423 = vld [vmem:[#allocation10 + $0x28] sm:$0xff]
    %v424 = vld [vmem:[#allocation10 + $0x30] sm:$0xff]
    %v425 = vld [vmem:[#allocation10 + $0x38] sm:$0xff]
    %v426 = vld [vmem:[#allocation10 + $0x40] sm:$0xff]
    %v427 = vld [vmem:[#allocation10 + $0x48] sm:$0xff]
    %v428 = vld [vmem:[#allocation10 + $0x50] sm:$0xff]
    %v429 = vld [vmem:[#allocation10 + $0x58] sm:$0xff]
    %v430 = vld [vmem:[#allocation10 + $0x60] sm:$0xff]
    %v431 = vld [vmem:[#allocation10 + $0x68] sm:$0xff]
    %v432 = vld [vmem:[#allocation10 + $0x70] sm:$0xff]
    %v433 = vld [vmem:[#allocation10 + $0x78] sm:$0xff]
    %v434 = vld [vmem:[#allocation10 + $0x80] sm:$0xff]
    %v435 = vld [vmem:[#allocation10 + $0x88] sm:$0xff]
    %v436 = vld [vmem:[#allocation10 + $0x90] sm:$0xff]
    %v437 = vld [vmem:[#allocation10 + $0x98] sm:$0xff]
    %v438 = vld [vmem:[#allocation10 + $0xa0] sm:$0xff]
    %v439 = vld [vmem:[#allocation10 + $0xa8] sm:$0xff]
    %v440 = vld [vmem:[#allocation10 + $0xb0] sm:$0xff]
    %v441 = vld [vmem:[#allocation10 + $0xb8] sm:$0xff]
    %v442 = vld [vmem:[#allocation10 + $0xc0] sm:$0xff]
    %v443 = vld [vmem:[#allocation10 + $0xc8] sm:$0xff]
    %v444 = vld [vmem:[#allocation10 + $0xd0] sm:$0xff]
    %v445 = vld [vmem:[#allocation10 + $0xd8] sm:$0xff]
    %v446 = vld [vmem:[#allocation10 + $0xe0] sm:$0xff]
    %v447 = vld [vmem:[#allocation10 + $0xe8] sm:$0xff]
    %v448 = vld [vmem:[#allocation10 + $0xf0] sm:$0xff]
    %v449 = vld [vmem:[#allocation10 + $0xf8] sm:$0xff]
    %v450 = vld [vmem:[#allocation10 + $0x100] sm:$0xff]
    %v451 = vld [vmem:[#allocation10 + $0x108] sm:$0xff]
    %v452 = vld [vmem:[#allocation10 + $0x110] sm:$0xff]
    %v453 = vld [vmem:[#allocation10 + $0x118] sm:$0xff]
    %v454 = vld [vmem:[#allocation10 + $0x120] sm:$0xff]
    %v455 = vld [vmem:[#allocation10 + $0x128] sm:$0xff]
    %v456 = vld [vmem:[#allocation10 + $0x130] sm:$0xff]
    %v457 = vld [vmem:[#allocation10 + $0x138] sm:$0xff]
    %v458 = vld [vmem:[#allocation10 + $0x140] sm:$0xff]
    %v459 = vld [vmem:[#allocation10 + $0x148] sm:$0xff]
    %v460 = vld [vmem:[#allocation10 + $0x150] sm:$0xff]
    %v461 = vld [vmem:[#allocation10 + $0x158] sm:$0xff]
    %v462 = vld [vmem:[#allocation10 + $0x160] sm:$0xff]
    %v463 = vld [vmem:[#allocation10 + $0x168] sm:$0xff]
    %v464 = vld [vmem:[#allocation10 + $0x170] sm:$0xff]
    %v465 = vld [vmem:[#allocation10 + $0x178] sm:$0xff]
    %v466 = vld [vmem:[#allocation10 + $0x180] sm:$0xff]
    %v467 = vld [vmem:[#allocation10 + $0x188] sm:$0xff]
    %v468 = vld [vmem:[#allocation10 + $0x190] sm:$0xff]
    %v469 = vld [vmem:[#allocation10 + $0x198] sm:$0xff]
    %v470 = vld [vmem:[#allocation10 + $0x1a0] sm:$0xff]
    %v471 = vld [vmem:[#allocation10 + $0x1a8] sm:$0xff]
    %v472 = vld [vmem:[#allocation10 + $0x1b0] sm:$0xff]
    %v473 = vld [vmem:[#allocation10 + $0x1b8] sm:$0xff]
    %v474 = vld [vmem:[#allocation10 + $0x1c0] sm:$0xff]
    %v475 = vld [vmem:[#allocation10 + $0x1c8] sm:$0xff]
    %v476 = vld [vmem:[#allocation10 + $0x1d0] sm:$0xff]
    %v477 = vld [vmem:[#allocation10 + $0x1d8] sm:$0xff]
    %v478 = vld [vmem:[#allocation10 + $0x1e0] sm:$0xff]
    %v479 = vld [vmem:[#allocation10 + $0x1e8] sm:$0xff]
    %v480 = vld [vmem:[#allocation10 + $0x1f0] sm:$0xff]
    %v481 = vld [vmem:[#allocation10 + $0x1f8] sm:$0xff]
    %v482 = vld [vmem:[%s6] sm:$0xf]
    %v484 = vlaneseq
    %v485 = vshrl.u32 %v484, 7
    %v486 = vsub.s32 0, %v485
    %v487 = vrot.slane %v482, %v486
    %v488 = vlaneseq
    %v489 = vshrl.u32 %v488, 7
    %v490 = vsub.s32 1, %v489
    %v491 = vrot.slane %v482, %v490
    %v492 = vlaneseq
    %v493 = vshrl.u32 %v492, 7
    %v494 = vsub.s32 2, %v493
    %v495 = vrot.slane %v482, %v494
    %v496 = vlaneseq
    %v497 = vshrl.u32 %v496, 7
    %v498 = vsub.s32 3, %v497
    %v499 = vrot.slane %v482, %v498
    %v568 = vunpack.c.l.b16 %v418
    %v569 = vunpack.c.h.b16 %v418
    %v570 = vunpack.c.l.b16 %v419
    %v571 = vunpack.c.h.b16 %v419
    %v572 = vunpack.c.l.b16 %v420
    %v573 = vunpack.c.h.b16 %v420
    %v574 = vunpack.c.l.b16 %v421
    %v575 = vunpack.c.h.b16 %v421
    %v576 = vunpack.c.l.b16 %v422
    %v577 = vunpack.c.h.b16 %v422
    %v578 = vunpack.c.l.b16 %v423
    %v579 = vunpack.c.h.b16 %v423
    %v580 = vunpack.c.l.b16 %v424
    %v581 = vunpack.c.h.b16 %v424
    %v582 = vunpack.c.l.b16 %v425
    %v583 = vunpack.c.h.b16 %v425
    %v584 = vunpack.c.l.b16 %v426
    %v585 = vunpack.c.h.b16 %v426
    %v586 = vunpack.c.l.b16 %v427
    %v587 = vunpack.c.h.b16 %v427
    %v588 = vunpack.c.l.b16 %v428
    %v589 = vunpack.c.h.b16 %v428
    %v590 = vunpack.c.l.b16 %v429
    %v591 = vunpack.c.h.b16 %v429
    %v592 = vunpack.c.l.b16 %v430
    %v593 = vunpack.c.h.b16 %v430
    %v594 = vunpack.c.l.b16 %v431
    %v595 = vunpack.c.h.b16 %v431
    %v596 = vunpack.c.l.b16 %v432
    %v597 = vunpack.c.h.b16 %v432
    %v598 = vunpack.c.l.b16 %v433
    %v599 = vunpack.c.h.b16 %v433
    %v600 = vunpack.c.l.b16 %v434
    %v601 = vunpack.c.h.b16 %v434
    %v602 = vunpack.c.l.b16 %v435
    %v603 = vunpack.c.h.b16 %v435
    %v604 = vunpack.c.l.b16 %v436
    %v605 = vunpack.c.h.b16 %v436
    %v606 = vunpack.c.l.b16 %v437
    %v607 = vunpack.c.h.b16 %v437
    %v608 = vunpack.c.l.b16 %v438
    %v609 = vunpack.c.h.b16 %v438
    %v610 = vunpack.c.l.b16 %v439
    %v611 = vunpack.c.h.b16 %v439
    %v612 = vunpack.c.l.b16 %v440
    %v613 = vunpack.c.h.b16 %v440
    %v614 = vunpack.c.l.b16 %v441
    %v615 = vunpack.c.h.b16 %v441
    %v616 = vunpack.c.l.b16 %v442
    %v617 = vunpack.c.h.b16 %v442
    %v618 = vunpack.c.l.b16 %v443
    %v619 = vunpack.c.h.b16 %v443
    %v620 = vunpack.c.l.b16 %v444
    %v621 = vunpack.c.h.b16 %v444
    %v622 = vunpack.c.l.b16 %v445
    %v623 = vunpack.c.h.b16 %v445
    %v624 = vunpack.c.l.b16 %v446
    %v625 = vunpack.c.h.b16 %v446
    %v626 = vunpack.c.l.b16 %v447
    %v627 = vunpack.c.h.b16 %v447
    %v628 = vunpack.c.l.b16 %v448
    %v629 = vunpack.c.h.b16 %v448
    %v630 = vunpack.c.l.b16 %v449
    %v631 = vunpack.c.h.b16 %v449
    %v632 = vunpack.c.l.b16 %v450
    %v633 = vunpack.c.h.b16 %v450
    %v634 = vunpack.c.l.b16 %v451
    %v635 = vunpack.c.h.b16 %v451
    %v636 = vunpack.c.l.b16 %v452
    %v637 = vunpack.c.h.b16 %v452
    %v638 = vunpack.c.l.b16 %v453
    %v639 = vunpack.c.h.b16 %v453
    %v640 = vunpack.c.l.b16 %v454
    %v641 = vunpack.c.h.b16 %v454
    %v642 = vunpack.c.l.b16 %v455
    %v643 = vunpack.c.h.b16 %v455
    %v644 = vunpack.c.l.b16 %v456
    %v645 = vunpack.c.h.b16 %v456
    %v646 = vunpack.c.l.b16 %v457
    %v647 = vunpack.c.h.b16 %v457
    %v648 = vunpack.c.l.b16 %v458
    %v649 = vunpack.c.h.b16 %v458
    %v650 = vunpack.c.l.b16 %v459
    %v651 = vunpack.c.h.b16 %v459
    %v652 = vunpack.c.l.b16 %v460
    %v653 = vunpack.c.h.b16 %v460
    %v654 = vunpack.c.l.b16 %v461
    %v655 = vunpack.c.h.b16 %v461
    %v656 = vunpack.c.l.b16 %v462
    %v657 = vunpack.c.h.b16 %v462
    %v658 = vunpack.c.l.b16 %v463
    %v659 = vunpack.c.h.b16 %v463
    %v660 = vunpack.c.l.b16 %v464
    %v661 = vunpack.c.h.b16 %v464
    %v662 = vunpack.c.l.b16 %v465
    %v663 = vunpack.c.h.b16 %v465
    %v664 = vunpack.c.l.b16 %v466
    %v665 = vunpack.c.h.b16 %v466
    %v666 = vunpack.c.l.b16 %v467
    %v667 = vunpack.c.h.b16 %v467
    %v668 = vunpack.c.l.b16 %v468
    %v669 = vunpack.c.h.b16 %v468
    %v670 = vunpack.c.l.b16 %v469
    %v671 = vunpack.c.h.b16 %v469
    %v672 = vunpack.c.l.b16 %v470
    %v673 = vunpack.c.h.b16 %v470
    %v674 = vunpack.c.l.b16 %v471
    %v675 = vunpack.c.h.b16 %v471
    %v676 = vunpack.c.l.b16 %v472
    %v677 = vunpack.c.h.b16 %v472
    %v678 = vunpack.c.l.b16 %v473
    %v679 = vunpack.c.h.b16 %v473
    %v680 = vunpack.c.l.b16 %v474
    %v681 = vunpack.c.h.b16 %v474
    %v682 = vunpack.c.l.b16 %v475
    %v683 = vunpack.c.h.b16 %v475
    %v684 = vunpack.c.l.b16 %v476
    %v685 = vunpack.c.h.b16 %v476
    %v686 = vunpack.c.l.b16 %v477
    %v687 = vunpack.c.h.b16 %v477
    %v688 = vunpack.c.l.b16 %v478
    %v689 = vunpack.c.h.b16 %v478
    %v690 = vunpack.c.l.b16 %v479
    %v691 = vunpack.c.h.b16 %v479
    %v692 = vunpack.c.l.b16 %v480
    %v693 = vunpack.c.h.b16 %v480
    %v694 = vunpack.c.l.b16 %v481
    %v695 = vunpack.c.h.b16 %v481
    %v696 = vpack.c.b16 %v572, %v568
    %v697 = vpack.c.b16 %v573, %v569
    %v698 = vpack.c.b16 %v574, %v570
    %v699 = vpack.c.b16 %v575, %v571
    %v700 = vpack.c.b16 %v580, %v576
    %v701 = vpack.c.b16 %v581, %v577
    %v702 = vpack.c.b16 %v582, %v578
    %v703 = vpack.c.b16 %v583, %v579
    %v704 = vpack.c.b16 %v588, %v584
    %v705 = vpack.c.b16 %v589, %v585
    %v706 = vpack.c.b16 %v590, %v586
    %v707 = vpack.c.b16 %v591, %v587
    %v708 = vpack.c.b16 %v596, %v592
    %v709 = vpack.c.b16 %v597, %v593
    %v710 = vpack.c.b16 %v598, %v594
    %v711 = vpack.c.b16 %v599, %v595
    %v712 = vpack.c.b16 %v604, %v600
    %v713 = vpack.c.b16 %v605, %v601
    %v714 = vpack.c.b16 %v606, %v602
    %v715 = vpack.c.b16 %v607, %v603
    %v716 = vpack.c.b16 %v612, %v608
    %v717 = vpack.c.b16 %v613, %v609
    %v718 = vpack.c.b16 %v614, %v610
    %v719 = vpack.c.b16 %v615, %v611
    %v720 = vpack.c.b16 %v620, %v616
    %v721 = vpack.c.b16 %v621, %v617
    %v722 = vpack.c.b16 %v622, %v618
    %v723 = vpack.c.b16 %v623, %v619
    %v724 = vpack.c.b16 %v628, %v624
    %v725 = vpack.c.b16 %v629, %v625
    %v726 = vpack.c.b16 %v630, %v626
    %v727 = vpack.c.b16 %v631, %v627
    %v728 = vpack.c.b16 %v636, %v632
    %v729 = vpack.c.b16 %v637, %v633
    %v730 = vpack.c.b16 %v638, %v634
    %v731 = vpack.c.b16 %v639, %v635
    %v732 = vpack.c.b16 %v644, %v640
    %v733 = vpack.c.b16 %v645, %v641
    %v734 = vpack.c.b16 %v646, %v642
    %v735 = vpack.c.b16 %v647, %v643
    %v736 = vpack.c.b16 %v652, %v648
    %v737 = vpack.c.b16 %v653, %v649
    %v738 = vpack.c.b16 %v654, %v650
    %v739 = vpack.c.b16 %v655, %v651
    %v740 = vpack.c.b16 %v660, %v656
    %v741 = vpack.c.b16 %v661, %v657
    %v742 = vpack.c.b16 %v662, %v658
    %v743 = vpack.c.b16 %v663, %v659
    %v744 = vpack.c.b16 %v668, %v664
    %v745 = vpack.c.b16 %v669, %v665
    %v746 = vpack.c.b16 %v670, %v666
    %v747 = vpack.c.b16 %v671, %v667
    %v748 = vpack.c.b16 %v676, %v672
    %v749 = vpack.c.b16 %v677, %v673
    %v750 = vpack.c.b16 %v678, %v674
    %v751 = vpack.c.b16 %v679, %v675
    %v752 = vpack.c.b16 %v684, %v680
    %v753 = vpack.c.b16 %v685, %v681
    %v754 = vpack.c.b16 %v686, %v682
    %v755 = vpack.c.b16 %v687, %v683
    %v756 = vpack.c.b16 %v692, %v688
    %v757 = vpack.c.b16 %v693, %v689
    %v758 = vpack.c.b16 %v694, %v690
    %v759 = vpack.c.b16 %v695, %v691
    %824 = vmatprep.subr.bf16.mxu0 %v697
    %825 = vmatpush1.bf16.msra.mxu0 %v696
    %826 = vmatprep.subr.bf16.mxu0 %v701
    %827 = vmatpush1.bf16.msra.mxu0 %v700
    %828 = vmatprep.subr.bf16.mxu0 %v705
    %829 = vmatpush1.bf16.msra.mxu0 %v704
    %830 = vmatprep.subr.bf16.mxu0 %v709
    %831 = vmatpush1.bf16.msra.mxu0 %v708
    %832 = vmatprep.subr.bf16.mxu0 %v713
    %833 = vmatpush1.bf16.msra.mxu0 %v712
    %834 = vmatprep.subr.bf16.mxu0 %v717
    %835 = vmatpush1.bf16.msra.mxu0 %v716
    %836 = vmatprep.subr.bf16.mxu0 %v721
    %837 = vmatpush1.bf16.msra.mxu0 %v720
    %838 = vmatprep.subr.bf16.mxu0 %v725
    %839 = vmatpush1.bf16.msra.mxu0 %v724
    %840 = vmatprep.subr.bf16.mxu0 %v729
    %841 = vmatpush1.bf16.msra.mxu0 %v728
    %842 = vmatprep.subr.bf16.mxu0 %v733
    %843 = vmatpush1.bf16.msra.mxu0 %v732
    %844 = vmatprep.subr.bf16.mxu0 %v737
    %845 = vmatpush1.bf16.msra.mxu0 %v736
    %846 = vmatprep.subr.bf16.mxu0 %v741
    %847 = vmatpush1.bf16.msra.mxu0 %v740
    %848 = vmatprep.subr.bf16.mxu0 %v745
    %849 = vmatpush1.bf16.msra.mxu0 %v744
    %850 = vmatprep.subr.bf16.mxu0 %v749
    %851 = vmatpush1.bf16.msra.mxu0 %v748
    %852 = vmatprep.subr.bf16.mxu0 %v753
    %853 = vmatpush1.bf16.msra.mxu0 %v752
    %854 = vmatprep.subr.bf16.mxu0 %v757
    %855 = vmatpush1.bf16.msra.mxu0 %v756
    %856 = vmatprep.mubr.bf16.mxu0 %v417
    %857 = vmatmul.mubr.bf16.gmra.mrb[0].mxu0 %v416
    %v858 = vpop.f32.mrb[0].mxu0
    %v859 = vadd.f32 %v487, %v858
    %v860 = vpop.f32.mrb[0].mxu0
    %v861 = vadd.f32 %v491, %v860
    %v862 = vpop.f32.mrb[0].mxu0
    %v863 = vpop.f32.mrb[0].mxu0
    %864 = vdwg.mxu0
    %865 = vmatprep.subr.bf16.mxu0 %v699
    %866 = vmatpush1.bf16.msra.mxu0 %v698
    %867 = vmatprep.subr.bf16.mxu0 %v703
    %868 = vmatpush1.bf16.msra.mxu0 %v702
    %869 = vmatprep.subr.bf16.mxu0 %v707
    %870 = vmatpush1.bf16.msra.mxu0 %v706
    %871 = vmatprep.subr.bf16.mxu0 %v711
    %872 = vmatpush1.bf16.msra.mxu0 %v710
    %873 = vmatprep.subr.bf16.mxu0 %v715
    %874 = vmatpush1.bf16.msra.mxu0 %v714
    %875 = vmatprep.subr.bf16.mxu0 %v719
    %876 = vmatpush1.bf16.msra.mxu0 %v718
    %877 = vmatprep.subr.bf16.mxu0 %v723
    %878 = vmatpush1.bf16.msra.mxu0 %v722
    %879 = vmatprep.subr.bf16.mxu0 %v727
    %880 = vmatpush1.bf16.msra.mxu0 %v726
    %881 = vmatprep.subr.bf16.mxu0 %v731
    %882 = vmatpush1.bf16.msra.mxu0 %v730
    %883 = vmatprep.subr.bf16.mxu0 %v735
    %884 = vmatpush1.bf16.msra.mxu0 %v734
    %885 = vmatprep.subr.bf16.mxu0 %v739
    %886 = vmatpush1.bf16.msra.mxu0 %v738
    %887 = vmatprep.subr.bf16.mxu0 %v743
    %888 = vmatpush1.bf16.msra.mxu0 %v742
    %889 = vmatprep.subr.bf16.mxu0 %v747
    %890 = vmatpush1.bf16.msra.mxu0 %v746
    %891 = vmatprep.subr.bf16.mxu0 %v751
    %892 = vmatpush1.bf16.msra.mxu0 %v750
    %893 = vmatprep.subr.bf16.mxu0 %v755
    %894 = vmatpush1.bf16.msra.mxu0 %v754
    %895 = vmatprep.subr.bf16.mxu0 %v759
    %896 = vmatpush1.bf16.msra.mxu0 %v758
    %897 = vmatprep.mubr.bf16.mxu0 %v417
    %898 = vmatmul.mubr.bf16.gmra.mrb[0].mxu0 %v416
    %v899 = vpop.f32.mrb[0].mxu0
    %v900 = vadd.f32 %v495, %v899
    %v901 = vpop.f32.mrb[0].mxu0
    %v902 = vadd.f32 %v499, %v901
    %v903 = vpop.f32.mrb[0].mxu0
    %v904 = vpop.f32.mrb[0].mxu0
    %905 = vdwg.mxu0
    %v906 = vmax.f32 %v859, 0.0
    %v907 = vmax.f32 %v861, 0.0
    %v908 = vmax.f32 %v900, 0.0
    %v909 = vmax.f32 %v902, 0.0
    %v910 = vpack.c.bf16 %v906, %v906
    %v911 = vpack.c.bf16 %v907, %v907
    %v912 = vpack.c.bf16 %v908, %v908
    %v913 = vpack.c.bf16 %v909, %v909
    %v914 = vld [vmem:[#allocation11] sm:$0xff]
    %v915 = vld [vmem:[#allocation11 + $0x8] sm:$0xff]
    %v916 = vld [vmem:[#allocation11 + $0x10] sm:$0xff]
    %v917 = vld [vmem:[#allocation11 + $0x18] sm:$0xff]
    %v918 = vld [vmem:[#allocation11 + $0x20] sm:$0xff]
    %v919 = vld [vmem:[#allocation11 + $0x28] sm:$0xff]
    %v920 = vld [vmem:[#allocation11 + $0x30] sm:$0xff]
    %v921 = vld [vmem:[#allocation11 + $0x38] sm:$0xff]
    %v922 = vld [vmem:[#allocation11 + $0x40] sm:$0xff]
    %v923 = vld [vmem:[#allocation11 + $0x48] sm:$0xff]
    %v924 = vld [vmem:[#allocation11 + $0x50] sm:$0xff]
    %v925 = vld [vmem:[#allocation11 + $0x58] sm:$0xff]
    %v926 = vld [vmem:[#allocation11 + $0x60] sm:$0xff]
    %v927 = vld [vmem:[#allocation11 + $0x68] sm:$0xff]
    %v928 = vld [vmem:[#allocation11 + $0x70] sm:$0xff]
    %v929 = vld [vmem:[#allocation11 + $0x78] sm:$0xff]
    %v930 = vld [vmem:[#allocation11 + $0x80] sm:$0xff]
    %v931 = vld [vmem:[#allocation11 + $0x88] sm:$0xff]
    %v932 = vld [vmem:[#allocation11 + $0x90] sm:$0xff]
    %v933 = vld [vmem:[#allocation11 + $0x98] sm:$0xff]
    %v934 = vld [vmem:[#allocation11 + $0xa0] sm:$0xff]
    %v935 = vld [vmem:[#allocation11 + $0xa8] sm:$0xff]
    %v936 = vld [vmem:[#allocation11 + $0xb0] sm:$0xff]
    %v937 = vld [vmem:[#allocation11 + $0xb8] sm:$0xff]
    %v938 = vld [vmem:[#allocation11 + $0xc0] sm:$0xff]
    %v939 = vld [vmem:[#allocation11 + $0xc8] sm:$0xff]
    %v940 = vld [vmem:[#allocation11 + $0xd0] sm:$0xff]
    %v941 = vld [vmem:[#allocation11 + $0xd8] sm:$0xff]
    %v942 = vld [vmem:[#allocation11 + $0xe0] sm:$0xff]
    %v943 = vld [vmem:[#allocation11 + $0xe8] sm:$0xff]
    %v944 = vld [vmem:[#allocation11 + $0xf0] sm:$0xff]
    %v945 = vld [vmem:[#allocation11 + $0xf8] sm:$0xff]
    %v946 = vld [vmem:[#allocation11 + $0x100] sm:$0xff]
    %v947 = vld [vmem:[#allocation11 + $0x108] sm:$0xff]
    %v948 = vld [vmem:[#allocation11 + $0x110] sm:$0xff]
    %v949 = vld [vmem:[#allocation11 + $0x118] sm:$0xff]
    %v950 = vld [vmem:[#allocation11 + $0x120] sm:$0xff]
    %v951 = vld [vmem:[#allocation11 + $0x128] sm:$0xff]
    %v952 = vld [vmem:[#allocation11 + $0x130] sm:$0xff]
    %v953 = vld [vmem:[#allocation11 + $0x138] sm:$0xff]
    %v954 = vld [vmem:[#allocation11 + $0x140] sm:$0xff]
    %v955 = vld [vmem:[#allocation11 + $0x148] sm:$0xff]
    %v956 = vld [vmem:[#allocation11 + $0x150] sm:$0xff]
    %v957 = vld [vmem:[#allocation11 + $0x158] sm:$0xff]
    %v958 = vld [vmem:[#allocation11 + $0x160] sm:$0xff]
    %v959 = vld [vmem:[#allocation11 + $0x168] sm:$0xff]
    %v960 = vld [vmem:[#allocation11 + $0x170] sm:$0xff]
    %v961 = vld [vmem:[#allocation11 + $0x178] sm:$0xff]
    %v962 = vld [vmem:[#allocation11 + $0x180] sm:$0xff]
    %v963 = vld [vmem:[#allocation11 + $0x188] sm:$0xff]
    %v964 = vld [vmem:[#allocation11 + $0x190] sm:$0xff]
    %v965 = vld [vmem:[#allocation11 + $0x198] sm:$0xff]
    %v966 = vld [vmem:[#allocation11 + $0x1a0] sm:$0xff]
    %v967 = vld [vmem:[#allocation11 + $0x1a8] sm:$0xff]
    %v968 = vld [vmem:[#allocation11 + $0x1b0] sm:$0xff]
    %v969 = vld [vmem:[#allocation11 + $0x1b8] sm:$0xff]
    %v970 = vld [vmem:[#allocation11 + $0x1c0] sm:$0xff]
    %v971 = vld [vmem:[#allocation11 + $0x1c8] sm:$0xff]
    %v972 = vld [vmem:[#allocation11 + $0x1d0] sm:$0xff]
    %v973 = vld [vmem:[#allocation11 + $0x1d8] sm:$0xff]
    %v974 = vld [vmem:[#allocation11 + $0x1e0] sm:$0xff]
    %v975 = vld [vmem:[#allocation11 + $0x1e8] sm:$0xff]
    %v976 = vld [vmem:[#allocation11 + $0x1f0] sm:$0xff]
    %v977 = vld [vmem:[#allocation11 + $0x1f8] sm:$0xff]
    %v978 = vld [vmem:[#allocation11 + $0x200] sm:$0xff]
    %v979 = vld [vmem:[#allocation11 + $0x208] sm:$0xff]
    %v980 = vld [vmem:[#allocation11 + $0x210] sm:$0xff]
    %v981 = vld [vmem:[#allocation11 + $0x218] sm:$0xff]
    %v982 = vld [vmem:[#allocation11 + $0x220] sm:$0xff]
    %v983 = vld [vmem:[#allocation11 + $0x228] sm:$0xff]
    %v984 = vld [vmem:[#allocation11 + $0x230] sm:$0xff]
    %v985 = vld [vmem:[#allocation11 + $0x238] sm:$0xff]
    %v986 = vld [vmem:[#allocation11 + $0x240] sm:$0xff]
    %v987 = vld [vmem:[#allocation11 + $0x248] sm:$0xff]
    %v988 = vld [vmem:[#allocation11 + $0x250] sm:$0xff]
    %v989 = vld [vmem:[#allocation11 + $0x258] sm:$0xff]
    %v990 = vld [vmem:[#allocation11 + $0x260] sm:$0xff]
    %v991 = vld [vmem:[#allocation11 + $0x268] sm:$0xff]
    %v992 = vld [vmem:[#allocation11 + $0x270] sm:$0xff]
    %v993 = vld [vmem:[#allocation11 + $0x278] sm:$0xff]
    %v994 = vld [vmem:[#allocation11 + $0x280] sm:$0xff]
    %v995 = vld [vmem:[#allocation11 + $0x288] sm:$0xff]
    %v996 = vld [vmem:[#allocation11 + $0x290] sm:$0xff]
    %v997 = vld [vmem:[#allocation11 + $0x298] sm:$0xff]
    %v998 = vld [vmem:[#allocation11 + $0x2a0] sm:$0xff]
    %v999 = vld [vmem:[#allocation11 + $0x2a8] sm:$0xff]
    %v1000 = vld [vmem:[#allocation11 + $0x2b0] sm:$0xff]
    %v1001 = vld [vmem:[#allocation11 + $0x2b8] sm:$0xff]
    %v1002 = vld [vmem:[#allocation11 + $0x2c0] sm:$0xff]
    %v1003 = vld [vmem:[#allocation11 + $0x2c8] sm:$0xff]
    %v1004 = vld [vmem:[#allocation11 + $0x2d0] sm:$0xff]
    %v1005 = vld [vmem:[#allocation11 + $0x2d8] sm:$0xff]
    %v1006 = vld [vmem:[#allocation11 + $0x2e0] sm:$0xff]
    %v1007 = vld [vmem:[#allocation11 + $0x2e8] sm:$0xff]
    %v1008 = vld [vmem:[#allocation11 + $0x2f0] sm:$0xff]
    %v1009 = vld [vmem:[#allocation11 + $0x2f8] sm:$0xff]
    %v1010 = vld [vmem:[#allocation11 + $0x300] sm:$0xff]
    %v1011 = vld [vmem:[#allocation11 + $0x308] sm:$0xff]
    %v1012 = vld [vmem:[#allocation11 + $0x310] sm:$0xff]
    %v1013 = vld [vmem:[#allocation11 + $0x318] sm:$0xff]
    %v1014 = vld [vmem:[#allocation11 + $0x320] sm:$0xff]
    %v1015 = vld [vmem:[#allocation11 + $0x328] sm:$0xff]
    %v1016 = vld [vmem:[#allocation11 + $0x330] sm:$0xff]
    %v1017 = vld [vmem:[#allocation11 + $0x338] sm:$0xff]
    %v1018 = vld [vmem:[#allocation11 + $0x340] sm:$0xff]
    %v1019 = vld [vmem:[#allocation11 + $0x348] sm:$0xff]
    %v1020 = vld [vmem:[#allocation11 + $0x350] sm:$0xff]
    %v1021 = vld [vmem:[#allocation11 + $0x358] sm:$0xff]
    %v1022 = vld [vmem:[#allocation11 + $0x360] sm:$0xff]
    %v1023 = vld [vmem:[#allocation11 + $0x368] sm:$0xff]
    %v1024 = vld [vmem:[#allocation11 + $0x370] sm:$0xff]
    %v1025 = vld [vmem:[#allocation11 + $0x378] sm:$0xff]
    %v1026 = vld [vmem:[#allocation11 + $0x380] sm:$0xff]
    %v1027 = vld [vmem:[#allocation11 + $0x388] sm:$0xff]
    %v1028 = vld [vmem:[#allocation11 + $0x390] sm:$0xff]
    %v1029 = vld [vmem:[#allocation11 + $0x398] sm:$0xff]
    %v1030 = vld [vmem:[#allocation11 + $0x3a0] sm:$0xff]
    %v1031 = vld [vmem:[#allocation11 + $0x3a8] sm:$0xff]
    %v1032 = vld [vmem:[#allocation11 + $0x3b0] sm:$0xff]
    %v1033 = vld [vmem:[#allocation11 + $0x3b8] sm:$0xff]
    %v1034 = vld [vmem:[#allocation11 + $0x3c0] sm:$0xff]
    %v1035 = vld [vmem:[#allocation11 + $0x3c8] sm:$0xff]
    %v1036 = vld [vmem:[#allocation11 + $0x3d0] sm:$0xff]
    %v1037 = vld [vmem:[#allocation11 + $0x3d8] sm:$0xff]
    %v1038 = vld [vmem:[#allocation11 + $0x3e0] sm:$0xff]
    %v1039 = vld [vmem:[#allocation11 + $0x3e8] sm:$0xff]
    %v1040 = vld [vmem:[#allocation11 + $0x3f0] sm:$0xff]
    %v1041 = vld [vmem:[#allocation11 + $0x3f8] sm:$0xff]
    %v1042 = vld [vmem:[#allocation11 + $0x400] sm:$0xff]
    %v1043 = vld [vmem:[#allocation11 + $0x408] sm:$0xff]
    %v1044 = vld [vmem:[#allocation11 + $0x410] sm:$0xff]
    %v1045 = vld [vmem:[#allocation11 + $0x418] sm:$0xff]
    %v1046 = vld [vmem:[#allocation11 + $0x420] sm:$0xff]
    %v1047 = vld [vmem:[#allocation11 + $0x428] sm:$0xff]
    %v1048 = vld [vmem:[#allocation11 + $0x430] sm:$0xff]
    %v1049 = vld [vmem:[#allocation11 + $0x438] sm:$0xff]
    %v1050 = vld [vmem:[#allocation11 + $0x440] sm:$0xff]
    %v1051 = vld [vmem:[#allocation11 + $0x448] sm:$0xff]
    %v1052 = vld [vmem:[#allocation11 + $0x450] sm:$0xff]
    %v1053 = vld [vmem:[#allocation11 + $0x458] sm:$0xff]
    %v1054 = vld [vmem:[#allocation11 + $0x460] sm:$0xff]
    %v1055 = vld [vmem:[#allocation11 + $0x468] sm:$0xff]
    %v1056 = vld [vmem:[#allocation11 + $0x470] sm:$0xff]
    %v1057 = vld [vmem:[#allocation11 + $0x478] sm:$0xff]
    %v1058 = vld [vmem:[#allocation11 + $0x480] sm:$0xff]
    %v1059 = vld [vmem:[#allocation11 + $0x488] sm:$0xff]
    %v1060 = vld [vmem:[#allocation11 + $0x490] sm:$0xff]
    %v1061 = vld [vmem:[#allocation11 + $0x498] sm:$0xff]
    %v1062 = vld [vmem:[#allocation11 + $0x4a0] sm:$0xff]
    %v1063 = vld [vmem:[#allocation11 + $0x4a8] sm:$0xff]
    %v1064 = vld [vmem:[#allocation11 + $0x4b0] sm:$0xff]
    %v1065 = vld [vmem:[#allocation11 + $0x4b8] sm:$0xff]
    %v1066 = vld [vmem:[#allocation11 + $0x4c0] sm:$0xff]
    %v1067 = vld [vmem:[#allocation11 + $0x4c8] sm:$0xff]
    %v1068 = vld [vmem:[#allocation11 + $0x4d0] sm:$0xff]
    %v1069 = vld [vmem:[#allocation11 + $0x4d8] sm:$0xff]
    %v1070 = vld [vmem:[#allocation11 + $0x4e0] sm:$0xff]
    %v1071 = vld [vmem:[#allocation11 + $0x4e8] sm:$0xff]
    %v1072 = vld [vmem:[#allocation11 + $0x4f0] sm:$0xff]
    %v1073 = vld [vmem:[#allocation11 + $0x4f8] sm:$0xff]
    %v1074 = vld [vmem:[#allocation11 + $0x500] sm:$0xff]
    %v1075 = vld [vmem:[#allocation11 + $0x508] sm:$0xff]
    %v1076 = vld [vmem:[#allocation11 + $0x510] sm:$0xff]
    %v1077 = vld [vmem:[#allocation11 + $0x518] sm:$0xff]
    %v1078 = vld [vmem:[#allocation11 + $0x520] sm:$0xff]
    %v1079 = vld [vmem:[#allocation11 + $0x528] sm:$0xff]
    %v1080 = vld [vmem:[#allocation11 + $0x530] sm:$0xff]
    %v1081 = vld [vmem:[#allocation11 + $0x538] sm:$0xff]
    %v1082 = vld [vmem:[#allocation11 + $0x540] sm:$0xff]
    %v1083 = vld [vmem:[#allocation11 + $0x548] sm:$0xff]
    %v1084 = vld [vmem:[#allocation11 + $0x550] sm:$0xff]
    %v1085 = vld [vmem:[#allocation11 + $0x558] sm:$0xff]
    %v1086 = vld [vmem:[#allocation11 + $0x560] sm:$0xff]
    %v1087 = vld [vmem:[#allocation11 + $0x568] sm:$0xff]
    %v1088 = vld [vmem:[#allocation11 + $0x570] sm:$0xff]
    %v1089 = vld [vmem:[#allocation11 + $0x578] sm:$0xff]
    %v1090 = vld [vmem:[#allocation11 + $0x580] sm:$0xff]
    %v1091 = vld [vmem:[#allocation11 + $0x588] sm:$0xff]
    %v1092 = vld [vmem:[#allocation11 + $0x590] sm:$0xff]
    %v1093 = vld [vmem:[#allocation11 + $0x598] sm:$0xff]
    %v1094 = vld [vmem:[#allocation11 + $0x5a0] sm:$0xff]
    %v1095 = vld [vmem:[#allocation11 + $0x5a8] sm:$0xff]
    %v1096 = vld [vmem:[#allocation11 + $0x5b0] sm:$0xff]
    %v1097 = vld [vmem:[#allocation11 + $0x5b8] sm:$0xff]
    %v1098 = vld [vmem:[#allocation11 + $0x5c0] sm:$0xff]
    %v1099 = vld [vmem:[#allocation11 + $0x5c8] sm:$0xff]
    %v1100 = vld [vmem:[#allocation11 + $0x5d0] sm:$0xff]
    %v1101 = vld [vmem:[#allocation11 + $0x5d8] sm:$0xff]
    %v1102 = vld [vmem:[#allocation11 + $0x5e0] sm:$0xff]
    %v1103 = vld [vmem:[#allocation11 + $0x5e8] sm:$0xff]
    %v1104 = vld [vmem:[#allocation11 + $0x5f0] sm:$0xff]
    %v1105 = vld [vmem:[#allocation11 + $0x5f8] sm:$0xff]
    %v1106 = vld [vmem:[#allocation11 + $0x600] sm:$0xff]
    %v1107 = vld [vmem:[#allocation11 + $0x608] sm:$0xff]
    %v1108 = vld [vmem:[#allocation11 + $0x610] sm:$0xff]
    %v1109 = vld [vmem:[#allocation11 + $0x618] sm:$0xff]
    %v1110 = vld [vmem:[#allocation11 + $0x620] sm:$0xff]
    %v1111 = vld [vmem:[#allocation11 + $0x628] sm:$0xff]
    %v1112 = vld [vmem:[#allocation11 + $0x630] sm:$0xff]
    %v1113 = vld [vmem:[#allocation11 + $0x638] sm:$0xff]
    %v1114 = vld [vmem:[#allocation11 + $0x640] sm:$0xff]
    %v1115 = vld [vmem:[#allocation11 + $0x648] sm:$0xff]
    %v1116 = vld [vmem:[#allocation11 + $0x650] sm:$0xff]
    %v1117 = vld [vmem:[#allocation11 + $0x658] sm:$0xff]
    %v1118 = vld [vmem:[#allocation11 + $0x660] sm:$0xff]
    %v1119 = vld [vmem:[#allocation11 + $0x668] sm:$0xff]
    %v1120 = vld [vmem:[#allocation11 + $0x670] sm:$0xff]
    %v1121 = vld [vmem:[#allocation11 + $0x678] sm:$0xff]
    %v1122 = vld [vmem:[#allocation11 + $0x680] sm:$0xff]
    %v1123 = vld [vmem:[#allocation11 + $0x688] sm:$0xff]
    %v1124 = vld [vmem:[#allocation11 + $0x690] sm:$0xff]
    %v1125 = vld [vmem:[#allocation11 + $0x698] sm:$0xff]
    %v1126 = vld [vmem:[#allocation11 + $0x6a0] sm:$0xff]
    %v1127 = vld [vmem:[#allocation11 + $0x6a8] sm:$0xff]
    %v1128 = vld [vmem:[#allocation11 + $0x6b0] sm:$0xff]
    %v1129 = vld [vmem:[#allocation11 + $0x6b8] sm:$0xff]
    %v1130 = vld [vmem:[#allocation11 + $0x6c0] sm:$0xff]
    %v1131 = vld [vmem:[#allocation11 + $0x6c8] sm:$0xff]
    %v1132 = vld [vmem:[#allocation11 + $0x6d0] sm:$0xff]
    %v1133 = vld [vmem:[#allocation11 + $0x6d8] sm:$0xff]
    %v1134 = vld [vmem:[#allocation11 + $0x6e0] sm:$0xff]
    %v1135 = vld [vmem:[#allocation11 + $0x6e8] sm:$0xff]
    %v1136 = vld [vmem:[#allocation11 + $0x6f0] sm:$0xff]
    %v1137 = vld [vmem:[#allocation11 + $0x6f8] sm:$0xff]
    %v1138 = vld [vmem:[#allocation11 + $0x700] sm:$0xff]
    %v1139 = vld [vmem:[#allocation11 + $0x708] sm:$0xff]
    %v1140 = vld [vmem:[#allocation11 + $0x710] sm:$0xff]
    %v1141 = vld [vmem:[#allocation11 + $0x718] sm:$0xff]
    %v1142 = vld [vmem:[#allocation11 + $0x720] sm:$0xff]
    %v1143 = vld [vmem:[#allocation11 + $0x728] sm:$0xff]
    %v1144 = vld [vmem:[#allocation11 + $0x730] sm:$0xff]
    %v1145 = vld [vmem:[#allocation11 + $0x738] sm:$0xff]
    %v1146 = vld [vmem:[#allocation11 + $0x740] sm:$0xff]
    %v1147 = vld [vmem:[#allocation11 + $0x748] sm:$0xff]
    %v1148 = vld [vmem:[#allocation11 + $0x750] sm:$0xff]
    %v1149 = vld [vmem:[#allocation11 + $0x758] sm:$0xff]
    %v1150 = vld [vmem:[#allocation11 + $0x760] sm:$0xff]
    %v1151 = vld [vmem:[#allocation11 + $0x768] sm:$0xff]
    %v1152 = vld [vmem:[#allocation11 + $0x770] sm:$0xff]
    %v1153 = vld [vmem:[#allocation11 + $0x778] sm:$0xff]
    %v1154 = vld [vmem:[#allocation11 + $0x780] sm:$0xff]
    %v1155 = vld [vmem:[#allocation11 + $0x788] sm:$0xff]
    %v1156 = vld [vmem:[#allocation11 + $0x790] sm:$0xff]
    %v1157 = vld [vmem:[#allocation11 + $0x798] sm:$0xff]
    %v1158 = vld [vmem:[#allocation11 + $0x7a0] sm:$0xff]
    %v1159 = vld [vmem:[#allocation11 + $0x7a8] sm:$0xff]
    %v1160 = vld [vmem:[#allocation11 + $0x7b0] sm:$0xff]
    %v1161 = vld [vmem:[#allocation11 + $0x7b8] sm:$0xff]
    %v1162 = vld [vmem:[#allocation11 + $0x7c0] sm:$0xff]
    %v1163 = vld [vmem:[#allocation11 + $0x7c8] sm:$0xff]
    %v1164 = vld [vmem:[#allocation11 + $0x7d0] sm:$0xff]
    %v1165 = vld [vmem:[#allocation11 + $0x7d8] sm:$0xff]
    %v1166 = vld [vmem:[#allocation11 + $0x7e0] sm:$0xff]
    %v1167 = vld [vmem:[#allocation11 + $0x7e8] sm:$0xff]
    %v1168 = vld [vmem:[#allocation11 + $0x7f0] sm:$0xff]
    %v1169 = vld [vmem:[#allocation11 + $0x7f8] sm:$0xff]
    %v1170 = vld [vmem:[%s8] sm:$0xff]
    %v1172 = vlaneseq
    %v1173 = vshrl.u32 %v1172, 7
    %v1174 = vsub.s32 0, %v1173
    %v1175 = vrot.slane %v1170, %v1174
    %v1176 = vlaneseq
    %v1177 = vshrl.u32 %v1176, 7
    %v1178 = vsub.s32 1, %v1177
    %v1179 = vrot.slane %v1170, %v1178
    %v1180 = vlaneseq
    %v1181 = vshrl.u32 %v1180, 7
    %v1182 = vsub.s32 2, %v1181
    %v1183 = vrot.slane %v1170, %v1182
    %v1184 = vlaneseq
    %v1185 = vshrl.u32 %v1184, 7
    %v1186 = vsub.s32 3, %v1185
    %v1187 = vrot.slane %v1170, %v1186
    %v1188 = vlaneseq
    %v1189 = vshrl.u32 %v1188, 7
    %v1190 = vsub.s32 4, %v1189
    %v1191 = vrot.slane %v1170, %v1190
    %v1192 = vlaneseq
    %v1193 = vshrl.u32 %v1192, 7
    %v1194 = vsub.s32 5, %v1193
    %v1195 = vrot.slane %v1170, %v1194
    %v1196 = vlaneseq
    %v1197 = vshrl.u32 %v1196, 7
    %v1198 = vsub.s32 6, %v1197
    %v1199 = vrot.slane %v1170, %v1198
    %v1200 = vlaneseq
    %v1201 = vshrl.u32 %v1200, 7
    %v1202 = vsub.s32 7, %v1201
    %v1203 = vrot.slane %v1170, %v1202
    %v1468 = vunpack.c.l.b16 %v914
    %v1469 = vunpack.c.h.b16 %v914
    %v1470 = vunpack.c.l.b16 %v915
    %v1471 = vunpack.c.h.b16 %v915
    %v1472 = vunpack.c.l.b16 %v916
    %v1473 = vunpack.c.h.b16 %v916
    %v1474 = vunpack.c.l.b16 %v917
    %v1475 = vunpack.c.h.b16 %v917
    %v1476 = vunpack.c.l.b16 %v918
    %v1477 = vunpack.c.h.b16 %v918
    %v1478 = vunpack.c.l.b16 %v919
    %v1479 = vunpack.c.h.b16 %v919
    %v1480 = vunpack.c.l.b16 %v920
    %v1481 = vunpack.c.h.b16 %v920
    %v1482 = vunpack.c.l.b16 %v921
    %v1483 = vunpack.c.h.b16 %v921
    %v1484 = vunpack.c.l.b16 %v922
    %v1485 = vunpack.c.h.b16 %v922
    %v1486 = vunpack.c.l.b16 %v923
    %v1487 = vunpack.c.h.b16 %v923
    %v1488 = vunpack.c.l.b16 %v924
    %v1489 = vunpack.c.h.b16 %v924
    %v1490 = vunpack.c.l.b16 %v925
    %v1491 = vunpack.c.h.b16 %v925
    %v1492 = vunpack.c.l.b16 %v926
    %v1493 = vunpack.c.h.b16 %v926
    %v1494 = vunpack.c.l.b16 %v927
    %v1495 = vunpack.c.h.b16 %v927
    %v1496 = vunpack.c.l.b16 %v928
    %v1497 = vunpack.c.h.b16 %v928
    %v1498 = vunpack.c.l.b16 %v929
    %v1499 = vunpack.c.h.b16 %v929
    %v1500 = vunpack.c.l.b16 %v930
    %v1501 = vunpack.c.h.b16 %v930
    %v1502 = vunpack.c.l.b16 %v931
    %v1503 = vunpack.c.h.b16 %v931
    %v1504 = vunpack.c.l.b16 %v932
    %v1505 = vunpack.c.h.b16 %v932
    %v1506 = vunpack.c.l.b16 %v933
    %v1507 = vunpack.c.h.b16 %v933
    %v1508 = vunpack.c.l.b16 %v934
    %v1509 = vunpack.c.h.b16 %v934
    %v1510 = vunpack.c.l.b16 %v935
    %v1511 = vunpack.c.h.b16 %v935
    %v1512 = vunpack.c.l.b16 %v936
    %v1513 = vunpack.c.h.b16 %v936
    %v1514 = vunpack.c.l.b16 %v937
    %v1515 = vunpack.c.h.b16 %v937
    %v1516 = vunpack.c.l.b16 %v938
    %v1517 = vunpack.c.h.b16 %v938
    %v1518 = vunpack.c.l.b16 %v939
    %v1519 = vunpack.c.h.b16 %v939
    %v1520 = vunpack.c.l.b16 %v940
    %v1521 = vunpack.c.h.b16 %v940
    %v1522 = vunpack.c.l.b16 %v941
    %v1523 = vunpack.c.h.b16 %v941
    %v1524 = vunpack.c.l.b16 %v942
    %v1525 = vunpack.c.h.b16 %v942
    %v1526 = vunpack.c.l.b16 %v943
    %v1527 = vunpack.c.h.b16 %v943
    %v1528 = vunpack.c.l.b16 %v944
    %v1529 = vunpack.c.h.b16 %v944
    %v1530 = vunpack.c.l.b16 %v945
    %v1531 = vunpack.c.h.b16 %v945
    %v1532 = vunpack.c.l.b16 %v946
    %v1533 = vunpack.c.h.b16 %v946
    %v1534 = vunpack.c.l.b16 %v947
    %v1535 = vunpack.c.h.b16 %v947
    %v1536 = vunpack.c.l.b16 %v948
    %v1537 = vunpack.c.h.b16 %v948
    %v1538 = vunpack.c.l.b16 %v949
    %v1539 = vunpack.c.h.b16 %v949
    %v1540 = vunpack.c.l.b16 %v950
    %v1541 = vunpack.c.h.b16 %v950
    %v1542 = vunpack.c.l.b16 %v951
    %v1543 = vunpack.c.h.b16 %v951
    %v1544 = vunpack.c.l.b16 %v952
    %v1545 = vunpack.c.h.b16 %v952
    %v1546 = vunpack.c.l.b16 %v953
    %v1547 = vunpack.c.h.b16 %v953
    %v1548 = vunpack.c.l.b16 %v954
    %v1549 = vunpack.c.h.b16 %v954
    %v1550 = vunpack.c.l.b16 %v955
    %v1551 = vunpack.c.h.b16 %v955
    %v1552 = vunpack.c.l.b16 %v956
    %v1553 = vunpack.c.h.b16 %v956
    %v1554 = vunpack.c.l.b16 %v957
    %v1555 = vunpack.c.h.b16 %v957
    %v1556 = vunpack.c.l.b16 %v958
    %v1557 = vunpack.c.h.b16 %v958
    %v1558 = vunpack.c.l.b16 %v959
    %v1559 = vunpack.c.h.b16 %v959
    %v1560 = vunpack.c.l.b16 %v960
    %v1561 = vunpack.c.h.b16 %v960
    %v1562 = vunpack.c.l.b16 %v961
    %v1563 = vunpack.c.h.b16 %v961
    %v1564 = vunpack.c.l.b16 %v962
    %v1565 = vunpack.c.h.b16 %v962
    %v1566 = vunpack.c.l.b16 %v963
    %v1567 = vunpack.c.h.b16 %v963
    %v1568 = vunpack.c.l.b16 %v964
    %v1569 = vunpack.c.h.b16 %v964
    %v1570 = vunpack.c.l.b16 %v965
    %v1571 = vunpack.c.h.b16 %v965
    %v1572 = vunpack.c.l.b16 %v966
    %v1573 = vunpack.c.h.b16 %v966
    %v1574 = vunpack.c.l.b16 %v967
    %v1575 = vunpack.c.h.b16 %v967
    %v1576 = vunpack.c.l.b16 %v968
    %v1577 = vunpack.c.h.b16 %v968
    %v1578 = vunpack.c.l.b16 %v969
    %v1579 = vunpack.c.h.b16 %v969
    %v1580 = vunpack.c.l.b16 %v970
    %v1581 = vunpack.c.h.b16 %v970
    %v1582 = vunpack.c.l.b16 %v971
    %v1583 = vunpack.c.h.b16 %v971
    %v1584 = vunpack.c.l.b16 %v972
    %v1585 = vunpack.c.h.b16 %v972
    %v1586 = vunpack.c.l.b16 %v973
    %v1587 = vunpack.c.h.b16 %v973
    %v1588 = vunpack.c.l.b16 %v974
    %v1589 = vunpack.c.h.b16 %v974
    %v1590 = vunpack.c.l.b16 %v975
    %v1591 = vunpack.c.h.b16 %v975
    %v1592 = vunpack.c.l.b16 %v976
    %v1593 = vunpack.c.h.b16 %v976
    %v1594 = vunpack.c.l.b16 %v977
    %v1595 = vunpack.c.h.b16 %v977
    %v1596 = vunpack.c.l.b16 %v978
    %v1597 = vunpack.c.h.b16 %v978
    %v1598 = vunpack.c.l.b16 %v979
    %v1599 = vunpack.c.h.b16 %v979
    %v1600 = vunpack.c.l.b16 %v980
    %v1601 = vunpack.c.h.b16 %v980
    %v1602 = vunpack.c.l.b16 %v981
    %v1603 = vunpack.c.h.b16 %v981
    %v1604 = vunpack.c.l.b16 %v982
    %v1605 = vunpack.c.h.b16 %v982
    %v1606 = vunpack.c.l.b16 %v983
    %v1607 = vunpack.c.h.b16 %v983
    %v1608 = vunpack.c.l.b16 %v984
    %v1609 = vunpack.c.h.b16 %v984
    %v1610 = vunpack.c.l.b16 %v985
    %v1611 = vunpack.c.h.b16 %v985
    %v1612 = vunpack.c.l.b16 %v986
    %v1613 = vunpack.c.h.b16 %v986
    %v1614 = vunpack.c.l.b16 %v987
    %v1615 = vunpack.c.h.b16 %v987
    %v1616 = vunpack.c.l.b16 %v988
    %v1617 = vunpack.c.h.b16 %v988
    %v1618 = vunpack.c.l.b16 %v989
    %v1619 = vunpack.c.h.b16 %v989
    %v1620 = vunpack.c.l.b16 %v990
    %v1621 = vunpack.c.h.b16 %v990
    %v1622 = vunpack.c.l.b16 %v991
    %v1623 = vunpack.c.h.b16 %v991
    %v1624 = vunpack.c.l.b16 %v992
    %v1625 = vunpack.c.h.b16 %v992
    %v1626 = vunpack.c.l.b16 %v993
    %v1627 = vunpack.c.h.b16 %v993
    %v1628 = vunpack.c.l.b16 %v994
    %v1629 = vunpack.c.h.b16 %v994
    %v1630 = vunpack.c.l.b16 %v995
    %v1631 = vunpack.c.h.b16 %v995
    %v1632 = vunpack.c.l.b16 %v996
    %v1633 = vunpack.c.h.b16 %v996
    %v1634 = vunpack.c.l.b16 %v997
    %v1635 = vunpack.c.h.b16 %v997
    %v1636 = vunpack.c.l.b16 %v998
    %v1637 = vunpack.c.h.b16 %v998
    %v1638 = vunpack.c.l.b16 %v999
    %v1639 = vunpack.c.h.b16 %v999
    %v1640 = vunpack.c.l.b16 %v1000
    %v1641 = vunpack.c.h.b16 %v1000
    %v1642 = vunpack.c.l.b16 %v1001
    %v1643 = vunpack.c.h.b16 %v1001
    %v1644 = vunpack.c.l.b16 %v1002
    %v1645 = vunpack.c.h.b16 %v1002
    %v1646 = vunpack.c.l.b16 %v1003
    %v1647 = vunpack.c.h.b16 %v1003
    %v1648 = vunpack.c.l.b16 %v1004
    %v1649 = vunpack.c.h.b16 %v1004
    %v1650 = vunpack.c.l.b16 %v1005
    %v1651 = vunpack.c.h.b16 %v1005
    %v1652 = vunpack.c.l.b16 %v1006
    %v1653 = vunpack.c.h.b16 %v1006
    %v1654 = vunpack.c.l.b16 %v1007
    %v1655 = vunpack.c.h.b16 %v1007
    %v1656 = vunpack.c.l.b16 %v1008
    %v1657 = vunpack.c.h.b16 %v1008
    %v1658 = vunpack.c.l.b16 %v1009
    %v1659 = vunpack.c.h.b16 %v1009
    %v1660 = vunpack.c.l.b16 %v1010
    %v1661 = vunpack.c.h.b16 %v1010
    %v1662 = vunpack.c.l.b16 %v1011
    %v1663 = vunpack.c.h.b16 %v1011
    %v1664 = vunpack.c.l.b16 %v1012
    %v1665 = vunpack.c.h.b16 %v1012
    %v1666 = vunpack.c.l.b16 %v1013
    %v1667 = vunpack.c.h.b16 %v1013
    %v1668 = vunpack.c.l.b16 %v1014
    %v1669 = vunpack.c.h.b16 %v1014
    %v1670 = vunpack.c.l.b16 %v1015
    %v1671 = vunpack.c.h.b16 %v1015
    %v1672 = vunpack.c.l.b16 %v1016
    %v1673 = vunpack.c.h.b16 %v1016
    %v1674 = vunpack.c.l.b16 %v1017
    %v1675 = vunpack.c.h.b16 %v1017
    %v1676 = vunpack.c.l.b16 %v1018
    %v1677 = vunpack.c.h.b16 %v1018
    %v1678 = vunpack.c.l.b16 %v1019
    %v1679 = vunpack.c.h.b16 %v1019
    %v1680 = vunpack.c.l.b16 %v1020
    %v1681 = vunpack.c.h.b16 %v1020
    %v1682 = vunpack.c.l.b16 %v1021
    %v1683 = vunpack.c.h.b16 %v1021
    %v1684 = vunpack.c.l.b16 %v1022
    %v1685 = vunpack.c.h.b16 %v1022
    %v1686 = vunpack.c.l.b16 %v1023
    %v1687 = vunpack.c.h.b16 %v1023
    %v1688 = vunpack.c.l.b16 %v1024
    %v1689 = vunpack.c.h.b16 %v1024
    %v1690 = vunpack.c.l.b16 %v1025
    %v1691 = vunpack.c.h.b16 %v1025
    %v1692 = vunpack.c.l.b16 %v1026
    %v1693 = vunpack.c.h.b16 %v1026
    %v1694 = vunpack.c.l.b16 %v1027
    %v1695 = vunpack.c.h.b16 %v1027
    %v1696 = vunpack.c.l.b16 %v1028
    %v1697 = vunpack.c.h.b16 %v1028
    %v1698 = vunpack.c.l.b16 %v1029
    %v1699 = vunpack.c.h.b16 %v1029
    %v1700 = vunpack.c.l.b16 %v1030
    %v1701 = vunpack.c.h.b16 %v1030
    %v1702 = vunpack.c.l.b16 %v1031
    %v1703 = vunpack.c.h.b16 %v1031
    %v1704 = vunpack.c.l.b16 %v1032
    %v1705 = vunpack.c.h.b16 %v1032
    %v1706 = vunpack.c.l.b16 %v1033
    %v1707 = vunpack.c.h.b16 %v1033
    %v1708 = vunpack.c.l.b16 %v1034
    %v1709 = vunpack.c.h.b16 %v1034
    %v1710 = vunpack.c.l.b16 %v1035
    %v1711 = vunpack.c.h.b16 %v1035
    %v1712 = vunpack.c.l.b16 %v1036
    %v1713 = vunpack.c.h.b16 %v1036
    %v1714 = vunpack.c.l.b16 %v1037
    %v1715 = vunpack.c.h.b16 %v1037
    %v1716 = vunpack.c.l.b16 %v1038
    %v1717 = vunpack.c.h.b16 %v1038
    %v1718 = vunpack.c.l.b16 %v1039
    %v1719 = vunpack.c.h.b16 %v1039
    %v1720 = vunpack.c.l.b16 %v1040
    %v1721 = vunpack.c.h.b16 %v1040
    %v1722 = vunpack.c.l.b16 %v1041
    %v1723 = vunpack.c.h.b16 %v1041
    %v1724 = vunpack.c.l.b16 %v1042
    %v1725 = vunpack.c.h.b16 %v1042
    %v1726 = vunpack.c.l.b16 %v1043
    %v1727 = vunpack.c.h.b16 %v1043
    %v1728 = vunpack.c.l.b16 %v1044
    %v1729 = vunpack.c.h.b16 %v1044
    %v1730 = vunpack.c.l.b16 %v1045
    %v1731 = vunpack.c.h.b16 %v1045
    %v1732 = vunpack.c.l.b16 %v1046
    %v1733 = vunpack.c.h.b16 %v1046
    %v1734 = vunpack.c.l.b16 %v1047
    %v1735 = vunpack.c.h.b16 %v1047
    %v1736 = vunpack.c.l.b16 %v1048
    %v1737 = vunpack.c.h.b16 %v1048
    %v1738 = vunpack.c.l.b16 %v1049
    %v1739 = vunpack.c.h.b16 %v1049
    %v1740 = vunpack.c.l.b16 %v1050
    %v1741 = vunpack.c.h.b16 %v1050
    %v1742 = vunpack.c.l.b16 %v1051
    %v1743 = vunpack.c.h.b16 %v1051
    %v1744 = vunpack.c.l.b16 %v1052
    %v1745 = vunpack.c.h.b16 %v1052
    %v1746 = vunpack.c.l.b16 %v1053
    %v1747 = vunpack.c.h.b16 %v1053
    %v1748 = vunpack.c.l.b16 %v1054
    %v1749 = vunpack.c.h.b16 %v1054
    %v1750 = vunpack.c.l.b16 %v1055
    %v1751 = vunpack.c.h.b16 %v1055
    %v1752 = vunpack.c.l.b16 %v1056
    %v1753 = vunpack.c.h.b16 %v1056
    %v1754 = vunpack.c.l.b16 %v1057
    %v1755 = vunpack.c.h.b16 %v1057
    %v1756 = vunpack.c.l.b16 %v1058
    %v1757 = vunpack.c.h.b16 %v1058
    %v1758 = vunpack.c.l.b16 %v1059
    %v1759 = vunpack.c.h.b16 %v1059
    %v1760 = vunpack.c.l.b16 %v1060
    %v1761 = vunpack.c.h.b16 %v1060
    %v1762 = vunpack.c.l.b16 %v1061
    %v1763 = vunpack.c.h.b16 %v1061
    %v1764 = vunpack.c.l.b16 %v1062
    %v1765 = vunpack.c.h.b16 %v1062
    %v1766 = vunpack.c.l.b16 %v1063
    %v1767 = vunpack.c.h.b16 %v1063
    %v1768 = vunpack.c.l.b16 %v1064
    %v1769 = vunpack.c.h.b16 %v1064
    %v1770 = vunpack.c.l.b16 %v1065
    %v1771 = vunpack.c.h.b16 %v1065
    %v1772 = vunpack.c.l.b16 %v1066
    %v1773 = vunpack.c.h.b16 %v1066
    %v1774 = vunpack.c.l.b16 %v1067
    %v1775 = vunpack.c.h.b16 %v1067
    %v1776 = vunpack.c.l.b16 %v1068
    %v1777 = vunpack.c.h.b16 %v1068
    %v1778 = vunpack.c.l.b16 %v1069
    %v1779 = vunpack.c.h.b16 %v1069
    %v1780 = vunpack.c.l.b16 %v1070
    %v1781 = vunpack.c.h.b16 %v1070
    %v1782 = vunpack.c.l.b16 %v1071
    %v1783 = vunpack.c.h.b16 %v1071
    %v1784 = vunpack.c.l.b16 %v1072
    %v1785 = vunpack.c.h.b16 %v1072
    %v1786 = vunpack.c.l.b16 %v1073
    %v1787 = vunpack.c.h.b16 %v1073
    %v1788 = vunpack.c.l.b16 %v1074
    %v1789 = vunpack.c.h.b16 %v1074
    %v1790 = vunpack.c.l.b16 %v1075
    %v1791 = vunpack.c.h.b16 %v1075
    %v1792 = vunpack.c.l.b16 %v1076
    %v1793 = vunpack.c.h.b16 %v1076
    %v1794 = vunpack.c.l.b16 %v1077
    %v1795 = vunpack.c.h.b16 %v1077
    %v1796 = vunpack.c.l.b16 %v1078
    %v1797 = vunpack.c.h.b16 %v1078
    %v1798 = vunpack.c.l.b16 %v1079
    %v1799 = vunpack.c.h.b16 %v1079
    %v1800 = vunpack.c.l.b16 %v1080
    %v1801 = vunpack.c.h.b16 %v1080
    %v1802 = vunpack.c.l.b16 %v1081
    %v1803 = vunpack.c.h.b16 %v1081
    %v1804 = vunpack.c.l.b16 %v1082
    %v1805 = vunpack.c.h.b16 %v1082
    %v1806 = vunpack.c.l.b16 %v1083
    %v1807 = vunpack.c.h.b16 %v1083
    %v1808 = vunpack.c.l.b16 %v1084
    %v1809 = vunpack.c.h.b16 %v1084
    %v1810 = vunpack.c.l.b16 %v1085
    %v1811 = vunpack.c.h.b16 %v1085
    %v1812 = vunpack.c.l.b16 %v1086
    %v1813 = vunpack.c.h.b16 %v1086
    %v1814 = vunpack.c.l.b16 %v1087
    %v1815 = vunpack.c.h.b16 %v1087
    %v1816 = vunpack.c.l.b16 %v1088
    %v1817 = vunpack.c.h.b16 %v1088
    %v1818 = vunpack.c.l.b16 %v1089
    %v1819 = vunpack.c.h.b16 %v1089
    %v1820 = vunpack.c.l.b16 %v1090
    %v1821 = vunpack.c.h.b16 %v1090
    %v1822 = vunpack.c.l.b16 %v1091
    %v1823 = vunpack.c.h.b16 %v1091
    %v1824 = vunpack.c.l.b16 %v1092
    %v1825 = vunpack.c.h.b16 %v1092
    %v1826 = vunpack.c.l.b16 %v1093
    %v1827 = vunpack.c.h.b16 %v1093
    %v1828 = vunpack.c.l.b16 %v1094
    %v1829 = vunpack.c.h.b16 %v1094
    %v1830 = vunpack.c.l.b16 %v1095
    %v1831 = vunpack.c.h.b16 %v1095
    %v1832 = vunpack.c.l.b16 %v1096
    %v1833 = vunpack.c.h.b16 %v1096
    %v1834 = vunpack.c.l.b16 %v1097
    %v1835 = vunpack.c.h.b16 %v1097
    %v1836 = vunpack.c.l.b16 %v1098
    %v1837 = vunpack.c.h.b16 %v1098
    %v1838 = vunpack.c.l.b16 %v1099
    %v1839 = vunpack.c.h.b16 %v1099
    %v1840 = vunpack.c.l.b16 %v1100
    %v1841 = vunpack.c.h.b16 %v1100
    %v1842 = vunpack.c.l.b16 %v1101
    %v1843 = vunpack.c.h.b16 %v1101
    %v1844 = vunpack.c.l.b16 %v1102
    %v1845 = vunpack.c.h.b16 %v1102
    %v1846 = vunpack.c.l.b16 %v1103
    %v1847 = vunpack.c.h.b16 %v1103
    %v1848 = vunpack.c.l.b16 %v1104
    %v1849 = vunpack.c.h.b16 %v1104
    %v1850 = vunpack.c.l.b16 %v1105
    %v1851 = vunpack.c.h.b16 %v1105
    %v1852 = vunpack.c.l.b16 %v1106
    %v1853 = vunpack.c.h.b16 %v1106
    %v1854 = vunpack.c.l.b16 %v1107
    %v1855 = vunpack.c.h.b16 %v1107
    %v1856 = vunpack.c.l.b16 %v1108
    %v1857 = vunpack.c.h.b16 %v1108
    %v1858 = vunpack.c.l.b16 %v1109
    %v1859 = vunpack.c.h.b16 %v1109
    %v1860 = vunpack.c.l.b16 %v1110
    %v1861 = vunpack.c.h.b16 %v1110
    %v1862 = vunpack.c.l.b16 %v1111
    %v1863 = vunpack.c.h.b16 %v1111
    %v1864 = vunpack.c.l.b16 %v1112
    %v1865 = vunpack.c.h.b16 %v1112
    %v1866 = vunpack.c.l.b16 %v1113
    %v1867 = vunpack.c.h.b16 %v1113
    %v1868 = vunpack.c.l.b16 %v1114
    %v1869 = vunpack.c.h.b16 %v1114
    %v1870 = vunpack.c.l.b16 %v1115
    %v1871 = vunpack.c.h.b16 %v1115
    %v1872 = vunpack.c.l.b16 %v1116
    %v1873 = vunpack.c.h.b16 %v1116
    %v1874 = vunpack.c.l.b16 %v1117
    %v1875 = vunpack.c.h.b16 %v1117
    %v1876 = vunpack.c.l.b16 %v1118
    %v1877 = vunpack.c.h.b16 %v1118
    %v1878 = vunpack.c.l.b16 %v1119
    %v1879 = vunpack.c.h.b16 %v1119
    %v1880 = vunpack.c.l.b16 %v1120
    %v1881 = vunpack.c.h.b16 %v1120
    %v1882 = vunpack.c.l.b16 %v1121
    %v1883 = vunpack.c.h.b16 %v1121
    %v1884 = vunpack.c.l.b16 %v1122
    %v1885 = vunpack.c.h.b16 %v1122
    %v1886 = vunpack.c.l.b16 %v1123
    %v1887 = vunpack.c.h.b16 %v1123
    %v1888 = vunpack.c.l.b16 %v1124
    %v1889 = vunpack.c.h.b16 %v1124
    %v1890 = vunpack.c.l.b16 %v1125
    %v1891 = vunpack.c.h.b16 %v1125
    %v1892 = vunpack.c.l.b16 %v1126
    %v1893 = vunpack.c.h.b16 %v1126
    %v1894 = vunpack.c.l.b16 %v1127
    %v1895 = vunpack.c.h.b16 %v1127
    %v1896 = vunpack.c.l.b16 %v1128
    %v1897 = vunpack.c.h.b16 %v1128
    %v1898 = vunpack.c.l.b16 %v1129
    %v1899 = vunpack.c.h.b16 %v1129
    %v1900 = vunpack.c.l.b16 %v1130
    %v1901 = vunpack.c.h.b16 %v1130
    %v1902 = vunpack.c.l.b16 %v1131
    %v1903 = vunpack.c.h.b16 %v1131
    %v1904 = vunpack.c.l.b16 %v1132
    %v1905 = vunpack.c.h.b16 %v1132
    %v1906 = vunpack.c.l.b16 %v1133
    %v1907 = vunpack.c.h.b16 %v1133
    %v1908 = vunpack.c.l.b16 %v1134
    %v1909 = vunpack.c.h.b16 %v1134
    %v1910 = vunpack.c.l.b16 %v1135
    %v1911 = vunpack.c.h.b16 %v1135
    %v1912 = vunpack.c.l.b16 %v1136
    %v1913 = vunpack.c.h.b16 %v1136
    %v1914 = vunpack.c.l.b16 %v1137
    %v1915 = vunpack.c.h.b16 %v1137
    %v1916 = vunpack.c.l.b16 %v1138
    %v1917 = vunpack.c.h.b16 %v1138
    %v1918 = vunpack.c.l.b16 %v1139
    %v1919 = vunpack.c.h.b16 %v1139
    %v1920 = vunpack.c.l.b16 %v1140
    %v1921 = vunpack.c.h.b16 %v1140
    %v1922 = vunpack.c.l.b16 %v1141
    %v1923 = vunpack.c.h.b16 %v1141
    %v1924 = vunpack.c.l.b16 %v1142
    %v1925 = vunpack.c.h.b16 %v1142
    %v1926 = vunpack.c.l.b16 %v1143
    %v1927 = vunpack.c.h.b16 %v1143
    %v1928 = vunpack.c.l.b16 %v1144
    %v1929 = vunpack.c.h.b16 %v1144
    %v1930 = vunpack.c.l.b16 %v1145
    %v1931 = vunpack.c.h.b16 %v1145
    %v1932 = vunpack.c.l.b16 %v1146
    %v1933 = vunpack.c.h.b16 %v1146
    %v1934 = vunpack.c.l.b16 %v1147
    %v1935 = vunpack.c.h.b16 %v1147
    %v1936 = vunpack.c.l.b16 %v1148
    %v1937 = vunpack.c.h.b16 %v1148
    %v1938 = vunpack.c.l.b16 %v1149
    %v1939 = vunpack.c.h.b16 %v1149
    %v1940 = vunpack.c.l.b16 %v1150
    %v1941 = vunpack.c.h.b16 %v1150
    %v1942 = vunpack.c.l.b16 %v1151
    %v1943 = vunpack.c.h.b16 %v1151
    %v1944 = vunpack.c.l.b16 %v1152
    %v1945 = vunpack.c.h.b16 %v1152
    %v1946 = vunpack.c.l.b16 %v1153
    %v1947 = vunpack.c.h.b16 %v1153
    %v1948 = vunpack.c.l.b16 %v1154
    %v1949 = vunpack.c.h.b16 %v1154
    %v1950 = vunpack.c.l.b16 %v1155
    %v1951 = vunpack.c.h.b16 %v1155
    %v1952 = vunpack.c.l.b16 %v1156
    %v1953 = vunpack.c.h.b16 %v1156
    %v1954 = vunpack.c.l.b16 %v1157
    %v1955 = vunpack.c.h.b16 %v1157
    %v1956 = vunpack.c.l.b16 %v1158
    %v1957 = vunpack.c.h.b16 %v1158
    %v1958 = vunpack.c.l.b16 %v1159
    %v1959 = vunpack.c.h.b16 %v1159
    %v1960 = vunpack.c.l.b16 %v1160
    %v1961 = vunpack.c.h.b16 %v1160
    %v1962 = vunpack.c.l.b16 %v1161
    %v1963 = vunpack.c.h.b16 %v1161
    %v1964 = vunpack.c.l.b16 %v1162
    %v1965 = vunpack.c.h.b16 %v1162
    %v1966 = vunpack.c.l.b16 %v1163
    %v1967 = vunpack.c.h.b16 %v1163
    %v1968 = vunpack.c.l.b16 %v1164
    %v1969 = vunpack.c.h.b16 %v1164
    %v1970 = vunpack.c.l.b16 %v1165
    %v1971 = vunpack.c.h.b16 %v1165
    %v1972 = vunpack.c.l.b16 %v1166
    %v1973 = vunpack.c.h.b16 %v1166
    %v1974 = vunpack.c.l.b16 %v1167
    %v1975 = vunpack.c.h.b16 %v1167
    %v1976 = vunpack.c.l.b16 %v1168
    %v1977 = vunpack.c.h.b16 %v1168
    %v1978 = vunpack.c.l.b16 %v1169
    %v1979 = vunpack.c.h.b16 %v1169
    %v1980 = vpack.c.b16 %v1476, %v1468
    %v1981 = vpack.c.b16 %v1477, %v1469
    %v1982 = vpack.c.b16 %v1478, %v1470
    %v1983 = vpack.c.b16 %v1479, %v1471
    %v1984 = vpack.c.b16 %v1480, %v1472
    %v1985 = vpack.c.b16 %v1481, %v1473
    %v1986 = vpack.c.b16 %v1482, %v1474
    %v1987 = vpack.c.b16 %v1483, %v1475
    %v1988 = vpack.c.b16 %v1492, %v1484
    %v1989 = vpack.c.b16 %v1493, %v1485
    %v1990 = vpack.c.b16 %v1494, %v1486
    %v1991 = vpack.c.b16 %v1495, %v1487
    %v1992 = vpack.c.b16 %v1496, %v1488
    %v1993 = vpack.c.b16 %v1497, %v1489
    %v1994 = vpack.c.b16 %v1498, %v1490
    %v1995 = vpack.c.b16 %v1499, %v1491
    %v1996 = vpack.c.b16 %v1508, %v1500
    %v1997 = vpack.c.b16 %v1509, %v1501
    %v1998 = vpack.c.b16 %v1510, %v1502
    %v1999 = vpack.c.b16 %v1511, %v1503
    %v2000 = vpack.c.b16 %v1512, %v1504
    %v2001 = vpack.c.b16 %v1513, %v1505
    %v2002 = vpack.c.b16 %v1514, %v1506
    %v2003 = vpack.c.b16 %v1515, %v1507
    %v2004 = vpack.c.b16 %v1524, %v1516
    %v2005 = vpack.c.b16 %v1525, %v1517
    %v2006 = vpack.c.b16 %v1526, %v1518
    %v2007 = vpack.c.b16 %v1527, %v1519
    %v2008 = vpack.c.b16 %v1528, %v1520
    %v2009 = vpack.c.b16 %v1529, %v1521
    %v2010 = vpack.c.b16 %v1530, %v1522
    %v2011 = vpack.c.b16 %v1531, %v1523
    %v2012 = vpack.c.b16 %v1540, %v1532
    %v2013 = vpack.c.b16 %v1541, %v1533
    %v2014 = vpack.c.b16 %v1542, %v1534
    %v2015 = vpack.c.b16 %v1543, %v1535
    %v2016 = vpack.c.b16 %v1544, %v1536
    %v2017 = vpack.c.b16 %v1545, %v1537
    %v2018 = vpack.c.b16 %v1546, %v1538
    %v2019 = vpack.c.b16 %v1547, %v1539
    %v2020 = vpack.c.b16 %v1556, %v1548
    %v2021 = vpack.c.b16 %v1557, %v1549
    %v2022 = vpack.c.b16 %v1558, %v1550
    %v2023 = vpack.c.b16 %v1559, %v1551
    %v2024 = vpack.c.b16 %v1560, %v1552
    %v2025 = vpack.c.b16 %v1561, %v1553
    %v2026 = vpack.c.b16 %v1562, %v1554
    %v2027 = vpack.c.b16 %v1563, %v1555
    %v2028 = vpack.c.b16 %v1572, %v1564
    %v2029 = vpack.c.b16 %v1573, %v1565
    %v2030 = vpack.c.b16 %v1574, %v1566
    %v2031 = vpack.c.b16 %v1575, %v1567
    %v2032 = vpack.c.b16 %v1576, %v1568
    %v2033 = vpack.c.b16 %v1577, %v1569
    %v2034 = vpack.c.b16 %v1578, %v1570
    %v2035 = vpack.c.b16 %v1579, %v1571
    %v2036 = vpack.c.b16 %v1588, %v1580
    %v2037 = vpack.c.b16 %v1589, %v1581
    %v2038 = vpack.c.b16 %v1590, %v1582
    %v2039 = vpack.c.b16 %v1591, %v1583
    %v2040 = vpack.c.b16 %v1592, %v1584
    %v2041 = vpack.c.b16 %v1593, %v1585
    %v2042 = vpack.c.b16 %v1594, %v1586
    %v2043 = vpack.c.b16 %v1595, %v1587
    %v2044 = vpack.c.b16 %v1604, %v1596
    %v2045 = vpack.c.b16 %v1605, %v1597
    %v2046 = vpack.c.b16 %v1606, %v1598
    %v2047 = vpack.c.b16 %v1607, %v1599
    %v2048 = vpack.c.b16 %v1608, %v1600
    %v2049 = vpack.c.b16 %v1609, %v1601
    %v2050 = vpack.c.b16 %v1610, %v1602
    %v2051 = vpack.c.b16 %v1611, %v1603
    %v2052 = vpack.c.b16 %v1620, %v1612
    %v2053 = vpack.c.b16 %v1621, %v1613
    %v2054 = vpack.c.b16 %v1622, %v1614
    %v2055 = vpack.c.b16 %v1623, %v1615
    %v2056 = vpack.c.b16 %v1624, %v1616
    %v2057 = vpack.c.b16 %v1625, %v1617
    %v2058 = vpack.c.b16 %v1626, %v1618
    %v2059 = vpack.c.b16 %v1627, %v1619
    %v2060 = vpack.c.b16 %v1636, %v1628
    %v2061 = vpack.c.b16 %v1637, %v1629
    %v2062 = vpack.c.b16 %v1638, %v1630
    %v2063 = vpack.c.b16 %v1639, %v1631
    %v2064 = vpack.c.b16 %v1640, %v1632
    %v2065 = vpack.c.b16 %v1641, %v1633
    %v2066 = vpack.c.b16 %v1642, %v1634
    %v2067 = vpack.c.b16 %v1643, %v1635
    %v2068 = vpack.c.b16 %v1652, %v1644
    %v2069 = vpack.c.b16 %v1653, %v1645
    %v2070 = vpack.c.b16 %v1654, %v1646
    %v2071 = vpack.c.b16 %v1655, %v1647
    %v2072 = vpack.c.b16 %v1656, %v1648
    %v2073 = vpack.c.b16 %v1657, %v1649
    %v2074 = vpack.c.b16 %v1658, %v1650
    %v2075 = vpack.c.b16 %v1659, %v1651
    %v2076 = vpack.c.b16 %v1668, %v1660
    %v2077 = vpack.c.b16 %v1669, %v1661
    %v2078 = vpack.c.b16 %v1670, %v1662
    %v2079 = vpack.c.b16 %v1671, %v1663
    %v2080 = vpack.c.b16 %v1672, %v1664
    %v2081 = vpack.c.b16 %v1673, %v1665
    %v2082 = vpack.c.b16 %v1674, %v1666
    %v2083 = vpack.c.b16 %v1675, %v1667
    %v2084 = vpack.c.b16 %v1684, %v1676
    %v2085 = vpack.c.b16 %v1685, %v1677
    %v2086 = vpack.c.b16 %v1686, %v1678
    %v2087 = vpack.c.b16 %v1687, %v1679
    %v2088 = vpack.c.b16 %v1688, %v1680
    %v2089 = vpack.c.b16 %v1689, %v1681
    %v2090 = vpack.c.b16 %v1690, %v1682
    %v2091 = vpack.c.b16 %v1691, %v1683
    %v2092 = vpack.c.b16 %v1700, %v1692
    %v2093 = vpack.c.b16 %v1701, %v1693
    %v2094 = vpack.c.b16 %v1702, %v1694
    %v2095 = vpack.c.b16 %v1703, %v1695
    %v2096 = vpack.c.b16 %v1704, %v1696
    %v2097 = vpack.c.b16 %v1705, %v1697
    %v2098 = vpack.c.b16 %v1706, %v1698
    %v2099 = vpack.c.b16 %v1707, %v1699
    %v2100 = vpack.c.b16 %v1716, %v1708
    %v2101 = vpack.c.b16 %v1717, %v1709
    %v2102 = vpack.c.b16 %v1718, %v1710
    %v2103 = vpack.c.b16 %v1719, %v1711
    %v2104 = vpack.c.b16 %v1720, %v1712
    %v2105 = vpack.c.b16 %v1721, %v1713
    %v2106 = vpack.c.b16 %v1722, %v1714
    %v2107 = vpack.c.b16 %v1723, %v1715
    %v2108 = vpack.c.b16 %v1732, %v1724
    %v2109 = vpack.c.b16 %v1733, %v1725
    %v2110 = vpack.c.b16 %v1734, %v1726
    %v2111 = vpack.c.b16 %v1735, %v1727
    %v2112 = vpack.c.b16 %v1736, %v1728
    %v2113 = vpack.c.b16 %v1737, %v1729
    %v2114 = vpack.c.b16 %v1738, %v1730
    %v2115 = vpack.c.b16 %v1739, %v1731
    %v2116 = vpack.c.b16 %v1748, %v1740
    %v2117 = vpack.c.b16 %v1749, %v1741
    %v2118 = vpack.c.b16 %v1750, %v1742
    %v2119 = vpack.c.b16 %v1751, %v1743
    %v2120 = vpack.c.b16 %v1752, %v1744
    %v2121 = vpack.c.b16 %v1753, %v1745
    %v2122 = vpack.c.b16 %v1754, %v1746
    %v2123 = vpack.c.b16 %v1755, %v1747
    %v2124 = vpack.c.b16 %v1764, %v1756
    %v2125 = vpack.c.b16 %v1765, %v1757
    %v2126 = vpack.c.b16 %v1766, %v1758
    %v2127 = vpack.c.b16 %v1767, %v1759
    %v2128 = vpack.c.b16 %v1768, %v1760
    %v2129 = vpack.c.b16 %v1769, %v1761
    %v2130 = vpack.c.b16 %v1770, %v1762
    %v2131 = vpack.c.b16 %v1771, %v1763
    %v2132 = vpack.c.b16 %v1780, %v1772
    %v2133 = vpack.c.b16 %v1781, %v1773
    %v2134 = vpack.c.b16 %v1782, %v1774
    %v2135 = vpack.c.b16 %v1783, %v1775
    %v2136 = vpack.c.b16 %v1784, %v1776
    %v2137 = vpack.c.b16 %v1785, %v1777
    %v2138 = vpack.c.b16 %v1786, %v1778
    %v2139 = vpack.c.b16 %v1787, %v1779
    %v2140 = vpack.c.b16 %v1796, %v1788
    %v2141 = vpack.c.b16 %v1797, %v1789
    %v2142 = vpack.c.b16 %v1798, %v1790
    %v2143 = vpack.c.b16 %v1799, %v1791
    %v2144 = vpack.c.b16 %v1800, %v1792
    %v2145 = vpack.c.b16 %v1801, %v1793
    %v2146 = vpack.c.b16 %v1802, %v1794
    %v2147 = vpack.c.b16 %v1803, %v1795
    %v2148 = vpack.c.b16 %v1812, %v1804
    %v2149 = vpack.c.b16 %v1813, %v1805
    %v2150 = vpack.c.b16 %v1814, %v1806
    %v2151 = vpack.c.b16 %v1815, %v1807
    %v2152 = vpack.c.b16 %v1816, %v1808
    %v2153 = vpack.c.b16 %v1817, %v1809
    %v2154 = vpack.c.b16 %v1818, %v1810
    %v2155 = vpack.c.b16 %v1819, %v1811
    %v2156 = vpack.c.b16 %v1828, %v1820
    %v2157 = vpack.c.b16 %v1829, %v1821
    %v2158 = vpack.c.b16 %v1830, %v1822
    %v2159 = vpack.c.b16 %v1831, %v1823
    %v2160 = vpack.c.b16 %v1832, %v1824
    %v2161 = vpack.c.b16 %v1833, %v1825
    %v2162 = vpack.c.b16 %v1834, %v1826
    %v2163 = vpack.c.b16 %v1835, %v1827
    %v2164 = vpack.c.b16 %v1844, %v1836
    %v2165 = vpack.c.b16 %v1845, %v1837
    %v2166 = vpack.c.b16 %v1846, %v1838
    %v2167 = vpack.c.b16 %v1847, %v1839
    %v2168 = vpack.c.b16 %v1848, %v1840
    %v2169 = vpack.c.b16 %v1849, %v1841
    %v2170 = vpack.c.b16 %v1850, %v1842
    %v2171 = vpack.c.b16 %v1851, %v1843
    %v2172 = vpack.c.b16 %v1860, %v1852
    %v2173 = vpack.c.b16 %v1861, %v1853
    %v2174 = vpack.c.b16 %v1862, %v1854
    %v2175 = vpack.c.b16 %v1863, %v1855
    %v2176 = vpack.c.b16 %v1864, %v1856
    %v2177 = vpack.c.b16 %v1865, %v1857
    %v2178 = vpack.c.b16 %v1866, %v1858
    %v2179 = vpack.c.b16 %v1867, %v1859
    %v2180 = vpack.c.b16 %v1876, %v1868
    %v2181 = vpack.c.b16 %v1877, %v1869
    %v2182 = vpack.c.b16 %v1878, %v1870
    %v2183 = vpack.c.b16 %v1879, %v1871
    %v2184 = vpack.c.b16 %v1880, %v1872
    %v2185 = vpack.c.b16 %v1881, %v1873
    %v2186 = vpack.c.b16 %v1882, %v1874
    %v2187 = vpack.c.b16 %v1883, %v1875
    %v2188 = vpack.c.b16 %v1892, %v1884
    %v2189 = vpack.c.b16 %v1893, %v1885
    %v2190 = vpack.c.b16 %v1894, %v1886
    %v2191 = vpack.c.b16 %v1895, %v1887
    %v2192 = vpack.c.b16 %v1896, %v1888
    %v2193 = vpack.c.b16 %v1897, %v1889
    %v2194 = vpack.c.b16 %v1898, %v1890
    %v2195 = vpack.c.b16 %v1899, %v1891
    %v2196 = vpack.c.b16 %v1908, %v1900
    %v2197 = vpack.c.b16 %v1909, %v1901
    %v2198 = vpack.c.b16 %v1910, %v1902
    %v2199 = vpack.c.b16 %v1911, %v1903
    %v2200 = vpack.c.b16 %v1912, %v1904
    %v2201 = vpack.c.b16 %v1913, %v1905
    %v2202 = vpack.c.b16 %v1914, %v1906
    %v2203 = vpack.c.b16 %v1915, %v1907
    %v2204 = vpack.c.b16 %v1924, %v1916
    %v2205 = vpack.c.b16 %v1925, %v1917
    %v2206 = vpack.c.b16 %v1926, %v1918
    %v2207 = vpack.c.b16 %v1927, %v1919
    %v2208 = vpack.c.b16 %v1928, %v1920
    %v2209 = vpack.c.b16 %v1929, %v1921
    %v2210 = vpack.c.b16 %v1930, %v1922
    %v2211 = vpack.c.b16 %v1931, %v1923
    %v2212 = vpack.c.b16 %v1940, %v1932
    %v2213 = vpack.c.b16 %v1941, %v1933
    %v2214 = vpack.c.b16 %v1942, %v1934
    %v2215 = vpack.c.b16 %v1943, %v1935
    %v2216 = vpack.c.b16 %v1944, %v1936
    %v2217 = vpack.c.b16 %v1945, %v1937
    %v2218 = vpack.c.b16 %v1946, %v1938
    %v2219 = vpack.c.b16 %v1947, %v1939
    %v2220 = vpack.c.b16 %v1956, %v1948
    %v2221 = vpack.c.b16 %v1957, %v1949
    %v2222 = vpack.c.b16 %v1958, %v1950
    %v2223 = vpack.c.b16 %v1959, %v1951
    %v2224 = vpack.c.b16 %v1960, %v1952
    %v2225 = vpack.c.b16 %v1961, %v1953
    %v2226 = vpack.c.b16 %v1962, %v1954
    %v2227 = vpack.c.b16 %v1963, %v1955
    %v2228 = vpack.c.b16 %v1972, %v1964
    %v2229 = vpack.c.b16 %v1973, %v1965
    %v2230 = vpack.c.b16 %v1974, %v1966
    %v2231 = vpack.c.b16 %v1975, %v1967
    %v2232 = vpack.c.b16 %v1976, %v1968
    %v2233 = vpack.c.b16 %v1977, %v1969
    %v2234 = vpack.c.b16 %v1978, %v1970
    %v2235 = vpack.c.b16 %v1979, %v1971
    %2492 = vmatprep.subr.bf16.mxu0 %v1981
    %2493 = vmatpush1.bf16.msra.mxu0 %v1980
    %2494 = vmatprep.subr.bf16.mxu0 %v1989
    %2495 = vmatpush1.bf16.msra.mxu0 %v1988
    %2496 = vmatprep.subr.bf16.mxu0 %v1997
    %2497 = vmatpush1.bf16.msra.mxu0 %v1996
    %2498 = vmatprep.subr.bf16.mxu0 %v2005
    %2499 = vmatpush1.bf16.msra.mxu0 %v2004
    %2500 = vmatprep.subr.bf16.mxu0 %v2013
    %2501 = vmatpush1.bf16.msra.mxu0 %v2012
    %2502 = vmatprep.subr.bf16.mxu0 %v2021
    %2503 = vmatpush1.bf16.msra.mxu0 %v2020
    %2504 = vmatprep.subr.bf16.mxu0 %v2029
    %2505 = vmatpush1.bf16.msra.mxu0 %v2028
    %2506 = vmatprep.subr.bf16.mxu0 %v2037
    %2507 = vmatpush1.bf16.msra.mxu0 %v2036
    %2508 = vmatprep.subr.bf16.mxu0 %v2045
    %2509 = vmatpush1.bf16.msra.mxu0 %v2044
    %2510 = vmatprep.subr.bf16.mxu0 %v2053
    %2511 = vmatpush1.bf16.msra.mxu0 %v2052
    %2512 = vmatprep.subr.bf16.mxu0 %v2061
    %2513 = vmatpush1.bf16.msra.mxu0 %v2060
    %2514 = vmatprep.subr.bf16.mxu0 %v2069
    %2515 = vmatpush1.bf16.msra.mxu0 %v2068
    %2516 = vmatprep.subr.bf16.mxu0 %v2077
    %2517 = vmatpush1.bf16.msra.mxu0 %v2076
    %2518 = vmatprep.subr.bf16.mxu0 %v2085
    %2519 = vmatpush1.bf16.msra.mxu0 %v2084
    %2520 = vmatprep.subr.bf16.mxu0 %v2093
    %2521 = vmatpush1.bf16.msra.mxu0 %v2092
    %2522 = vmatprep.subr.bf16.mxu0 %v2101
    %2523 = vmatpush1.bf16.msra.mxu0 %v2100
    %2524 = vmatprep.mubr.bf16.mxu0 %v911
    %2525 = vmatmul.mubr.bf16.gmra.mrb[0].mxu0 %v910
    %v2526 = vpop.f32.mrb[0].mxu0
    %v2527 = vadd.f32 %v1175, %v2526
    %v2528 = vpop.f32.mrb[0].mxu0
    %v2529 = vadd.f32 %v1179, %v2528
    %v2530 = vpop.f32.mrb[0].mxu0
    %v2531 = vpop.f32.mrb[0].mxu0
    %2532 = vdwg.mxu0
    %2533 = vmatprep.subr.bf16.mxu0 %v2109
    %2534 = vmatpush1.bf16.msra.mxu0 %v2108
    %2535 = vmatprep.subr.bf16.mxu0 %v2117
    %2536 = vmatpush1.bf16.msra.mxu0 %v2116
    %2537 = vmatprep.subr.bf16.mxu0 %v2125
    %2538 = vmatpush1.bf16.msra.mxu0 %v2124
    %2539 = vmatprep.subr.bf16.mxu0 %v2133
    %2540 = vmatpush1.bf16.msra.mxu0 %v2132
    %2541 = vmatprep.subr.bf16.mxu0 %v2141
    %2542 = vmatpush1.bf16.msra.mxu0 %v2140
    %2543 = vmatprep.subr.bf16.mxu0 %v2149
    %2544 = vmatpush1.bf16.msra.mxu0 %v2148
    %2545 = vmatprep.subr.bf16.mxu0 %v2157
    %2546 = vmatpush1.bf16.msra.mxu0 %v2156
    %2547 = vmatprep.subr.bf16.mxu0 %v2165
    %2548 = vmatpush1.bf16.msra.mxu0 %v2164
    %2549 = vmatprep.subr.bf16.mxu0 %v2173
    %2550 = vmatpush1.bf16.msra.mxu0 %v2172
    %2551 = vmatprep.subr.bf16.mxu0 %v2181
    %2552 = vmatpush1.bf16.msra.mxu0 %v2180
    %2553 = vmatprep.subr.bf16.mxu0 %v2189
    %2554 = vmatpush1.bf16.msra.mxu0 %v2188
    %2555 = vmatprep.subr.bf16.mxu0 %v2197
    %2556 = vmatpush1.bf16.msra.mxu0 %v2196
    %2557 = vmatprep.subr.bf16.mxu0 %v2205
    %2558 = vmatpush1.bf16.msra.mxu0 %v2204
    %2559 = vmatprep.subr.bf16.mxu0 %v2213
    %2560 = vmatpush1.bf16.msra.mxu0 %v2212
    %2561 = vmatprep.subr.bf16.mxu0 %v2221
    %2562 = vmatpush1.bf16.msra.mxu0 %v2220
    %2563 = vmatprep.subr.bf16.mxu0 %v2229
    %2564 = vmatpush1.bf16.msra.mxu0 %v2228
    %2565 = vmatprep.mubr.bf16.mxu0 %v913
    %2566 = vmatmul.mubr.bf16.gmra.mrb[0].mxu0 %v912
    %v2567 = vpop.f32.mrb[0].mxu0
    %v2568 = vadd.f32 %v2527, %v2567
    %v2569 = vpop.f32.mrb[0].mxu0
    %v2570 = vadd.f32 %v2529, %v2569
    %v2571 = vpop.f32.mrb[0].mxu0
    %v2572 = vpop.f32.mrb[0].mxu0
    %2573 = vdwg.mxu0
    %2574 = vmatprep.subr.bf16.mxu0 %v1983
    %2575 = vmatpush1.bf16.msra.mxu0 %v1982
    %2576 = vmatprep.subr.bf16.mxu0 %v1991
    %2577 = vmatpush1.bf16.msra.mxu0 %v1990
    %2578 = vmatprep.subr.bf16.mxu0 %v1999
    %2579 = vmatpush1.bf16.msra.mxu0 %v1998
    %2580 = vmatprep.subr.bf16.mxu0 %v2007
    %2581 = vmatpush1.bf16.msra.mxu0 %v2006
    %2582 = vmatprep.subr.bf16.mxu0 %v2015
    %2583 = vmatpush1.bf16.msra.mxu0 %v2014
    %2584 = vmatprep.subr.bf16.mxu0 %v2023
    %2585 = vmatpush1.bf16.msra.mxu0 %v2022
    %2586 = vmatprep.subr.bf16.mxu0 %v2031
    %2587 = vmatpush1.bf16.msra.mxu0 %v2030
    %2588 = vmatprep.subr.bf16.mxu0 %v2039
    %2589 = vmatpush1.bf16.msra.mxu0 %v2038
    %2590 = vmatprep.subr.bf16.mxu0 %v2047
    %2591 = vmatpush1.bf16.msra.mxu0 %v2046
    %2592 = vmatprep.subr.bf16.mxu0 %v2055
    %2593 = vmatpush1.bf16.msra.mxu0 %v2054
    %2594 = vmatprep.subr.bf16.mxu0 %v2063
    %2595 = vmatpush1.bf16.msra.mxu0 %v2062
    %2596 = vmatprep.subr.bf16.mxu0 %v2071
    %2597 = vmatpush1.bf16.msra.mxu0 %v2070
    %2598 = vmatprep.subr.bf16.mxu0 %v2079
    %2599 = vmatpush1.bf16.msra.mxu0 %v2078
    %2600 = vmatprep.subr.bf16.mxu0 %v2087
    %2601 = vmatpush1.bf16.msra.mxu0 %v2086
    %2602 = vmatprep.subr.bf16.mxu0 %v2095
    %2603 = vmatpush1.bf16.msra.mxu0 %v2094
    %2604 = vmatprep.subr.bf16.mxu0 %v2103
    %2605 = vmatpush1.bf16.msra.mxu0 %v2102
    %2606 = vmatprep.mubr.bf16.mxu0 %v911
    %2607 = vmatmul.mubr.bf16.gmra.mrb[0].mxu0 %v910
    %v2608 = vpop.f32.mrb[0].mxu0
    %v2609 = vadd.f32 %v1183, %v2608
    %v2610 = vpop.f32.mrb[0].mxu0
    %v2611 = vadd.f32 %v1187, %v2610
    %v2612 = vpop.f32.mrb[0].mxu0
    %v2613 = vpop.f32.mrb[0].mxu0
    %2614 = vdwg.mxu0
    %2615 = vmatprep.subr.bf16.mxu0 %v2111
    %2616 = vmatpush1.bf16.msra.mxu0 %v2110
    %2617 = vmatprep.subr.bf16.mxu0 %v2119
    %2618 = vmatpush1.bf16.msra.mxu0 %v2118
    %2619 = vmatprep.subr.bf16.mxu0 %v2127
    %2620 = vmatpush1.bf16.msra.mxu0 %v2126
    %2621 = vmatprep.subr.bf16.mxu0 %v2135
    %2622 = vmatpush1.bf16.msra.mxu0 %v2134
    %2623 = vmatprep.subr.bf16.mxu0 %v2143
    %2624 = vmatpush1.bf16.msra.mxu0 %v2142
    %2625 = vmatprep.subr.bf16.mxu0 %v2151
    %2626 = vmatpush1.bf16.msra.mxu0 %v2150
    %2627 = vmatprep.subr.bf16.mxu0 %v2159
    %2628 = vmatpush1.bf16.msra.mxu0 %v2158
    %2629 = vmatprep.subr.bf16.mxu0 %v2167
    %2630 = vmatpush1.bf16.msra.mxu0 %v2166
    %2631 = vmatprep.subr.bf16.mxu0 %v2175
    %2632 = vmatpush1.bf16.msra.mxu0 %v2174
    %2633 = vmatprep.subr.bf16.mxu0 %v2183
    %2634 = vmatpush1.bf16.msra.mxu0 %v2182
    %2635 = vmatprep.subr.bf16.mxu0 %v2191
    %2636 = vmatpush1.bf16.msra.mxu0 %v2190
    %2637 = vmatprep.subr.bf16.mxu0 %v2199
    %2638 = vmatpush1.bf16.msra.mxu0 %v2198
    %2639 = vmatprep.subr.bf16.mxu0 %v2207
    %2640 = vmatpush1.bf16.msra.mxu0 %v2206
    %2641 = vmatprep.subr.bf16.mxu0 %v2215
    %2642 = vmatpush1.bf16.msra.mxu0 %v2214
    %2643 = vmatprep.subr.bf16.mxu0 %v2223
    %2644 = vmatpush1.bf16.msra.mxu0 %v2222
    %2645 = vmatprep.subr.bf16.mxu0 %v2231
    %2646 = vmatpush1.bf16.msra.mxu0 %v2230
    %2647 = vmatprep.mubr.bf16.mxu0 %v913
    %2648 = vmatmul.mubr.bf16.gmra.mrb[0].mxu0 %v912
    %v2649 = vpop.f32.mrb[0].mxu0
    %v2650 = vadd.f32 %v2609, %v2649
    %v2651 = vpop.f32.mrb[0].mxu0
    %v2652 = vadd.f32 %v2611, %v2651
    %v2653 = vpop.f32.mrb[0].mxu0
    %v2654 = vpop.f32.mrb[0].mxu0
    %2655 = vdwg.mxu0
    %2656 = vmatprep.subr.bf16.mxu0 %v1985
    %2657 = vmatpush1.bf16.msra.mxu0 %v1984
    %2658 = vmatprep.subr.bf16.mxu0 %v1993
    %2659 = vmatpush1.bf16.msra.mxu0 %v1992
    %2660 = vmatprep.subr.bf16.mxu0 %v2001
    %2661 = vmatpush1.bf16.msra.mxu0 %v2000
    %2662 = vmatprep.subr.bf16.mxu0 %v2009
    %2663 = vmatpush1.bf16.msra.mxu0 %v2008
    %2664 = vmatprep.subr.bf16.mxu0 %v2017
    %2665 = vmatpush1.bf16.msra.mxu0 %v2016
    %2666 = vmatprep.subr.bf16.mxu0 %v2025
    %2667 = vmatpush1.bf16.msra.mxu0 %v2024
    %2668 = vmatprep.subr.bf16.mxu0 %v2033
    %2669 = vmatpush1.bf16.msra.mxu0 %v2032
    %2670 = vmatprep.subr.bf16.mxu0 %v2041
    %2671 = vmatpush1.bf16.msra.mxu0 %v2040
    %2672 = vmatprep.subr.bf16.mxu0 %v2049
    %2673 = vmatpush1.bf16.msra.mxu0 %v2048
    %2674 = vmatprep.subr.bf16.mxu0 %v2057
    %2675 = vmatpush1.bf16.msra.mxu0 %v2056
    %2676 = vmatprep.subr.bf16.mxu0 %v2065
    %2677 = vmatpush1.bf16.msra.mxu0 %v2064
    %2678 = vmatprep.subr.bf16.mxu0 %v2073
    %2679 = vmatpush1.bf16.msra.mxu0 %v2072
    %2680 = vmatprep.subr.bf16.mxu0 %v2081
    %2681 = vmatpush1.bf16.msra.mxu0 %v2080
    %2682 = vmatprep.subr.bf16.mxu0 %v2089
    %2683 = vmatpush1.bf16.msra.mxu0 %v2088
    %2684 = vmatprep.subr.bf16.mxu0 %v2097
    %2685 = vmatpush1.bf16.msra.mxu0 %v2096
    %2686 = vmatprep.subr.bf16.mxu0 %v2105
    %2687 = vmatpush1.bf16.msra.mxu0 %v2104
    %2688 = vmatprep.mubr.bf16.mxu0 %v911
    %2689 = vmatmul.mubr.bf16.gmra.mrb[0].mxu0 %v910
    %v2690 = vpop.f32.mrb[0].mxu0
    %v2691 = vadd.f32 %v1191, %v2690
    %v2692 = vpop.f32.mrb[0].mxu0
    %v2693 = vadd.f32 %v1195, %v2692
    %v2694 = vpop.f32.mrb[0].mxu0
    %v2695 = vpop.f32.mrb[0].mxu0
    %2696 = vdwg.mxu0
    %2697 = vmatprep.subr.bf16.mxu0 %v2113
    %2698 = vmatpush1.bf16.msra.mxu0 %v2112
    %2699 = vmatprep.subr.bf16.mxu0 %v2121
    %2700 = vmatpush1.bf16.msra.mxu0 %v2120
    %2701 = vmatprep.subr.bf16.mxu0 %v2129
    %2702 = vmatpush1.bf16.msra.mxu0 %v2128
    %2703 = vmatprep.subr.bf16.mxu0 %v2137
    %2704 = vmatpush1.bf16.msra.mxu0 %v2136
    %2705 = vmatprep.subr.bf16.mxu0 %v2145
    %2706 = vmatpush1.bf16.msra.mxu0 %v2144
    %2707 = vmatprep.subr.bf16.mxu0 %v2153
    %2708 = vmatpush1.bf16.msra.mxu0 %v2152
    %2709 = vmatprep.subr.bf16.mxu0 %v2161
    %2710 = vmatpush1.bf16.msra.mxu0 %v2160
    %2711 = vmatprep.subr.bf16.mxu0 %v2169
    %2712 = vmatpush1.bf16.msra.mxu0 %v2168
    %2713 = vmatprep.subr.bf16.mxu0 %v2177
    %2714 = vmatpush1.bf16.msra.mxu0 %v2176
    %2715 = vmatprep.subr.bf16.mxu0 %v2185
    %2716 = vmatpush1.bf16.msra.mxu0 %v2184
    %2717 = vmatprep.subr.bf16.mxu0 %v2193
    %2718 = vmatpush1.bf16.msra.mxu0 %v2192
    %2719 = vmatprep.subr.bf16.mxu0 %v2201
    %2720 = vmatpush1.bf16.msra.mxu0 %v2200
    %2721 = vmatprep.subr.bf16.mxu0 %v2209
    %2722 = vmatpush1.bf16.msra.mxu0 %v2208
    %2723 = vmatprep.subr.bf16.mxu0 %v2217
    %2724 = vmatpush1.bf16.msra.mxu0 %v2216
    %2725 = vmatprep.subr.bf16.mxu0 %v2225
    %2726 = vmatpush1.bf16.msra.mxu0 %v2224
    %2727 = vmatprep.subr.bf16.mxu0 %v2233
    %2728 = vmatpush1.bf16.msra.mxu0 %v2232
    %2729 = vmatprep.mubr.bf16.mxu0 %v913
    %2730 = vmatmul.mubr.bf16.gmra.mrb[0].mxu0 %v912
    %v2731 = vpop.f32.mrb[0].mxu0
    %v2732 = vadd.f32 %v2691, %v2731
    %v2733 = vpop.f32.mrb[0].mxu0
    %v2734 = vadd.f32 %v2693, %v2733
    %v2735 = vpop.f32.mrb[0].mxu0
    %v2736 = vpop.f32.mrb[0].mxu0
    %2737 = vdwg.mxu0
    %2738 = vmatprep.subr.bf16.mxu0 %v1987
    %2739 = vmatpush1.bf16.msra.mxu0 %v1986
    %2740 = vmatprep.subr.bf16.mxu0 %v1995
    %2741 = vmatpush1.bf16.msra.mxu0 %v1994
    %2742 = vmatprep.subr.bf16.mxu0 %v2003
    %2743 = vmatpush1.bf16.msra.mxu0 %v2002
    %2744 = vmatprep.subr.bf16.mxu0 %v2011
    %2745 = vmatpush1.bf16.msra.mxu0 %v2010
    %2746 = vmatprep.subr.bf16.mxu0 %v2019
    %2747 = vmatpush1.bf16.msra.mxu0 %v2018
    %2748 = vmatprep.subr.bf16.mxu0 %v2027
    %2749 = vmatpush1.bf16.msra.mxu0 %v2026
    %2750 = vmatprep.subr.bf16.mxu0 %v2035
    %2751 = vmatpush1.bf16.msra.mxu0 %v2034
    %2752 = vmatprep.subr.bf16.mxu0 %v2043
    %2753 = vmatpush1.bf16.msra.mxu0 %v2042
    %2754 = vmatprep.subr.bf16.mxu0 %v2051
    %2755 = vmatpush1.bf16.msra.mxu0 %v2050
    %2756 = vmatprep.subr.bf16.mxu0 %v2059
    %2757 = vmatpush1.bf16.msra.mxu0 %v2058
    %2758 = vmatprep.subr.bf16.mxu0 %v2067
    %2759 = vmatpush1.bf16.msra.mxu0 %v2066
    %2760 = vmatprep.subr.bf16.mxu0 %v2075
    %2761 = vmatpush1.bf16.msra.mxu0 %v2074
    %2762 = vmatprep.subr.bf16.mxu0 %v2083
    %2763 = vmatpush1.bf16.msra.mxu0 %v2082
    %2764 = vmatprep.subr.bf16.mxu0 %v2091
    %2765 = vmatpush1.bf16.msra.mxu0 %v2090
    %2766 = vmatprep.subr.bf16.mxu0 %v2099
    %2767 = vmatpush1.bf16.msra.mxu0 %v2098
    %2768 = vmatprep.subr.bf16.mxu0 %v2107
    %2769 = vmatpush1.bf16.msra.mxu0 %v2106
    %2770 = vmatprep.mubr.bf16.mxu0 %v911
    %2771 = vmatmul.mubr.bf16.gmra.mrb[0].mxu0 %v910
    %v2772 = vpop.f32.mrb[0].mxu0
    %v2773 = vadd.f32 %v1199, %v2772
    %v2774 = vpop.f32.mrb[0].mxu0
    %v2775 = vadd.f32 %v1203, %v2774
    %v2776 = vpop.f32.mrb[0].mxu0
    %v2777 = vpop.f32.mrb[0].mxu0
    %2778 = vdwg.mxu0
    %2779 = vmatprep.subr.bf16.mxu0 %v2115
    %2780 = vmatpush1.bf16.msra.mxu0 %v2114
    %2781 = vmatprep.subr.bf16.mxu0 %v2123
    %2782 = vmatpush1.bf16.msra.mxu0 %v2122
    %2783 = vmatprep.subr.bf16.mxu0 %v2131
    %2784 = vmatpush1.bf16.msra.mxu0 %v2130
    %2785 = vmatprep.subr.bf16.mxu0 %v2139
    %2786 = vmatpush1.bf16.msra.mxu0 %v2138
    %2787 = vmatprep.subr.bf16.mxu0 %v2147
    %2788 = vmatpush1.bf16.msra.mxu0 %v2146
    %2789 = vmatprep.subr.bf16.mxu0 %v2155
    %2790 = vmatpush1.bf16.msra.mxu0 %v2154
    %2791 = vmatprep.subr.bf16.mxu0 %v2163
    %2792 = vmatpush1.bf16.msra.mxu0 %v2162
    %2793 = vmatprep.subr.bf16.mxu0 %v2171
    %2794 = vmatpush1.bf16.msra.mxu0 %v2170
    %2795 = vmatprep.subr.bf16.mxu0 %v2179
    %2796 = vmatpush1.bf16.msra.mxu0 %v2178
    %2797 = vmatprep.subr.bf16.mxu0 %v2187
    %2798 = vmatpush1.bf16.msra.mxu0 %v2186
    %2799 = vmatprep.subr.bf16.mxu0 %v2195
    %2800 = vmatpush1.bf16.msra.mxu0 %v2194
    %2801 = vmatprep.subr.bf16.mxu0 %v2203
    %2802 = vmatpush1.bf16.msra.mxu0 %v2202
    %2803 = vmatprep.subr.bf16.mxu0 %v2211
    %2804 = vmatpush1.bf16.msra.mxu0 %v2210
    %2805 = vmatprep.subr.bf16.mxu0 %v2219
    %2806 = vmatpush1.bf16.msra.mxu0 %v2218
    %2807 = vmatprep.subr.bf16.mxu0 %v2227
    %2808 = vmatpush1.bf16.msra.mxu0 %v2226
    %2809 = vmatprep.subr.bf16.mxu0 %v2235
    %2810 = vmatpush1.bf16.msra.mxu0 %v2234
    %2811 = vmatprep.mubr.bf16.mxu0 %v913
    %2812 = vmatmul.mubr.bf16.gmra.mrb[0].mxu0 %v912
    %v2813 = vpop.f32.mrb[0].mxu0
    %v2814 = vadd.f32 %v2773, %v2813
    %v2815 = vpop.f32.mrb[0].mxu0
    %v2816 = vadd.f32 %v2775, %v2815
    %v2817 = vpop.f32.mrb[0].mxu0
    %v2818 = vpop.f32.mrb[0].mxu0
    %2819 = vdwg.mxu0
    %v2820 = vmax.f32 %v2568, 0.0
    %v2821 = vmax.f32 %v2570, 0.0
    %v2822 = vmax.f32 %v2650, 0.0
    %v2823 = vmax.f32 %v2652, 0.0
    %v2824 = vmax.f32 %v2732, 0.0
    %v2825 = vmax.f32 %v2734, 0.0
    %v2826 = vmax.f32 %v2814, 0.0
    %v2827 = vmax.f32 %v2816, 0.0
    %v2828 = vpack.c.bf16 %v2820, %v2820
    %v2829 = vpack.c.bf16 %v2821, %v2821
    %v2830 = vpack.c.bf16 %v2822, %v2822
    %v2831 = vpack.c.bf16 %v2823, %v2823
    %v2832 = vpack.c.bf16 %v2824, %v2824
    %v2833 = vpack.c.bf16 %v2825, %v2825
    %v2834 = vpack.c.bf16 %v2826, %v2826
    %v2835 = vpack.c.bf16 %v2827, %v2827
    %v2836 = vld [vmem:[#allocation13] sm:$0xff]
    %v2837 = vld [vmem:[#allocation13 + $0x8] sm:$0xff]
    %v2838 = vld [vmem:[#allocation13 + $0x10] sm:$0xff]
    %v2839 = vld [vmem:[#allocation13 + $0x18] sm:$0xff]
    %v2840 = vld [vmem:[#allocation13 + $0x20] sm:$0xff]
    %v2841 = vld [vmem:[#allocation13 + $0x28] sm:$0xff]
    %v2842 = vld [vmem:[#allocation13 + $0x30] sm:$0xff]
    %v2843 = vld [vmem:[#allocation13 + $0x38] sm:$0xff]
    %v2844 = vld [vmem:[#allocation13 + $0x40] sm:$0xff]
    %v2845 = vld [vmem:[#allocation13 + $0x48] sm:$0xff]
    %v2846 = vld [vmem:[#allocation13 + $0x50] sm:$0xff]
    %v2847 = vld [vmem:[#allocation13 + $0x58] sm:$0xff]
    %v2848 = vld [vmem:[#allocation13 + $0x60] sm:$0xff]
    %v2849 = vld [vmem:[#allocation13 + $0x68] sm:$0xff]
    %v2850 = vld [vmem:[#allocation13 + $0x70] sm:$0xff]
    %v2851 = vld [vmem:[#allocation13 + $0x78] sm:$0xff]
    %v2852 = vld [vmem:[#allocation13 + $0x80] sm:$0xff]
    %v2853 = vld [vmem:[#allocation13 + $0x88] sm:$0xff]
    %v2854 = vld [vmem:[#allocation13 + $0x90] sm:$0xff]
    %v2855 = vld [vmem:[#allocation13 + $0x98] sm:$0xff]
    %v2856 = vld [vmem:[#allocation13 + $0xa0] sm:$0xff]
    %v2857 = vld [vmem:[#allocation13 + $0xa8] sm:$0xff]
    %v2858 = vld [vmem:[#allocation13 + $0xb0] sm:$0xff]
    %v2859 = vld [vmem:[#allocation13 + $0xb8] sm:$0xff]
    %v2860 = vld [vmem:[#allocation13 + $0xc0] sm:$0xff]
    %v2861 = vld [vmem:[#allocation13 + $0xc8] sm:$0xff]
    %v2862 = vld [vmem:[#allocation13 + $0xd0] sm:$0xff]
    %v2863 = vld [vmem:[#allocation13 + $0xd8] sm:$0xff]
    %v2864 = vld [vmem:[#allocation13 + $0xe0] sm:$0xff]
    %v2865 = vld [vmem:[#allocation13 + $0xe8] sm:$0xff]
    %v2866 = vld [vmem:[#allocation13 + $0xf0] sm:$0xff]
    %v2867 = vld [vmem:[#allocation13 + $0xf8] sm:$0xff]
    %v2868 = vld [vmem:[#allocation13 + $0x100] sm:$0xff]
    %v2869 = vld [vmem:[#allocation13 + $0x108] sm:$0xff]
    %v2870 = vld [vmem:[#allocation13 + $0x110] sm:$0xff]
    %v2871 = vld [vmem:[#allocation13 + $0x118] sm:$0xff]
    %v2872 = vld [vmem:[#allocation13 + $0x120] sm:$0xff]
    %v2873 = vld [vmem:[#allocation13 + $0x128] sm:$0xff]
    %v2874 = vld [vmem:[#allocation13 + $0x130] sm:$0xff]
    %v2875 = vld [vmem:[#allocation13 + $0x138] sm:$0xff]
    %v2876 = vld [vmem:[#allocation13 + $0x140] sm:$0xff]
    %v2877 = vld [vmem:[#allocation13 + $0x148] sm:$0xff]
    %v2878 = vld [vmem:[#allocation13 + $0x150] sm:$0xff]
    %v2879 = vld [vmem:[#allocation13 + $0x158] sm:$0xff]
    %v2880 = vld [vmem:[#allocation13 + $0x160] sm:$0xff]
    %v2881 = vld [vmem:[#allocation13 + $0x168] sm:$0xff]
    %v2882 = vld [vmem:[#allocation13 + $0x170] sm:$0xff]
    %v2883 = vld [vmem:[#allocation13 + $0x178] sm:$0xff]
    %v2884 = vld [vmem:[#allocation13 + $0x180] sm:$0xff]
    %v2885 = vld [vmem:[#allocation13 + $0x188] sm:$0xff]
    %v2886 = vld [vmem:[#allocation13 + $0x190] sm:$0xff]
    %v2887 = vld [vmem:[#allocation13 + $0x198] sm:$0xff]
    %v2888 = vld [vmem:[#allocation13 + $0x1a0] sm:$0xff]
    %v2889 = vld [vmem:[#allocation13 + $0x1a8] sm:$0xff]
    %v2890 = vld [vmem:[#allocation13 + $0x1b0] sm:$0xff]
    %v2891 = vld [vmem:[#allocation13 + $0x1b8] sm:$0xff]
    %v2892 = vld [vmem:[#allocation13 + $0x1c0] sm:$0xff]
    %v2893 = vld [vmem:[#allocation13 + $0x1c8] sm:$0xff]
    %v2894 = vld [vmem:[#allocation13 + $0x1d0] sm:$0xff]
    %v2895 = vld [vmem:[#allocation13 + $0x1d8] sm:$0xff]
    %v2896 = vld [vmem:[#allocation13 + $0x1e0] sm:$0xff]
    %v2897 = vld [vmem:[#allocation13 + $0x1e8] sm:$0xff]
    %v2898 = vld [vmem:[#allocation13 + $0x1f0] sm:$0xff]
    %v2899 = vld [vmem:[#allocation13 + $0x1f8] sm:$0xff]
    %v2900 = vld [vmem:[#allocation13 + $0x200] sm:$0xff]
    %v2901 = vld [vmem:[#allocation13 + $0x208] sm:$0xff]
    %v2902 = vld [vmem:[#allocation13 + $0x210] sm:$0xff]
    %v2903 = vld [vmem:[#allocation13 + $0x218] sm:$0xff]
    %v2904 = vld [vmem:[#allocation13 + $0x220] sm:$0xff]
    %v2905 = vld [vmem:[#allocation13 + $0x228] sm:$0xff]
    %v2906 = vld [vmem:[#allocation13 + $0x230] sm:$0xff]
    %v2907 = vld [vmem:[#allocation13 + $0x238] sm:$0xff]
    %v2908 = vld [vmem:[#allocation13 + $0x240] sm:$0xff]
    %v2909 = vld [vmem:[#allocation13 + $0x248] sm:$0xff]
    %v2910 = vld [vmem:[#allocation13 + $0x250] sm:$0xff]
    %v2911 = vld [vmem:[#allocation13 + $0x258] sm:$0xff]
    %v2912 = vld [vmem:[#allocation13 + $0x260] sm:$0xff]
    %v2913 = vld [vmem:[#allocation13 + $0x268] sm:$0xff]
    %v2914 = vld [vmem:[#allocation13 + $0x270] sm:$0xff]
    %v2915 = vld [vmem:[#allocation13 + $0x278] sm:$0xff]
    %v2916 = vld [vmem:[#allocation13 + $0x280] sm:$0xff]
    %v2917 = vld [vmem:[#allocation13 + $0x288] sm:$0xff]
    %v2918 = vld [vmem:[#allocation13 + $0x290] sm:$0xff]
    %v2919 = vld [vmem:[#allocation13 + $0x298] sm:$0xff]
    %v2920 = vld [vmem:[#allocation13 + $0x2a0] sm:$0xff]
    %v2921 = vld [vmem:[#allocation13 + $0x2a8] sm:$0xff]
    %v2922 = vld [vmem:[#allocation13 + $0x2b0] sm:$0xff]
    %v2923 = vld [vmem:[#allocation13 + $0x2b8] sm:$0xff]
    %v2924 = vld [vmem:[#allocation13 + $0x2c0] sm:$0xff]
    %v2925 = vld [vmem:[#allocation13 + $0x2c8] sm:$0xff]
    %v2926 = vld [vmem:[#allocation13 + $0x2d0] sm:$0xff]
    %v2927 = vld [vmem:[#allocation13 + $0x2d8] sm:$0xff]
    %v2928 = vld [vmem:[#allocation13 + $0x2e0] sm:$0xff]
    %v2929 = vld [vmem:[#allocation13 + $0x2e8] sm:$0xff]
    %v2930 = vld [vmem:[#allocation13 + $0x2f0] sm:$0xff]
    %v2931 = vld [vmem:[#allocation13 + $0x2f8] sm:$0xff]
    %v2932 = vld [vmem:[#allocation13 + $0x300] sm:$0xff]
    %v2933 = vld [vmem:[#allocation13 + $0x308] sm:$0xff]
    %v2934 = vld [vmem:[#allocation13 + $0x310] sm:$0xff]
    %v2935 = vld [vmem:[#allocation13 + $0x318] sm:$0xff]
    %v2936 = vld [vmem:[#allocation13 + $0x320] sm:$0xff]
    %v2937 = vld [vmem:[#allocation13 + $0x328] sm:$0xff]
    %v2938 = vld [vmem:[#allocation13 + $0x330] sm:$0xff]
    %v2939 = vld [vmem:[#allocation13 + $0x338] sm:$0xff]
    %v2940 = vld [vmem:[#allocation13 + $0x340] sm:$0xff]
    %v2941 = vld [vmem:[#allocation13 + $0x348] sm:$0xff]
    %v2942 = vld [vmem:[#allocation13 + $0x350] sm:$0xff]
    %v2943 = vld [vmem:[#allocation13 + $0x358] sm:$0xff]
    %v2944 = vld [vmem:[#allocation13 + $0x360] sm:$0xff]
    %v2945 = vld [vmem:[#allocation13 + $0x368] sm:$0xff]
    %v2946 = vld [vmem:[#allocation13 + $0x370] sm:$0xff]
    %v2947 = vld [vmem:[#allocation13 + $0x378] sm:$0xff]
    %v2948 = vld [vmem:[#allocation13 + $0x380] sm:$0xff]
    %v2949 = vld [vmem:[#allocation13 + $0x388] sm:$0xff]
    %v2950 = vld [vmem:[#allocation13 + $0x390] sm:$0xff]
    %v2951 = vld [vmem:[#allocation13 + $0x398] sm:$0xff]
    %v2952 = vld [vmem:[#allocation13 + $0x3a0] sm:$0xff]
    %v2953 = vld [vmem:[#allocation13 + $0x3a8] sm:$0xff]
    %v2954 = vld [vmem:[#allocation13 + $0x3b0] sm:$0xff]
    %v2955 = vld [vmem:[#allocation13 + $0x3b8] sm:$0xff]
    %v2956 = vld [vmem:[#allocation13 + $0x3c0] sm:$0xff]
    %v2957 = vld [vmem:[#allocation13 + $0x3c8] sm:$0xff]
    %v2958 = vld [vmem:[#allocation13 + $0x3d0] sm:$0xff]
    %v2959 = vld [vmem:[#allocation13 + $0x3d8] sm:$0xff]
    %v2960 = vld [vmem:[#allocation13 + $0x3e0] sm:$0xff]
    %v2961 = vld [vmem:[#allocation13 + $0x3e8] sm:$0xff]
    %v2962 = vld [vmem:[#allocation13 + $0x3f0] sm:$0xff]
    %v2963 = vld [vmem:[#allocation13 + $0x3f8] sm:$0xff]
    %v2964 = vld [vmem:[#allocation13 + $0x400] sm:$0xff]
    %v2965 = vld [vmem:[#allocation13 + $0x408] sm:$0xff]
    %v2966 = vld [vmem:[#allocation13 + $0x410] sm:$0xff]
    %v2967 = vld [vmem:[#allocation13 + $0x418] sm:$0xff]
    %v2968 = vld [vmem:[#allocation13 + $0x420] sm:$0xff]
    %v2969 = vld [vmem:[#allocation13 + $0x428] sm:$0xff]
    %v2970 = vld [vmem:[#allocation13 + $0x430] sm:$0xff]
    %v2971 = vld [vmem:[#allocation13 + $0x438] sm:$0xff]
    %v2972 = vld [vmem:[#allocation13 + $0x440] sm:$0xff]
    %v2973 = vld [vmem:[#allocation13 + $0x448] sm:$0xff]
    %v2974 = vld [vmem:[#allocation13 + $0x450] sm:$0xff]
    %v2975 = vld [vmem:[#allocation13 + $0x458] sm:$0xff]
    %v2976 = vld [vmem:[#allocation13 + $0x460] sm:$0xff]
    %v2977 = vld [vmem:[#allocation13 + $0x468] sm:$0xff]
    %v2978 = vld [vmem:[#allocation13 + $0x470] sm:$0xff]
    %v2979 = vld [vmem:[#allocation13 + $0x478] sm:$0xff]
    %v2980 = vld [vmem:[#allocation13 + $0x480] sm:$0xff]
    %v2981 = vld [vmem:[#allocation13 + $0x488] sm:$0xff]
    %v2982 = vld [vmem:[#allocation13 + $0x490] sm:$0xff]
    %v2983 = vld [vmem:[#allocation13 + $0x498] sm:$0xff]
    %v2984 = vld [vmem:[#allocation13 + $0x4a0] sm:$0xff]
    %v2985 = vld [vmem:[#allocation13 + $0x4a8] sm:$0xff]
    %v2986 = vld [vmem:[#allocation13 + $0x4b0] sm:$0xff]
    %v2987 = vld [vmem:[#allocation13 + $0x4b8] sm:$0xff]
    %v2988 = vld [vmem:[#allocation13 + $0x4c0] sm:$0xff]
    %v2989 = vld [vmem:[#allocation13 + $0x4c8] sm:$0xff]
    %v2990 = vld [vmem:[#allocation13 + $0x4d0] sm:$0xff]
    %v2991 = vld [vmem:[#allocation13 + $0x4d8] sm:$0xff]
    %v2992 = vld [vmem:[#allocation13 + $0x4e0] sm:$0xff]
    %v2993 = vld [vmem:[#allocation13 + $0x4e8] sm:$0xff]
    %v2994 = vld [vmem:[#allocation13 + $0x4f0] sm:$0xff]
    %v2995 = vld [vmem:[#allocation13 + $0x4f8] sm:$0xff]
    %v2996 = vld [vmem:[#allocation13 + $0x500] sm:$0xff]
    %v2997 = vld [vmem:[#allocation13 + $0x508] sm:$0xff]
    %v2998 = vld [vmem:[#allocation13 + $0x510] sm:$0xff]
    %v2999 = vld [vmem:[#allocation13 + $0x518] sm:$0xff]
    %v3000 = vld [vmem:[#allocation13 + $0x520] sm:$0xff]
    %v3001 = vld [vmem:[#allocation13 + $0x528] sm:$0xff]
    %v3002 = vld [vmem:[#allocation13 + $0x530] sm:$0xff]
    %v3003 = vld [vmem:[#allocation13 + $0x538] sm:$0xff]
    %v3004 = vld [vmem:[#allocation13 + $0x540] sm:$0xff]
    %v3005 = vld [vmem:[#allocation13 + $0x548] sm:$0xff]
    %v3006 = vld [vmem:[#allocation13 + $0x550] sm:$0xff]
    %v3007 = vld [vmem:[#allocation13 + $0x558] sm:$0xff]
    %v3008 = vld [vmem:[#allocation13 + $0x560] sm:$0xff]
    %v3009 = vld [vmem:[#allocation13 + $0x568] sm:$0xff]
    %v3010 = vld [vmem:[#allocation13 + $0x570] sm:$0xff]
    %v3011 = vld [vmem:[#allocation13 + $0x578] sm:$0xff]
    %v3012 = vld [vmem:[#allocation13 + $0x580] sm:$0xff]
    %v3013 = vld [vmem:[#allocation13 + $0x588] sm:$0xff]
    %v3014 = vld [vmem:[#allocation13 + $0x590] sm:$0xff]
    %v3015 = vld [vmem:[#allocation13 + $0x598] sm:$0xff]
    %v3016 = vld [vmem:[#allocation13 + $0x5a0] sm:$0xff]
    %v3017 = vld [vmem:[#allocation13 + $0x5a8] sm:$0xff]
    %v3018 = vld [vmem:[#allocation13 + $0x5b0] sm:$0xff]
    %v3019 = vld [vmem:[#allocation13 + $0x5b8] sm:$0xff]
    %v3020 = vld [vmem:[#allocation13 + $0x5c0] sm:$0xff]
    %v3021 = vld [vmem:[#allocation13 + $0x5c8] sm:$0xff]
    %v3022 = vld [vmem:[#allocation13 + $0x5d0] sm:$0xff]
    %v3023 = vld [vmem:[#allocation13 + $0x5d8] sm:$0xff]
    %v3024 = vld [vmem:[#allocation13 + $0x5e0] sm:$0xff]
    %v3025 = vld [vmem:[#allocation13 + $0x5e8] sm:$0xff]
    %v3026 = vld [vmem:[#allocation13 + $0x5f0] sm:$0xff]
    %v3027 = vld [vmem:[#allocation13 + $0x5f8] sm:$0xff]
    %v3028 = vld [vmem:[#allocation13 + $0x600] sm:$0xff]
    %v3029 = vld [vmem:[#allocation13 + $0x608] sm:$0xff]
    %v3030 = vld [vmem:[#allocation13 + $0x610] sm:$0xff]
    %v3031 = vld [vmem:[#allocation13 + $0x618] sm:$0xff]
    %v3032 = vld [vmem:[#allocation13 + $0x620] sm:$0xff]
    %v3033 = vld [vmem:[#allocation13 + $0x628] sm:$0xff]
    %v3034 = vld [vmem:[#allocation13 + $0x630] sm:$0xff]
    %v3035 = vld [vmem:[#allocation13 + $0x638] sm:$0xff]
    %v3036 = vld [vmem:[#allocation13 + $0x640] sm:$0xff]
    %v3037 = vld [vmem:[#allocation13 + $0x648] sm:$0xff]
    %v3038 = vld [vmem:[#allocation13 + $0x650] sm:$0xff]
    %v3039 = vld [vmem:[#allocation13 + $0x658] sm:$0xff]
    %v3040 = vld [vmem:[#allocation13 + $0x660] sm:$0xff]
    %v3041 = vld [vmem:[#allocation13 + $0x668] sm:$0xff]
    %v3042 = vld [vmem:[#allocation13 + $0x670] sm:$0xff]
    %v3043 = vld [vmem:[#allocation13 + $0x678] sm:$0xff]
    %v3044 = vld [vmem:[#allocation13 + $0x680] sm:$0xff]
    %v3045 = vld [vmem:[#allocation13 + $0x688] sm:$0xff]
    %v3046 = vld [vmem:[#allocation13 + $0x690] sm:$0xff]
    %v3047 = vld [vmem:[#allocation13 + $0x698] sm:$0xff]
    %v3048 = vld [vmem:[#allocation13 + $0x6a0] sm:$0xff]
    %v3049 = vld [vmem:[#allocation13 + $0x6a8] sm:$0xff]
    %v3050 = vld [vmem:[#allocation13 + $0x6b0] sm:$0xff]
    %v3051 = vld [vmem:[#allocation13 + $0x6b8] sm:$0xff]
    %v3052 = vld [vmem:[#allocation13 + $0x6c0] sm:$0xff]
    %v3053 = vld [vmem:[#allocation13 + $0x6c8] sm:$0xff]
    %v3054 = vld [vmem:[#allocation13 + $0x6d0] sm:$0xff]
    %v3055 = vld [vmem:[#allocation13 + $0x6d8] sm:$0xff]
    %v3056 = vld [vmem:[#allocation13 + $0x6e0] sm:$0xff]
    %v3057 = vld [vmem:[#allocation13 + $0x6e8] sm:$0xff]
    %v3058 = vld [vmem:[#allocation13 + $0x6f0] sm:$0xff]
    %v3059 = vld [vmem:[#allocation13 + $0x6f8] sm:$0xff]
    %v3060 = vld [vmem:[#allocation13 + $0x700] sm:$0xff]
    %v3061 = vld [vmem:[#allocation13 + $0x708] sm:$0xff]
    %v3062 = vld [vmem:[#allocation13 + $0x710] sm:$0xff]
    %v3063 = vld [vmem:[#allocation13 + $0x718] sm:$0xff]
    %v3064 = vld [vmem:[#allocation13 + $0x720] sm:$0xff]
    %v3065 = vld [vmem:[#allocation13 + $0x728] sm:$0xff]
    %v3066 = vld [vmem:[#allocation13 + $0x730] sm:$0xff]
    %v3067 = vld [vmem:[#allocation13 + $0x738] sm:$0xff]
    %v3068 = vld [vmem:[#allocation13 + $0x740] sm:$0xff]
    %v3069 = vld [vmem:[#allocation13 + $0x748] sm:$0xff]
    %v3070 = vld [vmem:[#allocation13 + $0x750] sm:$0xff]
    %v3071 = vld [vmem:[#allocation13 + $0x758] sm:$0xff]
    %v3072 = vld [vmem:[#allocation13 + $0x760] sm:$0xff]
    %v3073 = vld [vmem:[#allocation13 + $0x768] sm:$0xff]
    %v3074 = vld [vmem:[#allocation13 + $0x770] sm:$0xff]
    %v3075 = vld [vmem:[#allocation13 + $0x778] sm:$0xff]
    %v3076 = vld [vmem:[#allocation13 + $0x780] sm:$0xff]
    %v3077 = vld [vmem:[#allocation13 + $0x788] sm:$0xff]
    %v3078 = vld [vmem:[#allocation13 + $0x790] sm:$0xff]
    %v3079 = vld [vmem:[#allocation13 + $0x798] sm:$0xff]
    %v3080 = vld [vmem:[#allocation13 + $0x7a0] sm:$0xff]
    %v3081 = vld [vmem:[#allocation13 + $0x7a8] sm:$0xff]
    %v3082 = vld [vmem:[#allocation13 + $0x7b0] sm:$0xff]
    %v3083 = vld [vmem:[#allocation13 + $0x7b8] sm:$0xff]
    %v3084 = vld [vmem:[#allocation13 + $0x7c0] sm:$0xff]
    %v3085 = vld [vmem:[#allocation13 + $0x7c8] sm:$0xff]
    %v3086 = vld [vmem:[#allocation13 + $0x7d0] sm:$0xff]
    %v3087 = vld [vmem:[#allocation13 + $0x7d8] sm:$0xff]
    %v3088 = vld [vmem:[#allocation13 + $0x7e0] sm:$0xff]
    %v3089 = vld [vmem:[#allocation13 + $0x7e8] sm:$0xff]
    %v3090 = vld [vmem:[#allocation13 + $0x7f0] sm:$0xff]
    %v3091 = vld [vmem:[#allocation13 + $0x7f8] sm:$0xff]
    %v3092 = vld [vmem:[%s10] sm:$0xf]
    %v3094 = vlaneseq
    %v3095 = vshrl.u32 %v3094, 7
    %v3096 = vsub.s32 0, %v3095
    %v3097 = vrot.slane %v3092, %v3096
    %v3098 = vlaneseq
    %v3099 = vshrl.u32 %v3098, 7
    %v3100 = vsub.s32 1, %v3099
    %v3101 = vrot.slane %v3092, %v3100
    %v3102 = vlaneseq
    %v3103 = vshrl.u32 %v3102, 7
    %v3104 = vsub.s32 2, %v3103
    %v3105 = vrot.slane %v3092, %v3104
    %v3106 = vlaneseq
    %v3107 = vshrl.u32 %v3106, 7
    %v3108 = vsub.s32 3, %v3107
    %v3109 = vrot.slane %v3092, %v3108
    %v3370 = vunpack.c.l.b16 %v2836
    %v3371 = vunpack.c.h.b16 %v2836
    %v3372 = vunpack.c.l.b16 %v2837
    %v3373 = vunpack.c.h.b16 %v2837
    %v3374 = vunpack.c.l.b16 %v2838
    %v3375 = vunpack.c.h.b16 %v2838
    %v3376 = vunpack.c.l.b16 %v2839
    %v3377 = vunpack.c.h.b16 %v2839
    %v3378 = vunpack.c.l.b16 %v2840
    %v3379 = vunpack.c.h.b16 %v2840
    %v3380 = vunpack.c.l.b16 %v2841
    %v3381 = vunpack.c.h.b16 %v2841
    %v3382 = vunpack.c.l.b16 %v2842
    %v3383 = vunpack.c.h.b16 %v2842
    %v3384 = vunpack.c.l.b16 %v2843
    %v3385 = vunpack.c.h.b16 %v2843
    %v3386 = vunpack.c.l.b16 %v2844
    %v3387 = vunpack.c.h.b16 %v2844
    %v3388 = vunpack.c.l.b16 %v2845
    %v3389 = vunpack.c.h.b16 %v2845
    %v3390 = vunpack.c.l.b16 %v2846
    %v3391 = vunpack.c.h.b16 %v2846
    %v3392 = vunpack.c.l.b16 %v2847
    %v3393 = vunpack.c.h.b16 %v2847
    %v3394 = vunpack.c.l.b16 %v2848
    %v3395 = vunpack.c.h.b16 %v2848
    %v3396 = vunpack.c.l.b16 %v2849
    %v3397 = vunpack.c.h.b16 %v2849
    %v3398 = vunpack.c.l.b16 %v2850
    %v3399 = vunpack.c.h.b16 %v2850
    %v3400 = vunpack.c.l.b16 %v2851
    %v3401 = vunpack.c.h.b16 %v2851
    %v3402 = vunpack.c.l.b16 %v2852
    %v3403 = vunpack.c.h.b16 %v2852
    %v3404 = vunpack.c.l.b16 %v2853
    %v3405 = vunpack.c.h.b16 %v2853
    %v3406 = vunpack.c.l.b16 %v2854
    %v3407 = vunpack.c.h.b16 %v2854
    %v3408 = vunpack.c.l.b16 %v2855
    %v3409 = vunpack.c.h.b16 %v2855
    %v3410 = vunpack.c.l.b16 %v2856
    %v3411 = vunpack.c.h.b16 %v2856
    %v3412 = vunpack.c.l.b16 %v2857
    %v3413 = vunpack.c.h.b16 %v2857
    %v3414 = vunpack.c.l.b16 %v2858
    %v3415 = vunpack.c.h.b16 %v2858
    %v3416 = vunpack.c.l.b16 %v2859
    %v3417 = vunpack.c.h.b16 %v2859
    %v3418 = vunpack.c.l.b16 %v2860
    %v3419 = vunpack.c.h.b16 %v2860
    %v3420 = vunpack.c.l.b16 %v2861
    %v3421 = vunpack.c.h.b16 %v2861
    %v3422 = vunpack.c.l.b16 %v2862
    %v3423 = vunpack.c.h.b16 %v2862
    %v3424 = vunpack.c.l.b16 %v2863
    %v3425 = vunpack.c.h.b16 %v2863
    %v3426 = vunpack.c.l.b16 %v2864
    %v3427 = vunpack.c.h.b16 %v2864
    %v3428 = vunpack.c.l.b16 %v2865
    %v3429 = vunpack.c.h.b16 %v2865
    %v3430 = vunpack.c.l.b16 %v2866
    %v3431 = vunpack.c.h.b16 %v2866
    %v3432 = vunpack.c.l.b16 %v2867
    %v3433 = vunpack.c.h.b16 %v2867
    %v3434 = vunpack.c.l.b16 %v2868
    %v3435 = vunpack.c.h.b16 %v2868
    %v3436 = vunpack.c.l.b16 %v2869
    %v3437 = vunpack.c.h.b16 %v2869
    %v3438 = vunpack.c.l.b16 %v2870
    %v3439 = vunpack.c.h.b16 %v2870
    %v3440 = vunpack.c.l.b16 %v2871
    %v3441 = vunpack.c.h.b16 %v2871
    %v3442 = vunpack.c.l.b16 %v2872
    %v3443 = vunpack.c.h.b16 %v2872
    %v3444 = vunpack.c.l.b16 %v2873
    %v3445 = vunpack.c.h.b16 %v2873
    %v3446 = vunpack.c.l.b16 %v2874
    %v3447 = vunpack.c.h.b16 %v2874
    %v3448 = vunpack.c.l.b16 %v2875
    %v3449 = vunpack.c.h.b16 %v2875
    %v3450 = vunpack.c.l.b16 %v2876
    %v3451 = vunpack.c.h.b16 %v2876
    %v3452 = vunpack.c.l.b16 %v2877
    %v3453 = vunpack.c.h.b16 %v2877
    %v3454 = vunpack.c.l.b16 %v2878
    %v3455 = vunpack.c.h.b16 %v2878
    %v3456 = vunpack.c.l.b16 %v2879
    %v3457 = vunpack.c.h.b16 %v2879
    %v3458 = vunpack.c.l.b16 %v2880
    %v3459 = vunpack.c.h.b16 %v2880
    %v3460 = vunpack.c.l.b16 %v2881
    %v3461 = vunpack.c.h.b16 %v2881
    %v3462 = vunpack.c.l.b16 %v2882
    %v3463 = vunpack.c.h.b16 %v2882
    %v3464 = vunpack.c.l.b16 %v2883
    %v3465 = vunpack.c.h.b16 %v2883
    %v3466 = vunpack.c.l.b16 %v2884
    %v3467 = vunpack.c.h.b16 %v2884
    %v3468 = vunpack.c.l.b16 %v2885
    %v3469 = vunpack.c.h.b16 %v2885
    %v3470 = vunpack.c.l.b16 %v2886
    %v3471 = vunpack.c.h.b16 %v2886
    %v3472 = vunpack.c.l.b16 %v2887
    %v3473 = vunpack.c.h.b16 %v2887
    %v3474 = vunpack.c.l.b16 %v2888
    %v3475 = vunpack.c.h.b16 %v2888
    %v3476 = vunpack.c.l.b16 %v2889
    %v3477 = vunpack.c.h.b16 %v2889
    %v3478 = vunpack.c.l.b16 %v2890
    %v3479 = vunpack.c.h.b16 %v2890
    %v3480 = vunpack.c.l.b16 %v2891
    %v3481 = vunpack.c.h.b16 %v2891
    %v3482 = vunpack.c.l.b16 %v2892
    %v3483 = vunpack.c.h.b16 %v2892
    %v3484 = vunpack.c.l.b16 %v2893
    %v3485 = vunpack.c.h.b16 %v2893
    %v3486 = vunpack.c.l.b16 %v2894
    %v3487 = vunpack.c.h.b16 %v2894
    %v3488 = vunpack.c.l.b16 %v2895
    %v3489 = vunpack.c.h.b16 %v2895
    %v3490 = vunpack.c.l.b16 %v2896
    %v3491 = vunpack.c.h.b16 %v2896
    %v3492 = vunpack.c.l.b16 %v2897
    %v3493 = vunpack.c.h.b16 %v2897
    %v3494 = vunpack.c.l.b16 %v2898
    %v3495 = vunpack.c.h.b16 %v2898
    %v3496 = vunpack.c.l.b16 %v2899
    %v3497 = vunpack.c.h.b16 %v2899
    %v3498 = vunpack.c.l.b16 %v2900
    %v3499 = vunpack.c.h.b16 %v2900
    %v3500 = vunpack.c.l.b16 %v2901
    %v3501 = vunpack.c.h.b16 %v2901
    %v3502 = vunpack.c.l.b16 %v2902
    %v3503 = vunpack.c.h.b16 %v2902
    %v3504 = vunpack.c.l.b16 %v2903
    %v3505 = vunpack.c.h.b16 %v2903
    %v3506 = vunpack.c.l.b16 %v2904
    %v3507 = vunpack.c.h.b16 %v2904
    %v3508 = vunpack.c.l.b16 %v2905
    %v3509 = vunpack.c.h.b16 %v2905
    %v3510 = vunpack.c.l.b16 %v2906
    %v3511 = vunpack.c.h.b16 %v2906
    %v3512 = vunpack.c.l.b16 %v2907
    %v3513 = vunpack.c.h.b16 %v2907
    %v3514 = vunpack.c.l.b16 %v2908
    %v3515 = vunpack.c.h.b16 %v2908
    %v3516 = vunpack.c.l.b16 %v2909
    %v3517 = vunpack.c.h.b16 %v2909
    %v3518 = vunpack.c.l.b16 %v2910
    %v3519 = vunpack.c.h.b16 %v2910
    %v3520 = vunpack.c.l.b16 %v2911
    %v3521 = vunpack.c.h.b16 %v2911
    %v3522 = vunpack.c.l.b16 %v2912
    %v3523 = vunpack.c.h.b16 %v2912
    %v3524 = vunpack.c.l.b16 %v2913
    %v3525 = vunpack.c.h.b16 %v2913
    %v3526 = vunpack.c.l.b16 %v2914
    %v3527 = vunpack.c.h.b16 %v2914
    %v3528 = vunpack.c.l.b16 %v2915
    %v3529 = vunpack.c.h.b16 %v2915
    %v3530 = vunpack.c.l.b16 %v2916
    %v3531 = vunpack.c.h.b16 %v2916
    %v3532 = vunpack.c.l.b16 %v2917
    %v3533 = vunpack.c.h.b16 %v2917
    %v3534 = vunpack.c.l.b16 %v2918
    %v3535 = vunpack.c.h.b16 %v2918
    %v3536 = vunpack.c.l.b16 %v2919
    %v3537 = vunpack.c.h.b16 %v2919
    %v3538 = vunpack.c.l.b16 %v2920
    %v3539 = vunpack.c.h.b16 %v2920
    %v3540 = vunpack.c.l.b16 %v2921
    %v3541 = vunpack.c.h.b16 %v2921
    %v3542 = vunpack.c.l.b16 %v2922
    %v3543 = vunpack.c.h.b16 %v2922
    %v3544 = vunpack.c.l.b16 %v2923
    %v3545 = vunpack.c.h.b16 %v2923
    %v3546 = vunpack.c.l.b16 %v2924
    %v3547 = vunpack.c.h.b16 %v2924
    %v3548 = vunpack.c.l.b16 %v2925
    %v3549 = vunpack.c.h.b16 %v2925
    %v3550 = vunpack.c.l.b16 %v2926
    %v3551 = vunpack.c.h.b16 %v2926
    %v3552 = vunpack.c.l.b16 %v2927
    %v3553 = vunpack.c.h.b16 %v2927
    %v3554 = vunpack.c.l.b16 %v2928
    %v3555 = vunpack.c.h.b16 %v2928
    %v3556 = vunpack.c.l.b16 %v2929
    %v3557 = vunpack.c.h.b16 %v2929
    %v3558 = vunpack.c.l.b16 %v2930
    %v3559 = vunpack.c.h.b16 %v2930
    %v3560 = vunpack.c.l.b16 %v2931
    %v3561 = vunpack.c.h.b16 %v2931
    %v3562 = vunpack.c.l.b16 %v2932
    %v3563 = vunpack.c.h.b16 %v2932
    %v3564 = vunpack.c.l.b16 %v2933
    %v3565 = vunpack.c.h.b16 %v2933
    %v3566 = vunpack.c.l.b16 %v2934
    %v3567 = vunpack.c.h.b16 %v2934
    %v3568 = vunpack.c.l.b16 %v2935
    %v3569 = vunpack.c.h.b16 %v2935
    %v3570 = vunpack.c.l.b16 %v2936
    %v3571 = vunpack.c.h.b16 %v2936
    %v3572 = vunpack.c.l.b16 %v2937
    %v3573 = vunpack.c.h.b16 %v2937
    %v3574 = vunpack.c.l.b16 %v2938
    %v3575 = vunpack.c.h.b16 %v2938
    %v3576 = vunpack.c.l.b16 %v2939
    %v3577 = vunpack.c.h.b16 %v2939
    %v3578 = vunpack.c.l.b16 %v2940
    %v3579 = vunpack.c.h.b16 %v2940
    %v3580 = vunpack.c.l.b16 %v2941
    %v3581 = vunpack.c.h.b16 %v2941
    %v3582 = vunpack.c.l.b16 %v2942
    %v3583 = vunpack.c.h.b16 %v2942
    %v3584 = vunpack.c.l.b16 %v2943
    %v3585 = vunpack.c.h.b16 %v2943
    %v3586 = vunpack.c.l.b16 %v2944
    %v3587 = vunpack.c.h.b16 %v2944
    %v3588 = vunpack.c.l.b16 %v2945
    %v3589 = vunpack.c.h.b16 %v2945
    %v3590 = vunpack.c.l.b16 %v2946
    %v3591 = vunpack.c.h.b16 %v2946
    %v3592 = vunpack.c.l.b16 %v2947
    %v3593 = vunpack.c.h.b16 %v2947
    %v3594 = vunpack.c.l.b16 %v2948
    %v3595 = vunpack.c.h.b16 %v2948
    %v3596 = vunpack.c.l.b16 %v2949
    %v3597 = vunpack.c.h.b16 %v2949
    %v3598 = vunpack.c.l.b16 %v2950
    %v3599 = vunpack.c.h.b16 %v2950
    %v3600 = vunpack.c.l.b16 %v2951
    %v3601 = vunpack.c.h.b16 %v2951
    %v3602 = vunpack.c.l.b16 %v2952
    %v3603 = vunpack.c.h.b16 %v2952
    %v3604 = vunpack.c.l.b16 %v2953
    %v3605 = vunpack.c.h.b16 %v2953
    %v3606 = vunpack.c.l.b16 %v2954
    %v3607 = vunpack.c.h.b16 %v2954
    %v3608 = vunpack.c.l.b16 %v2955
    %v3609 = vunpack.c.h.b16 %v2955
    %v3610 = vunpack.c.l.b16 %v2956
    %v3611 = vunpack.c.h.b16 %v2956
    %v3612 = vunpack.c.l.b16 %v2957
    %v3613 = vunpack.c.h.b16 %v2957
    %v3614 = vunpack.c.l.b16 %v2958
    %v3615 = vunpack.c.h.b16 %v2958
    %v3616 = vunpack.c.l.b16 %v2959
    %v3617 = vunpack.c.h.b16 %v2959
    %v3618 = vunpack.c.l.b16 %v2960
    %v3619 = vunpack.c.h.b16 %v2960
    %v3620 = vunpack.c.l.b16 %v2961
    %v3621 = vunpack.c.h.b16 %v2961
    %v3622 = vunpack.c.l.b16 %v2962
    %v3623 = vunpack.c.h.b16 %v2962
    %v3624 = vunpack.c.l.b16 %v2963
    %v3625 = vunpack.c.h.b16 %v2963
    %v3626 = vunpack.c.l.b16 %v2964
    %v3627 = vunpack.c.h.b16 %v2964
    %v3628 = vunpack.c.l.b16 %v2965
    %v3629 = vunpack.c.h.b16 %v2965
    %v3630 = vunpack.c.l.b16 %v2966
    %v3631 = vunpack.c.h.b16 %v2966
    %v3632 = vunpack.c.l.b16 %v2967
    %v3633 = vunpack.c.h.b16 %v2967
    %v3634 = vunpack.c.l.b16 %v2968
    %v3635 = vunpack.c.h.b16 %v2968
    %v3636 = vunpack.c.l.b16 %v2969
    %v3637 = vunpack.c.h.b16 %v2969
    %v3638 = vunpack.c.l.b16 %v2970
    %v3639 = vunpack.c.h.b16 %v2970
    %v3640 = vunpack.c.l.b16 %v2971
    %v3641 = vunpack.c.h.b16 %v2971
    %v3642 = vunpack.c.l.b16 %v2972
    %v3643 = vunpack.c.h.b16 %v2972
    %v3644 = vunpack.c.l.b16 %v2973
    %v3645 = vunpack.c.h.b16 %v2973
    %v3646 = vunpack.c.l.b16 %v2974
    %v3647 = vunpack.c.h.b16 %v2974
    %v3648 = vunpack.c.l.b16 %v2975
    %v3649 = vunpack.c.h.b16 %v2975
    %v3650 = vunpack.c.l.b16 %v2976
    %v3651 = vunpack.c.h.b16 %v2976
    %v3652 = vunpack.c.l.b16 %v2977
    %v3653 = vunpack.c.h.b16 %v2977
    %v3654 = vunpack.c.l.b16 %v2978
    %v3655 = vunpack.c.h.b16 %v2978
    %v3656 = vunpack.c.l.b16 %v2979
    %v3657 = vunpack.c.h.b16 %v2979
    %v3658 = vunpack.c.l.b16 %v2980
    %v3659 = vunpack.c.h.b16 %v2980
    %v3660 = vunpack.c.l.b16 %v2981
    %v3661 = vunpack.c.h.b16 %v2981
    %v3662 = vunpack.c.l.b16 %v2982
    %v3663 = vunpack.c.h.b16 %v2982
    %v3664 = vunpack.c.l.b16 %v2983
    %v3665 = vunpack.c.h.b16 %v2983
    %v3666 = vunpack.c.l.b16 %v2984
    %v3667 = vunpack.c.h.b16 %v2984
    %v3668 = vunpack.c.l.b16 %v2985
    %v3669 = vunpack.c.h.b16 %v2985
    %v3670 = vunpack.c.l.b16 %v2986
    %v3671 = vunpack.c.h.b16 %v2986
    %v3672 = vunpack.c.l.b16 %v2987
    %v3673 = vunpack.c.h.b16 %v2987
    %v3674 = vunpack.c.l.b16 %v2988
    %v3675 = vunpack.c.h.b16 %v2988
    %v3676 = vunpack.c.l.b16 %v2989
    %v3677 = vunpack.c.h.b16 %v2989
    %v3678 = vunpack.c.l.b16 %v2990
    %v3679 = vunpack.c.h.b16 %v2990
    %v3680 = vunpack.c.l.b16 %v2991
    %v3681 = vunpack.c.h.b16 %v2991
    %v3682 = vunpack.c.l.b16 %v2992
    %v3683 = vunpack.c.h.b16 %v2992
    %v3684 = vunpack.c.l.b16 %v2993
    %v3685 = vunpack.c.h.b16 %v2993
    %v3686 = vunpack.c.l.b16 %v2994
    %v3687 = vunpack.c.h.b16 %v2994
    %v3688 = vunpack.c.l.b16 %v2995
    %v3689 = vunpack.c.h.b16 %v2995
    %v3690 = vunpack.c.l.b16 %v2996
    %v3691 = vunpack.c.h.b16 %v2996
    %v3692 = vunpack.c.l.b16 %v2997
    %v3693 = vunpack.c.h.b16 %v2997
    %v3694 = vunpack.c.l.b16 %v2998
    %v3695 = vunpack.c.h.b16 %v2998
    %v3696 = vunpack.c.l.b16 %v2999
    %v3697 = vunpack.c.h.b16 %v2999
    %v3698 = vunpack.c.l.b16 %v3000
    %v3699 = vunpack.c.h.b16 %v3000
    %v3700 = vunpack.c.l.b16 %v3001
    %v3701 = vunpack.c.h.b16 %v3001
    %v3702 = vunpack.c.l.b16 %v3002
    %v3703 = vunpack.c.h.b16 %v3002
    %v3704 = vunpack.c.l.b16 %v3003
    %v3705 = vunpack.c.h.b16 %v3003
    %v3706 = vunpack.c.l.b16 %v3004
    %v3707 = vunpack.c.h.b16 %v3004
    %v3708 = vunpack.c.l.b16 %v3005
    %v3709 = vunpack.c.h.b16 %v3005
    %v3710 = vunpack.c.l.b16 %v3006
    %v3711 = vunpack.c.h.b16 %v3006
    %v3712 = vunpack.c.l.b16 %v3007
    %v3713 = vunpack.c.h.b16 %v3007
    %v3714 = vunpack.c.l.b16 %v3008
    %v3715 = vunpack.c.h.b16 %v3008
    %v3716 = vunpack.c.l.b16 %v3009
    %v3717 = vunpack.c.h.b16 %v3009
    %v3718 = vunpack.c.l.b16 %v3010
    %v3719 = vunpack.c.h.b16 %v3010
    %v3720 = vunpack.c.l.b16 %v3011
    %v3721 = vunpack.c.h.b16 %v3011
    %v3722 = vunpack.c.l.b16 %v3012
    %v3723 = vunpack.c.h.b16 %v3012
    %v3724 = vunpack.c.l.b16 %v3013
    %v3725 = vunpack.c.h.b16 %v3013
    %v3726 = vunpack.c.l.b16 %v3014
    %v3727 = vunpack.c.h.b16 %v3014
    %v3728 = vunpack.c.l.b16 %v3015
    %v3729 = vunpack.c.h.b16 %v3015
    %v3730 = vunpack.c.l.b16 %v3016
    %v3731 = vunpack.c.h.b16 %v3016
    %v3732 = vunpack.c.l.b16 %v3017
    %v3733 = vunpack.c.h.b16 %v3017
    %v3734 = vunpack.c.l.b16 %v3018
    %v3735 = vunpack.c.h.b16 %v3018
    %v3736 = vunpack.c.l.b16 %v3019
    %v3737 = vunpack.c.h.b16 %v3019
    %v3738 = vunpack.c.l.b16 %v3020
    %v3739 = vunpack.c.h.b16 %v3020
    %v3740 = vunpack.c.l.b16 %v3021
    %v3741 = vunpack.c.h.b16 %v3021
    %v3742 = vunpack.c.l.b16 %v3022
    %v3743 = vunpack.c.h.b16 %v3022
    %v3744 = vunpack.c.l.b16 %v3023
    %v3745 = vunpack.c.h.b16 %v3023
    %v3746 = vunpack.c.l.b16 %v3024
    %v3747 = vunpack.c.h.b16 %v3024
    %v3748 = vunpack.c.l.b16 %v3025
    %v3749 = vunpack.c.h.b16 %v3025
    %v3750 = vunpack.c.l.b16 %v3026
    %v3751 = vunpack.c.h.b16 %v3026
    %v3752 = vunpack.c.l.b16 %v3027
    %v3753 = vunpack.c.h.b16 %v3027
    %v3754 = vunpack.c.l.b16 %v3028
    %v3755 = vunpack.c.h.b16 %v3028
    %v3756 = vunpack.c.l.b16 %v3029
    %v3757 = vunpack.c.h.b16 %v3029
    %v3758 = vunpack.c.l.b16 %v3030
    %v3759 = vunpack.c.h.b16 %v3030
    %v3760 = vunpack.c.l.b16 %v3031
    %v3761 = vunpack.c.h.b16 %v3031
    %v3762 = vunpack.c.l.b16 %v3032
    %v3763 = vunpack.c.h.b16 %v3032
    %v3764 = vunpack.c.l.b16 %v3033
    %v3765 = vunpack.c.h.b16 %v3033
    %v3766 = vunpack.c.l.b16 %v3034
    %v3767 = vunpack.c.h.b16 %v3034
    %v3768 = vunpack.c.l.b16 %v3035
    %v3769 = vunpack.c.h.b16 %v3035
    %v3770 = vunpack.c.l.b16 %v3036
    %v3771 = vunpack.c.h.b16 %v3036
    %v3772 = vunpack.c.l.b16 %v3037
    %v3773 = vunpack.c.h.b16 %v3037
    %v3774 = vunpack.c.l.b16 %v3038
    %v3775 = vunpack.c.h.b16 %v3038
    %v3776 = vunpack.c.l.b16 %v3039
    %v3777 = vunpack.c.h.b16 %v3039
    %v3778 = vunpack.c.l.b16 %v3040
    %v3779 = vunpack.c.h.b16 %v3040
    %v3780 = vunpack.c.l.b16 %v3041
    %v3781 = vunpack.c.h.b16 %v3041
    %v3782 = vunpack.c.l.b16 %v3042
    %v3783 = vunpack.c.h.b16 %v3042
    %v3784 = vunpack.c.l.b16 %v3043
    %v3785 = vunpack.c.h.b16 %v3043
    %v3786 = vunpack.c.l.b16 %v3044
    %v3787 = vunpack.c.h.b16 %v3044
    %v3788 = vunpack.c.l.b16 %v3045
    %v3789 = vunpack.c.h.b16 %v3045
    %v3790 = vunpack.c.l.b16 %v3046
    %v3791 = vunpack.c.h.b16 %v3046
    %v3792 = vunpack.c.l.b16 %v3047
    %v3793 = vunpack.c.h.b16 %v3047
    %v3794 = vunpack.c.l.b16 %v3048
    %v3795 = vunpack.c.h.b16 %v3048
    %v3796 = vunpack.c.l.b16 %v3049
    %v3797 = vunpack.c.h.b16 %v3049
    %v3798 = vunpack.c.l.b16 %v3050
    %v3799 = vunpack.c.h.b16 %v3050
    %v3800 = vunpack.c.l.b16 %v3051
    %v3801 = vunpack.c.h.b16 %v3051
    %v3802 = vunpack.c.l.b16 %v3052
    %v3803 = vunpack.c.h.b16 %v3052
    %v3804 = vunpack.c.l.b16 %v3053
    %v3805 = vunpack.c.h.b16 %v3053
    %v3806 = vunpack.c.l.b16 %v3054
    %v3807 = vunpack.c.h.b16 %v3054
    %v3808 = vunpack.c.l.b16 %v3055
    %v3809 = vunpack.c.h.b16 %v3055
    %v3810 = vunpack.c.l.b16 %v3056
    %v3811 = vunpack.c.h.b16 %v3056
    %v3812 = vunpack.c.l.b16 %v3057
    %v3813 = vunpack.c.h.b16 %v3057
    %v3814 = vunpack.c.l.b16 %v3058
    %v3815 = vunpack.c.h.b16 %v3058
    %v3816 = vunpack.c.l.b16 %v3059
    %v3817 = vunpack.c.h.b16 %v3059
    %v3818 = vunpack.c.l.b16 %v3060
    %v3819 = vunpack.c.h.b16 %v3060
    %v3820 = vunpack.c.l.b16 %v3061
    %v3821 = vunpack.c.h.b16 %v3061
    %v3822 = vunpack.c.l.b16 %v3062
    %v3823 = vunpack.c.h.b16 %v3062
    %v3824 = vunpack.c.l.b16 %v3063
    %v3825 = vunpack.c.h.b16 %v3063
    %v3826 = vunpack.c.l.b16 %v3064
    %v3827 = vunpack.c.h.b16 %v3064
    %v3828 = vunpack.c.l.b16 %v3065
    %v3829 = vunpack.c.h.b16 %v3065
    %v3830 = vunpack.c.l.b16 %v3066
    %v3831 = vunpack.c.h.b16 %v3066
    %v3832 = vunpack.c.l.b16 %v3067
    %v3833 = vunpack.c.h.b16 %v3067
    %v3834 = vunpack.c.l.b16 %v3068
    %v3835 = vunpack.c.h.b16 %v3068
    %v3836 = vunpack.c.l.b16 %v3069
    %v3837 = vunpack.c.h.b16 %v3069
    %v3838 = vunpack.c.l.b16 %v3070
    %v3839 = vunpack.c.h.b16 %v3070
    %v3840 = vunpack.c.l.b16 %v3071
    %v3841 = vunpack.c.h.b16 %v3071
    %v3842 = vunpack.c.l.b16 %v3072
    %v3843 = vunpack.c.h.b16 %v3072
    %v3844 = vunpack.c.l.b16 %v3073
    %v3845 = vunpack.c.h.b16 %v3073
    %v3846 = vunpack.c.l.b16 %v3074
    %v3847 = vunpack.c.h.b16 %v3074
    %v3848 = vunpack.c.l.b16 %v3075
    %v3849 = vunpack.c.h.b16 %v3075
    %v3850 = vunpack.c.l.b16 %v3076
    %v3851 = vunpack.c.h.b16 %v3076
    %v3852 = vunpack.c.l.b16 %v3077
    %v3853 = vunpack.c.h.b16 %v3077
    %v3854 = vunpack.c.l.b16 %v3078
    %v3855 = vunpack.c.h.b16 %v3078
    %v3856 = vunpack.c.l.b16 %v3079
    %v3857 = vunpack.c.h.b16 %v3079
    %v3858 = vunpack.c.l.b16 %v3080
    %v3859 = vunpack.c.h.b16 %v3080
    %v3860 = vunpack.c.l.b16 %v3081
    %v3861 = vunpack.c.h.b16 %v3081
    %v3862 = vunpack.c.l.b16 %v3082
    %v3863 = vunpack.c.h.b16 %v3082
    %v3864 = vunpack.c.l.b16 %v3083
    %v3865 = vunpack.c.h.b16 %v3083
    %v3866 = vunpack.c.l.b16 %v3084
    %v3867 = vunpack.c.h.b16 %v3084
    %v3868 = vunpack.c.l.b16 %v3085
    %v3869 = vunpack.c.h.b16 %v3085
    %v3870 = vunpack.c.l.b16 %v3086
    %v3871 = vunpack.c.h.b16 %v3086
    %v3872 = vunpack.c.l.b16 %v3087
    %v3873 = vunpack.c.h.b16 %v3087
    %v3874 = vunpack.c.l.b16 %v3088
    %v3875 = vunpack.c.h.b16 %v3088
    %v3876 = vunpack.c.l.b16 %v3089
    %v3877 = vunpack.c.h.b16 %v3089
    %v3878 = vunpack.c.l.b16 %v3090
    %v3879 = vunpack.c.h.b16 %v3090
    %v3880 = vunpack.c.l.b16 %v3091
    %v3881 = vunpack.c.h.b16 %v3091
    %v3882 = vpack.c.b16 %v3374, %v3370
    %v3883 = vpack.c.b16 %v3375, %v3371
    %v3884 = vpack.c.b16 %v3376, %v3372
    %v3885 = vpack.c.b16 %v3377, %v3373
    %v3886 = vpack.c.b16 %v3382, %v3378
    %v3887 = vpack.c.b16 %v3383, %v3379
    %v3888 = vpack.c.b16 %v3384, %v3380
    %v3889 = vpack.c.b16 %v3385, %v3381
    %v3890 = vpack.c.b16 %v3390, %v3386
    %v3891 = vpack.c.b16 %v3391, %v3387
    %v3892 = vpack.c.b16 %v3392, %v3388
    %v3893 = vpack.c.b16 %v3393, %v3389
    %v3894 = vpack.c.b16 %v3398, %v3394
    %v3895 = vpack.c.b16 %v3399, %v3395
    %v3896 = vpack.c.b16 %v3400, %v3396
    %v3897 = vpack.c.b16 %v3401, %v3397
    %v3898 = vpack.c.b16 %v3406, %v3402
    %v3899 = vpack.c.b16 %v3407, %v3403
    %v3900 = vpack.c.b16 %v3408, %v3404
    %v3901 = vpack.c.b16 %v3409, %v3405
    %v3902 = vpack.c.b16 %v3414, %v3410
    %v3903 = vpack.c.b16 %v3415, %v3411
    %v3904 = vpack.c.b16 %v3416, %v3412
    %v3905 = vpack.c.b16 %v3417, %v3413
    %v3906 = vpack.c.b16 %v3422, %v3418
    %v3907 = vpack.c.b16 %v3423, %v3419
    %v3908 = vpack.c.b16 %v3424, %v3420
    %v3909 = vpack.c.b16 %v3425, %v3421
    %v3910 = vpack.c.b16 %v3430, %v3426
    %v3911 = vpack.c.b16 %v3431, %v3427
    %v3912 = vpack.c.b16 %v3432, %v3428
    %v3913 = vpack.c.b16 %v3433, %v3429
    %v3914 = vpack.c.b16 %v3438, %v3434
    %v3915 = vpack.c.b16 %v3439, %v3435
    %v3916 = vpack.c.b16 %v3440, %v3436
    %v3917 = vpack.c.b16 %v3441, %v3437
    %v3918 = vpack.c.b16 %v3446, %v3442
    %v3919 = vpack.c.b16 %v3447, %v3443
    %v3920 = vpack.c.b16 %v3448, %v3444
    %v3921 = vpack.c.b16 %v3449, %v3445
    %v3922 = vpack.c.b16 %v3454, %v3450
    %v3923 = vpack.c.b16 %v3455, %v3451
    %v3924 = vpack.c.b16 %v3456, %v3452
    %v3925 = vpack.c.b16 %v3457, %v3453
    %v3926 = vpack.c.b16 %v3462, %v3458
    %v3927 = vpack.c.b16 %v3463, %v3459
    %v3928 = vpack.c.b16 %v3464, %v3460
    %v3929 = vpack.c.b16 %v3465, %v3461
    %v3930 = vpack.c.b16 %v3470, %v3466
    %v3931 = vpack.c.b16 %v3471, %v3467
    %v3932 = vpack.c.b16 %v3472, %v3468
    %v3933 = vpack.c.b16 %v3473, %v3469
    %v3934 = vpack.c.b16 %v3478, %v3474
    %v3935 = vpack.c.b16 %v3479, %v3475
    %v3936 = vpack.c.b16 %v3480, %v3476
    %v3937 = vpack.c.b16 %v3481, %v3477
    %v3938 = vpack.c.b16 %v3486, %v3482
    %v3939 = vpack.c.b16 %v3487, %v3483
    %v3940 = vpack.c.b16 %v3488, %v3484
    %v3941 = vpack.c.b16 %v3489, %v3485
    %v3942 = vpack.c.b16 %v3494, %v3490
    %v3943 = vpack.c.b16 %v3495, %v3491
    %v3944 = vpack.c.b16 %v3496, %v3492
    %v3945 = vpack.c.b16 %v3497, %v3493
    %v3946 = vpack.c.b16 %v3502, %v3498
    %v3947 = vpack.c.b16 %v3503, %v3499
    %v3948 = vpack.c.b16 %v3504, %v3500
    %v3949 = vpack.c.b16 %v3505, %v3501
    %v3950 = vpack.c.b16 %v3510, %v3506
    %v3951 = vpack.c.b16 %v3511, %v3507
    %v3952 = vpack.c.b16 %v3512, %v3508
    %v3953 = vpack.c.b16 %v3513, %v3509
    %v3954 = vpack.c.b16 %v3518, %v3514
    %v3955 = vpack.c.b16 %v3519, %v3515
    %v3956 = vpack.c.b16 %v3520, %v3516
    %v3957 = vpack.c.b16 %v3521, %v3517
    %v3958 = vpack.c.b16 %v3526, %v3522
    %v3959 = vpack.c.b16 %v3527, %v3523
    %v3960 = vpack.c.b16 %v3528, %v3524
    %v3961 = vpack.c.b16 %v3529, %v3525
    %v3962 = vpack.c.b16 %v3534, %v3530
    %v3963 = vpack.c.b16 %v3535, %v3531
    %v3964 = vpack.c.b16 %v3536, %v3532
    %v3965 = vpack.c.b16 %v3537, %v3533
    %v3966 = vpack.c.b16 %v3542, %v3538
    %v3967 = vpack.c.b16 %v3543, %v3539
    %v3968 = vpack.c.b16 %v3544, %v3540
    %v3969 = vpack.c.b16 %v3545, %v3541
    %v3970 = vpack.c.b16 %v3550, %v3546
    %v3971 = vpack.c.b16 %v3551, %v3547
    %v3972 = vpack.c.b16 %v3552, %v3548
    %v3973 = vpack.c.b16 %v3553, %v3549
    %v3974 = vpack.c.b16 %v3558, %v3554
    %v3975 = vpack.c.b16 %v3559, %v3555
    %v3976 = vpack.c.b16 %v3560, %v3556
    %v3977 = vpack.c.b16 %v3561, %v3557
    %v3978 = vpack.c.b16 %v3566, %v3562
    %v3979 = vpack.c.b16 %v3567, %v3563
    %v3980 = vpack.c.b16 %v3568, %v3564
    %v3981 = vpack.c.b16 %v3569, %v3565
    %v3982 = vpack.c.b16 %v3574, %v3570
    %v3983 = vpack.c.b16 %v3575, %v3571
    %v3984 = vpack.c.b16 %v3576, %v3572
    %v3985 = vpack.c.b16 %v3577, %v3573
    %v3986 = vpack.c.b16 %v3582, %v3578
    %v3987 = vpack.c.b16 %v3583, %v3579
    %v3988 = vpack.c.b16 %v3584, %v3580
    %v3989 = vpack.c.b16 %v3585, %v3581
    %v3990 = vpack.c.b16 %v3590, %v3586
    %v3991 = vpack.c.b16 %v3591, %v3587
    %v3992 = vpack.c.b16 %v3592, %v3588
    %v3993 = vpack.c.b16 %v3593, %v3589
    %v3994 = vpack.c.b16 %v3598, %v3594
    %v3995 = vpack.c.b16 %v3599, %v3595
    %v3996 = vpack.c.b16 %v3600, %v3596
    %v3997 = vpack.c.b16 %v3601, %v3597
    %v3998 = vpack.c.b16 %v3606, %v3602
    %v3999 = vpack.c.b16 %v3607, %v3603
    %v4000 = vpack.c.b16 %v3608, %v3604
    %v4001 = vpack.c.b16 %v3609, %v3605
    %v4002 = vpack.c.b16 %v3614, %v3610
    %v4003 = vpack.c.b16 %v3615, %v3611
    %v4004 = vpack.c.b16 %v3616, %v3612
    %v4005 = vpack.c.b16 %v3617, %v3613
    %v4006 = vpack.c.b16 %v3622, %v3618
    %v4007 = vpack.c.b16 %v3623, %v3619
    %v4008 = vpack.c.b16 %v3624, %v3620
    %v4009 = vpack.c.b16 %v3625, %v3621
    %v4010 = vpack.c.b16 %v3630, %v3626
    %v4011 = vpack.c.b16 %v3631, %v3627
    %v4012 = vpack.c.b16 %v3632, %v3628
    %v4013 = vpack.c.b16 %v3633, %v3629
    %v4014 = vpack.c.b16 %v3638, %v3634
    %v4015 = vpack.c.b16 %v3639, %v3635
    %v4016 = vpack.c.b16 %v3640, %v3636
    %v4017 = vpack.c.b16 %v3641, %v3637
    %v4018 = vpack.c.b16 %v3646, %v3642
    %v4019 = vpack.c.b16 %v3647, %v3643
    %v4020 = vpack.c.b16 %v3648, %v3644
    %v4021 = vpack.c.b16 %v3649, %v3645
    %v4022 = vpack.c.b16 %v3654, %v3650
    %v4023 = vpack.c.b16 %v3655, %v3651
    %v4024 = vpack.c.b16 %v3656, %v3652
    %v4025 = vpack.c.b16 %v3657, %v3653
    %v4026 = vpack.c.b16 %v3662, %v3658
    %v4027 = vpack.c.b16 %v3663, %v3659
    %v4028 = vpack.c.b16 %v3664, %v3660
    %v4029 = vpack.c.b16 %v3665, %v3661
    %v4030 = vpack.c.b16 %v3670, %v3666
    %v4031 = vpack.c.b16 %v3671, %v3667
    %v4032 = vpack.c.b16 %v3672, %v3668
    %v4033 = vpack.c.b16 %v3673, %v3669
    %v4034 = vpack.c.b16 %v3678, %v3674
    %v4035 = vpack.c.b16 %v3679, %v3675
    %v4036 = vpack.c.b16 %v3680, %v3676
    %v4037 = vpack.c.b16 %v3681, %v3677
    %v4038 = vpack.c.b16 %v3686, %v3682
    %v4039 = vpack.c.b16 %v3687, %v3683
    %v4040 = vpack.c.b16 %v3688, %v3684
    %v4041 = vpack.c.b16 %v3689, %v3685
    %v4042 = vpack.c.b16 %v3694, %v3690
    %v4043 = vpack.c.b16 %v3695, %v3691
    %v4044 = vpack.c.b16 %v3696, %v3692
    %v4045 = vpack.c.b16 %v3697, %v3693
    %v4046 = vpack.c.b16 %v3702, %v3698
    %v4047 = vpack.c.b16 %v3703, %v3699
    %v4048 = vpack.c.b16 %v3704, %v3700
    %v4049 = vpack.c.b16 %v3705, %v3701
    %v4050 = vpack.c.b16 %v3710, %v3706
    %v4051 = vpack.c.b16 %v3711, %v3707
    %v4052 = vpack.c.b16 %v3712, %v3708
    %v4053 = vpack.c.b16 %v3713, %v3709
    %v4054 = vpack.c.b16 %v3718, %v3714
    %v4055 = vpack.c.b16 %v3719, %v3715
    %v4056 = vpack.c.b16 %v3720, %v3716
    %v4057 = vpack.c.b16 %v3721, %v3717
    %v4058 = vpack.c.b16 %v3726, %v3722
    %v4059 = vpack.c.b16 %v3727, %v3723
    %v4060 = vpack.c.b16 %v3728, %v3724
    %v4061 = vpack.c.b16 %v3729, %v3725
    %v4062 = vpack.c.b16 %v3734, %v3730
    %v4063 = vpack.c.b16 %v3735, %v3731
    %v4064 = vpack.c.b16 %v3736, %v3732
    %v4065 = vpack.c.b16 %v3737, %v3733
    %v4066 = vpack.c.b16 %v3742, %v3738
    %v4067 = vpack.c.b16 %v3743, %v3739
    %v4068 = vpack.c.b16 %v3744, %v3740
    %v4069 = vpack.c.b16 %v3745, %v3741
    %v4070 = vpack.c.b16 %v3750, %v3746
    %v4071 = vpack.c.b16 %v3751, %v3747
    %v4072 = vpack.c.b16 %v3752, %v3748
    %v4073 = vpack.c.b16 %v3753, %v3749
    %v4074 = vpack.c.b16 %v3758, %v3754
    %v4075 = vpack.c.b16 %v3759, %v3755
    %v4076 = vpack.c.b16 %v3760, %v3756
    %v4077 = vpack.c.b16 %v3761, %v3757
    %v4078 = vpack.c.b16 %v3766, %v3762
    %v4079 = vpack.c.b16 %v3767, %v3763
    %v4080 = vpack.c.b16 %v3768, %v3764
    %v4081 = vpack.c.b16 %v3769, %v3765
    %v4082 = vpack.c.b16 %v3774, %v3770
    %v4083 = vpack.c.b16 %v3775, %v3771
    %v4084 = vpack.c.b16 %v3776, %v3772
    %v4085 = vpack.c.b16 %v3777, %v3773
    %v4086 = vpack.c.b16 %v3782, %v3778
    %v4087 = vpack.c.b16 %v3783, %v3779
    %v4088 = vpack.c.b16 %v3784, %v3780
    %v4089 = vpack.c.b16 %v3785, %v3781
    %v4090 = vpack.c.b16 %v3790, %v3786
    %v4091 = vpack.c.b16 %v3791, %v3787
    %v4092 = vpack.c.b16 %v3792, %v3788
    %v4093 = vpack.c.b16 %v3793, %v3789
    %v4094 = vpack.c.b16 %v3798, %v3794
    %v4095 = vpack.c.b16 %v3799, %v3795
    %v4096 = vpack.c.b16 %v3800, %v3796
    %v4097 = vpack.c.b16 %v3801, %v3797
    %v4098 = vpack.c.b16 %v3806, %v3802
    %v4099 = vpack.c.b16 %v3807, %v3803
    %v4100 = vpack.c.b16 %v3808, %v3804
    %v4101 = vpack.c.b16 %v3809, %v3805
    %v4102 = vpack.c.b16 %v3814, %v3810
    %v4103 = vpack.c.b16 %v3815, %v3811
    %v4104 = vpack.c.b16 %v3816, %v3812
    %v4105 = vpack.c.b16 %v3817, %v3813
    %v4106 = vpack.c.b16 %v3822, %v3818
    %v4107 = vpack.c.b16 %v3823, %v3819
    %v4108 = vpack.c.b16 %v3824, %v3820
    %v4109 = vpack.c.b16 %v3825, %v3821
    %v4110 = vpack.c.b16 %v3830, %v3826
    %v4111 = vpack.c.b16 %v3831, %v3827
    %v4112 = vpack.c.b16 %v3832, %v3828
    %v4113 = vpack.c.b16 %v3833, %v3829
    %v4114 = vpack.c.b16 %v3838, %v3834
    %v4115 = vpack.c.b16 %v3839, %v3835
    %v4116 = vpack.c.b16 %v3840, %v3836
    %v4117 = vpack.c.b16 %v3841, %v3837
    %v4118 = vpack.c.b16 %v3846, %v3842
    %v4119 = vpack.c.b16 %v3847, %v3843
    %v4120 = vpack.c.b16 %v3848, %v3844
    %v4121 = vpack.c.b16 %v3849, %v3845
    %v4122 = vpack.c.b16 %v3854, %v3850
    %v4123 = vpack.c.b16 %v3855, %v3851
    %v4124 = vpack.c.b16 %v3856, %v3852
    %v4125 = vpack.c.b16 %v3857, %v3853
    %v4126 = vpack.c.b16 %v3862, %v3858
    %v4127 = vpack.c.b16 %v3863, %v3859
    %v4128 = vpack.c.b16 %v3864, %v3860
    %v4129 = vpack.c.b16 %v3865, %v3861
    %v4130 = vpack.c.b16 %v3870, %v3866
    %v4131 = vpack.c.b16 %v3871, %v3867
    %v4132 = vpack.c.b16 %v3872, %v3868
    %v4133 = vpack.c.b16 %v3873, %v3869
    %v4134 = vpack.c.b16 %v3878, %v3874
    %v4135 = vpack.c.b16 %v3879, %v3875
    %v4136 = vpack.c.b16 %v3880, %v3876
    %v4137 = vpack.c.b16 %v3881, %v3877
    %4394 = vmatprep.subr.bf16.mxu0 %v3883
    %4395 = vmatpush1.bf16.msra.mxu0 %v3882
    %4396 = vmatprep.subr.bf16.mxu0 %v3887
    %4397 = vmatpush1.bf16.msra.mxu0 %v3886
    %4398 = vmatprep.subr.bf16.mxu0 %v3891
    %4399 = vmatpush1.bf16.msra.mxu0 %v3890
    %4400 = vmatprep.subr.bf16.mxu0 %v3895
    %4401 = vmatpush1.bf16.msra.mxu0 %v3894
    %4402 = vmatprep.subr.bf16.mxu0 %v3899
    %4403 = vmatpush1.bf16.msra.mxu0 %v3898
    %4404 = vmatprep.subr.bf16.mxu0 %v3903
    %4405 = vmatpush1.bf16.msra.mxu0 %v3902
    %4406 = vmatprep.subr.bf16.mxu0 %v3907
    %4407 = vmatpush1.bf16.msra.mxu0 %v3906
    %4408 = vmatprep.subr.bf16.mxu0 %v3911
    %4409 = vmatpush1.bf16.msra.mxu0 %v3910
    %4410 = vmatprep.subr.bf16.mxu0 %v3915
    %4411 = vmatpush1.bf16.msra.mxu0 %v3914
    %4412 = vmatprep.subr.bf16.mxu0 %v3919
    %4413 = vmatpush1.bf16.msra.mxu0 %v3918
    %4414 = vmatprep.subr.bf16.mxu0 %v3923
    %4415 = vmatpush1.bf16.msra.mxu0 %v3922
    %4416 = vmatprep.subr.bf16.mxu0 %v3927
    %4417 = vmatpush1.bf16.msra.mxu0 %v3926
    %4418 = vmatprep.subr.bf16.mxu0 %v3931
    %4419 = vmatpush1.bf16.msra.mxu0 %v3930
    %4420 = vmatprep.subr.bf16.mxu0 %v3935
    %4421 = vmatpush1.bf16.msra.mxu0 %v3934
    %4422 = vmatprep.subr.bf16.mxu0 %v3939
    %4423 = vmatpush1.bf16.msra.mxu0 %v3938
    %4424 = vmatprep.subr.bf16.mxu0 %v3943
    %4425 = vmatpush1.bf16.msra.mxu0 %v3942
    %4426 = vmatprep.mubr.bf16.mxu0 %v2829
    %4427 = vmatmul.mubr.bf16.gmra.mrb[0].mxu0 %v2828
    %v4428 = vpop.f32.mrb[0].mxu0
    %v4429 = vadd.f32 %v3097, %v4428
    %v4430 = vpop.f32.mrb[0].mxu0
    %v4431 = vadd.f32 %v3101, %v4430
    %v4432 = vpop.f32.mrb[0].mxu0
    %v4433 = vpop.f32.mrb[0].mxu0
    %4434 = vdwg.mxu0
    %4435 = vmatprep.subr.bf16.mxu0 %v3947
    %4436 = vmatpush1.bf16.msra.mxu0 %v3946
    %4437 = vmatprep.subr.bf16.mxu0 %v3951
    %4438 = vmatpush1.bf16.msra.mxu0 %v3950
    %4439 = vmatprep.subr.bf16.mxu0 %v3955
    %4440 = vmatpush1.bf16.msra.mxu0 %v3954
    %4441 = vmatprep.subr.bf16.mxu0 %v3959
    %4442 = vmatpush1.bf16.msra.mxu0 %v3958
    %4443 = vmatprep.subr.bf16.mxu0 %v3963
    %4444 = vmatpush1.bf16.msra.mxu0 %v3962
    %4445 = vmatprep.subr.bf16.mxu0 %v3967
    %4446 = vmatpush1.bf16.msra.mxu0 %v3966
    %4447 = vmatprep.subr.bf16.mxu0 %v3971
    %4448 = vmatpush1.bf16.msra.mxu0 %v3970
    %4449 = vmatprep.subr.bf16.mxu0 %v3975
    %4450 = vmatpush1.bf16.msra.mxu0 %v3974
    %4451 = vmatprep.subr.bf16.mxu0 %v3979
    %4452 = vmatpush1.bf16.msra.mxu0 %v3978
    %4453 = vmatprep.subr.bf16.mxu0 %v3983
    %4454 = vmatpush1.bf16.msra.mxu0 %v3982
    %4455 = vmatprep.subr.bf16.mxu0 %v3987
    %4456 = vmatpush1.bf16.msra.mxu0 %v3986
    %4457 = vmatprep.subr.bf16.mxu0 %v3991
    %4458 = vmatpush1.bf16.msra.mxu0 %v3990
    %4459 = vmatprep.subr.bf16.mxu0 %v3995
    %4460 = vmatpush1.bf16.msra.mxu0 %v3994
    %4461 = vmatprep.subr.bf16.mxu0 %v3999
    %4462 = vmatpush1.bf16.msra.mxu0 %v3998
    %4463 = vmatprep.subr.bf16.mxu0 %v4003
    %4464 = vmatpush1.bf16.msra.mxu0 %v4002
    %4465 = vmatprep.subr.bf16.mxu0 %v4007
    %4466 = vmatpush1.bf16.msra.mxu0 %v4006
    %4467 = vmatprep.mubr.bf16.mxu0 %v2831
    %4468 = vmatmul.mubr.bf16.gmra.mrb[0].mxu0 %v2830
    %v4469 = vpop.f32.mrb[0].mxu0
    %v4470 = vadd.f32 %v4429, %v4469
    %v4471 = vpop.f32.mrb[0].mxu0
    %v4472 = vadd.f32 %v4431, %v4471
    %v4473 = vpop.f32.mrb[0].mxu0
    %v4474 = vpop.f32.mrb[0].mxu0
    %4475 = vdwg.mxu0
    %4476 = vmatprep.subr.bf16.mxu0 %v4011
    %4477 = vmatpush1.bf16.msra.mxu0 %v4010
    %4478 = vmatprep.subr.bf16.mxu0 %v4015
    %4479 = vmatpush1.bf16.msra.mxu0 %v4014
    %4480 = vmatprep.subr.bf16.mxu0 %v4019
    %4481 = vmatpush1.bf16.msra.mxu0 %v4018
    %4482 = vmatprep.subr.bf16.mxu0 %v4023
    %4483 = vmatpush1.bf16.msra.mxu0 %v4022
    %4484 = vmatprep.subr.bf16.mxu0 %v4027
    %4485 = vmatpush1.bf16.msra.mxu0 %v4026
    %4486 = vmatprep.subr.bf16.mxu0 %v4031
    %4487 = vmatpush1.bf16.msra.mxu0 %v4030
    %4488 = vmatprep.subr.bf16.mxu0 %v4035
    %4489 = vmatpush1.bf16.msra.mxu0 %v4034
    %4490 = vmatprep.subr.bf16.mxu0 %v4039
    %4491 = vmatpush1.bf16.msra.mxu0 %v4038
    %4492 = vmatprep.subr.bf16.mxu0 %v4043
    %4493 = vmatpush1.bf16.msra.mxu0 %v4042
    %4494 = vmatprep.subr.bf16.mxu0 %v4047
    %4495 = vmatpush1.bf16.msra.mxu0 %v4046
    %4496 = vmatprep.subr.bf16.mxu0 %v4051
    %4497 = vmatpush1.bf16.msra.mxu0 %v4050
    %4498 = vmatprep.subr.bf16.mxu0 %v4055
    %4499 = vmatpush1.bf16.msra.mxu0 %v4054
    %4500 = vmatprep.subr.bf16.mxu0 %v4059
    %4501 = vmatpush1.bf16.msra.mxu0 %v4058
    %4502 = vmatprep.subr.bf16.mxu0 %v4063
    %4503 = vmatpush1.bf16.msra.mxu0 %v4062
    %4504 = vmatprep.subr.bf16.mxu0 %v4067
    %4505 = vmatpush1.bf16.msra.mxu0 %v4066
    %4506 = vmatprep.subr.bf16.mxu0 %v4071
    %4507 = vmatpush1.bf16.msra.mxu0 %v4070
    %4508 = vmatprep.mubr.bf16.mxu0 %v2833
    %4509 = vmatmul.mubr.bf16.gmra.mrb[0].mxu0 %v2832
    %v4510 = vpop.f32.mrb[0].mxu0
    %v4511 = vadd.f32 %v4470, %v4510
    %v4512 = vpop.f32.mrb[0].mxu0
    %v4513 = vadd.f32 %v4472, %v4512
    %v4514 = vpop.f32.mrb[0].mxu0
    %v4515 = vpop.f32.mrb[0].mxu0
    %4516 = vdwg.mxu0
    %4517 = vmatprep.subr.bf16.mxu0 %v4075
    %4518 = vmatpush1.bf16.msra.mxu0 %v4074
    %4519 = vmatprep.subr.bf16.mxu0 %v4079
    %4520 = vmatpush1.bf16.msra.mxu0 %v4078
    %4521 = vmatprep.subr.bf16.mxu0 %v4083
    %4522 = vmatpush1.bf16.msra.mxu0 %v4082
    %4523 = vmatprep.subr.bf16.mxu0 %v4087
    %4524 = vmatpush1.bf16.msra.mxu0 %v4086
    %4525 = vmatprep.subr.bf16.mxu0 %v4091
    %4526 = vmatpush1.bf16.msra.mxu0 %v4090
    %4527 = vmatprep.subr.bf16.mxu0 %v4095
    %4528 = vmatpush1.bf16.msra.mxu0 %v4094
    %4529 = vmatprep.subr.bf16.mxu0 %v4099
    %4530 = vmatpush1.bf16.msra.mxu0 %v4098
    %4531 = vmatprep.subr.bf16.mxu0 %v4103
    %4532 = vmatpush1.bf16.msra.mxu0 %v4102
    %4533 = vmatprep.subr.bf16.mxu0 %v4107
    %4534 = vmatpush1.bf16.msra.mxu0 %v4106
    %4535 = vmatprep.subr.bf16.mxu0 %v4111
    %4536 = vmatpush1.bf16.msra.mxu0 %v4110
    %4537 = vmatprep.subr.bf16.mxu0 %v4115
    %4538 = vmatpush1.bf16.msra.mxu0 %v4114
    %4539 = vmatprep.subr.bf16.mxu0 %v4119
    %4540 = vmatpush1.bf16.msra.mxu0 %v4118
    %4541 = vmatprep.subr.bf16.mxu0 %v4123
    %4542 = vmatpush1.bf16.msra.mxu0 %v4122
    %4543 = vmatprep.subr.bf16.mxu0 %v4127
    %4544 = vmatpush1.bf16.msra.mxu0 %v4126
    %4545 = vmatprep.subr.bf16.mxu0 %v4131
    %4546 = vmatpush1.bf16.msra.mxu0 %v4130
    %4547 = vmatprep.subr.bf16.mxu0 %v4135
    %4548 = vmatpush1.bf16.msra.mxu0 %v4134
    %4549 = vmatprep.mubr.bf16.mxu0 %v2835
    %4550 = vmatmul.mubr.bf16.gmra.mrb[0].mxu0 %v2834
    %v4551 = vpop.f32.mrb[0].mxu0
    %v4552 = vadd.f32 %v4511, %v4551
    %v4553 = vpop.f32.mrb[0].mxu0
    %v4554 = vadd.f32 %v4513, %v4553
    %v4555 = vpop.f32.mrb[0].mxu0
    %v4556 = vpop.f32.mrb[0].mxu0
    %4557 = vdwg.mxu0
    %4558 = vmatprep.subr.bf16.mxu0 %v3885
    %4559 = vmatpush1.bf16.msra.mxu0 %v3884
    %4560 = vmatprep.subr.bf16.mxu0 %v3889
    %4561 = vmatpush1.bf16.msra.mxu0 %v3888
    %4562 = vmatprep.subr.bf16.mxu0 %v3893
    %4563 = vmatpush1.bf16.msra.mxu0 %v3892
    %4564 = vmatprep.subr.bf16.mxu0 %v3897
    %4565 = vmatpush1.bf16.msra.mxu0 %v3896
    %4566 = vmatprep.subr.bf16.mxu0 %v3901
    %4567 = vmatpush1.bf16.msra.mxu0 %v3900
    %4568 = vmatprep.subr.bf16.mxu0 %v3905
    %4569 = vmatpush1.bf16.msra.mxu0 %v3904
    %4570 = vmatprep.subr.bf16.mxu0 %v3909
    %4571 = vmatpush1.bf16.msra.mxu0 %v3908
    %4572 = vmatprep.subr.bf16.mxu0 %v3913
    %4573 = vmatpush1.bf16.msra.mxu0 %v3912
    %4574 = vmatprep.subr.bf16.mxu0 %v3917
    %4575 = vmatpush1.bf16.msra.mxu0 %v3916
    %4576 = vmatprep.subr.bf16.mxu0 %v3921
    %4577 = vmatpush1.bf16.msra.mxu0 %v3920
    %4578 = vmatprep.subr.bf16.mxu0 %v3925
    %4579 = vmatpush1.bf16.msra.mxu0 %v3924
    %4580 = vmatprep.subr.bf16.mxu0 %v3929
    %4581 = vmatpush1.bf16.msra.mxu0 %v3928
    %4582 = vmatprep.subr.bf16.mxu0 %v3933
    %4583 = vmatpush1.bf16.msra.mxu0 %v3932
    %4584 = vmatprep.subr.bf16.mxu0 %v3937
    %4585 = vmatpush1.bf16.msra.mxu0 %v3936
    %4586 = vmatprep.subr.bf16.mxu0 %v3941
    %4587 = vmatpush1.bf16.msra.mxu0 %v3940
    %4588 = vmatprep.subr.bf16.mxu0 %v3945
    %4589 = vmatpush1.bf16.msra.mxu0 %v3944
    %4590 = vmatprep.mubr.bf16.mxu0 %v2829
    %4591 = vmatmul.mubr.bf16.gmra.mrb[0].mxu0 %v2828
    %v4592 = vpop.f32.mrb[0].mxu0
    %v4593 = vadd.f32 %v3105, %v4592
    %v4594 = vpop.f32.mrb[0].mxu0
    %v4595 = vadd.f32 %v3109, %v4594
    %v4596 = vpop.f32.mrb[0].mxu0
    %v4597 = vpop.f32.mrb[0].mxu0
    %4598 = vdwg.mxu0
    %4599 = vmatprep.subr.bf16.mxu0 %v3949
    %4600 = vmatpush1.bf16.msra.mxu0 %v3948
    %4601 = vmatprep.subr.bf16.mxu0 %v3953
    %4602 = vmatpush1.bf16.msra.mxu0 %v3952
    %4603 = vmatprep.subr.bf16.mxu0 %v3957
    %4604 = vmatpush1.bf16.msra.mxu0 %v3956
    %4605 = vmatprep.subr.bf16.mxu0 %v3961
    %4606 = vmatpush1.bf16.msra.mxu0 %v3960
    %4607 = vmatprep.subr.bf16.mxu0 %v3965
    %4608 = vmatpush1.bf16.msra.mxu0 %v3964
    %4609 = vmatprep.subr.bf16.mxu0 %v3969
    %4610 = vmatpush1.bf16.msra.mxu0 %v3968
    %4611 = vmatprep.subr.bf16.mxu0 %v3973
    %4612 = vmatpush1.bf16.msra.mxu0 %v3972
    %4613 = vmatprep.subr.bf16.mxu0 %v3977
    %4614 = vmatpush1.bf16.msra.mxu0 %v3976
    %4615 = vmatprep.subr.bf16.mxu0 %v3981
    %4616 = vmatpush1.bf16.msra.mxu0 %v3980
    %4617 = vmatprep.subr.bf16.mxu0 %v3985
    %4618 = vmatpush1.bf16.msra.mxu0 %v3984
    %4619 = vmatprep.subr.bf16.mxu0 %v3989
    %4620 = vmatpush1.bf16.msra.mxu0 %v3988
    %4621 = vmatprep.subr.bf16.mxu0 %v3993
    %4622 = vmatpush1.bf16.msra.mxu0 %v3992
    %4623 = vmatprep.subr.bf16.mxu0 %v3997
    %4624 = vmatpush1.bf16.msra.mxu0 %v3996
    %4625 = vmatprep.subr.bf16.mxu0 %v4001
    %4626 = vmatpush1.bf16.msra.mxu0 %v4000
    %4627 = vmatprep.subr.bf16.mxu0 %v4005
    %4628 = vmatpush1.bf16.msra.mxu0 %v4004
    %4629 = vmatprep.subr.bf16.mxu0 %v4009
    %4630 = vmatpush1.bf16.msra.mxu0 %v4008
    %4631 = vmatprep.mubr.bf16.mxu0 %v2831
    %4632 = vmatmul.mubr.bf16.gmra.mrb[0].mxu0 %v2830
    %v4633 = vpop.f32.mrb[0].mxu0
    %v4634 = vadd.f32 %v4593, %v4633
    %v4635 = vpop.f32.mrb[0].mxu0
    %v4636 = vadd.f32 %v4595, %v4635
    %v4637 = vpop.f32.mrb[0].mxu0
    %v4638 = vpop.f32.mrb[0].mxu0
    %4639 = vdwg.mxu0
    %4640 = vmatprep.subr.bf16.mxu0 %v4013
    %4641 = vmatpush1.bf16.msra.mxu0 %v4012
    %4642 = vmatprep.subr.bf16.mxu0 %v4017
    %4643 = vmatpush1.bf16.msra.mxu0 %v4016
    %4644 = vmatprep.subr.bf16.mxu0 %v4021
    %4645 = vmatpush1.bf16.msra.mxu0 %v4020
    %4646 = vmatprep.subr.bf16.mxu0 %v4025
    %4647 = vmatpush1.bf16.msra.mxu0 %v4024
    %4648 = vmatprep.subr.bf16.mxu0 %v4029
    %4649 = vmatpush1.bf16.msra.mxu0 %v4028
    %4650 = vmatprep.subr.bf16.mxu0 %v4033
    %4651 = vmatpush1.bf16.msra.mxu0 %v4032
    %4652 = vmatprep.subr.bf16.mxu0 %v4037
    %4653 = vmatpush1.bf16.msra.mxu0 %v4036
    %4654 = vmatprep.subr.bf16.mxu0 %v4041
    %4655 = vmatpush1.bf16.msra.mxu0 %v4040
    %4656 = vmatprep.subr.bf16.mxu0 %v4045
    %4657 = vmatpush1.bf16.msra.mxu0 %v4044
    %4658 = vmatprep.subr.bf16.mxu0 %v4049
    %4659 = vmatpush1.bf16.msra.mxu0 %v4048
    %4660 = vmatprep.subr.bf16.mxu0 %v4053
    %4661 = vmatpush1.bf16.msra.mxu0 %v4052
    %4662 = vmatprep.subr.bf16.mxu0 %v4057
    %4663 = vmatpush1.bf16.msra.mxu0 %v4056
    %4664 = vmatprep.subr.bf16.mxu0 %v4061
    %4665 = vmatpush1.bf16.msra.mxu0 %v4060
    %4666 = vmatprep.subr.bf16.mxu0 %v4065
    %4667 = vmatpush1.bf16.msra.mxu0 %v4064
    %4668 = vmatprep.subr.bf16.mxu0 %v4069
    %4669 = vmatpush1.bf16.msra.mxu0 %v4068
    %4670 = vmatprep.subr.bf16.mxu0 %v4073
    %4671 = vmatpush1.bf16.msra.mxu0 %v4072
    %4672 = vmatprep.mubr.bf16.mxu0 %v2833
    %4673 = vmatmul.mubr.bf16.gmra.mrb[0].mxu0 %v2832
    %v4674 = vpop.f32.mrb[0].mxu0
    %v4675 = vadd.f32 %v4634, %v4674
    %v4676 = vpop.f32.mrb[0].mxu0
    %v4677 = vadd.f32 %v4636, %v4676
    %v4678 = vpop.f32.mrb[0].mxu0
    %v4679 = vpop.f32.mrb[0].mxu0
    %4680 = vdwg.mxu0
    %4681 = vmatprep.subr.bf16.mxu0 %v4077
    %4682 = vmatpush1.bf16.msra.mxu0 %v4076
    %4683 = vmatprep.subr.bf16.mxu0 %v4081
    %4684 = vmatpush1.bf16.msra.mxu0 %v4080
    %4685 = vmatprep.subr.bf16.mxu0 %v4085
    %4686 = vmatpush1.bf16.msra.mxu0 %v4084
    %4687 = vmatprep.subr.bf16.mxu0 %v4089
    %4688 = vmatpush1.bf16.msra.mxu0 %v4088
    %4689 = vmatprep.subr.bf16.mxu0 %v4093
    %4690 = vmatpush1.bf16.msra.mxu0 %v4092
    %4691 = vmatprep.subr.bf16.mxu0 %v4097
    %4692 = vmatpush1.bf16.msra.mxu0 %v4096
    %4693 = vmatprep.subr.bf16.mxu0 %v4101
    %4694 = vmatpush1.bf16.msra.mxu0 %v4100
    %4695 = vmatprep.subr.bf16.mxu0 %v4105
    %4696 = vmatpush1.bf16.msra.mxu0 %v4104
    %4697 = vmatprep.subr.bf16.mxu0 %v4109
    %4698 = vmatpush1.bf16.msra.mxu0 %v4108
    %4699 = vmatprep.subr.bf16.mxu0 %v4113
    %4700 = vmatpush1.bf16.msra.mxu0 %v4112
    %4701 = vmatprep.subr.bf16.mxu0 %v4117
    %4702 = vmatpush1.bf16.msra.mxu0 %v4116
    %4703 = vmatprep.subr.bf16.mxu0 %v4121
    %4704 = vmatpush1.bf16.msra.mxu0 %v4120
    %4705 = vmatprep.subr.bf16.mxu0 %v4125
    %4706 = vmatpush1.bf16.msra.mxu0 %v4124
    %4707 = vmatprep.subr.bf16.mxu0 %v4129
    %4708 = vmatpush1.bf16.msra.mxu0 %v4128
    %4709 = vmatprep.subr.bf16.mxu0 %v4133
    %4710 = vmatpush1.bf16.msra.mxu0 %v4132
    %4711 = vmatprep.subr.bf16.mxu0 %v4137
    %4712 = vmatpush1.bf16.msra.mxu0 %v4136
    %4713 = vmatprep.mubr.bf16.mxu0 %v2835
    %4714 = vmatmul.mubr.bf16.gmra.mrb[0].mxu0 %v2834
    %v4715 = vpop.f32.mrb[0].mxu0
    %v4716 = vadd.f32 %v4675, %v4715
    %v4717 = vpop.f32.mrb[0].mxu0
    %v4718 = vadd.f32 %v4677, %v4717
    %v4719 = vpop.f32.mrb[0].mxu0
    %v4720 = vpop.f32.mrb[0].mxu0
    %4721 = vdwg.mxu0
    %v4722 = vmax.f32 %v4552, 0.0
    %v4723 = vmax.f32 %v4554, 0.0
    %v4724 = vmax.f32 %v4716, 0.0
    %v4725 = vmax.f32 %v4718, 0.0
    %v4726 = vpack.c.bf16 %v4722, %v4722
    %v4727 = vpack.c.bf16 %v4723, %v4723
    %v4728 = vpack.c.bf16 %v4724, %v4724
    %v4729 = vpack.c.bf16 %v4725, %v4725
    %v4730 = vld [vmem:[#allocation14] sm:$0xf]
    %v4731 = vld [vmem:[#allocation14 + $0x4] sm:$0xf]
    %v4732 = vld [vmem:[#allocation14 + $0x8] sm:$0xf]
    %v4733 = vld [vmem:[#allocation14 + $0xc] sm:$0xf]
    %v4734 = vld [vmem:[#allocation14 + $0x10] sm:$0xf]
    %v4735 = vld [vmem:[#allocation14 + $0x14] sm:$0xf]
    %v4736 = vld [vmem:[#allocation14 + $0x18] sm:$0xf]
    %v4737 = vld [vmem:[#allocation14 + $0x1c] sm:$0xf]
    %v4738 = vld [vmem:[#allocation14 + $0x20] sm:$0xf]
    %v4739 = vld [vmem:[#allocation14 + $0x24] sm:$0xf]
    %v4740 = vld [vmem:[#allocation14 + $0x28] sm:$0xf]
    %v4741 = vld [vmem:[#allocation14 + $0x2c] sm:$0xf]
    %v4742 = vld [vmem:[#allocation14 + $0x30] sm:$0xf]
    %v4743 = vld [vmem:[#allocation14 + $0x34] sm:$0xf]
    %v4744 = vld [vmem:[#allocation14 + $0x38] sm:$0xf]
    %v4745 = vld [vmem:[#allocation14 + $0x3c] sm:$0xf]
    %v4746 = vld [vmem:[#allocation14 + $0x40] sm:$0xf]
    %v4747 = vld [vmem:[#allocation14 + $0x44] sm:$0xf]
    %v4748 = vld [vmem:[#allocation14 + $0x48] sm:$0xf]
    %v4749 = vld [vmem:[#allocation14 + $0x4c] sm:$0xf]
    %v4750 = vld [vmem:[#allocation14 + $0x50] sm:$0xf]
    %v4751 = vld [vmem:[#allocation14 + $0x54] sm:$0xf]
    %v4752 = vld [vmem:[#allocation14 + $0x58] sm:$0xf]
    %v4753 = vld [vmem:[#allocation14 + $0x5c] sm:$0xf]
    %v4754 = vld [vmem:[#allocation14 + $0x60] sm:$0xf]
    %v4755 = vld [vmem:[#allocation14 + $0x64] sm:$0xf]
    %v4756 = vld [vmem:[#allocation14 + $0x68] sm:$0xf]
    %v4757 = vld [vmem:[#allocation14 + $0x6c] sm:$0xf]
    %v4758 = vld [vmem:[#allocation14 + $0x70] sm:$0xf]
    %v4759 = vld [vmem:[#allocation14 + $0x74] sm:$0xf]
    %v4760 = vld [vmem:[#allocation14 + $0x78] sm:$0xf]
    %v4761 = vld [vmem:[#allocation14 + $0x7c] sm:$0xf]
    %v4762 = vld [vmem:[#allocation14 + $0x80] sm:$0xf]
    %v4763 = vld [vmem:[#allocation14 + $0x84] sm:$0xf]
    %v4764 = vld [vmem:[#allocation14 + $0x88] sm:$0xf]
    %v4765 = vld [vmem:[#allocation14 + $0x8c] sm:$0xf]
    %v4766 = vld [vmem:[#allocation14 + $0x90] sm:$0xf]
    %v4767 = vld [vmem:[#allocation14 + $0x94] sm:$0xf]
    %v4768 = vld [vmem:[#allocation14 + $0x98] sm:$0xf]
    %v4769 = vld [vmem:[#allocation14 + $0x9c] sm:$0xf]
    %v4770 = vld [vmem:[#allocation14 + $0xa0] sm:$0xf]
    %v4771 = vld [vmem:[#allocation14 + $0xa4] sm:$0xf]
    %v4772 = vld [vmem:[#allocation14 + $0xa8] sm:$0xf]
    %v4773 = vld [vmem:[#allocation14 + $0xac] sm:$0xf]
    %v4774 = vld [vmem:[#allocation14 + $0xb0] sm:$0xf]
    %v4775 = vld [vmem:[#allocation14 + $0xb4] sm:$0xf]
    %v4776 = vld [vmem:[#allocation14 + $0xb8] sm:$0xf]
    %v4777 = vld [vmem:[#allocation14 + $0xbc] sm:$0xf]
    %v4778 = vld [vmem:[#allocation14 + $0xc0] sm:$0xf]
    %v4779 = vld [vmem:[#allocation14 + $0xc4] sm:$0xf]
    %v4780 = vld [vmem:[#allocation14 + $0xc8] sm:$0xf]
    %v4781 = vld [vmem:[#allocation14 + $0xcc] sm:$0xf]
    %v4782 = vld [vmem:[#allocation14 + $0xd0] sm:$0xf]
    %v4783 = vld [vmem:[#allocation14 + $0xd4] sm:$0xf]
    %v4784 = vld [vmem:[#allocation14 + $0xd8] sm:$0xf]
    %v4785 = vld [vmem:[#allocation14 + $0xdc] sm:$0xf]
    %v4786 = vld [vmem:[#allocation14 + $0xe0] sm:$0xf]
    %v4787 = vld [vmem:[#allocation14 + $0xe4] sm:$0xf]
    %v4788 = vld [vmem:[#allocation14 + $0xe8] sm:$0xf]
    %v4789 = vld [vmem:[#allocation14 + $0xec] sm:$0xf]
    %v4790 = vld [vmem:[#allocation14 + $0xf0] sm:$0xf]
    %v4791 = vld [vmem:[#allocation14 + $0xf4] sm:$0xf]
    %v4792 = vld [vmem:[#allocation14 + $0xf8] sm:$0xf]
    %v4793 = vld [vmem:[#allocation14 + $0xfc] sm:$0xf]
    %v4794 = vld [vmem:[%s12] sm:$0x1]
    %v4796 = vlaneseq
    %v4797 = vshrl.u32 %v4796, 7
    %v4798 = vsub.s32 0, %v4797
    %v4799 = vrot.slane %v4794, %v4798
    %v4865 = vunpack.c.l.b16 %v4730
    %v4866 = vunpack.c.l.b16 %v4731
    %v4867 = vunpack.c.l.b16 %v4732
    %v4868 = vunpack.c.l.b16 %v4733
    %v4869 = vunpack.c.l.b16 %v4734
    %v4870 = vunpack.c.l.b16 %v4735
    %v4871 = vunpack.c.l.b16 %v4736
    %v4872 = vunpack.c.l.b16 %v4737
    %v4873 = vunpack.c.l.b16 %v4738
    %v4874 = vunpack.c.l.b16 %v4739
    %v4875 = vunpack.c.l.b16 %v4740
    %v4876 = vunpack.c.l.b16 %v4741
    %v4877 = vunpack.c.l.b16 %v4742
    %v4878 = vunpack.c.l.b16 %v4743
    %v4879 = vunpack.c.l.b16 %v4744
    %v4880 = vunpack.c.l.b16 %v4745
    %v4881 = vunpack.c.l.b16 %v4746
    %v4882 = vunpack.c.l.b16 %v4747
    %v4883 = vunpack.c.l.b16 %v4748
    %v4884 = vunpack.c.l.b16 %v4749
    %v4885 = vunpack.c.l.b16 %v4750
    %v4886 = vunpack.c.l.b16 %v4751
    %v4887 = vunpack.c.l.b16 %v4752
    %v4888 = vunpack.c.l.b16 %v4753
    %v4889 = vunpack.c.l.b16 %v4754
    %v4890 = vunpack.c.l.b16 %v4755
    %v4891 = vunpack.c.l.b16 %v4756
    %v4892 = vunpack.c.l.b16 %v4757
    %v4893 = vunpack.c.l.b16 %v4758
    %v4894 = vunpack.c.l.b16 %v4759
    %v4895 = vunpack.c.l.b16 %v4760
    %v4896 = vunpack.c.l.b16 %v4761
    %v4897 = vunpack.c.l.b16 %v4762
    %v4898 = vunpack.c.l.b16 %v4763
    %v4899 = vunpack.c.l.b16 %v4764
    %v4900 = vunpack.c.l.b16 %v4765
    %v4901 = vunpack.c.l.b16 %v4766
    %v4902 = vunpack.c.l.b16 %v4767
    %v4903 = vunpack.c.l.b16 %v4768
    %v4904 = vunpack.c.l.b16 %v4769
    %v4905 = vunpack.c.l.b16 %v4770
    %v4906 = vunpack.c.l.b16 %v4771
    %v4907 = vunpack.c.l.b16 %v4772
    %v4908 = vunpack.c.l.b16 %v4773
    %v4909 = vunpack.c.l.b16 %v4774
    %v4910 = vunpack.c.l.b16 %v4775
    %v4911 = vunpack.c.l.b16 %v4776
    %v4912 = vunpack.c.l.b16 %v4777
    %v4913 = vunpack.c.l.b16 %v4778
    %v4914 = vunpack.c.l.b16 %v4779
    %v4915 = vunpack.c.l.b16 %v4780
    %v4916 = vunpack.c.l.b16 %v4781
    %v4917 = vunpack.c.l.b16 %v4782
    %v4918 = vunpack.c.l.b16 %v4783
    %v4919 = vunpack.c.l.b16 %v4784
    %v4920 = vunpack.c.l.b16 %v4785
    %v4921 = vunpack.c.l.b16 %v4786
    %v4922 = vunpack.c.l.b16 %v4787
    %v4923 = vunpack.c.l.b16 %v4788
    %v4924 = vunpack.c.l.b16 %v4789
    %v4925 = vunpack.c.l.b16 %v4790
    %v4926 = vunpack.c.l.b16 %v4791
    %v4927 = vunpack.c.l.b16 %v4792
    %v4928 = vunpack.c.l.b16 %v4793
    %v4929 = vpack.c.b16 %v4866, %v4865
    %v4930 = vpack.c.b16 %v4868, %v4867
    %v4931 = vpack.c.b16 %v4870, %v4869
    %v4932 = vpack.c.b16 %v4872, %v4871
    %v4933 = vpack.c.b16 %v4874, %v4873
    %v4934 = vpack.c.b16 %v4876, %v4875
    %v4935 = vpack.c.b16 %v4878, %v4877
    %v4936 = vpack.c.b16 %v4880, %v4879
    %v4937 = vpack.c.b16 %v4882, %v4881
    %v4938 = vpack.c.b16 %v4884, %v4883
    %v4939 = vpack.c.b16 %v4886, %v4885
    %v4940 = vpack.c.b16 %v4888, %v4887
    %v4941 = vpack.c.b16 %v4890, %v4889
    %v4942 = vpack.c.b16 %v4892, %v4891
    %v4943 = vpack.c.b16 %v4894, %v4893
    %v4944 = vpack.c.b16 %v4896, %v4895
    %v4945 = vpack.c.b16 %v4898, %v4897
    %v4946 = vpack.c.b16 %v4900, %v4899
    %v4947 = vpack.c.b16 %v4902, %v4901
    %v4948 = vpack.c.b16 %v4904, %v4903
    %v4949 = vpack.c.b16 %v4906, %v4905
    %v4950 = vpack.c.b16 %v4908, %v4907
    %v4951 = vpack.c.b16 %v4910, %v4909
    %v4952 = vpack.c.b16 %v4912, %v4911
    %v4953 = vpack.c.b16 %v4914, %v4913
    %v4954 = vpack.c.b16 %v4916, %v4915
    %v4955 = vpack.c.b16 %v4918, %v4917
    %v4956 = vpack.c.b16 %v4920, %v4919
    %v4957 = vpack.c.b16 %v4922, %v4921
    %v4958 = vpack.c.b16 %v4924, %v4923
    %v4959 = vpack.c.b16 %v4926, %v4925
    %v4960 = vpack.c.b16 %v4928, %v4927
    %4993 = vmatprep.subr.bf16.mxu0 0
    %4994 = vmatpush1.bf16.msra.mxu0 %v4929
    %4995 = vmatprep.subr.bf16.mxu0 0
    %4996 = vmatpush1.bf16.msra.mxu0 %v4930
    %4997 = vmatprep.subr.bf16.mxu0 0
    %4998 = vmatpush1.bf16.msra.mxu0 %v4931
    %4999 = vmatprep.subr.bf16.mxu0 0
    %5000 = vmatpush1.bf16.msra.mxu0 %v4932
    %5001 = vmatprep.subr.bf16.mxu0 0
    %5002 = vmatpush1.bf16.msra.mxu0 %v4933
    %5003 = vmatprep.subr.bf16.mxu0 0
    %5004 = vmatpush1.bf16.msra.mxu0 %v4934
    %5005 = vmatprep.subr.bf16.mxu0 0
    %5006 = vmatpush1.bf16.msra.mxu0 %v4935
    %5007 = vmatprep.subr.bf16.mxu0 0
    %5008 = vmatpush1.bf16.msra.mxu0 %v4936
    %5009 = vmatprep.subr.bf16.mxu0 0
    %5010 = vmatpush1.bf16.msra.mxu0 %v4937
    %5011 = vmatprep.subr.bf16.mxu0 0
    %5012 = vmatpush1.bf16.msra.mxu0 %v4938
    %5013 = vmatprep.subr.bf16.mxu0 0
    %5014 = vmatpush1.bf16.msra.mxu0 %v4939
    %5015 = vmatprep.subr.bf16.mxu0 0
    %5016 = vmatpush1.bf16.msra.mxu0 %v4940
    %5017 = vmatprep.subr.bf16.mxu0 0
    %5018 = vmatpush1.bf16.msra.mxu0 %v4941
    %5019 = vmatprep.subr.bf16.mxu0 0
    %5020 = vmatpush1.bf16.msra.mxu0 %v4942
    %5021 = vmatprep.subr.bf16.mxu0 0
    %5022 = vmatpush1.bf16.msra.mxu0 %v4943
    %5023 = vmatprep.subr.bf16.mxu0 0
    %5024 = vmatpush1.bf16.msra.mxu0 %v4944
    %5025 = vmatprep.mubr.bf16.mxu0 %v4727
    %5026 = vmatmul.mubr.bf16.gmra.mrb[0].mxu0 %v4726
    %v5027 = vpop.f32.mrb[0].mxu0
    %v5028 = vadd.f32 %v4799, %v5027
    %v5029 = vpop.f32.mrb[0].mxu0
    %v5030 = vpop.f32.mrb[0].mxu0
    %v5031 = vpop.f32.mrb[0].mxu0
    %5032 = vdwg.mxu0
    %5033 = vmatprep.subr.bf16.mxu0 0
    %5034 = vmatpush1.bf16.msra.mxu0 %v4945
    %5035 = vmatprep.subr.bf16.mxu0 0
    %5036 = vmatpush1.bf16.msra.mxu0 %v4946
    %5037 = vmatprep.subr.bf16.mxu0 0
    %5038 = vmatpush1.bf16.msra.mxu0 %v4947
    %5039 = vmatprep.subr.bf16.mxu0 0
    %5040 = vmatpush1.bf16.msra.mxu0 %v4948
    %5041 = vmatprep.subr.bf16.mxu0 0
    %5042 = vmatpush1.bf16.msra.mxu0 %v4949
    %5043 = vmatprep.subr.bf16.mxu0 0
    %5044 = vmatpush1.bf16.msra.mxu0 %v4950
    %5045 = vmatprep.subr.bf16.mxu0 0
    %5046 = vmatpush1.bf16.msra.mxu0 %v4951
    %5047 = vmatprep.subr.bf16.mxu0 0
    %5048 = vmatpush1.bf16.msra.mxu0 %v4952
    %5049 = vmatprep.subr.bf16.mxu0 0
    %5050 = vmatpush1.bf16.msra.mxu0 %v4953
    %5051 = vmatprep.subr.bf16.mxu0 0
    %5052 = vmatpush1.bf16.msra.mxu0 %v4954
    %5053 = vmatprep.subr.bf16.mxu0 0
    %5054 = vmatpush1.bf16.msra.mxu0 %v4955
    %5055 = vmatprep.subr.bf16.mxu0 0
    %5056 = vmatpush1.bf16.msra.mxu0 %v4956
    %5057 = vmatprep.subr.bf16.mxu0 0
    %5058 = vmatpush1.bf16.msra.mxu0 %v4957
    %5059 = vmatprep.subr.bf16.mxu0 0
    %5060 = vmatpush1.bf16.msra.mxu0 %v4958
    %5061 = vmatprep.subr.bf16.mxu0 0
    %5062 = vmatpush1.bf16.msra.mxu0 %v4959
    %5063 = vmatprep.subr.bf16.mxu0 0
    %5064 = vmatpush1.bf16.msra.mxu0 %v4960
    %5065 = vmatprep.mubr.bf16.mxu0 %v4729
    %5066 = vmatmul.mubr.bf16.gmra.mrb[0].mxu0 %v4728
    %v5067 = vpop.f32.mrb[0].mxu0
    %v5068 = vadd.f32 %v5028, %v5067
    %v5069 = vpop.f32.mrb[0].mxu0
    %v5070 = vpop.f32.mrb[0].mxu0
    %v5071 = vpop.f32.mrb[0].mxu0
    %5072 = vdwg.mxu0
    %5073 = vst [vmem:[#allocation16] sm:$0xff] %v5068
    // Predicated region
    $region86: #{tpu_custom_call.1} parent=1 // pred_check
      _
    $region87: #{tpu_custom_call.1} parent=1 // pred_check_branch
      %5075 = sbr.rel (0) target = $region89
    $region88: #{tpu_custom_call.1} parent=1 // pred_region
      %s5077 = ssub.s32 128, 128
      %5078 = vsyncadd [#allocation4], %s5077
      %s5080 = sshll.u32 [#allocation16], 4
      %s5081 = int_to_ptr.vmem [resolvable:$true] %s5080
      %5083 = dma.vmem_to_hbm [thread:$0]  %s5081, 128, %s13, [#allocation4]
    $region89: #{tpu_custom_call.1} parent=1 // pred_fallthru
      _
    // Predicated region
    $region90: #{tpu_custom_call.1} parent=1 // pred_check
      _
    $region91: #{tpu_custom_call.1} parent=1 // pred_check_branch
      %5085 = sbr.rel (0) target = $region93
    $region92: #{tpu_custom_call.1} parent=1 // pred_region
      %5086 = dma.done [#allocation4], 128
    $region93: #{tpu_custom_call.1} parent=1 // pred_fallthru
      _
    %5087 = vsyncpa [#allocation3], 1
    %5088 = vsyncpa [#allocation6], 1
    %5089 = vsyncpa [#allocation9], 1
    %5090 = vsyncpa [#allocation12], 1
    %5091 = vsyncpa [#allocation15], 1
    %5092 = vsyncpa [#allocation4], 1

</llo_original>
